<compile_context>
chip_gen: v5e
topology: v5e:2x2
jax: 0.10.0
libtpu: 0.0.40
codegen_flags: <defaults>
</compile_context>

<pallas_src>
import functools

import numpy as np
import jax
import jax.numpy as jnp
from jax.experimental import pallas as pl
from jax.experimental.pallas import tpu as pltpu


_VMEM_LIMIT = 32 * 1024 * 1024  # explicit scoped-VMEM limit (v5e default is 16 MiB)


# ----------------------------------------------------------------------------
# The single fused kernel
# ----------------------------------------------------------------------------
def lenet_kernel(x_ref, w1q_ref, b1_ref, w2q_ref, b2_ref,
                 wf1_ref, bf1_ref, wf2_ref, bf2_ref, wf3_ref, bf3_ref, o_ref):
    """Whole LeNet forward for one batch tile.

    x_ref   : (TB, 784)       bf16  flattened 28x28 input
    w1q_ref : (4, 784, 864)   bf16  conv1+pool quadrant matrices (lanes: ip,jp,co)
    b1_ref  : (1, 864)        f32
    w2q_ref : (4, 864, 256)   bf16  conv2+pool quadrant matrices (lanes: PyTorch
                                    NCHW flatten order co*16 + i*4 + j)
    b2_ref  : (1, 256)        f32
    wf*_ref : fc weights, features padded to 128 lanes (bf16); bf*_ref biases (f32)
    o_ref   : (TB, 128)       f32   logits (first 10 lanes real), lane-dense store
    """
    f32 = jnp.float32
    x = x_ref[...]                                                    # (TB, 784)

    # conv1 + 2x2 maxpool: one MXU matmul per pool quadrant, elementwise max.
    m = jnp.dot(x, w1q_ref[0], preferred_element_type=f32)
    for q in range(1, 4):
        m = jnp.maximum(m, jnp.dot(x, w1q_ref[q], preferred_element_type=f32))
    h1 = jnp.maximum(m + b1_ref[...], 0.0).astype(jnp.bfloat16)      # (TB, 864)

    # conv2 + 2x2 maxpool (output columns already in PyTorch flatten order).
    m = jnp.dot(h1, w2q_ref[0], preferred_element_type=f32)
    for q in range(1, 4):
        m = jnp.maximum(m, jnp.dot(h1, w2q_ref[q], preferred_element_type=f32))
    h2 = jnp.maximum(m + b2_ref[...], 0.0).astype(jnp.bfloat16)      # (TB, 256)

    # fc1 -> relu -> fc2 -> relu -> fc3  (K = 256 / 128 / 128, no padded zeros
    # beyond the natural 128-lane tile).
    h3 = jnp.maximum(jnp.dot(h2, wf1_ref[...], preferred_element_type=f32)
                     + bf1_ref[...], 0.0).astype(jnp.bfloat16)
    h4 = jnp.maximum(jnp.dot(h3, wf2_ref[...], preferred_element_type=f32)
                     + bf2_ref[...], 0.0).astype(jnp.bfloat16)
    o_ref[...] = (jnp.dot(h4, wf3_ref[...], preferred_element_type=f32)
                  + bf3_ref[...])


def _full_spec(arr):
    nd = arr.ndim
    return pl.BlockSpec(arr.shape, lambda i, _nd=nd: (0,) * _nd)


def lenet_fused_call(x2d, weights, *, tile_b=512):
    """x2d: (N, 784) bf16 -> (N, 128) f32 logits (first 10 columns real)."""
    (w1q, b1, w2q, b2, wf1, bf1, wf2, bf2, wf3, bf3) = weights
    n = x2d.shape[0]
    tb = n if n <= tile_b else tile_b   # tb == n (full dim) or a multiple of 8
    return pl.pallas_call(
        lenet_kernel,
        out_shape=jax.ShapeDtypeStruct((n, 128), jnp.float32),
        grid=(pl.cdiv(n, tb),),
        in_specs=[
            pl.BlockSpec((tb, 784), lambda i: (i, 0)),
            _full_spec(w1q), _full_spec(b1),
            _full_spec(w2q), _full_spec(b2),
            _full_spec(wf1), _full_spec(bf1),
            _full_spec(wf2), _full_spec(bf2),
            _full_spec(wf3), _full_spec(bf3),
        ],
        out_specs=pl.BlockSpec((tb, 128), lambda i: (i, 0)),
        compiler_params=pltpu.CompilerParams(
            dimension_semantics=("parallel",),   # shards batch tiles across TCs
            vmem_limit_bytes=_VMEM_LIMIT,
        ),
    )(x2d, w1q, b1, w2q, b2, wf1, bf1, wf2, bf2, wf3, bf3)


# ----------------------------------------------------------------------------
# Parameter prep (runs ONCE, eagerly, outside jit): fold conv+pool into dense
# pool-quadrant matrices and fold the PyTorch flatten into conv2's columns.
# ----------------------------------------------------------------------------
def init_params(key):
    """Deterministic PyTorch-layout parameters (Conv: OIHW, Linear: (out, in))."""
    ks = jax.random.split(key, 10)

    def u(k, shape, fan_in):
        bound = 1.0 / (fan_in ** 0.5)
        return jax.random.uniform(k, shape, jnp.float32, -bound, bound)

    return {
        "conv1_w": u(ks[0], (6, 1, 5, 5), 1 * 25),
        "conv1_b": u(ks[1], (6,), 1 * 25),
        "conv2_w": u(ks[2], (16, 6, 5, 5), 6 * 25),
        "conv2_b": u(ks[3], (16,), 6 * 25),
        "fc1_w": u(ks[4], (120, 256), 256),
        "fc1_b": u(ks[5], (120,), 256),
        "fc2_w": u(ks[6], (84, 120), 120),
        "fc2_b": u(ks[7], (84,), 120),
        "fc3_w": u(ks[8], (10, 84), 84),
        "fc3_b": u(ks[9], (10,), 84),
    }


def prep_params(p):
    f32, bf16 = jnp.float32, jnp.bfloat16

    # ---- conv1 + 2x2 maxpool as 4 dense quadrant matrices: 784 -> 864 ------
    # input rows:  r*28 + c              (flattened 28x28, Cin=1)
    # output cols: ip*72 + jp*6 + co     (pooled 12x12 map, 6 channels)
    ip, jp, co, kh, kw = [a.ravel() for a in np.meshgrid(
        np.arange(12), np.arange(12), np.arange(6), np.arange(5), np.arange(5),
        indexing="ij")]
    col1 = ip * 72 + jp * 6 + co
    vals1 = p["conv1_w"][:, 0][co, kh, kw]                  # (21600,)
    w1q = []
    for a in range(2):
        for b in range(2):
            row = (2 * ip + a + kh) * 28 + (2 * jp + b + kw)
            w1q.append(jnp.zeros((784, 864), f32).at[row, col1].set(vals1))
    w1q = jnp.stack(w1q).astype(bf16)                       # (4, 784, 864)
    b1 = jnp.tile(p["conv1_b"], 12 * 12).reshape(1, 864).astype(f32)

    # ---- conv2 + 2x2 maxpool as 4 dense quadrant matrices: 864 -> 256 ------
    # output cols use the PyTorch NCHW flatten order co2*16 + i2*4 + j2, so h2
    # feeds fc1 directly with K = 256 (no padded flatten).
    i2, j2, co2, ci, kh, kw = [a.ravel() for a in np.meshgrid(
        np.arange(4), np.arange(4), np.arange(16), np.arange(6),
        np.arange(5), np.arange(5), indexing="ij")]
    col2 = co2 * 16 + i2 * 4 + j2
    vals2 = p["conv2_w"][co2, ci, kh, kw]                   # (38400,)
    w2q = []
    for a in range(2):
        for b in range(2):
            row = (2 * i2 + a + kh) * 72 + (2 * j2 + b + kw) * 6 + ci
            w2q.append(jnp.zeros((864, 256), f32).at[row, col2].set(vals2))
    w2q = jnp.stack(w2q).astype(bf16)                       # (4, 864, 256)
    b2 = jnp.repeat(p["conv2_b"], 16).reshape(1, 256).astype(f32)

    # ---- fc layers: transpose + pad features to 128 lanes ------------------
    wf1 = jnp.pad(p["fc1_w"].T, ((0, 0), (0, 8))).astype(bf16)      # (256, 128)
    bf1 = jnp.pad(p["fc1_b"], (0, 8)).reshape(1, 128).astype(f32)
    wf2 = jnp.pad(p["fc2_w"].T, ((0, 8), (0, 44))).astype(bf16)     # (128, 128)
    bf2 = jnp.pad(p["fc2_b"], (0, 44)).reshape(1, 128).astype(f32)
    wf3 = jnp.pad(p["fc3_w"].T, ((0, 44), (0, 118))).astype(bf16)   # (128, 128)
    bf3 = jnp.pad(p["fc3_b"], (0, 118)).reshape(1, 128).astype(f32)

    return (w1q, b1, w2q, b2, wf1, bf1, wf2, bf2, wf3, bf3)


# ----------------------------------------------------------------------------
# Forward pass and pure-JAX reference
# ----------------------------------------------------------------------------
def lenet_pallas(x_nchw, weights, *, tile_b=512):
    n = x_nchw.shape[0]
    x2d = x_nchw.reshape(n, 28 * 28).astype(jnp.bfloat16)   # free reshape (Cin=1)
    out = lenet_fused_call(x2d, weights, tile_b=tile_b)      # (n, 128) f32
    return out[:, :10]


def lenet_reference(x, p):
    """Pure-JAX/XLA reference matching the PyTorch forward exactly."""
    dn = ("NCHW", "OIHW", "NCHW")
    hi = jax.lax.Precision.HIGHEST
    y = jax.lax.conv_general_dilated(
        x, p["conv1_w"], (1, 1), "VALID", dimension_numbers=dn, precision=hi
    ) + p["conv1_b"][None, :, None, None]
    y = jax.lax.reduce_window(y, -jnp.inf, jax.lax.max, (1, 1, 2, 2), (1, 1, 2, 2), "VALID")
    y = jnp.maximum(y, 0.0)
    y = jax.lax.conv_general_dilated(
        y, p["conv2_w"], (1, 1), "VALID", dimension_numbers=dn, precision=hi
    ) + p["conv2_b"][None, :, None, None]
    y = jax.lax.reduce_window(y, -jnp.inf, jax.lax.max, (1, 1, 2, 2), (1, 1, 2, 2), "VALID")
    y = jnp.maximum(y, 0.0)
    y = y.reshape(y.shape[0], -1)
    y = jnp.maximum(jnp.dot(y, p["fc1_w"].T, precision=hi) + p["fc1_b"], 0.0)
    y = jnp.maximum(jnp.dot(y, p["fc2_w"].T, precision=hi) + p["fc2_b"], 0.0)
    return jnp.dot(y, p["fc3_w"].T, precision=hi) + p["fc3_b"]


if __name__ == "__main__":
    key = jax.random.PRNGKey(0)
    pkey, xkey = jax.random.split(key)
    params = init_params(pkey)
    weights = prep_params(params)   # one-time, eager; reused every forward call

    # LeNet's 16*4*4 flatten implies 28x28 single-channel inputs; batch=2 is the
    # small deterministic test shape (grid of one tile), not a throughput config.
    x = jax.random.normal(xkey, (2, 1, 28, 28), jnp.float32)

    fwd = jax.jit(functools.partial(lenet_pallas, weights=weights))
    out = jax.block_until_ready(fwd(x))

    ref = jax.block_until_ready(lenet_reference(x, params))

    assert out.shape == (2, 10), out.shape
    assert bool(jnp.all(jnp.isfinite(out)))
    # bf16 operands / activations vs the f32 HIGHEST-precision reference:
    # matches at the loose 2e-2 tolerance (inference-grade), as in v2.
    assert jnp.allclose(out, ref, rtol=2e-2, atol=2e-2), (
        f"max abs err {float(jnp.max(jnp.abs(out - ref)))}"
    )
    print("KERNEL_OK")
</pallas_src>

<mosaic_0001>
module attributes {stable_mosaic.version = 11 : i64} {
  func.func @lenet_kernel(%arg0: i32, %arg1: memref<2x784xbf16, #tpu.memory_space<vmem>>, %arg2: memref<4x784x864xbf16, #tpu.memory_space<vmem>>, %arg3: memref<1x864xf32, #tpu.memory_space<vmem>>, %arg4: memref<4x864x256xbf16, #tpu.memory_space<vmem>>, %arg5: memref<1x256xf32, #tpu.memory_space<vmem>>, %arg6: memref<256x128xbf16, #tpu.memory_space<vmem>>, %arg7: memref<1x128xf32, #tpu.memory_space<vmem>>, %arg8: memref<128x128xbf16, #tpu.memory_space<vmem>>, %arg9: memref<1x128xf32, #tpu.memory_space<vmem>>, %arg10: memref<128x128xbf16, #tpu.memory_space<vmem>>, %arg11: memref<1x128xf32, #tpu.memory_space<vmem>>, %arg12: memref<2x128xf32, #tpu.memory_space<vmem>>) attributes {dimension_semantics = [#tpu.dimension_semantics<parallel>], iteration_bounds = array<i64: 1>, scalar_prefetch = 0 : i64, scratch_operands = 0 : i64, tpu.core_type = #tpu.core_type<tc>, window_params = [{transform_indices = @transform_0, window_bounds = array<i64: 2, 784>}, {pipeline_mode = #tpu.pipeline_mode<synchronous>, transform_indices = @transform_1, window_bounds = array<i64: 4, 784, 864>}, {pipeline_mode = #tpu.pipeline_mode<synchronous>, transform_indices = @transform_2, window_bounds = array<i64: 1, 864>}, {pipeline_mode = #tpu.pipeline_mode<synchronous>, transform_indices = @transform_3, window_bounds = array<i64: 4, 864, 256>}, {pipeline_mode = #tpu.pipeline_mode<synchronous>, transform_indices = @transform_4, window_bounds = array<i64: 1, 256>}, {pipeline_mode = #tpu.pipeline_mode<synchronous>, transform_indices = @transform_5, window_bounds = array<i64: 256, 128>}, {pipeline_mode = #tpu.pipeline_mode<synchronous>, transform_indices = @transform_6, window_bounds = array<i64: 1, 128>}, {pipeline_mode = #tpu.pipeline_mode<synchronous>, transform_indices = @transform_7, window_bounds = array<i64: 128, 128>}, {pipeline_mode = #tpu.pipeline_mode<synchronous>, transform_indices = @transform_8, window_bounds = array<i64: 1, 128>}, {pipeline_mode = #tpu.pipeline_mode<synchronous>, transform_indices = @transform_9, window_bounds = array<i64: 128, 128>}, {pipeline_mode = #tpu.pipeline_mode<synchronous>, transform_indices = @transform_10, window_bounds = array<i64: 1, 128>}, {transform_indices = @transform_11, window_bounds = array<i64: 2, 128>}]} {
    %c0 = arith.constant 0 : index
    %c0_0 = arith.constant 0 : index
    %0 = vector.load %arg1[%c0, %c0_0] : memref<2x784xbf16, #tpu.memory_space<vmem>>, vector<2x784xbf16>
    %c0_1 = arith.constant 0 : index
    %c0_2 = arith.constant 0 : index
    %c0_3 = arith.constant 0 : index
    %1 = vector.load %arg2[%c0_1, %c0_2, %c0_3] : memref<4x784x864xbf16, #tpu.memory_space<vmem>>, vector<1x784x864xbf16>
    %2 = vector.shape_cast %1 : vector<1x784x864xbf16> to vector<784x864xbf16>
    %cst = arith.constant dense<0.000000e+00> : vector<2x864xf32>
    %3 = tpu.matmul %0, %2, %cst {dimension_numbers = #tpu.dot_dimension_numbers<[1], [0], [0], [1], [0, 0, 1, 1], [], []>} : vector<2x784xbf16>, vector<784x864xbf16>, vector<2x864xf32> -> vector<2x864xf32>
    %c1 = arith.constant 1 : index
    %c0_4 = arith.constant 0 : index
    %c0_5 = arith.constant 0 : index
    %4 = vector.load %arg2[%c1, %c0_4, %c0_5] : memref<4x784x864xbf16, #tpu.memory_space<vmem>>, vector<1x784x864xbf16>
    %5 = vector.shape_cast %4 : vector<1x784x864xbf16> to vector<784x864xbf16>
    %cst_6 = arith.constant dense<0.000000e+00> : vector<2x864xf32>
    %6 = tpu.matmul %0, %5, %cst_6 {dimension_numbers = #tpu.dot_dimension_numbers<[1], [0], [0], [1], [0, 0, 1, 1], [], []>} : vector<2x784xbf16>, vector<784x864xbf16>, vector<2x864xf32> -> vector<2x864xf32>
    %7 = arith.maximumf %3, %6 : vector<2x864xf32>
    %c2 = arith.constant 2 : index
    %c0_7 = arith.constant 0 : index
    %c0_8 = arith.constant 0 : index
    %8 = vector.load %arg2[%c2, %c0_7, %c0_8] : memref<4x784x864xbf16, #tpu.memory_space<vmem>>, vector<1x784x864xbf16>
    %9 = vector.shape_cast %8 : vector<1x784x864xbf16> to vector<784x864xbf16>
    %cst_9 = arith.constant dense<0.000000e+00> : vector<2x864xf32>
    %10 = tpu.matmul %0, %9, %cst_9 {dimension_numbers = #tpu.dot_dimension_numbers<[1], [0], [0], [1], [0, 0, 1, 1], [], []>} : vector<2x784xbf16>, vector<784x864xbf16>, vector<2x864xf32> -> vector<2x864xf32>
    %11 = arith.maximumf %7, %10 : vector<2x864xf32>
    %c3 = arith.constant 3 : index
    %c0_10 = arith.constant 0 : index
    %c0_11 = arith.constant 0 : index
    %12 = vector.load %arg2[%c3, %c0_10, %c0_11] : memref<4x784x864xbf16, #tpu.memory_space<vmem>>, vector<1x784x864xbf16>
    %13 = vector.shape_cast %12 : vector<1x784x864xbf16> to vector<784x864xbf16>
    %cst_12 = arith.constant dense<0.000000e+00> : vector<2x864xf32>
    %14 = tpu.matmul %0, %13, %cst_12 {dimension_numbers = #tpu.dot_dimension_numbers<[1], [0], [0], [1], [0, 0, 1, 1], [], []>} : vector<2x784xbf16>, vector<784x864xbf16>, vector<2x864xf32> -> vector<2x864xf32>
    %15 = arith.maximumf %11, %14 : vector<2x864xf32>
    %c0_13 = arith.constant 0 : index
    %c0_14 = arith.constant 0 : index
    %16 = vector.load %arg3[%c0_13, %c0_14] : memref<1x864xf32, #tpu.memory_space<vmem>>, vector<1x864xf32>
    %17 = vector.broadcast %16 : vector<1x864xf32> to vector<2x864xf32>
    %18 = arith.addf %15, %17 : vector<2x864xf32>
    %cst_15 = arith.constant 0.000000e+00 : f32
    %19 = vector.broadcast %cst_15 : f32 to vector<2x864xf32>
    %20 = arith.maximumf %18, %19 : vector<2x864xf32>
    %21 = arith.truncf %20 : vector<2x864xf32> to vector<2x864xbf16>
    %c0_16 = arith.constant 0 : index
    %c0_17 = arith.constant 0 : index
    %c0_18 = arith.constant 0 : index
    %22 = vector.load %arg4[%c0_16, %c0_17, %c0_18] : memref<4x864x256xbf16, #tpu.memory_space<vmem>>, vector<1x864x256xbf16>
    %23 = vector.shape_cast %22 : vector<1x864x256xbf16> to vector<864x256xbf16>
    %cst_19 = arith.constant dense<0.000000e+00> : vector<2x256xf32>
    %24 = tpu.matmul %21, %23, %cst_19 {dimension_numbers = #tpu.dot_dimension_numbers<[1], [0], [0], [1], [0, 0, 1, 1], [], []>} : vector<2x864xbf16>, vector<864x256xbf16>, vector<2x256xf32> -> vector<2x256xf32>
    %c1_20 = arith.constant 1 : index
    %c0_21 = arith.constant 0 : index
    %c0_22 = arith.constant 0 : index
    %25 = vector.load %arg4[%c1_20, %c0_21, %c0_22] : memref<4x864x256xbf16, #tpu.memory_space<vmem>>, vector<1x864x256xbf16>
    %26 = vector.shape_cast %25 : vector<1x864x256xbf16> to vector<864x256xbf16>
    %cst_23 = arith.constant dense<0.000000e+00> : vector<2x256xf32>
    %27 = tpu.matmul %21, %26, %cst_23 {dimension_numbers = #tpu.dot_dimension_numbers<[1], [0], [0], [1], [0, 0, 1, 1], [], []>} : vector<2x864xbf16>, vector<864x256xbf16>, vector<2x256xf32> -> vector<2x256xf32>
    %28 = arith.maximumf %24, %27 : vector<2x256xf32>
    %c2_24 = arith.constant 2 : index
    %c0_25 = arith.constant 0 : index
    %c0_26 = arith.constant 0 : index
    %29 = vector.load %arg4[%c2_24, %c0_25, %c0_26] : memref<4x864x256xbf16, #tpu.memory_space<vmem>>, vector<1x864x256xbf16>
    %30 = vector.shape_cast %29 : vector<1x864x256xbf16> to vector<864x256xbf16>
    %cst_27 = arith.constant dense<0.000000e+00> : vector<2x256xf32>
    %31 = tpu.matmul %21, %30, %cst_27 {dimension_numbers = #tpu.dot_dimension_numbers<[1], [0], [0], [1], [0, 0, 1, 1], [], []>} : vector<2x864xbf16>, vector<864x256xbf16>, vector<2x256xf32> -> vector<2x256xf32>
    %32 = arith.maximumf %28, %31 : vector<2x256xf32>
    %c3_28 = arith.constant 3 : index
    %c0_29 = arith.constant 0 : index
    %c0_30 = arith.constant 0 : index
    %33 = vector.load %arg4[%c3_28, %c0_29, %c0_30] : memref<4x864x256xbf16, #tpu.memory_space<vmem>>, vector<1x864x256xbf16>
    %34 = vector.shape_cast %33 : vector<1x864x256xbf16> to vector<864x256xbf16>
    %cst_31 = arith.constant dense<0.000000e+00> : vector<2x256xf32>
    %35 = tpu.matmul %21, %34, %cst_31 {dimension_numbers = #tpu.dot_dimension_numbers<[1], [0], [0], [1], [0, 0, 1, 1], [], []>} : vector<2x864xbf16>, vector<864x256xbf16>, vector<2x256xf32> -> vector<2x256xf32>
    %36 = arith.maximumf %32, %35 : vector<2x256xf32>
    %c0_32 = arith.constant 0 : index
    %c0_33 = arith.constant 0 : index
    %37 = vector.load %arg5[%c0_32, %c0_33] : memref<1x256xf32, #tpu.memory_space<vmem>>, vector<1x256xf32>
    %38 = vector.broadcast %37 : vector<1x256xf32> to vector<2x256xf32>
    %39 = arith.addf %36, %38 : vector<2x256xf32>
    %cst_34 = arith.constant 0.000000e+00 : f32
    %40 = vector.broadcast %cst_34 : f32 to vector<2x256xf32>
    %41 = arith.maximumf %39, %40 : vector<2x256xf32>
    %42 = arith.truncf %41 : vector<2x256xf32> to vector<2x256xbf16>
    %c0_35 = arith.constant 0 : index
    %c0_36 = arith.constant 0 : index
    %43 = vector.load %arg6[%c0_35, %c0_36] : memref<256x128xbf16, #tpu.memory_space<vmem>>, vector<256x128xbf16>
    %cst_37 = arith.constant dense<0.000000e+00> : vector<2x128xf32>
    %44 = tpu.matmul %42, %43, %cst_37 {dimension_numbers = #tpu.dot_dimension_numbers<[1], [0], [0], [1], [0, 0, 1, 1], [], []>} : vector<2x256xbf16>, vector<256x128xbf16>, vector<2x128xf32> -> vector<2x128xf32>
    %c0_38 = arith.constant 0 : index
    %c0_39 = arith.constant 0 : index
    %45 = vector.load %arg7[%c0_38, %c0_39] : memref<1x128xf32, #tpu.memory_space<vmem>>, vector<1x128xf32>
    %46 = vector.broadcast %45 : vector<1x128xf32> to vector<2x128xf32>
    %47 = arith.addf %44, %46 : vector<2x128xf32>
    %cst_40 = arith.constant 0.000000e+00 : f32
    %48 = vector.broadcast %cst_40 : f32 to vector<2x128xf32>
    %49 = arith.maximumf %47, %48 : vector<2x128xf32>
    %50 = arith.truncf %49 : vector<2x128xf32> to vector<2x128xbf16>
    %c0_41 = arith.constant 0 : index
    %c0_42 = arith.constant 0 : index
    %51 = vector.load %arg8[%c0_41, %c0_42] : memref<128x128xbf16, #tpu.memory_space<vmem>>, vector<128x128xbf16>
    %cst_43 = arith.constant dense<0.000000e+00> : vector<2x128xf32>
    %52 = tpu.matmul %50, %51, %cst_43 {dimension_numbers = #tpu.dot_dimension_numbers<[1], [0], [0], [1], [0, 0, 1, 1], [], []>} : vector<2x128xbf16>, vector<128x128xbf16>, vector<2x128xf32> -> vector<2x128xf32>
    %c0_44 = arith.constant 0 : index
    %c0_45 = arith.constant 0 : index
    %53 = vector.load %arg9[%c0_44, %c0_45] : memref<1x128xf32, #tpu.memory_space<vmem>>, vector<1x128xf32>
    %54 = vector.broadcast %53 : vector<1x128xf32> to vector<2x128xf32>
    %55 = arith.addf %52, %54 : vector<2x128xf32>
    %cst_46 = arith.constant 0.000000e+00 : f32
    %56 = vector.broadcast %cst_46 : f32 to vector<2x128xf32>
    %57 = arith.maximumf %55, %56 : vector<2x128xf32>
    %58 = arith.truncf %57 : vector<2x128xf32> to vector<2x128xbf16>
    %c0_47 = arith.constant 0 : index
    %c0_48 = arith.constant 0 : index
    %59 = vector.load %arg10[%c0_47, %c0_48] : memref<128x128xbf16, #tpu.memory_space<vmem>>, vector<128x128xbf16>
    %cst_49 = arith.constant dense<0.000000e+00> : vector<2x128xf32>
    %60 = tpu.matmul %58, %59, %cst_49 {dimension_numbers = #tpu.dot_dimension_numbers<[1], [0], [0], [1], [0, 0, 1, 1], [], []>} : vector<2x128xbf16>, vector<128x128xbf16>, vector<2x128xf32> -> vector<2x128xf32>
    %c0_50 = arith.constant 0 : index
    %c0_51 = arith.constant 0 : index
    %61 = vector.load %arg11[%c0_50, %c0_51] : memref<1x128xf32, #tpu.memory_space<vmem>>, vector<1x128xf32>
    %62 = vector.broadcast %61 : vector<1x128xf32> to vector<2x128xf32>
    %63 = arith.addf %60, %62 : vector<2x128xf32>
    %c0_52 = arith.constant 0 : index
    %c0_53 = arith.constant 0 : index
    %64 = vector.load %arg12[%c0_52, %c0_53] : memref<2x128xf32, #tpu.memory_space<vmem>>, vector<2x128xf32>
    tpu.vector_store %arg12[%c0_52, %c0_53], %63 {strides = array<i32>} : memref<2x128xf32, #tpu.memory_space<vmem>>, vector<2x128xf32>,
    return
  }
  func.func @transform_0(%arg0: i32) -> (i32, i32) {
    %c0_i32 = arith.constant 0 : i32
    %c0_i32_0 = arith.constant 0 : i32
    return %arg0, %c0_i32 : i32, i32
  }
  func.func @transform_1(%arg0: i32) -> (i32, i32, i32) {
    %c0_i32 = arith.constant 0 : i32
    %c0_i32_0 = arith.constant 0 : i32
    %c0_i32_1 = arith.constant 0 : i32
    %c0_i32_2 = arith.constant 0 : i32
    return %c0_i32, %c0_i32_0, %c0_i32_1 : i32, i32, i32
  }
  func.func @transform_2(%arg0: i32) -> (i32, i32) {
    %c0_i32 = arith.constant 0 : i32
    %c0_i32_0 = arith.constant 0 : i32
    %c0_i32_1 = arith.constant 0 : i32
    return %c0_i32, %c0_i32_0 : i32, i32
  }
  func.func @transform_3(%arg0: i32) -> (i32, i32, i32) {
    %c0_i32 = arith.constant 0 : i32
    %c0_i32_0 = arith.constant 0 : i32
    %c0_i32_1 = arith.constant 0 : i32
    %c0_i32_2 = arith.constant 0 : i32
    return %c0_i32, %c0_i32_0, %c0_i32_1 : i32, i32, i32
  }
  func.func @transform_4(%arg0: i32) -> (i32, i32) {
    %c0_i32 = arith.constant 0 : i32
    %c0_i32_0 = arith.constant 0 : i32
    %c0_i32_1 = arith.constant 0 : i32
    return %c0_i32, %c0_i32_0 : i32, i32
  }
  func.func @transform_5(%arg0: i32) -> (i32, i32) {
    %c0_i32 = arith.constant 0 : i32
    %c0_i32_0 = arith.constant 0 : i32
    %c0_i32_1 = arith.constant 0 : i32
    return %c0_i32, %c0_i32_0 : i32, i32
  }
  func.func @transform_6(%arg0: i32) -> (i32, i32) {
    %c0_i32 = arith.constant 0 : i32
    %c0_i32_0 = arith.constant 0 : i32
    %c0_i32_1 = arith.constant 0 : i32
    return %c0_i32, %c0_i32_0 : i32, i32
  }
  func.func @transform_7(%arg0: i32) -> (i32, i32) {
    %c0_i32 = arith.constant 0 : i32
    %c0_i32_0 = arith.constant 0 : i32
    %c0_i32_1 = arith.constant 0 : i32
    return %c0_i32, %c0_i32_0 : i32, i32
  }
  func.func @transform_8(%arg0: i32) -> (i32, i32) {
    %c0_i32 = arith.constant 0 : i32
    %c0_i32_0 = arith.constant 0 : i32
    %c0_i32_1 = arith.constant 0 : i32
    return %c0_i32, %c0_i32_0 : i32, i32
  }
  func.func @transform_9(%arg0: i32) -> (i32, i32) {
    %c0_i32 = arith.constant 0 : i32
    %c0_i32_0 = arith.constant 0 : i32
    %c0_i32_1 = arith.constant 0 : i32
    return %c0_i32, %c0_i32_0 : i32, i32
  }
  func.func @transform_10(%arg0: i32) -> (i32, i32) {
    %c0_i32 = arith.constant 0 : i32
    %c0_i32_0 = arith.constant 0 : i32
    %c0_i32_1 = arith.constant 0 : i32
    return %c0_i32, %c0_i32_0 : i32, i32
  }
  func.func @transform_11(%arg0: i32) -> (i32, i32) {
    %c0_i32 = arith.constant 0 : i32
    %c0_i32_0 = arith.constant 0 : i32
    return %arg0, %c0_i32 : i32, i32
  }
}

</mosaic_0001>

<llo_original>
// kernel: lenet_pallas.1
$region0: #{lenet_pallas.1}
  #allocation0 [shape = 'u32[]', space=smem, size = 0x4, offset = 0x4, fixed_abs, tag = 'smem constant byte address 0x4 - core index']
  #allocation1 [shape = 'u32[72,128]{1,0:T(1,128)}', space=vmem, size = 0x9000, scoped, tag = 'internal scratch']
  %s0 = inlined_call_operand.vmem [shape: bf16[2,784], index: 0, kind: input, shape index: {}]
  %s1 = inlined_call_operand.hbm [shape: bf16[4,784,864], index: 1, kind: input, shape index: {}]
  %s2 = inlined_call_operand.hbm [shape: f32[1,864], index: 2, kind: input, shape index: {}]
  %s3 = inlined_call_operand.hbm [shape: bf16[4,864,256], index: 3, kind: input, shape index: {}]
  %s4 = inlined_call_operand.hbm [shape: f32[1,256], index: 4, kind: input, shape index: {}]
  %s5 = inlined_call_operand.hbm [shape: bf16[256,128], index: 5, kind: input, shape index: {}]
  %s6 = inlined_call_operand.hbm [shape: f32[1,128], index: 6, kind: input, shape index: {}]
  %s7 = inlined_call_operand.hbm [shape: bf16[128,128], index: 7, kind: input, shape index: {}]
  %s8 = inlined_call_operand.hbm [shape: f32[1,128], index: 8, kind: input, shape index: {}]
  %s9 = inlined_call_operand.hbm [shape: bf16[128,128], index: 9, kind: input, shape index: {}]
  %s10 = inlined_call_operand.hbm [shape: f32[1,128], index: 10, kind: input, shape index: {}]
  %s11 = inlined_call_operand.hbm [shape: f32[2,128], index: 11, kind: output, shape index: {}]
  %s12 = sld [smem:[#allocation0]]
  $region94: #{lenet_pallas.1} parent=0
    _
  %s14 = ssub.s32 1, %s12
  %s15 = scalar_select 0, %s14, %s12
  $region1: #{lenet_pallas.1} parent=0
    #allocation2 [shape = 'u8[5619712]{0}', space=vmem, size = 0x55c000, scoped, tag = 'input window, operand 1, single buffered']
    #allocation3 [shape = 's32[1]{0}', space=sflag, size = 0x4, scoped, tag = 'scoped memory for lenet_pallas.1']
    #allocation4 [shape = 's32[1]{0}', space=sflag, size = 0x4, scoped, tag = 'scoped memory for lenet_pallas.1']
    #allocation5 [shape = 'u8[3584]{0}', space=vmem, size = 0x1000, scoped, tag = 'input window, operand 2, single buffered']
    #allocation6 [shape = 's32[1]{0}', space=sflag, size = 0x4, scoped, tag = 'scoped memory for lenet_pallas.1']
    #allocation7 [shape = 'u8[1769472]{0}', space=vmem, size = 0x1b0000, scoped, tag = 'input window, operand 3, single buffered']
    #allocation8 [shape = 'u8[1024]{0}', space=vmem, size = 0x400, scoped, tag = 'input window, operand 4, single buffered']
    #allocation9 [shape = 's32[1]{0}', space=sflag, size = 0x4, scoped, tag = 'scoped memory for lenet_pallas.1']
    #allocation10 [shape = 'u8[65536]{0}', space=vmem, size = 0x10000, scoped, tag = 'input window, operand 5, single buffered']
    #allocation11 [shape = 'u8[512]{0}', space=vmem, size = 0x400, scoped, tag = 'input window, operand 6, single buffered']
    #allocation12 [shape = 's32[1]{0}', space=sflag, size = 0x4, scoped, tag = 'scoped memory for lenet_pallas.1']
    #allocation13 [shape = 'u8[32768]{0}', space=vmem, size = 0x8000, scoped, tag = 'input window, operand 7, single buffered']
    #allocation14 [shape = 'u8[512]{0}', space=vmem, size = 0x400, scoped, tag = 'input window, operand 8, single buffered']
    #allocation15 [shape = 's32[1]{0}', space=sflag, size = 0x4, scoped, tag = 'scoped memory for lenet_pallas.1']
    #allocation16 [shape = 'u8[32768]{0}', space=vmem, size = 0x8000, scoped, tag = 'input window, operand 9, single buffered']
    #allocation17 [shape = 'u8[512]{0}', space=vmem, size = 0x400, scoped, tag = 'input window, operand 10, single buffered']
    #allocation18 [shape = 's32[1]{0}', space=sflag, size = 0x4, scoped, tag = 'scoped memory for lenet_pallas.1']
    #allocation19 [shape = 'u8[1024]{0}', space=vmem, size = 0x400, scoped, tag = 'output window, operand 0, single buffered']
    %16 = vsyncpa [#allocation3], 0
    %17 = vsyncpa [#allocation6], 0
    %18 = vsyncpa [#allocation9], 0
    %19 = vsyncpa [#allocation12], 0
    %20 = vsyncpa [#allocation15], 0
    %21 = vsyncpa [#allocation18], 0
    %22 = vsyncpa [#allocation4], 0
    // Predicated region
    $region2: #{lenet_pallas.1} parent=1 // pred_check
      _
    $region3: #{lenet_pallas.1} parent=1 // pred_check_branch
      %24 = sbr.rel (0) target = $region5
    $region4: #{lenet_pallas.1} parent=1 // pred_region
      _
    $region5: #{lenet_pallas.1} parent=1 // pred_fallthru
      _
    // Predicated region
    $region6: #{lenet_pallas.1} parent=1 // pred_check
      _
    $region7: #{lenet_pallas.1} parent=1 // pred_check_branch
      %26 = sbr.rel (0) target = $region9
    $region8: #{lenet_pallas.1} parent=1 // pred_region
      %28 = vsyncadd [#allocation3], 0
      %s29 = sshll.u32 %s1, 4
      %s30 = int_to_ptr.hbm [resolvable:$true] %s29
      %s31 = sshll.u32 [#allocation2], 4
      %s32 = int_to_ptr.vmem [resolvable:$true] %s31
      %37 = dma.hbm_to_vmem [thread:$0]  %s30, 175616, %s32, [#allocation3], 448, 448, 28
    $region9: #{lenet_pallas.1} parent=1 // pred_fallthru
      _
    // Predicated region
    $region10: #{lenet_pallas.1} parent=1 // pred_check
      _
    $region11: #{lenet_pallas.1} parent=1 // pred_check_branch
      %39 = sbr.rel (0) target = $region13
    $region12: #{lenet_pallas.1} parent=1 // pred_region
      %41 = vsyncadd [#allocation6], 0
      %s43 = sshll.u32 %s2, 4
      %s44 = int_to_ptr.hbm [resolvable:$true] %s43
      %s45 = sshll.u32 [#allocation5], 4
      %s46 = int_to_ptr.vmem [resolvable:$true] %s45
      %48 = dma.hbm_to_vmem [thread:$0]  %s44, 112, %s46, [#allocation6]
    $region13: #{lenet_pallas.1} parent=1 // pred_fallthru
      _
    // Predicated region
    $region14: #{lenet_pallas.1} parent=1 // pred_check
      _
    $region15: #{lenet_pallas.1} parent=1 // pred_check_branch
      %50 = sbr.rel (0) target = $region17
    $region16: #{lenet_pallas.1} parent=1 // pred_region
      %52 = vsyncadd [#allocation6], 0
      %s53 = sshll.u32 %s3, 4
      %s54 = int_to_ptr.hbm [resolvable:$true] %s53
      %s55 = sshll.u32 [#allocation7], 4
      %s56 = int_to_ptr.vmem [resolvable:$true] %s55
      %61 = dma.hbm_to_vmem [thread:$0]  %s54, 55296, %s56, [#allocation6], 128, 128, 8
    $region17: #{lenet_pallas.1} parent=1 // pred_fallthru
      _
    // Predicated region
    $region18: #{lenet_pallas.1} parent=1 // pred_check
      _
    $region19: #{lenet_pallas.1} parent=1 // pred_check_branch
      %63 = sbr.rel (0) target = $region21
    $region20: #{lenet_pallas.1} parent=1 // pred_region
      %65 = vsyncadd [#allocation9], 0
      %s67 = sshll.u32 %s4, 4
      %s68 = int_to_ptr.hbm [resolvable:$true] %s67
      %s69 = sshll.u32 [#allocation8], 4
      %s70 = int_to_ptr.vmem [resolvable:$true] %s69
      %72 = dma.hbm_to_vmem [thread:$0]  %s68, 32, %s70, [#allocation9]
    $region21: #{lenet_pallas.1} parent=1 // pred_fallthru
      _
    // Predicated region
    $region22: #{lenet_pallas.1} parent=1 // pred_check
      _
    $region23: #{lenet_pallas.1} parent=1 // pred_check_branch
      %74 = sbr.rel (0) target = $region25
    $region24: #{lenet_pallas.1} parent=1 // pred_region
      %76 = vsyncadd [#allocation9], 0
      %s77 = sshll.u32 %s5, 4
      %s78 = int_to_ptr.hbm [resolvable:$true] %s77
      %s79 = sshll.u32 [#allocation10], 4
      %s80 = int_to_ptr.vmem [resolvable:$true] %s79
      %85 = dma.hbm_to_vmem [thread:$0]  %s78, 2048, %s80, [#allocation9], 64, 64, 4
    $region25: #{lenet_pallas.1} parent=1 // pred_fallthru
      _
    // Predicated region
    $region26: #{lenet_pallas.1} parent=1 // pred_check
      _
    $region27: #{lenet_pallas.1} parent=1 // pred_check_branch
      %87 = sbr.rel (0) target = $region29
    $region28: #{lenet_pallas.1} parent=1 // pred_region
      %89 = vsyncadd [#allocation12], 0
      %s91 = sshll.u32 %s6, 4
      %s92 = int_to_ptr.hbm [resolvable:$true] %s91
      %s93 = sshll.u32 [#allocation11], 4
      %s94 = int_to_ptr.vmem [resolvable:$true] %s93
      %96 = dma.hbm_to_vmem [thread:$0]  %s92, 16, %s94, [#allocation12]
    $region29: #{lenet_pallas.1} parent=1 // pred_fallthru
      _
    // Predicated region
    $region30: #{lenet_pallas.1} parent=1 // pred_check
      _
    $region31: #{lenet_pallas.1} parent=1 // pred_check_branch
      %98 = sbr.rel (0) target = $region33
    $region32: #{lenet_pallas.1} parent=1 // pred_region
      %100 = vsyncadd [#allocation12], 0
      %s101 = sshll.u32 %s7, 4
      %s102 = int_to_ptr.hbm [resolvable:$true] %s101
      %s103 = sshll.u32 [#allocation13], 4
      %s104 = int_to_ptr.vmem [resolvable:$true] %s103
      %109 = dma.hbm_to_vmem [thread:$0]  %s102, 1024, %s104, [#allocation12], 64, 64, 4
    $region33: #{lenet_pallas.1} parent=1 // pred_fallthru
      _
    // Predicated region
    $region34: #{lenet_pallas.1} parent=1 // pred_check
      _
    $region35: #{lenet_pallas.1} parent=1 // pred_check_branch
      %111 = sbr.rel (0) target = $region37
    $region36: #{lenet_pallas.1} parent=1 // pred_region
      %113 = vsyncadd [#allocation15], 0
      %s115 = sshll.u32 %s8, 4
      %s116 = int_to_ptr.hbm [resolvable:$true] %s115
      %s117 = sshll.u32 [#allocation14], 4
      %s118 = int_to_ptr.vmem [resolvable:$true] %s117
      %120 = dma.hbm_to_vmem [thread:$0]  %s116, 16, %s118, [#allocation15]
    $region37: #{lenet_pallas.1} parent=1 // pred_fallthru
      _
    // Predicated region
    $region38: #{lenet_pallas.1} parent=1 // pred_check
      _
    $region39: #{lenet_pallas.1} parent=1 // pred_check_branch
      %122 = sbr.rel (0) target = $region41
    $region40: #{lenet_pallas.1} parent=1 // pred_region
      %124 = vsyncadd [#allocation15], 0
      %s125 = sshll.u32 %s9, 4
      %s126 = int_to_ptr.hbm [resolvable:$true] %s125
      %s127 = sshll.u32 [#allocation16], 4
      %s128 = int_to_ptr.vmem [resolvable:$true] %s127
      %133 = dma.hbm_to_vmem [thread:$0]  %s126, 1024, %s128, [#allocation15], 64, 64, 4
    $region41: #{lenet_pallas.1} parent=1 // pred_fallthru
      _
    // Predicated region
    $region42: #{lenet_pallas.1} parent=1 // pred_check
      _
    $region43: #{lenet_pallas.1} parent=1 // pred_check_branch
      %135 = sbr.rel (0) target = $region45
    $region44: #{lenet_pallas.1} parent=1 // pred_region
      %137 = vsyncadd [#allocation18], 0
      %s139 = sshll.u32 %s10, 4
      %s140 = int_to_ptr.hbm [resolvable:$true] %s139
      %s141 = sshll.u32 [#allocation17], 4
      %s142 = int_to_ptr.vmem [resolvable:$true] %s141
      %144 = dma.hbm_to_vmem [thread:$0]  %s140, 16, %s142, [#allocation18]
    $region45: #{lenet_pallas.1} parent=1 // pred_fallthru
      _
    // Predicated region
    $region46: #{lenet_pallas.1} parent=1 // pred_check
      _
    $region47: #{lenet_pallas.1} parent=1 // pred_check_branch
      %146 = sbr.rel (0) target = $region49
    $region48: #{lenet_pallas.1} parent=1 // pred_region
      %148 = dma.done [#allocation3], 175616
    $region49: #{lenet_pallas.1} parent=1 // pred_fallthru
      _
    // Predicated region
    $region50: #{lenet_pallas.1} parent=1 // pred_check
      _
    $region51: #{lenet_pallas.1} parent=1 // pred_check_branch
      %150 = sbr.rel (0) target = $region53
    $region52: #{lenet_pallas.1} parent=1 // pred_region
      %152 = dma.done [#allocation6], 112
    $region53: #{lenet_pallas.1} parent=1 // pred_fallthru
      _
    // Predicated region
    $region54: #{lenet_pallas.1} parent=1 // pred_check
      _
    $region55: #{lenet_pallas.1} parent=1 // pred_check_branch
      %154 = sbr.rel (0) target = $region57
    $region56: #{lenet_pallas.1} parent=1 // pred_region
      %156 = dma.done [#allocation6], 55296
    $region57: #{lenet_pallas.1} parent=1 // pred_fallthru
      _
    // Predicated region
    $region58: #{lenet_pallas.1} parent=1 // pred_check
      _
    $region59: #{lenet_pallas.1} parent=1 // pred_check_branch
      %158 = sbr.rel (0) target = $region61
    $region60: #{lenet_pallas.1} parent=1 // pred_region
      %160 = dma.done [#allocation9], 32
    $region61: #{lenet_pallas.1} parent=1 // pred_fallthru
      _
    // Predicated region
    $region62: #{lenet_pallas.1} parent=1 // pred_check
      _
    $region63: #{lenet_pallas.1} parent=1 // pred_check_branch
      %162 = sbr.rel (0) target = $region65
    $region64: #{lenet_pallas.1} parent=1 // pred_region
      %164 = dma.done [#allocation9], 2048
    $region65: #{lenet_pallas.1} parent=1 // pred_fallthru
      _
    // Predicated region
    $region66: #{lenet_pallas.1} parent=1 // pred_check
      _
    $region67: #{lenet_pallas.1} parent=1 // pred_check_branch
      %166 = sbr.rel (0) target = $region69
    $region68: #{lenet_pallas.1} parent=1 // pred_region
      %168 = dma.done [#allocation12], 16
    $region69: #{lenet_pallas.1} parent=1 // pred_fallthru
      _
    // Predicated region
    $region70: #{lenet_pallas.1} parent=1 // pred_check
      _
    $region71: #{lenet_pallas.1} parent=1 // pred_check_branch
      %170 = sbr.rel (0) target = $region73
    $region72: #{lenet_pallas.1} parent=1 // pred_region
      %172 = dma.done [#allocation12], 1024
    $region73: #{lenet_pallas.1} parent=1 // pred_fallthru
      _
    // Predicated region
    $region74: #{lenet_pallas.1} parent=1 // pred_check
      _
    $region75: #{lenet_pallas.1} parent=1 // pred_check_branch
      %174 = sbr.rel (0) target = $region77
    $region76: #{lenet_pallas.1} parent=1 // pred_region
      %176 = dma.done [#allocation15], 16
    $region77: #{lenet_pallas.1} parent=1 // pred_fallthru
      _
    // Predicated region
    $region78: #{lenet_pallas.1} parent=1 // pred_check
      _
    $region79: #{lenet_pallas.1} parent=1 // pred_check_branch
      %178 = sbr.rel (0) target = $region81
    $region80: #{lenet_pallas.1} parent=1 // pred_region
      %180 = dma.done [#allocation15], 1024
    $region81: #{lenet_pallas.1} parent=1 // pred_fallthru
      _
    // Predicated region
    $region82: #{lenet_pallas.1} parent=1 // pred_check
      _
    $region83: #{lenet_pallas.1} parent=1 // pred_check_branch
      %182 = sbr.rel (0) target = $region85
    $region84: #{lenet_pallas.1} parent=1 // pred_region
      %184 = dma.done [#allocation18], 16
    $region85: #{lenet_pallas.1} parent=1 // pred_fallthru
      _
    %v186 = vld [vmem:[%s0] sm:$0x7f]
    %v187 = vld [vmem:[#allocation2] sm:$0xff]
    %v188 = vld [vmem:[#allocation2 + $0x8] sm:$0xff]
    %v189 = vld [vmem:[#allocation2 + $0x10] sm:$0xff]
    %v190 = vld [vmem:[#allocation2 + $0x18] sm:$0xf]
    %v191 = vld [vmem:[#allocation2 + $0x1c] sm:$0xff]
    %v192 = vld [vmem:[#allocation2 + $0x24] sm:$0xff]
    %v193 = vld [vmem:[#allocation2 + $0x2c] sm:$0xff]
    %v194 = vld [vmem:[#allocation2 + $0x34] sm:$0xf]
    %v195 = vld [vmem:[#allocation2 + $0x38] sm:$0xff]
    %v196 = vld [vmem:[#allocation2 + $0x40] sm:$0xff]
    %v197 = vld [vmem:[#allocation2 + $0x48] sm:$0xff]
    %v198 = vld [vmem:[#allocation2 + $0x50] sm:$0xf]
    %v199 = vld [vmem:[#allocation2 + $0x54] sm:$0xff]
    %v200 = vld [vmem:[#allocation2 + $0x5c] sm:$0xff]
    %v201 = vld [vmem:[#allocation2 + $0x64] sm:$0xff]
    %v202 = vld [vmem:[#allocation2 + $0x6c] sm:$0xf]
    %v203 = vld [vmem:[#allocation2 + $0x70] sm:$0xff]
    %v204 = vld [vmem:[#allocation2 + $0x78] sm:$0xff]
    %v205 = vld [vmem:[#allocation2 + $0x80] sm:$0xff]
    %v206 = vld [vmem:[#allocation2 + $0x88] sm:$0xf]
    %v207 = vld [vmem:[#allocation2 + $0x8c] sm:$0xff]
    %v208 = vld [vmem:[#allocation2 + $0x94] sm:$0xff]
    %v209 = vld [vmem:[#allocation2 + $0x9c] sm:$0xff]
    %v210 = vld [vmem:[#allocation2 + $0xa4] sm:$0xf]
    %v211 = vld [vmem:[#allocation2 + $0xa8] sm:$0xff]
    %v212 = vld [vmem:[#allocation2 + $0xb0] sm:$0xff]
    %v213 = vld [vmem:[#allocation2 + $0xb8] sm:$0xff]
    %v214 = vld [vmem:[#allocation2 + $0xc0] sm:$0xf]
    %v215 = vld [vmem:[#allocation2 + $0xc4] sm:$0xff]
    %v216 = vld [vmem:[#allocation2 + $0xcc] sm:$0xff]
    %v217 = vld [vmem:[#allocation2 + $0xd4] sm:$0xff]
    %v218 = vld [vmem:[#allocation2 + $0xdc] sm:$0xf]
    %v219 = vld [vmem:[#allocation2 + $0xe0] sm:$0xff]
    %v220 = vld [vmem:[#allocation2 + $0xe8] sm:$0xff]
    %v221 = vld [vmem:[#allocation2 + $0xf0] sm:$0xff]
    %v222 = vld [vmem:[#allocation2 + $0xf8] sm:$0xf]
    %v223 = vld [vmem:[#allocation2 + $0xfc] sm:$0xff]
    %v224 = vld [vmem:[#allocation2 + $0x104] sm:$0xff]
    %v225 = vld [vmem:[#allocation2 + $0x10c] sm:$0xff]
    %v226 = vld [vmem:[#allocation2 + $0x114] sm:$0xf]
    %v227 = vld [vmem:[#allocation2 + $0x118] sm:$0xff]
    %v228 = vld [vmem:[#allocation2 + $0x120] sm:$0xff]
    %v229 = vld [vmem:[#allocation2 + $0x128] sm:$0xff]
    %v230 = vld [vmem:[#allocation2 + $0x130] sm:$0xf]
    %v231 = vld [vmem:[#allocation2 + $0x134] sm:$0xff]
    %v232 = vld [vmem:[#allocation2 + $0x13c] sm:$0xff]
    %v233 = vld [vmem:[#allocation2 + $0x144] sm:$0xff]
    %v234 = vld [vmem:[#allocation2 + $0x14c] sm:$0xf]
    %v235 = vld [vmem:[#allocation2 + $0x150] sm:$0xff]
    %v236 = vld [vmem:[#allocation2 + $0x158] sm:$0xff]
    %v237 = vld [vmem:[#allocation2 + $0x160] sm:$0xff]
    %v238 = vld [vmem:[#allocation2 + $0x168] sm:$0xf]
    %v239 = vld [vmem:[#allocation2 + $0x16c] sm:$0xff]
    %v240 = vld [vmem:[#allocation2 + $0x174] sm:$0xff]
    %v241 = vld [vmem:[#allocation2 + $0x17c] sm:$0xff]
    %v242 = vld [vmem:[#allocation2 + $0x184] sm:$0xf]
    %v243 = vld [vmem:[#allocation2 + $0x188] sm:$0xff]
    %v244 = vld [vmem:[#allocation2 + $0x190] sm:$0xff]
    %v245 = vld [vmem:[#allocation2 + $0x198] sm:$0xff]
    %v246 = vld [vmem:[#allocation2 + $0x1a0] sm:$0xf]
    %v247 = vld [vmem:[#allocation2 + $0x1a4] sm:$0xff]
    %v248 = vld [vmem:[#allocation2 + $0x1ac] sm:$0xff]
    %v249 = vld [vmem:[#allocation2 + $0x1b4] sm:$0xff]
    %v250 = vld [vmem:[#allocation2 + $0x1bc] sm:$0xf]
    %v251 = vld [vmem:[#allocation2 + $0x1c0] sm:$0xff]
    %v252 = vld [vmem:[#allocation2 + $0x1c8] sm:$0xff]
    %v253 = vld [vmem:[#allocation2 + $0x1d0] sm:$0xff]
    %v254 = vld [vmem:[#allocation2 + $0x1d8] sm:$0xf]
    %v255 = vld [vmem:[#allocation2 + $0x1dc] sm:$0xff]
    %v256 = vld [vmem:[#allocation2 + $0x1e4] sm:$0xff]
    %v257 = vld [vmem:[#allocation2 + $0x1ec] sm:$0xff]
    %v258 = vld [vmem:[#allocation2 + $0x1f4] sm:$0xf]
    %v259 = vld [vmem:[#allocation2 + $0x1f8] sm:$0xff]
    %v260 = vld [vmem:[#allocation2 + $0x200] sm:$0xff]
    %v261 = vld [vmem:[#allocation2 + $0x208] sm:$0xff]
    %v262 = vld [vmem:[#allocation2 + $0x210] sm:$0xf]
    %v263 = vld [vmem:[#allocation2 + $0x214] sm:$0xff]
    %v264 = vld [vmem:[#allocation2 + $0x21c] sm:$0xff]
    %v265 = vld [vmem:[#allocation2 + $0x224] sm:$0xff]
    %v266 = vld [vmem:[#allocation2 + $0x22c] sm:$0xf]
    %v267 = vld [vmem:[#allocation2 + $0x230] sm:$0xff]
    %v268 = vld [vmem:[#allocation2 + $0x238] sm:$0xff]
    %v269 = vld [vmem:[#allocation2 + $0x240] sm:$0xff]
    %v270 = vld [vmem:[#allocation2 + $0x248] sm:$0xf]
    %v271 = vld [vmem:[#allocation2 + $0x24c] sm:$0xff]
    %v272 = vld [vmem:[#allocation2 + $0x254] sm:$0xff]
    %v273 = vld [vmem:[#allocation2 + $0x25c] sm:$0xff]
    %v274 = vld [vmem:[#allocation2 + $0x264] sm:$0xf]
    %v275 = vld [vmem:[#allocation2 + $0x268] sm:$0xff]
    %v276 = vld [vmem:[#allocation2 + $0x270] sm:$0xff]
    %v277 = vld [vmem:[#allocation2 + $0x278] sm:$0xff]
    %v278 = vld [vmem:[#allocation2 + $0x280] sm:$0xf]
    %v279 = vld [vmem:[#allocation2 + $0x284] sm:$0xff]
    %v280 = vld [vmem:[#allocation2 + $0x28c] sm:$0xff]
    %v281 = vld [vmem:[#allocation2 + $0x294] sm:$0xff]
    %v282 = vld [vmem:[#allocation2 + $0x29c] sm:$0xf]
    %v283 = vld [vmem:[#allocation2 + $0x2a0] sm:$0xff]
    %v284 = vld [vmem:[#allocation2 + $0x2a8] sm:$0xff]
    %v285 = vld [vmem:[#allocation2 + $0x2b0] sm:$0xff]
    %v286 = vld [vmem:[#allocation2 + $0x2b8] sm:$0xf]
    %v287 = vld [vmem:[#allocation2 + $0x2bc] sm:$0xff]
    %v288 = vld [vmem:[#allocation2 + $0x2c4] sm:$0xff]
    %v289 = vld [vmem:[#allocation2 + $0x2cc] sm:$0xff]
    %v290 = vld [vmem:[#allocation2 + $0x2d4] sm:$0xf]
    %v291 = vld [vmem:[#allocation2 + $0x2d8] sm:$0xff]
    %v292 = vld [vmem:[#allocation2 + $0x2e0] sm:$0xff]
    %v293 = vld [vmem:[#allocation2 + $0x2e8] sm:$0xff]
    %v294 = vld [vmem:[#allocation2 + $0x2f0] sm:$0xf]
    %v295 = vld [vmem:[#allocation2 + $0x2f4] sm:$0xff]
    %v296 = vld [vmem:[#allocation2 + $0x2fc] sm:$0xff]
    %v297 = vld [vmem:[#allocation2 + $0x304] sm:$0xff]
    %v298 = vld [vmem:[#allocation2 + $0x30c] sm:$0xf]
    %v299 = vld [vmem:[#allocation2 + $0x310] sm:$0xff]
    %v300 = vld [vmem:[#allocation2 + $0x318] sm:$0xff]
    %v301 = vld [vmem:[#allocation2 + $0x320] sm:$0xff]
    %v302 = vld [vmem:[#allocation2 + $0x328] sm:$0xf]
    %v303 = vld [vmem:[#allocation2 + $0x32c] sm:$0xff]
    %v304 = vld [vmem:[#allocation2 + $0x334] sm:$0xff]
    %v305 = vld [vmem:[#allocation2 + $0x33c] sm:$0xff]
    %v306 = vld [vmem:[#allocation2 + $0x344] sm:$0xf]
    %v307 = vld [vmem:[#allocation2 + $0x348] sm:$0xff]
    %v308 = vld [vmem:[#allocation2 + $0x350] sm:$0xff]
    %v309 = vld [vmem:[#allocation2 + $0x358] sm:$0xff]
    %v310 = vld [vmem:[#allocation2 + $0x360] sm:$0xf]
    %v311 = vld [vmem:[#allocation2 + $0x364] sm:$0xff]
    %v312 = vld [vmem:[#allocation2 + $0x36c] sm:$0xff]
    %v313 = vld [vmem:[#allocation2 + $0x374] sm:$0xff]
    %v314 = vld [vmem:[#allocation2 + $0x37c] sm:$0xf]
    %v315 = vld [vmem:[#allocation2 + $0x380] sm:$0xff]
    %v316 = vld [vmem:[#allocation2 + $0x388] sm:$0xff]
    %v317 = vld [vmem:[#allocation2 + $0x390] sm:$0xff]
    %v318 = vld [vmem:[#allocation2 + $0x398] sm:$0xf]
    %v319 = vld [vmem:[#allocation2 + $0x39c] sm:$0xff]
    %v320 = vld [vmem:[#allocation2 + $0x3a4] sm:$0xff]
    %v321 = vld [vmem:[#allocation2 + $0x3ac] sm:$0xff]
    %v322 = vld [vmem:[#allocation2 + $0x3b4] sm:$0xf]
    %v323 = vld [vmem:[#allocation2 + $0x3b8] sm:$0xff]
    %v324 = vld [vmem:[#allocation2 + $0x3c0] sm:$0xff]
    %v325 = vld [vmem:[#allocation2 + $0x3c8] sm:$0xff]
    %v326 = vld [vmem:[#allocation2 + $0x3d0] sm:$0xf]
    %v327 = vld [vmem:[#allocation2 + $0x3d4] sm:$0xff]
    %v328 = vld [vmem:[#allocation2 + $0x3dc] sm:$0xff]
    %v329 = vld [vmem:[#allocation2 + $0x3e4] sm:$0xff]
    %v330 = vld [vmem:[#allocation2 + $0x3ec] sm:$0xf]
    %v331 = vld [vmem:[#allocation2 + $0x3f0] sm:$0xff]
    %v332 = vld [vmem:[#allocation2 + $0x3f8] sm:$0xff]
    %v333 = vld [vmem:[#allocation2 + $0x400] sm:$0xff]
    %v334 = vld [vmem:[#allocation2 + $0x408] sm:$0xf]
    %v335 = vld [vmem:[#allocation2 + $0x40c] sm:$0xff]
    %v336 = vld [vmem:[#allocation2 + $0x414] sm:$0xff]
    %v337 = vld [vmem:[#allocation2 + $0x41c] sm:$0xff]
    %v338 = vld [vmem:[#allocation2 + $0x424] sm:$0xf]
    %v339 = vld [vmem:[#allocation2 + $0x428] sm:$0xff]
    %v340 = vld [vmem:[#allocation2 + $0x430] sm:$0xff]
    %v341 = vld [vmem:[#allocation2 + $0x438] sm:$0xff]
    %v342 = vld [vmem:[#allocation2 + $0x440] sm:$0xf]
    %v343 = vld [vmem:[#allocation2 + $0x444] sm:$0xff]
    %v344 = vld [vmem:[#allocation2 + $0x44c] sm:$0xff]
    %v345 = vld [vmem:[#allocation2 + $0x454] sm:$0xff]
    %v346 = vld [vmem:[#allocation2 + $0x45c] sm:$0xf]
    %v347 = vld [vmem:[#allocation2 + $0x460] sm:$0xff]
    %v348 = vld [vmem:[#allocation2 + $0x468] sm:$0xff]
    %v349 = vld [vmem:[#allocation2 + $0x470] sm:$0xff]
    %v350 = vld [vmem:[#allocation2 + $0x478] sm:$0xf]
    %v351 = vld [vmem:[#allocation2 + $0x47c] sm:$0xff]
    %v352 = vld [vmem:[#allocation2 + $0x484] sm:$0xff]
    %v353 = vld [vmem:[#allocation2 + $0x48c] sm:$0xff]
    %v354 = vld [vmem:[#allocation2 + $0x494] sm:$0xf]
    %v355 = vld [vmem:[#allocation2 + $0x498] sm:$0xff]
    %v356 = vld [vmem:[#allocation2 + $0x4a0] sm:$0xff]
    %v357 = vld [vmem:[#allocation2 + $0x4a8] sm:$0xff]
    %v358 = vld [vmem:[#allocation2 + $0x4b0] sm:$0xf]
    %v359 = vld [vmem:[#allocation2 + $0x4b4] sm:$0xff]
    %v360 = vld [vmem:[#allocation2 + $0x4bc] sm:$0xff]
    %v361 = vld [vmem:[#allocation2 + $0x4c4] sm:$0xff]
    %v362 = vld [vmem:[#allocation2 + $0x4cc] sm:$0xf]
    %v363 = vld [vmem:[#allocation2 + $0x4d0] sm:$0xff]
    %v364 = vld [vmem:[#allocation2 + $0x4d8] sm:$0xff]
    %v365 = vld [vmem:[#allocation2 + $0x4e0] sm:$0xff]
    %v366 = vld [vmem:[#allocation2 + $0x4e8] sm:$0xf]
    %v367 = vld [vmem:[#allocation2 + $0x4ec] sm:$0xff]
    %v368 = vld [vmem:[#allocation2 + $0x4f4] sm:$0xff]
    %v369 = vld [vmem:[#allocation2 + $0x4fc] sm:$0xff]
    %v370 = vld [vmem:[#allocation2 + $0x504] sm:$0xf]
    %v371 = vld [vmem:[#allocation2 + $0x508] sm:$0xff]
    %v372 = vld [vmem:[#allocation2 + $0x510] sm:$0xff]
    %v373 = vld [vmem:[#allocation2 + $0x518] sm:$0xff]
    %v374 = vld [vmem:[#allocation2 + $0x520] sm:$0xf]
    %v375 = vld [vmem:[#allocation2 + $0x524] sm:$0xff]
    %v376 = vld [vmem:[#allocation2 + $0x52c] sm:$0xff]
    %v377 = vld [vmem:[#allocation2 + $0x534] sm:$0xff]
    %v378 = vld [vmem:[#allocation2 + $0x53c] sm:$0xf]
    %v379 = vld [vmem:[#allocation2 + $0x540] sm:$0xff]
    %v380 = vld [vmem:[#allocation2 + $0x548] sm:$0xff]
    %v381 = vld [vmem:[#allocation2 + $0x550] sm:$0xff]
    %v382 = vld [vmem:[#allocation2 + $0x558] sm:$0xf]
    %v383 = vld [vmem:[#allocation2 + $0x55c] sm:$0xff]
    %v384 = vld [vmem:[#allocation2 + $0x564] sm:$0xff]
    %v385 = vld [vmem:[#allocation2 + $0x56c] sm:$0xff]
    %v386 = vld [vmem:[#allocation2 + $0x574] sm:$0xf]
    %v387 = vld [vmem:[#allocation2 + $0x578] sm:$0xff]
    %v388 = vld [vmem:[#allocation2 + $0x580] sm:$0xff]
    %v389 = vld [vmem:[#allocation2 + $0x588] sm:$0xff]
    %v390 = vld [vmem:[#allocation2 + $0x590] sm:$0xf]
    %v391 = vld [vmem:[#allocation2 + $0x594] sm:$0xff]
    %v392 = vld [vmem:[#allocation2 + $0x59c] sm:$0xff]
    %v393 = vld [vmem:[#allocation2 + $0x5a4] sm:$0xff]
    %v394 = vld [vmem:[#allocation2 + $0x5ac] sm:$0xf]
    %v395 = vld [vmem:[#allocation2 + $0x5b0] sm:$0xff]
    %v396 = vld [vmem:[#allocation2 + $0x5b8] sm:$0xff]
    %v397 = vld [vmem:[#allocation2 + $0x5c0] sm:$0xff]
    %v398 = vld [vmem:[#allocation2 + $0x5c8] sm:$0xf]
    %v399 = vld [vmem:[#allocation2 + $0x5cc] sm:$0xff]
    %v400 = vld [vmem:[#allocation2 + $0x5d4] sm:$0xff]
    %v401 = vld [vmem:[#allocation2 + $0x5dc] sm:$0xff]
    %v402 = vld [vmem:[#allocation2 + $0x5e4] sm:$0xf]
    %v403 = vld [vmem:[#allocation2 + $0x5e8] sm:$0xff]
    %v404 = vld [vmem:[#allocation2 + $0x5f0] sm:$0xff]
    %v405 = vld [vmem:[#allocation2 + $0x5f8] sm:$0xff]
    %v406 = vld [vmem:[#allocation2 + $0x600] sm:$0xf]
    %v407 = vld [vmem:[#allocation2 + $0x604] sm:$0xff]
    %v408 = vld [vmem:[#allocation2 + $0x60c] sm:$0xff]
    %v409 = vld [vmem:[#allocation2 + $0x614] sm:$0xff]
    %v410 = vld [vmem:[#allocation2 + $0x61c] sm:$0xf]
    %v411 = vld [vmem:[#allocation2 + $0x620] sm:$0xff]
    %v412 = vld [vmem:[#allocation2 + $0x628] sm:$0xff]
    %v413 = vld [vmem:[#allocation2 + $0x630] sm:$0xff]
    %v414 = vld [vmem:[#allocation2 + $0x638] sm:$0xf]
    %v415 = vld [vmem:[#allocation2 + $0x63c] sm:$0xff]
    %v416 = vld [vmem:[#allocation2 + $0x644] sm:$0xff]
    %v417 = vld [vmem:[#allocation2 + $0x64c] sm:$0xff]
    %v418 = vld [vmem:[#allocation2 + $0x654] sm:$0xf]
    %v419 = vld [vmem:[#allocation2 + $0x658] sm:$0xff]
    %v420 = vld [vmem:[#allocation2 + $0x660] sm:$0xff]
    %v421 = vld [vmem:[#allocation2 + $0x668] sm:$0xff]
    %v422 = vld [vmem:[#allocation2 + $0x670] sm:$0xf]
    %v423 = vld [vmem:[#allocation2 + $0x674] sm:$0xff]
    %v424 = vld [vmem:[#allocation2 + $0x67c] sm:$0xff]
    %v425 = vld [vmem:[#allocation2 + $0x684] sm:$0xff]
    %v426 = vld [vmem:[#allocation2 + $0x68c] sm:$0xf]
    %v427 = vld [vmem:[#allocation2 + $0x690] sm:$0xff]
    %v428 = vld [vmem:[#allocation2 + $0x698] sm:$0xff]
    %v429 = vld [vmem:[#allocation2 + $0x6a0] sm:$0xff]
    %v430 = vld [vmem:[#allocation2 + $0x6a8] sm:$0xf]
    %v431 = vld [vmem:[#allocation2 + $0x6ac] sm:$0xff]
    %v432 = vld [vmem:[#allocation2 + $0x6b4] sm:$0xff]
    %v433 = vld [vmem:[#allocation2 + $0x6bc] sm:$0xff]
    %v434 = vld [vmem:[#allocation2 + $0x6c4] sm:$0xf]
    %v435 = vld [vmem:[#allocation2 + $0x6c8] sm:$0xff]
    %v436 = vld [vmem:[#allocation2 + $0x6d0] sm:$0xff]
    %v437 = vld [vmem:[#allocation2 + $0x6d8] sm:$0xff]
    %v438 = vld [vmem:[#allocation2 + $0x6e0] sm:$0xf]
    %v439 = vld [vmem:[#allocation2 + $0x6e4] sm:$0xff]
    %v440 = vld [vmem:[#allocation2 + $0x6ec] sm:$0xff]
    %v441 = vld [vmem:[#allocation2 + $0x6f4] sm:$0xff]
    %v442 = vld [vmem:[#allocation2 + $0x6fc] sm:$0xf]
    %v443 = vld [vmem:[#allocation2 + $0x700] sm:$0xff]
    %v444 = vld [vmem:[#allocation2 + $0x708] sm:$0xff]
    %v445 = vld [vmem:[#allocation2 + $0x710] sm:$0xff]
    %v446 = vld [vmem:[#allocation2 + $0x718] sm:$0xf]
    %v447 = vld [vmem:[#allocation2 + $0x71c] sm:$0xff]
    %v448 = vld [vmem:[#allocation2 + $0x724] sm:$0xff]
    %v449 = vld [vmem:[#allocation2 + $0x72c] sm:$0xff]
    %v450 = vld [vmem:[#allocation2 + $0x734] sm:$0xf]
    %v451 = vld [vmem:[#allocation2 + $0x738] sm:$0xff]
    %v452 = vld [vmem:[#allocation2 + $0x740] sm:$0xff]
    %v453 = vld [vmem:[#allocation2 + $0x748] sm:$0xff]
    %v454 = vld [vmem:[#allocation2 + $0x750] sm:$0xf]
    %v455 = vld [vmem:[#allocation2 + $0x754] sm:$0xff]
    %v456 = vld [vmem:[#allocation2 + $0x75c] sm:$0xff]
    %v457 = vld [vmem:[#allocation2 + $0x764] sm:$0xff]
    %v458 = vld [vmem:[#allocation2 + $0x76c] sm:$0xf]
    %v459 = vld [vmem:[#allocation2 + $0x770] sm:$0xff]
    %v460 = vld [vmem:[#allocation2 + $0x778] sm:$0xff]
    %v461 = vld [vmem:[#allocation2 + $0x780] sm:$0xff]
    %v462 = vld [vmem:[#allocation2 + $0x788] sm:$0xf]
    %v463 = vld [vmem:[#allocation2 + $0x78c] sm:$0xff]
    %v464 = vld [vmem:[#allocation2 + $0x794] sm:$0xff]
    %v465 = vld [vmem:[#allocation2 + $0x79c] sm:$0xff]
    %v466 = vld [vmem:[#allocation2 + $0x7a4] sm:$0xf]
    %v467 = vld [vmem:[#allocation2 + $0x7a8] sm:$0xff]
    %v468 = vld [vmem:[#allocation2 + $0x7b0] sm:$0xff]
    %v469 = vld [vmem:[#allocation2 + $0x7b8] sm:$0xff]
    %v470 = vld [vmem:[#allocation2 + $0x7c0] sm:$0xf]
    %v471 = vld [vmem:[#allocation2 + $0x7c4] sm:$0xff]
    %v472 = vld [vmem:[#allocation2 + $0x7cc] sm:$0xff]
    %v473 = vld [vmem:[#allocation2 + $0x7d4] sm:$0xff]
    %v474 = vld [vmem:[#allocation2 + $0x7dc] sm:$0xf]
    %v475 = vld [vmem:[#allocation2 + $0x7e0] sm:$0xff]
    %v476 = vld [vmem:[#allocation2 + $0x7e8] sm:$0xff]
    %v477 = vld [vmem:[#allocation2 + $0x7f0] sm:$0xff]
    %v478 = vld [vmem:[#allocation2 + $0x7f8] sm:$0xf]
    %v479 = vld [vmem:[#allocation2 + $0x7fc] sm:$0xff]
    %v480 = vld [vmem:[#allocation2 + $0x804] sm:$0xff]
    %v481 = vld [vmem:[#allocation2 + $0x80c] sm:$0xff]
    %v482 = vld [vmem:[#allocation2 + $0x814] sm:$0xf]
    %v483 = vld [vmem:[#allocation2 + $0x818] sm:$0xff]
    %v484 = vld [vmem:[#allocation2 + $0x820] sm:$0xff]
    %v485 = vld [vmem:[#allocation2 + $0x828] sm:$0xff]
    %v486 = vld [vmem:[#allocation2 + $0x830] sm:$0xf]
    %v487 = vld [vmem:[#allocation2 + $0x834] sm:$0xff]
    %v488 = vld [vmem:[#allocation2 + $0x83c] sm:$0xff]
    %v489 = vld [vmem:[#allocation2 + $0x844] sm:$0xff]
    %v490 = vld [vmem:[#allocation2 + $0x84c] sm:$0xf]
    %v491 = vld [vmem:[#allocation2 + $0x850] sm:$0xff]
    %v492 = vld [vmem:[#allocation2 + $0x858] sm:$0xff]
    %v493 = vld [vmem:[#allocation2 + $0x860] sm:$0xff]
    %v494 = vld [vmem:[#allocation2 + $0x868] sm:$0xf]
    %v495 = vld [vmem:[#allocation2 + $0x86c] sm:$0xff]
    %v496 = vld [vmem:[#allocation2 + $0x874] sm:$0xff]
    %v497 = vld [vmem:[#allocation2 + $0x87c] sm:$0xff]
    %v498 = vld [vmem:[#allocation2 + $0x884] sm:$0xf]
    %v499 = vld [vmem:[#allocation2 + $0x888] sm:$0xff]
    %v500 = vld [vmem:[#allocation2 + $0x890] sm:$0xff]
    %v501 = vld [vmem:[#allocation2 + $0x898] sm:$0xff]
    %v502 = vld [vmem:[#allocation2 + $0x8a0] sm:$0xf]
    %v503 = vld [vmem:[#allocation2 + $0x8a4] sm:$0xff]
    %v504 = vld [vmem:[#allocation2 + $0x8ac] sm:$0xff]
    %v505 = vld [vmem:[#allocation2 + $0x8b4] sm:$0xff]
    %v506 = vld [vmem:[#allocation2 + $0x8bc] sm:$0xf]
    %v507 = vld [vmem:[#allocation2 + $0x8c0] sm:$0xff]
    %v508 = vld [vmem:[#allocation2 + $0x8c8] sm:$0xff]
    %v509 = vld [vmem:[#allocation2 + $0x8d0] sm:$0xff]
    %v510 = vld [vmem:[#allocation2 + $0x8d8] sm:$0xf]
    %v511 = vld [vmem:[#allocation2 + $0x8dc] sm:$0xff]
    %v512 = vld [vmem:[#allocation2 + $0x8e4] sm:$0xff]
    %v513 = vld [vmem:[#allocation2 + $0x8ec] sm:$0xff]
    %v514 = vld [vmem:[#allocation2 + $0x8f4] sm:$0xf]
    %v515 = vld [vmem:[#allocation2 + $0x8f8] sm:$0xff]
    %v516 = vld [vmem:[#allocation2 + $0x900] sm:$0xff]
    %v517 = vld [vmem:[#allocation2 + $0x908] sm:$0xff]
    %v518 = vld [vmem:[#allocation2 + $0x910] sm:$0xf]
    %v519 = vld [vmem:[#allocation2 + $0x914] sm:$0xff]
    %v520 = vld [vmem:[#allocation2 + $0x91c] sm:$0xff]
    %v521 = vld [vmem:[#allocation2 + $0x924] sm:$0xff]
    %v522 = vld [vmem:[#allocation2 + $0x92c] sm:$0xf]
    %v523 = vld [vmem:[#allocation2 + $0x930] sm:$0xff]
    %v524 = vld [vmem:[#allocation2 + $0x938] sm:$0xff]
    %v525 = vld [vmem:[#allocation2 + $0x940] sm:$0xff]
    %v526 = vld [vmem:[#allocation2 + $0x948] sm:$0xf]
    %v527 = vld [vmem:[#allocation2 + $0x94c] sm:$0xff]
    %v528 = vld [vmem:[#allocation2 + $0x954] sm:$0xff]
    %v529 = vld [vmem:[#allocation2 + $0x95c] sm:$0xff]
    %v530 = vld [vmem:[#allocation2 + $0x964] sm:$0xf]
    %v531 = vld [vmem:[#allocation2 + $0x968] sm:$0xff]
    %v532 = vld [vmem:[#allocation2 + $0x970] sm:$0xff]
    %v533 = vld [vmem:[#allocation2 + $0x978] sm:$0xff]
    %v534 = vld [vmem:[#allocation2 + $0x980] sm:$0xf]
    %v535 = vld [vmem:[#allocation2 + $0x984] sm:$0xff]
    %v536 = vld [vmem:[#allocation2 + $0x98c] sm:$0xff]
    %v537 = vld [vmem:[#allocation2 + $0x994] sm:$0xff]
    %v538 = vld [vmem:[#allocation2 + $0x99c] sm:$0xf]
    %v539 = vld [vmem:[#allocation2 + $0x9a0] sm:$0xff]
    %v540 = vld [vmem:[#allocation2 + $0x9a8] sm:$0xff]
    %v541 = vld [vmem:[#allocation2 + $0x9b0] sm:$0xff]
    %v542 = vld [vmem:[#allocation2 + $0x9b8] sm:$0xf]
    %v543 = vld [vmem:[#allocation2 + $0x9bc] sm:$0xff]
    %v544 = vld [vmem:[#allocation2 + $0x9c4] sm:$0xff]
    %v545 = vld [vmem:[#allocation2 + $0x9cc] sm:$0xff]
    %v546 = vld [vmem:[#allocation2 + $0x9d4] sm:$0xf]
    %v547 = vld [vmem:[#allocation2 + $0x9d8] sm:$0xff]
    %v548 = vld [vmem:[#allocation2 + $0x9e0] sm:$0xff]
    %v549 = vld [vmem:[#allocation2 + $0x9e8] sm:$0xff]
    %v550 = vld [vmem:[#allocation2 + $0x9f0] sm:$0xf]
    %v551 = vld [vmem:[#allocation2 + $0x9f4] sm:$0xff]
    %v552 = vld [vmem:[#allocation2 + $0x9fc] sm:$0xff]
    %v553 = vld [vmem:[#allocation2 + $0xa04] sm:$0xff]
    %v554 = vld [vmem:[#allocation2 + $0xa0c] sm:$0xf]
    %v555 = vld [vmem:[#allocation2 + $0xa10] sm:$0xff]
    %v556 = vld [vmem:[#allocation2 + $0xa18] sm:$0xff]
    %v557 = vld [vmem:[#allocation2 + $0xa20] sm:$0xff]
    %v558 = vld [vmem:[#allocation2 + $0xa28] sm:$0xf]
    %v559 = vld [vmem:[#allocation2 + $0xa2c] sm:$0xff]
    %v560 = vld [vmem:[#allocation2 + $0xa34] sm:$0xff]
    %v561 = vld [vmem:[#allocation2 + $0xa3c] sm:$0xff]
    %v562 = vld [vmem:[#allocation2 + $0xa44] sm:$0xf]
    %v563 = vld [vmem:[#allocation2 + $0xa48] sm:$0xff]
    %v564 = vld [vmem:[#allocation2 + $0xa50] sm:$0xff]
    %v565 = vld [vmem:[#allocation2 + $0xa58] sm:$0xff]
    %v566 = vld [vmem:[#allocation2 + $0xa60] sm:$0xf]
    %v567 = vld [vmem:[#allocation2 + $0xa64] sm:$0xff]
    %v568 = vld [vmem:[#allocation2 + $0xa6c] sm:$0xff]
    %v569 = vld [vmem:[#allocation2 + $0xa74] sm:$0xff]
    %v570 = vld [vmem:[#allocation2 + $0xa7c] sm:$0xf]
    %v571 = vld [vmem:[#allocation2 + $0xa80] sm:$0xff]
    %v572 = vld [vmem:[#allocation2 + $0xa88] sm:$0xff]
    %v573 = vld [vmem:[#allocation2 + $0xa90] sm:$0xff]
    %v574 = vld [vmem:[#allocation2 + $0xa98] sm:$0xf]
    %v575 = vld [vmem:[#allocation2 + $0xa9c] sm:$0xff]
    %v576 = vld [vmem:[#allocation2 + $0xaa4] sm:$0xff]
    %v577 = vld [vmem:[#allocation2 + $0xaac] sm:$0xff]
    %v578 = vld [vmem:[#allocation2 + $0xab4] sm:$0xf]
    %580 = vst [vmem:[#allocation1] ss:$9 sm:$0xff] %v186
    %v581 = vld [vmem:[#allocation1] sm:$0xff]
    %v582 = vld [vmem:[#allocation1 + $0x9] sm:$0xff]
    %v583 = vld [vmem:[#allocation1 + $0x12] sm:$0xff]
    %v584 = vld [vmem:[#allocation1 + $0x1b] sm:$0xff]
    %v585 = vld [vmem:[#allocation1 + $0x24] sm:$0xff]
    %v586 = vld [vmem:[#allocation1 + $0x2d] sm:$0xff]
    %v587 = vld [vmem:[#allocation1 + $0x36] sm:$0xff]
    %v986 = vunpack.c.l.b16 %v187
    %v987 = vunpack.c.h.b16 %v187
    %v988 = vunpack.c.l.b16 %v188
    %v989 = vunpack.c.h.b16 %v188
    %v990 = vunpack.c.l.b16 %v189
    %v991 = vunpack.c.h.b16 %v189
    %v992 = vunpack.c.l.b16 %v190
    %v993 = vunpack.c.l.b16 %v191
    %v994 = vunpack.c.h.b16 %v191
    %v995 = vunpack.c.l.b16 %v192
    %v996 = vunpack.c.h.b16 %v192
    %v997 = vunpack.c.l.b16 %v193
    %v998 = vunpack.c.h.b16 %v193
    %v999 = vunpack.c.l.b16 %v194
    %v1000 = vunpack.c.l.b16 %v195
    %v1001 = vunpack.c.h.b16 %v195
    %v1002 = vunpack.c.l.b16 %v196
    %v1003 = vunpack.c.h.b16 %v196
    %v1004 = vunpack.c.l.b16 %v197
    %v1005 = vunpack.c.h.b16 %v197
    %v1006 = vunpack.c.l.b16 %v198
    %v1007 = vunpack.c.l.b16 %v199
    %v1008 = vunpack.c.h.b16 %v199
    %v1009 = vunpack.c.l.b16 %v200
    %v1010 = vunpack.c.h.b16 %v200
    %v1011 = vunpack.c.l.b16 %v201
    %v1012 = vunpack.c.h.b16 %v201
    %v1013 = vunpack.c.l.b16 %v202
    %v1014 = vunpack.c.l.b16 %v203
    %v1015 = vunpack.c.h.b16 %v203
    %v1016 = vunpack.c.l.b16 %v204
    %v1017 = vunpack.c.h.b16 %v204
    %v1018 = vunpack.c.l.b16 %v205
    %v1019 = vunpack.c.h.b16 %v205
    %v1020 = vunpack.c.l.b16 %v206
    %v1021 = vunpack.c.l.b16 %v207
    %v1022 = vunpack.c.h.b16 %v207
    %v1023 = vunpack.c.l.b16 %v208
    %v1024 = vunpack.c.h.b16 %v208
    %v1025 = vunpack.c.l.b16 %v209
    %v1026 = vunpack.c.h.b16 %v209
    %v1027 = vunpack.c.l.b16 %v210
    %v1028 = vunpack.c.l.b16 %v211
    %v1029 = vunpack.c.h.b16 %v211
    %v1030 = vunpack.c.l.b16 %v212
    %v1031 = vunpack.c.h.b16 %v212
    %v1032 = vunpack.c.l.b16 %v213
    %v1033 = vunpack.c.h.b16 %v213
    %v1034 = vunpack.c.l.b16 %v214
    %v1035 = vunpack.c.l.b16 %v215
    %v1036 = vunpack.c.h.b16 %v215
    %v1037 = vunpack.c.l.b16 %v216
    %v1038 = vunpack.c.h.b16 %v216
    %v1039 = vunpack.c.l.b16 %v217
    %v1040 = vunpack.c.h.b16 %v217
    %v1041 = vunpack.c.l.b16 %v218
    %v1042 = vunpack.c.l.b16 %v219
    %v1043 = vunpack.c.h.b16 %v219
    %v1044 = vunpack.c.l.b16 %v220
    %v1045 = vunpack.c.h.b16 %v220
    %v1046 = vunpack.c.l.b16 %v221
    %v1047 = vunpack.c.h.b16 %v221
    %v1048 = vunpack.c.l.b16 %v222
    %v1049 = vunpack.c.l.b16 %v223
    %v1050 = vunpack.c.h.b16 %v223
    %v1051 = vunpack.c.l.b16 %v224
    %v1052 = vunpack.c.h.b16 %v224
    %v1053 = vunpack.c.l.b16 %v225
    %v1054 = vunpack.c.h.b16 %v225
    %v1055 = vunpack.c.l.b16 %v226
    %v1056 = vunpack.c.l.b16 %v227
    %v1057 = vunpack.c.h.b16 %v227
    %v1058 = vunpack.c.l.b16 %v228
    %v1059 = vunpack.c.h.b16 %v228
    %v1060 = vunpack.c.l.b16 %v229
    %v1061 = vunpack.c.h.b16 %v229
    %v1062 = vunpack.c.l.b16 %v230
    %v1063 = vunpack.c.l.b16 %v231
    %v1064 = vunpack.c.h.b16 %v231
    %v1065 = vunpack.c.l.b16 %v232
    %v1066 = vunpack.c.h.b16 %v232
    %v1067 = vunpack.c.l.b16 %v233
    %v1068 = vunpack.c.h.b16 %v233
    %v1069 = vunpack.c.l.b16 %v234
    %v1070 = vunpack.c.l.b16 %v235
    %v1071 = vunpack.c.h.b16 %v235
    %v1072 = vunpack.c.l.b16 %v236
    %v1073 = vunpack.c.h.b16 %v236
    %v1074 = vunpack.c.l.b16 %v237
    %v1075 = vunpack.c.h.b16 %v237
    %v1076 = vunpack.c.l.b16 %v238
    %v1077 = vunpack.c.l.b16 %v239
    %v1078 = vunpack.c.h.b16 %v239
    %v1079 = vunpack.c.l.b16 %v240
    %v1080 = vunpack.c.h.b16 %v240
    %v1081 = vunpack.c.l.b16 %v241
    %v1082 = vunpack.c.h.b16 %v241
    %v1083 = vunpack.c.l.b16 %v242
    %v1084 = vunpack.c.l.b16 %v243
    %v1085 = vunpack.c.h.b16 %v243
    %v1086 = vunpack.c.l.b16 %v244
    %v1087 = vunpack.c.h.b16 %v244
    %v1088 = vunpack.c.l.b16 %v245
    %v1089 = vunpack.c.h.b16 %v245
    %v1090 = vunpack.c.l.b16 %v246
    %v1091 = vunpack.c.l.b16 %v247
    %v1092 = vunpack.c.h.b16 %v247
    %v1093 = vunpack.c.l.b16 %v248
    %v1094 = vunpack.c.h.b16 %v248
    %v1095 = vunpack.c.l.b16 %v249
    %v1096 = vunpack.c.h.b16 %v249
    %v1097 = vunpack.c.l.b16 %v250
    %v1098 = vunpack.c.l.b16 %v251
    %v1099 = vunpack.c.h.b16 %v251
    %v1100 = vunpack.c.l.b16 %v252
    %v1101 = vunpack.c.h.b16 %v252
    %v1102 = vunpack.c.l.b16 %v253
    %v1103 = vunpack.c.h.b16 %v253
    %v1104 = vunpack.c.l.b16 %v254
    %v1105 = vunpack.c.l.b16 %v255
    %v1106 = vunpack.c.h.b16 %v255
    %v1107 = vunpack.c.l.b16 %v256
    %v1108 = vunpack.c.h.b16 %v256
    %v1109 = vunpack.c.l.b16 %v257
    %v1110 = vunpack.c.h.b16 %v257
    %v1111 = vunpack.c.l.b16 %v258
    %v1112 = vunpack.c.l.b16 %v259
    %v1113 = vunpack.c.h.b16 %v259
    %v1114 = vunpack.c.l.b16 %v260
    %v1115 = vunpack.c.h.b16 %v260
    %v1116 = vunpack.c.l.b16 %v261
    %v1117 = vunpack.c.h.b16 %v261
    %v1118 = vunpack.c.l.b16 %v262
    %v1119 = vunpack.c.l.b16 %v263
    %v1120 = vunpack.c.h.b16 %v263
    %v1121 = vunpack.c.l.b16 %v264
    %v1122 = vunpack.c.h.b16 %v264
    %v1123 = vunpack.c.l.b16 %v265
    %v1124 = vunpack.c.h.b16 %v265
    %v1125 = vunpack.c.l.b16 %v266
    %v1126 = vunpack.c.l.b16 %v267
    %v1127 = vunpack.c.h.b16 %v267
    %v1128 = vunpack.c.l.b16 %v268
    %v1129 = vunpack.c.h.b16 %v268
    %v1130 = vunpack.c.l.b16 %v269
    %v1131 = vunpack.c.h.b16 %v269
    %v1132 = vunpack.c.l.b16 %v270
    %v1133 = vunpack.c.l.b16 %v271
    %v1134 = vunpack.c.h.b16 %v271
    %v1135 = vunpack.c.l.b16 %v272
    %v1136 = vunpack.c.h.b16 %v272
    %v1137 = vunpack.c.l.b16 %v273
    %v1138 = vunpack.c.h.b16 %v273
    %v1139 = vunpack.c.l.b16 %v274
    %v1140 = vunpack.c.l.b16 %v275
    %v1141 = vunpack.c.h.b16 %v275
    %v1142 = vunpack.c.l.b16 %v276
    %v1143 = vunpack.c.h.b16 %v276
    %v1144 = vunpack.c.l.b16 %v277
    %v1145 = vunpack.c.h.b16 %v277
    %v1146 = vunpack.c.l.b16 %v278
    %v1147 = vunpack.c.l.b16 %v279
    %v1148 = vunpack.c.h.b16 %v279
    %v1149 = vunpack.c.l.b16 %v280
    %v1150 = vunpack.c.h.b16 %v280
    %v1151 = vunpack.c.l.b16 %v281
    %v1152 = vunpack.c.h.b16 %v281
    %v1153 = vunpack.c.l.b16 %v282
    %v1154 = vunpack.c.l.b16 %v283
    %v1155 = vunpack.c.h.b16 %v283
    %v1156 = vunpack.c.l.b16 %v284
    %v1157 = vunpack.c.h.b16 %v284
    %v1158 = vunpack.c.l.b16 %v285
    %v1159 = vunpack.c.h.b16 %v285
    %v1160 = vunpack.c.l.b16 %v286
    %v1161 = vunpack.c.l.b16 %v287
    %v1162 = vunpack.c.h.b16 %v287
    %v1163 = vunpack.c.l.b16 %v288
    %v1164 = vunpack.c.h.b16 %v288
    %v1165 = vunpack.c.l.b16 %v289
    %v1166 = vunpack.c.h.b16 %v289
    %v1167 = vunpack.c.l.b16 %v290
    %v1168 = vunpack.c.l.b16 %v291
    %v1169 = vunpack.c.h.b16 %v291
    %v1170 = vunpack.c.l.b16 %v292
    %v1171 = vunpack.c.h.b16 %v292
    %v1172 = vunpack.c.l.b16 %v293
    %v1173 = vunpack.c.h.b16 %v293
    %v1174 = vunpack.c.l.b16 %v294
    %v1175 = vunpack.c.l.b16 %v295
    %v1176 = vunpack.c.h.b16 %v295
    %v1177 = vunpack.c.l.b16 %v296
    %v1178 = vunpack.c.h.b16 %v296
    %v1179 = vunpack.c.l.b16 %v297
    %v1180 = vunpack.c.h.b16 %v297
    %v1181 = vunpack.c.l.b16 %v298
    %v1182 = vunpack.c.l.b16 %v299
    %v1183 = vunpack.c.h.b16 %v299
    %v1184 = vunpack.c.l.b16 %v300
    %v1185 = vunpack.c.h.b16 %v300
    %v1186 = vunpack.c.l.b16 %v301
    %v1187 = vunpack.c.h.b16 %v301
    %v1188 = vunpack.c.l.b16 %v302
    %v1189 = vunpack.c.l.b16 %v303
    %v1190 = vunpack.c.h.b16 %v303
    %v1191 = vunpack.c.l.b16 %v304
    %v1192 = vunpack.c.h.b16 %v304
    %v1193 = vunpack.c.l.b16 %v305
    %v1194 = vunpack.c.h.b16 %v305
    %v1195 = vunpack.c.l.b16 %v306
    %v1196 = vunpack.c.l.b16 %v307
    %v1197 = vunpack.c.h.b16 %v307
    %v1198 = vunpack.c.l.b16 %v308
    %v1199 = vunpack.c.h.b16 %v308
    %v1200 = vunpack.c.l.b16 %v309
    %v1201 = vunpack.c.h.b16 %v309
    %v1202 = vunpack.c.l.b16 %v310
    %v1203 = vunpack.c.l.b16 %v311
    %v1204 = vunpack.c.h.b16 %v311
    %v1205 = vunpack.c.l.b16 %v312
    %v1206 = vunpack.c.h.b16 %v312
    %v1207 = vunpack.c.l.b16 %v313
    %v1208 = vunpack.c.h.b16 %v313
    %v1209 = vunpack.c.l.b16 %v314
    %v1210 = vunpack.c.l.b16 %v315
    %v1211 = vunpack.c.h.b16 %v315
    %v1212 = vunpack.c.l.b16 %v316
    %v1213 = vunpack.c.h.b16 %v316
    %v1214 = vunpack.c.l.b16 %v317
    %v1215 = vunpack.c.h.b16 %v317
    %v1216 = vunpack.c.l.b16 %v318
    %v1217 = vunpack.c.l.b16 %v319
    %v1218 = vunpack.c.h.b16 %v319
    %v1219 = vunpack.c.l.b16 %v320
    %v1220 = vunpack.c.h.b16 %v320
    %v1221 = vunpack.c.l.b16 %v321
    %v1222 = vunpack.c.h.b16 %v321
    %v1223 = vunpack.c.l.b16 %v322
    %v1224 = vunpack.c.l.b16 %v323
    %v1225 = vunpack.c.h.b16 %v323
    %v1226 = vunpack.c.l.b16 %v324
    %v1227 = vunpack.c.h.b16 %v324
    %v1228 = vunpack.c.l.b16 %v325
    %v1229 = vunpack.c.h.b16 %v325
    %v1230 = vunpack.c.l.b16 %v326
    %v1231 = vunpack.c.l.b16 %v327
    %v1232 = vunpack.c.h.b16 %v327
    %v1233 = vunpack.c.l.b16 %v328
    %v1234 = vunpack.c.h.b16 %v328
    %v1235 = vunpack.c.l.b16 %v329
    %v1236 = vunpack.c.h.b16 %v329
    %v1237 = vunpack.c.l.b16 %v330
    %v1238 = vunpack.c.l.b16 %v331
    %v1239 = vunpack.c.h.b16 %v331
    %v1240 = vunpack.c.l.b16 %v332
    %v1241 = vunpack.c.h.b16 %v332
    %v1242 = vunpack.c.l.b16 %v333
    %v1243 = vunpack.c.h.b16 %v333
    %v1244 = vunpack.c.l.b16 %v334
    %v1245 = vunpack.c.l.b16 %v335
    %v1246 = vunpack.c.h.b16 %v335
    %v1247 = vunpack.c.l.b16 %v336
    %v1248 = vunpack.c.h.b16 %v336
    %v1249 = vunpack.c.l.b16 %v337
    %v1250 = vunpack.c.h.b16 %v337
    %v1251 = vunpack.c.l.b16 %v338
    %v1252 = vunpack.c.l.b16 %v339
    %v1253 = vunpack.c.h.b16 %v339
    %v1254 = vunpack.c.l.b16 %v340
    %v1255 = vunpack.c.h.b16 %v340
    %v1256 = vunpack.c.l.b16 %v341
    %v1257 = vunpack.c.h.b16 %v341
    %v1258 = vunpack.c.l.b16 %v342
    %v1259 = vunpack.c.l.b16 %v343
    %v1260 = vunpack.c.h.b16 %v343
    %v1261 = vunpack.c.l.b16 %v344
    %v1262 = vunpack.c.h.b16 %v344
    %v1263 = vunpack.c.l.b16 %v345
    %v1264 = vunpack.c.h.b16 %v345
    %v1265 = vunpack.c.l.b16 %v346
    %v1266 = vunpack.c.l.b16 %v347
    %v1267 = vunpack.c.h.b16 %v347
    %v1268 = vunpack.c.l.b16 %v348
    %v1269 = vunpack.c.h.b16 %v348
    %v1270 = vunpack.c.l.b16 %v349
    %v1271 = vunpack.c.h.b16 %v349
    %v1272 = vunpack.c.l.b16 %v350
    %v1273 = vunpack.c.l.b16 %v351
    %v1274 = vunpack.c.h.b16 %v351
    %v1275 = vunpack.c.l.b16 %v352
    %v1276 = vunpack.c.h.b16 %v352
    %v1277 = vunpack.c.l.b16 %v353
    %v1278 = vunpack.c.h.b16 %v353
    %v1279 = vunpack.c.l.b16 %v354
    %v1280 = vunpack.c.l.b16 %v355
    %v1281 = vunpack.c.h.b16 %v355
    %v1282 = vunpack.c.l.b16 %v356
    %v1283 = vunpack.c.h.b16 %v356
    %v1284 = vunpack.c.l.b16 %v357
    %v1285 = vunpack.c.h.b16 %v357
    %v1286 = vunpack.c.l.b16 %v358
    %v1287 = vunpack.c.l.b16 %v359
    %v1288 = vunpack.c.h.b16 %v359
    %v1289 = vunpack.c.l.b16 %v360
    %v1290 = vunpack.c.h.b16 %v360
    %v1291 = vunpack.c.l.b16 %v361
    %v1292 = vunpack.c.h.b16 %v361
    %v1293 = vunpack.c.l.b16 %v362
    %v1294 = vunpack.c.l.b16 %v363
    %v1295 = vunpack.c.h.b16 %v363
    %v1296 = vunpack.c.l.b16 %v364
    %v1297 = vunpack.c.h.b16 %v364
    %v1298 = vunpack.c.l.b16 %v365
    %v1299 = vunpack.c.h.b16 %v365
    %v1300 = vunpack.c.l.b16 %v366
    %v1301 = vunpack.c.l.b16 %v367
    %v1302 = vunpack.c.h.b16 %v367
    %v1303 = vunpack.c.l.b16 %v368
    %v1304 = vunpack.c.h.b16 %v368
    %v1305 = vunpack.c.l.b16 %v369
    %v1306 = vunpack.c.h.b16 %v369
    %v1307 = vunpack.c.l.b16 %v370
    %v1308 = vunpack.c.l.b16 %v371
    %v1309 = vunpack.c.h.b16 %v371
    %v1310 = vunpack.c.l.b16 %v372
    %v1311 = vunpack.c.h.b16 %v372
    %v1312 = vunpack.c.l.b16 %v373
    %v1313 = vunpack.c.h.b16 %v373
    %v1314 = vunpack.c.l.b16 %v374
    %v1315 = vunpack.c.l.b16 %v375
    %v1316 = vunpack.c.h.b16 %v375
    %v1317 = vunpack.c.l.b16 %v376
    %v1318 = vunpack.c.h.b16 %v376
    %v1319 = vunpack.c.l.b16 %v377
    %v1320 = vunpack.c.h.b16 %v377
    %v1321 = vunpack.c.l.b16 %v378
    %v1322 = vunpack.c.l.b16 %v379
    %v1323 = vunpack.c.h.b16 %v379
    %v1324 = vunpack.c.l.b16 %v380
    %v1325 = vunpack.c.h.b16 %v380
    %v1326 = vunpack.c.l.b16 %v381
    %v1327 = vunpack.c.h.b16 %v381
    %v1328 = vunpack.c.l.b16 %v382
    %v1329 = vunpack.c.l.b16 %v383
    %v1330 = vunpack.c.h.b16 %v383
    %v1331 = vunpack.c.l.b16 %v384
    %v1332 = vunpack.c.h.b16 %v384
    %v1333 = vunpack.c.l.b16 %v385
    %v1334 = vunpack.c.h.b16 %v385
    %v1335 = vunpack.c.l.b16 %v386
    %v1336 = vunpack.c.l.b16 %v387
    %v1337 = vunpack.c.h.b16 %v387
    %v1338 = vunpack.c.l.b16 %v388
    %v1339 = vunpack.c.h.b16 %v388
    %v1340 = vunpack.c.l.b16 %v389
    %v1341 = vunpack.c.h.b16 %v389
    %v1342 = vunpack.c.l.b16 %v390
    %v1343 = vunpack.c.l.b16 %v391
    %v1344 = vunpack.c.h.b16 %v391
    %v1345 = vunpack.c.l.b16 %v392
    %v1346 = vunpack.c.h.b16 %v392
    %v1347 = vunpack.c.l.b16 %v393
    %v1348 = vunpack.c.h.b16 %v393
    %v1349 = vunpack.c.l.b16 %v394
    %v1350 = vunpack.c.l.b16 %v395
    %v1351 = vunpack.c.h.b16 %v395
    %v1352 = vunpack.c.l.b16 %v396
    %v1353 = vunpack.c.h.b16 %v396
    %v1354 = vunpack.c.l.b16 %v397
    %v1355 = vunpack.c.h.b16 %v397
    %v1356 = vunpack.c.l.b16 %v398
    %v1357 = vunpack.c.l.b16 %v399
    %v1358 = vunpack.c.h.b16 %v399
    %v1359 = vunpack.c.l.b16 %v400
    %v1360 = vunpack.c.h.b16 %v400
    %v1361 = vunpack.c.l.b16 %v401
    %v1362 = vunpack.c.h.b16 %v401
    %v1363 = vunpack.c.l.b16 %v402
    %v1364 = vunpack.c.l.b16 %v403
    %v1365 = vunpack.c.h.b16 %v403
    %v1366 = vunpack.c.l.b16 %v404
    %v1367 = vunpack.c.h.b16 %v404
    %v1368 = vunpack.c.l.b16 %v405
    %v1369 = vunpack.c.h.b16 %v405
    %v1370 = vunpack.c.l.b16 %v406
    %v1371 = vunpack.c.l.b16 %v407
    %v1372 = vunpack.c.h.b16 %v407
    %v1373 = vunpack.c.l.b16 %v408
    %v1374 = vunpack.c.h.b16 %v408
    %v1375 = vunpack.c.l.b16 %v409
    %v1376 = vunpack.c.h.b16 %v409
    %v1377 = vunpack.c.l.b16 %v410
    %v1378 = vunpack.c.l.b16 %v411
    %v1379 = vunpack.c.h.b16 %v411
    %v1380 = vunpack.c.l.b16 %v412
    %v1381 = vunpack.c.h.b16 %v412
    %v1382 = vunpack.c.l.b16 %v413
    %v1383 = vunpack.c.h.b16 %v413
    %v1384 = vunpack.c.l.b16 %v414
    %v1385 = vunpack.c.l.b16 %v415
    %v1386 = vunpack.c.h.b16 %v415
    %v1387 = vunpack.c.l.b16 %v416
    %v1388 = vunpack.c.h.b16 %v416
    %v1389 = vunpack.c.l.b16 %v417
    %v1390 = vunpack.c.h.b16 %v417
    %v1391 = vunpack.c.l.b16 %v418
    %v1392 = vunpack.c.l.b16 %v419
    %v1393 = vunpack.c.h.b16 %v419
    %v1394 = vunpack.c.l.b16 %v420
    %v1395 = vunpack.c.h.b16 %v420
    %v1396 = vunpack.c.l.b16 %v421
    %v1397 = vunpack.c.h.b16 %v421
    %v1398 = vunpack.c.l.b16 %v422
    %v1399 = vunpack.c.l.b16 %v423
    %v1400 = vunpack.c.h.b16 %v423
    %v1401 = vunpack.c.l.b16 %v424
    %v1402 = vunpack.c.h.b16 %v424
    %v1403 = vunpack.c.l.b16 %v425
    %v1404 = vunpack.c.h.b16 %v425
    %v1405 = vunpack.c.l.b16 %v426
    %v1406 = vunpack.c.l.b16 %v427
    %v1407 = vunpack.c.h.b16 %v427
    %v1408 = vunpack.c.l.b16 %v428
    %v1409 = vunpack.c.h.b16 %v428
    %v1410 = vunpack.c.l.b16 %v429
    %v1411 = vunpack.c.h.b16 %v429
    %v1412 = vunpack.c.l.b16 %v430
    %v1413 = vunpack.c.l.b16 %v431
    %v1414 = vunpack.c.h.b16 %v431
    %v1415 = vunpack.c.l.b16 %v432
    %v1416 = vunpack.c.h.b16 %v432
    %v1417 = vunpack.c.l.b16 %v433
    %v1418 = vunpack.c.h.b16 %v433
    %v1419 = vunpack.c.l.b16 %v434
    %v1420 = vunpack.c.l.b16 %v435
    %v1421 = vunpack.c.h.b16 %v435
    %v1422 = vunpack.c.l.b16 %v436
    %v1423 = vunpack.c.h.b16 %v436
    %v1424 = vunpack.c.l.b16 %v437
    %v1425 = vunpack.c.h.b16 %v437
    %v1426 = vunpack.c.l.b16 %v438
    %v1427 = vunpack.c.l.b16 %v439
    %v1428 = vunpack.c.h.b16 %v439
    %v1429 = vunpack.c.l.b16 %v440
    %v1430 = vunpack.c.h.b16 %v440
    %v1431 = vunpack.c.l.b16 %v441
    %v1432 = vunpack.c.h.b16 %v441
    %v1433 = vunpack.c.l.b16 %v442
    %v1434 = vunpack.c.l.b16 %v443
    %v1435 = vunpack.c.h.b16 %v443
    %v1436 = vunpack.c.l.b16 %v444
    %v1437 = vunpack.c.h.b16 %v444
    %v1438 = vunpack.c.l.b16 %v445
    %v1439 = vunpack.c.h.b16 %v445
    %v1440 = vunpack.c.l.b16 %v446
    %v1441 = vunpack.c.l.b16 %v447
    %v1442 = vunpack.c.h.b16 %v447
    %v1443 = vunpack.c.l.b16 %v448
    %v1444 = vunpack.c.h.b16 %v448
    %v1445 = vunpack.c.l.b16 %v449
    %v1446 = vunpack.c.h.b16 %v449
    %v1447 = vunpack.c.l.b16 %v450
    %v1448 = vunpack.c.l.b16 %v451
    %v1449 = vunpack.c.h.b16 %v451
    %v1450 = vunpack.c.l.b16 %v452
    %v1451 = vunpack.c.h.b16 %v452
    %v1452 = vunpack.c.l.b16 %v453
    %v1453 = vunpack.c.h.b16 %v453
    %v1454 = vunpack.c.l.b16 %v454
    %v1455 = vunpack.c.l.b16 %v455
    %v1456 = vunpack.c.h.b16 %v455
    %v1457 = vunpack.c.l.b16 %v456
    %v1458 = vunpack.c.h.b16 %v456
    %v1459 = vunpack.c.l.b16 %v457
    %v1460 = vunpack.c.h.b16 %v457
    %v1461 = vunpack.c.l.b16 %v458
    %v1462 = vunpack.c.l.b16 %v459
    %v1463 = vunpack.c.h.b16 %v459
    %v1464 = vunpack.c.l.b16 %v460
    %v1465 = vunpack.c.h.b16 %v460
    %v1466 = vunpack.c.l.b16 %v461
    %v1467 = vunpack.c.h.b16 %v461
    %v1468 = vunpack.c.l.b16 %v462
    %v1469 = vunpack.c.l.b16 %v463
    %v1470 = vunpack.c.h.b16 %v463
    %v1471 = vunpack.c.l.b16 %v464
    %v1472 = vunpack.c.h.b16 %v464
    %v1473 = vunpack.c.l.b16 %v465
    %v1474 = vunpack.c.h.b16 %v465
    %v1475 = vunpack.c.l.b16 %v466
    %v1476 = vunpack.c.l.b16 %v467
    %v1477 = vunpack.c.h.b16 %v467
    %v1478 = vunpack.c.l.b16 %v468
    %v1479 = vunpack.c.h.b16 %v468
    %v1480 = vunpack.c.l.b16 %v469
    %v1481 = vunpack.c.h.b16 %v469
    %v1482 = vunpack.c.l.b16 %v470
    %v1483 = vunpack.c.l.b16 %v471
    %v1484 = vunpack.c.h.b16 %v471
    %v1485 = vunpack.c.l.b16 %v472
    %v1486 = vunpack.c.h.b16 %v472
    %v1487 = vunpack.c.l.b16 %v473
    %v1488 = vunpack.c.h.b16 %v473
    %v1489 = vunpack.c.l.b16 %v474
    %v1490 = vunpack.c.l.b16 %v475
    %v1491 = vunpack.c.h.b16 %v475
    %v1492 = vunpack.c.l.b16 %v476
    %v1493 = vunpack.c.h.b16 %v476
    %v1494 = vunpack.c.l.b16 %v477
    %v1495 = vunpack.c.h.b16 %v477
    %v1496 = vunpack.c.l.b16 %v478
    %v1497 = vunpack.c.l.b16 %v479
    %v1498 = vunpack.c.h.b16 %v479
    %v1499 = vunpack.c.l.b16 %v480
    %v1500 = vunpack.c.h.b16 %v480
    %v1501 = vunpack.c.l.b16 %v481
    %v1502 = vunpack.c.h.b16 %v481
    %v1503 = vunpack.c.l.b16 %v482
    %v1504 = vunpack.c.l.b16 %v483
    %v1505 = vunpack.c.h.b16 %v483
    %v1506 = vunpack.c.l.b16 %v484
    %v1507 = vunpack.c.h.b16 %v484
    %v1508 = vunpack.c.l.b16 %v485
    %v1509 = vunpack.c.h.b16 %v485
    %v1510 = vunpack.c.l.b16 %v486
    %v1511 = vunpack.c.l.b16 %v487
    %v1512 = vunpack.c.h.b16 %v487
    %v1513 = vunpack.c.l.b16 %v488
    %v1514 = vunpack.c.h.b16 %v488
    %v1515 = vunpack.c.l.b16 %v489
    %v1516 = vunpack.c.h.b16 %v489
    %v1517 = vunpack.c.l.b16 %v490
    %v1518 = vunpack.c.l.b16 %v491
    %v1519 = vunpack.c.h.b16 %v491
    %v1520 = vunpack.c.l.b16 %v492
    %v1521 = vunpack.c.h.b16 %v492
    %v1522 = vunpack.c.l.b16 %v493
    %v1523 = vunpack.c.h.b16 %v493
    %v1524 = vunpack.c.l.b16 %v494
    %v1525 = vunpack.c.l.b16 %v495
    %v1526 = vunpack.c.h.b16 %v495
    %v1527 = vunpack.c.l.b16 %v496
    %v1528 = vunpack.c.h.b16 %v496
    %v1529 = vunpack.c.l.b16 %v497
    %v1530 = vunpack.c.h.b16 %v497
    %v1531 = vunpack.c.l.b16 %v498
    %v1532 = vunpack.c.l.b16 %v499
    %v1533 = vunpack.c.h.b16 %v499
    %v1534 = vunpack.c.l.b16 %v500
    %v1535 = vunpack.c.h.b16 %v500
    %v1536 = vunpack.c.l.b16 %v501
    %v1537 = vunpack.c.h.b16 %v501
    %v1538 = vunpack.c.l.b16 %v502
    %v1539 = vunpack.c.l.b16 %v503
    %v1540 = vunpack.c.h.b16 %v503
    %v1541 = vunpack.c.l.b16 %v504
    %v1542 = vunpack.c.h.b16 %v504
    %v1543 = vunpack.c.l.b16 %v505
    %v1544 = vunpack.c.h.b16 %v505
    %v1545 = vunpack.c.l.b16 %v506
    %v1546 = vunpack.c.l.b16 %v507
    %v1547 = vunpack.c.h.b16 %v507
    %v1548 = vunpack.c.l.b16 %v508
    %v1549 = vunpack.c.h.b16 %v508
    %v1550 = vunpack.c.l.b16 %v509
    %v1551 = vunpack.c.h.b16 %v509
    %v1552 = vunpack.c.l.b16 %v510
    %v1553 = vunpack.c.l.b16 %v511
    %v1554 = vunpack.c.h.b16 %v511
    %v1555 = vunpack.c.l.b16 %v512
    %v1556 = vunpack.c.h.b16 %v512
    %v1557 = vunpack.c.l.b16 %v513
    %v1558 = vunpack.c.h.b16 %v513
    %v1559 = vunpack.c.l.b16 %v514
    %v1560 = vunpack.c.l.b16 %v515
    %v1561 = vunpack.c.h.b16 %v515
    %v1562 = vunpack.c.l.b16 %v516
    %v1563 = vunpack.c.h.b16 %v516
    %v1564 = vunpack.c.l.b16 %v517
    %v1565 = vunpack.c.h.b16 %v517
    %v1566 = vunpack.c.l.b16 %v518
    %v1567 = vunpack.c.l.b16 %v519
    %v1568 = vunpack.c.h.b16 %v519
    %v1569 = vunpack.c.l.b16 %v520
    %v1570 = vunpack.c.h.b16 %v520
    %v1571 = vunpack.c.l.b16 %v521
    %v1572 = vunpack.c.h.b16 %v521
    %v1573 = vunpack.c.l.b16 %v522
    %v1574 = vunpack.c.l.b16 %v523
    %v1575 = vunpack.c.h.b16 %v523
    %v1576 = vunpack.c.l.b16 %v524
    %v1577 = vunpack.c.h.b16 %v524
    %v1578 = vunpack.c.l.b16 %v525
    %v1579 = vunpack.c.h.b16 %v525
    %v1580 = vunpack.c.l.b16 %v526
    %v1581 = vunpack.c.l.b16 %v527
    %v1582 = vunpack.c.h.b16 %v527
    %v1583 = vunpack.c.l.b16 %v528
    %v1584 = vunpack.c.h.b16 %v528
    %v1585 = vunpack.c.l.b16 %v529
    %v1586 = vunpack.c.h.b16 %v529
    %v1587 = vunpack.c.l.b16 %v530
    %v1588 = vunpack.c.l.b16 %v531
    %v1589 = vunpack.c.h.b16 %v531
    %v1590 = vunpack.c.l.b16 %v532
    %v1591 = vunpack.c.h.b16 %v532
    %v1592 = vunpack.c.l.b16 %v533
    %v1593 = vunpack.c.h.b16 %v533
    %v1594 = vunpack.c.l.b16 %v534
    %v1595 = vunpack.c.l.b16 %v535
    %v1596 = vunpack.c.h.b16 %v535
    %v1597 = vunpack.c.l.b16 %v536
    %v1598 = vunpack.c.h.b16 %v536
    %v1599 = vunpack.c.l.b16 %v537
    %v1600 = vunpack.c.h.b16 %v537
    %v1601 = vunpack.c.l.b16 %v538
    %v1602 = vunpack.c.l.b16 %v539
    %v1603 = vunpack.c.h.b16 %v539
    %v1604 = vunpack.c.l.b16 %v540
    %v1605 = vunpack.c.h.b16 %v540
    %v1606 = vunpack.c.l.b16 %v541
    %v1607 = vunpack.c.h.b16 %v541
    %v1608 = vunpack.c.l.b16 %v542
    %v1609 = vunpack.c.l.b16 %v543
    %v1610 = vunpack.c.h.b16 %v543
    %v1611 = vunpack.c.l.b16 %v544
    %v1612 = vunpack.c.h.b16 %v544
    %v1613 = vunpack.c.l.b16 %v545
    %v1614 = vunpack.c.h.b16 %v545
    %v1615 = vunpack.c.l.b16 %v546
    %v1616 = vunpack.c.l.b16 %v547
    %v1617 = vunpack.c.h.b16 %v547
    %v1618 = vunpack.c.l.b16 %v548
    %v1619 = vunpack.c.h.b16 %v548
    %v1620 = vunpack.c.l.b16 %v549
    %v1621 = vunpack.c.h.b16 %v549
    %v1622 = vunpack.c.l.b16 %v550
    %v1623 = vunpack.c.l.b16 %v551
    %v1624 = vunpack.c.h.b16 %v551
    %v1625 = vunpack.c.l.b16 %v552
    %v1626 = vunpack.c.h.b16 %v552
    %v1627 = vunpack.c.l.b16 %v553
    %v1628 = vunpack.c.h.b16 %v553
    %v1629 = vunpack.c.l.b16 %v554
    %v1630 = vunpack.c.l.b16 %v555
    %v1631 = vunpack.c.h.b16 %v555
    %v1632 = vunpack.c.l.b16 %v556
    %v1633 = vunpack.c.h.b16 %v556
    %v1634 = vunpack.c.l.b16 %v557
    %v1635 = vunpack.c.h.b16 %v557
    %v1636 = vunpack.c.l.b16 %v558
    %v1637 = vunpack.c.l.b16 %v559
    %v1638 = vunpack.c.h.b16 %v559
    %v1639 = vunpack.c.l.b16 %v560
    %v1640 = vunpack.c.h.b16 %v560
    %v1641 = vunpack.c.l.b16 %v561
    %v1642 = vunpack.c.h.b16 %v561
    %v1643 = vunpack.c.l.b16 %v562
    %v1644 = vunpack.c.l.b16 %v563
    %v1645 = vunpack.c.h.b16 %v563
    %v1646 = vunpack.c.l.b16 %v564
    %v1647 = vunpack.c.h.b16 %v564
    %v1648 = vunpack.c.l.b16 %v565
    %v1649 = vunpack.c.h.b16 %v565
    %v1650 = vunpack.c.l.b16 %v566
    %v1651 = vunpack.c.l.b16 %v567
    %v1652 = vunpack.c.h.b16 %v567
    %v1653 = vunpack.c.l.b16 %v568
    %v1654 = vunpack.c.h.b16 %v568
    %v1655 = vunpack.c.l.b16 %v569
    %v1656 = vunpack.c.h.b16 %v569
    %v1657 = vunpack.c.l.b16 %v570
    %v1658 = vunpack.c.l.b16 %v571
    %v1659 = vunpack.c.h.b16 %v571
    %v1660 = vunpack.c.l.b16 %v572
    %v1661 = vunpack.c.h.b16 %v572
    %v1662 = vunpack.c.l.b16 %v573
    %v1663 = vunpack.c.h.b16 %v573
    %v1664 = vunpack.c.l.b16 %v574
    %v1665 = vunpack.c.l.b16 %v575
    %v1666 = vunpack.c.h.b16 %v575
    %v1667 = vunpack.c.l.b16 %v576
    %v1668 = vunpack.c.h.b16 %v576
    %v1669 = vunpack.c.l.b16 %v577
    %v1670 = vunpack.c.h.b16 %v577
    %v1671 = vunpack.c.l.b16 %v578
    %v1672 = vpack.c.b16 %v993, %v986
    %v1673 = vpack.c.b16 %v994, %v987
    %v1674 = vpack.c.b16 %v995, %v988
    %v1675 = vpack.c.b16 %v996, %v989
    %v1676 = vpack.c.b16 %v997, %v990
    %v1677 = vpack.c.b16 %v998, %v991
    %v1678 = vpack.c.b16 %v999, %v992
    %v1679 = vpack.c.b16 %v1007, %v1000
    %v1680 = vpack.c.b16 %v1008, %v1001
    %v1681 = vpack.c.b16 %v1009, %v1002
    %v1682 = vpack.c.b16 %v1010, %v1003
    %v1683 = vpack.c.b16 %v1011, %v1004
    %v1684 = vpack.c.b16 %v1012, %v1005
    %v1685 = vpack.c.b16 %v1013, %v1006
    %v1686 = vpack.c.b16 %v1021, %v1014
    %v1687 = vpack.c.b16 %v1022, %v1015
    %v1688 = vpack.c.b16 %v1023, %v1016
    %v1689 = vpack.c.b16 %v1024, %v1017
    %v1690 = vpack.c.b16 %v1025, %v1018
    %v1691 = vpack.c.b16 %v1026, %v1019
    %v1692 = vpack.c.b16 %v1027, %v1020
    %v1693 = vpack.c.b16 %v1035, %v1028
    %v1694 = vpack.c.b16 %v1036, %v1029
    %v1695 = vpack.c.b16 %v1037, %v1030
    %v1696 = vpack.c.b16 %v1038, %v1031
    %v1697 = vpack.c.b16 %v1039, %v1032
    %v1698 = vpack.c.b16 %v1040, %v1033
    %v1699 = vpack.c.b16 %v1041, %v1034
    %v1700 = vpack.c.b16 %v1049, %v1042
    %v1701 = vpack.c.b16 %v1050, %v1043
    %v1702 = vpack.c.b16 %v1051, %v1044
    %v1703 = vpack.c.b16 %v1052, %v1045
    %v1704 = vpack.c.b16 %v1053, %v1046
    %v1705 = vpack.c.b16 %v1054, %v1047
    %v1706 = vpack.c.b16 %v1055, %v1048
    %v1707 = vpack.c.b16 %v1063, %v1056
    %v1708 = vpack.c.b16 %v1064, %v1057
    %v1709 = vpack.c.b16 %v1065, %v1058
    %v1710 = vpack.c.b16 %v1066, %v1059
    %v1711 = vpack.c.b16 %v1067, %v1060
    %v1712 = vpack.c.b16 %v1068, %v1061
    %v1713 = vpack.c.b16 %v1069, %v1062
    %v1714 = vpack.c.b16 %v1077, %v1070
    %v1715 = vpack.c.b16 %v1078, %v1071
    %v1716 = vpack.c.b16 %v1079, %v1072
    %v1717 = vpack.c.b16 %v1080, %v1073
    %v1718 = vpack.c.b16 %v1081, %v1074
    %v1719 = vpack.c.b16 %v1082, %v1075
    %v1720 = vpack.c.b16 %v1083, %v1076
    %v1721 = vpack.c.b16 %v1091, %v1084
    %v1722 = vpack.c.b16 %v1092, %v1085
    %v1723 = vpack.c.b16 %v1093, %v1086
    %v1724 = vpack.c.b16 %v1094, %v1087
    %v1725 = vpack.c.b16 %v1095, %v1088
    %v1726 = vpack.c.b16 %v1096, %v1089
    %v1727 = vpack.c.b16 %v1097, %v1090
    %v1728 = vpack.c.b16 %v1105, %v1098
    %v1729 = vpack.c.b16 %v1106, %v1099
    %v1730 = vpack.c.b16 %v1107, %v1100
    %v1731 = vpack.c.b16 %v1108, %v1101
    %v1732 = vpack.c.b16 %v1109, %v1102
    %v1733 = vpack.c.b16 %v1110, %v1103
    %v1734 = vpack.c.b16 %v1111, %v1104
    %v1735 = vpack.c.b16 %v1119, %v1112
    %v1736 = vpack.c.b16 %v1120, %v1113
    %v1737 = vpack.c.b16 %v1121, %v1114
    %v1738 = vpack.c.b16 %v1122, %v1115
    %v1739 = vpack.c.b16 %v1123, %v1116
    %v1740 = vpack.c.b16 %v1124, %v1117
    %v1741 = vpack.c.b16 %v1125, %v1118
    %v1742 = vpack.c.b16 %v1133, %v1126
    %v1743 = vpack.c.b16 %v1134, %v1127
    %v1744 = vpack.c.b16 %v1135, %v1128
    %v1745 = vpack.c.b16 %v1136, %v1129
    %v1746 = vpack.c.b16 %v1137, %v1130
    %v1747 = vpack.c.b16 %v1138, %v1131
    %v1748 = vpack.c.b16 %v1139, %v1132
    %v1749 = vpack.c.b16 %v1147, %v1140
    %v1750 = vpack.c.b16 %v1148, %v1141
    %v1751 = vpack.c.b16 %v1149, %v1142
    %v1752 = vpack.c.b16 %v1150, %v1143
    %v1753 = vpack.c.b16 %v1151, %v1144
    %v1754 = vpack.c.b16 %v1152, %v1145
    %v1755 = vpack.c.b16 %v1153, %v1146
    %v1756 = vpack.c.b16 %v1161, %v1154
    %v1757 = vpack.c.b16 %v1162, %v1155
    %v1758 = vpack.c.b16 %v1163, %v1156
    %v1759 = vpack.c.b16 %v1164, %v1157
    %v1760 = vpack.c.b16 %v1165, %v1158
    %v1761 = vpack.c.b16 %v1166, %v1159
    %v1762 = vpack.c.b16 %v1167, %v1160
    %v1763 = vpack.c.b16 %v1175, %v1168
    %v1764 = vpack.c.b16 %v1176, %v1169
    %v1765 = vpack.c.b16 %v1177, %v1170
    %v1766 = vpack.c.b16 %v1178, %v1171
    %v1767 = vpack.c.b16 %v1179, %v1172
    %v1768 = vpack.c.b16 %v1180, %v1173
    %v1769 = vpack.c.b16 %v1181, %v1174
    %v1770 = vpack.c.b16 %v1189, %v1182
    %v1771 = vpack.c.b16 %v1190, %v1183
    %v1772 = vpack.c.b16 %v1191, %v1184
    %v1773 = vpack.c.b16 %v1192, %v1185
    %v1774 = vpack.c.b16 %v1193, %v1186
    %v1775 = vpack.c.b16 %v1194, %v1187
    %v1776 = vpack.c.b16 %v1195, %v1188
    %v1777 = vpack.c.b16 %v1203, %v1196
    %v1778 = vpack.c.b16 %v1204, %v1197
    %v1779 = vpack.c.b16 %v1205, %v1198
    %v1780 = vpack.c.b16 %v1206, %v1199
    %v1781 = vpack.c.b16 %v1207, %v1200
    %v1782 = vpack.c.b16 %v1208, %v1201
    %v1783 = vpack.c.b16 %v1209, %v1202
    %v1784 = vpack.c.b16 %v1217, %v1210
    %v1785 = vpack.c.b16 %v1218, %v1211
    %v1786 = vpack.c.b16 %v1219, %v1212
    %v1787 = vpack.c.b16 %v1220, %v1213
    %v1788 = vpack.c.b16 %v1221, %v1214
    %v1789 = vpack.c.b16 %v1222, %v1215
    %v1790 = vpack.c.b16 %v1223, %v1216
    %v1791 = vpack.c.b16 %v1231, %v1224
    %v1792 = vpack.c.b16 %v1232, %v1225
    %v1793 = vpack.c.b16 %v1233, %v1226
    %v1794 = vpack.c.b16 %v1234, %v1227
    %v1795 = vpack.c.b16 %v1235, %v1228
    %v1796 = vpack.c.b16 %v1236, %v1229
    %v1797 = vpack.c.b16 %v1237, %v1230
    %v1798 = vpack.c.b16 %v1245, %v1238
    %v1799 = vpack.c.b16 %v1246, %v1239
    %v1800 = vpack.c.b16 %v1247, %v1240
    %v1801 = vpack.c.b16 %v1248, %v1241
    %v1802 = vpack.c.b16 %v1249, %v1242
    %v1803 = vpack.c.b16 %v1250, %v1243
    %v1804 = vpack.c.b16 %v1251, %v1244
    %v1805 = vpack.c.b16 %v1259, %v1252
    %v1806 = vpack.c.b16 %v1260, %v1253
    %v1807 = vpack.c.b16 %v1261, %v1254
    %v1808 = vpack.c.b16 %v1262, %v1255
    %v1809 = vpack.c.b16 %v1263, %v1256
    %v1810 = vpack.c.b16 %v1264, %v1257
    %v1811 = vpack.c.b16 %v1265, %v1258
    %v1812 = vpack.c.b16 %v1273, %v1266
    %v1813 = vpack.c.b16 %v1274, %v1267
    %v1814 = vpack.c.b16 %v1275, %v1268
    %v1815 = vpack.c.b16 %v1276, %v1269
    %v1816 = vpack.c.b16 %v1277, %v1270
    %v1817 = vpack.c.b16 %v1278, %v1271
    %v1818 = vpack.c.b16 %v1279, %v1272
    %v1819 = vpack.c.b16 %v1287, %v1280
    %v1820 = vpack.c.b16 %v1288, %v1281
    %v1821 = vpack.c.b16 %v1289, %v1282
    %v1822 = vpack.c.b16 %v1290, %v1283
    %v1823 = vpack.c.b16 %v1291, %v1284
    %v1824 = vpack.c.b16 %v1292, %v1285
    %v1825 = vpack.c.b16 %v1293, %v1286
    %v1826 = vpack.c.b16 %v1301, %v1294
    %v1827 = vpack.c.b16 %v1302, %v1295
    %v1828 = vpack.c.b16 %v1303, %v1296
    %v1829 = vpack.c.b16 %v1304, %v1297
    %v1830 = vpack.c.b16 %v1305, %v1298
    %v1831 = vpack.c.b16 %v1306, %v1299
    %v1832 = vpack.c.b16 %v1307, %v1300
    %v1833 = vpack.c.b16 %v1315, %v1308
    %v1834 = vpack.c.b16 %v1316, %v1309
    %v1835 = vpack.c.b16 %v1317, %v1310
    %v1836 = vpack.c.b16 %v1318, %v1311
    %v1837 = vpack.c.b16 %v1319, %v1312
    %v1838 = vpack.c.b16 %v1320, %v1313
    %v1839 = vpack.c.b16 %v1321, %v1314
    %v1840 = vpack.c.b16 %v1329, %v1322
    %v1841 = vpack.c.b16 %v1330, %v1323
    %v1842 = vpack.c.b16 %v1331, %v1324
    %v1843 = vpack.c.b16 %v1332, %v1325
    %v1844 = vpack.c.b16 %v1333, %v1326
    %v1845 = vpack.c.b16 %v1334, %v1327
    %v1846 = vpack.c.b16 %v1335, %v1328
    %v1847 = vpack.c.b16 %v1343, %v1336
    %v1848 = vpack.c.b16 %v1344, %v1337
    %v1849 = vpack.c.b16 %v1345, %v1338
    %v1850 = vpack.c.b16 %v1346, %v1339
    %v1851 = vpack.c.b16 %v1347, %v1340
    %v1852 = vpack.c.b16 %v1348, %v1341
    %v1853 = vpack.c.b16 %v1349, %v1342
    %v1854 = vpack.c.b16 %v1357, %v1350
    %v1855 = vpack.c.b16 %v1358, %v1351
    %v1856 = vpack.c.b16 %v1359, %v1352
    %v1857 = vpack.c.b16 %v1360, %v1353
    %v1858 = vpack.c.b16 %v1361, %v1354
    %v1859 = vpack.c.b16 %v1362, %v1355
    %v1860 = vpack.c.b16 %v1363, %v1356
    %v1861 = vpack.c.b16 %v1371, %v1364
    %v1862 = vpack.c.b16 %v1372, %v1365
    %v1863 = vpack.c.b16 %v1373, %v1366
    %v1864 = vpack.c.b16 %v1374, %v1367
    %v1865 = vpack.c.b16 %v1375, %v1368
    %v1866 = vpack.c.b16 %v1376, %v1369
    %v1867 = vpack.c.b16 %v1377, %v1370
    %v1868 = vpack.c.b16 %v1385, %v1378
    %v1869 = vpack.c.b16 %v1386, %v1379
    %v1870 = vpack.c.b16 %v1387, %v1380
    %v1871 = vpack.c.b16 %v1388, %v1381
    %v1872 = vpack.c.b16 %v1389, %v1382
    %v1873 = vpack.c.b16 %v1390, %v1383
    %v1874 = vpack.c.b16 %v1391, %v1384
    %v1875 = vpack.c.b16 %v1399, %v1392
    %v1876 = vpack.c.b16 %v1400, %v1393
    %v1877 = vpack.c.b16 %v1401, %v1394
    %v1878 = vpack.c.b16 %v1402, %v1395
    %v1879 = vpack.c.b16 %v1403, %v1396
    %v1880 = vpack.c.b16 %v1404, %v1397
    %v1881 = vpack.c.b16 %v1405, %v1398
    %v1882 = vpack.c.b16 %v1413, %v1406
    %v1883 = vpack.c.b16 %v1414, %v1407
    %v1884 = vpack.c.b16 %v1415, %v1408
    %v1885 = vpack.c.b16 %v1416, %v1409
    %v1886 = vpack.c.b16 %v1417, %v1410
    %v1887 = vpack.c.b16 %v1418, %v1411
    %v1888 = vpack.c.b16 %v1419, %v1412
    %v1889 = vpack.c.b16 %v1427, %v1420
    %v1890 = vpack.c.b16 %v1428, %v1421
    %v1891 = vpack.c.b16 %v1429, %v1422
    %v1892 = vpack.c.b16 %v1430, %v1423
    %v1893 = vpack.c.b16 %v1431, %v1424
    %v1894 = vpack.c.b16 %v1432, %v1425
    %v1895 = vpack.c.b16 %v1433, %v1426
    %v1896 = vpack.c.b16 %v1441, %v1434
    %v1897 = vpack.c.b16 %v1442, %v1435
    %v1898 = vpack.c.b16 %v1443, %v1436
    %v1899 = vpack.c.b16 %v1444, %v1437
    %v1900 = vpack.c.b16 %v1445, %v1438
    %v1901 = vpack.c.b16 %v1446, %v1439
    %v1902 = vpack.c.b16 %v1447, %v1440
    %v1903 = vpack.c.b16 %v1455, %v1448
    %v1904 = vpack.c.b16 %v1456, %v1449
    %v1905 = vpack.c.b16 %v1457, %v1450
    %v1906 = vpack.c.b16 %v1458, %v1451
    %v1907 = vpack.c.b16 %v1459, %v1452
    %v1908 = vpack.c.b16 %v1460, %v1453
    %v1909 = vpack.c.b16 %v1461, %v1454
    %v1910 = vpack.c.b16 %v1469, %v1462
    %v1911 = vpack.c.b16 %v1470, %v1463
    %v1912 = vpack.c.b16 %v1471, %v1464
    %v1913 = vpack.c.b16 %v1472, %v1465
    %v1914 = vpack.c.b16 %v1473, %v1466
    %v1915 = vpack.c.b16 %v1474, %v1467
    %v1916 = vpack.c.b16 %v1475, %v1468
    %v1917 = vpack.c.b16 %v1483, %v1476
    %v1918 = vpack.c.b16 %v1484, %v1477
    %v1919 = vpack.c.b16 %v1485, %v1478
    %v1920 = vpack.c.b16 %v1486, %v1479
    %v1921 = vpack.c.b16 %v1487, %v1480
    %v1922 = vpack.c.b16 %v1488, %v1481
    %v1923 = vpack.c.b16 %v1489, %v1482
    %v1924 = vpack.c.b16 %v1497, %v1490
    %v1925 = vpack.c.b16 %v1498, %v1491
    %v1926 = vpack.c.b16 %v1499, %v1492
    %v1927 = vpack.c.b16 %v1500, %v1493
    %v1928 = vpack.c.b16 %v1501, %v1494
    %v1929 = vpack.c.b16 %v1502, %v1495
    %v1930 = vpack.c.b16 %v1503, %v1496
    %v1931 = vpack.c.b16 %v1511, %v1504
    %v1932 = vpack.c.b16 %v1512, %v1505
    %v1933 = vpack.c.b16 %v1513, %v1506
    %v1934 = vpack.c.b16 %v1514, %v1507
    %v1935 = vpack.c.b16 %v1515, %v1508
    %v1936 = vpack.c.b16 %v1516, %v1509
    %v1937 = vpack.c.b16 %v1517, %v1510
    %v1938 = vpack.c.b16 %v1525, %v1518
    %v1939 = vpack.c.b16 %v1526, %v1519
    %v1940 = vpack.c.b16 %v1527, %v1520
    %v1941 = vpack.c.b16 %v1528, %v1521
    %v1942 = vpack.c.b16 %v1529, %v1522
    %v1943 = vpack.c.b16 %v1530, %v1523
    %v1944 = vpack.c.b16 %v1531, %v1524
    %v1945 = vpack.c.b16 %v1539, %v1532
    %v1946 = vpack.c.b16 %v1540, %v1533
    %v1947 = vpack.c.b16 %v1541, %v1534
    %v1948 = vpack.c.b16 %v1542, %v1535
    %v1949 = vpack.c.b16 %v1543, %v1536
    %v1950 = vpack.c.b16 %v1544, %v1537
    %v1951 = vpack.c.b16 %v1545, %v1538
    %v1952 = vpack.c.b16 %v1553, %v1546
    %v1953 = vpack.c.b16 %v1554, %v1547
    %v1954 = vpack.c.b16 %v1555, %v1548
    %v1955 = vpack.c.b16 %v1556, %v1549
    %v1956 = vpack.c.b16 %v1557, %v1550
    %v1957 = vpack.c.b16 %v1558, %v1551
    %v1958 = vpack.c.b16 %v1559, %v1552
    %v1959 = vpack.c.b16 %v1567, %v1560
    %v1960 = vpack.c.b16 %v1568, %v1561
    %v1961 = vpack.c.b16 %v1569, %v1562
    %v1962 = vpack.c.b16 %v1570, %v1563
    %v1963 = vpack.c.b16 %v1571, %v1564
    %v1964 = vpack.c.b16 %v1572, %v1565
    %v1965 = vpack.c.b16 %v1573, %v1566
    %v1966 = vpack.c.b16 %v1581, %v1574
    %v1967 = vpack.c.b16 %v1582, %v1575
    %v1968 = vpack.c.b16 %v1583, %v1576
    %v1969 = vpack.c.b16 %v1584, %v1577
    %v1970 = vpack.c.b16 %v1585, %v1578
    %v1971 = vpack.c.b16 %v1586, %v1579
    %v1972 = vpack.c.b16 %v1587, %v1580
    %v1973 = vpack.c.b16 %v1595, %v1588
    %v1974 = vpack.c.b16 %v1596, %v1589
    %v1975 = vpack.c.b16 %v1597, %v1590
    %v1976 = vpack.c.b16 %v1598, %v1591
    %v1977 = vpack.c.b16 %v1599, %v1592
    %v1978 = vpack.c.b16 %v1600, %v1593
    %v1979 = vpack.c.b16 %v1601, %v1594
    %v1980 = vpack.c.b16 %v1609, %v1602
    %v1981 = vpack.c.b16 %v1610, %v1603
    %v1982 = vpack.c.b16 %v1611, %v1604
    %v1983 = vpack.c.b16 %v1612, %v1605
    %v1984 = vpack.c.b16 %v1613, %v1606
    %v1985 = vpack.c.b16 %v1614, %v1607
    %v1986 = vpack.c.b16 %v1615, %v1608
    %v1987 = vpack.c.b16 %v1623, %v1616
    %v1988 = vpack.c.b16 %v1624, %v1617
    %v1989 = vpack.c.b16 %v1625, %v1618
    %v1990 = vpack.c.b16 %v1626, %v1619
    %v1991 = vpack.c.b16 %v1627, %v1620
    %v1992 = vpack.c.b16 %v1628, %v1621
    %v1993 = vpack.c.b16 %v1629, %v1622
    %v1994 = vpack.c.b16 %v1637, %v1630
    %v1995 = vpack.c.b16 %v1638, %v1631
    %v1996 = vpack.c.b16 %v1639, %v1632
    %v1997 = vpack.c.b16 %v1640, %v1633
    %v1998 = vpack.c.b16 %v1641, %v1634
    %v1999 = vpack.c.b16 %v1642, %v1635
    %v2000 = vpack.c.b16 %v1643, %v1636
    %v2001 = vpack.c.b16 %v1651, %v1644
    %v2002 = vpack.c.b16 %v1652, %v1645
    %v2003 = vpack.c.b16 %v1653, %v1646
    %v2004 = vpack.c.b16 %v1654, %v1647
    %v2005 = vpack.c.b16 %v1655, %v1648
    %v2006 = vpack.c.b16 %v1656, %v1649
    %v2007 = vpack.c.b16 %v1657, %v1650
    %v2008 = vpack.c.b16 %v1665, %v1658
    %v2009 = vpack.c.b16 %v1666, %v1659
    %v2010 = vpack.c.b16 %v1667, %v1660
    %v2011 = vpack.c.b16 %v1668, %v1661
    %v2012 = vpack.c.b16 %v1669, %v1662
    %v2013 = vpack.c.b16 %v1670, %v1663
    %v2014 = vpack.c.b16 %v1671, %v1664
    %vm2358 = vcmask 130048
    %v2359 = vsel %vm2358, %v587, 0
    %2361 = vmatpush.bf16.msra.mxu0 %v1721
    %2362 = vmatpush.bf16.msra.mxu0 %v1714
    %2363 = vmatpush.bf16.msra.mxu0 %v1707
    %2364 = vmatpush.bf16.msra.mxu0 %v1700
    %2365 = vmatpush.bf16.msra.mxu0 %v1693
    %2366 = vmatpush.bf16.msra.mxu0 %v1686
    %2367 = vmatpush.bf16.msra.mxu0 %v1679
    %2368 = vmatpush.bf16.msra.mxu0 %v1672
    %2369 = vmatmul.bf16.gmra.mxu0 %v581
    %v2370 = vpop.f32.mrf.mxu0
    %v2371 = vadd.f32 0.0, %v2370
    %v2372 = vpop.f32.mrf.mxu0
    %2373 = vdwg.mxu0
    %2374 = vmatpush.bf16.msra.mxu0 %v1777
    %2375 = vmatpush.bf16.msra.mxu0 %v1770
    %2376 = vmatpush.bf16.msra.mxu0 %v1763
    %2377 = vmatpush.bf16.msra.mxu0 %v1756
    %2378 = vmatpush.bf16.msra.mxu0 %v1749
    %2379 = vmatpush.bf16.msra.mxu0 %v1742
    %2380 = vmatpush.bf16.msra.mxu0 %v1735
    %2381 = vmatpush.bf16.msra.mxu0 %v1728
    %2382 = vmatmul.bf16.gmra.mxu0 %v582
    %v2383 = vpop.f32.mrf.mxu0
    %v2384 = vadd.f32 %v2371, %v2383
    %v2385 = vpop.f32.mrf.mxu0
    %2386 = vdwg.mxu0
    %2387 = vmatpush.bf16.msra.mxu0 %v1833
    %2388 = vmatpush.bf16.msra.mxu0 %v1826
    %2389 = vmatpush.bf16.msra.mxu0 %v1819
    %2390 = vmatpush.bf16.msra.mxu0 %v1812
    %2391 = vmatpush.bf16.msra.mxu0 %v1805
    %2392 = vmatpush.bf16.msra.mxu0 %v1798
    %2393 = vmatpush.bf16.msra.mxu0 %v1791
    %2394 = vmatpush.bf16.msra.mxu0 %v1784
    %2395 = vmatmul.bf16.gmra.mxu0 %v583
    %v2396 = vpop.f32.mrf.mxu0
    %v2397 = vadd.f32 %v2384, %v2396
    %v2398 = vpop.f32.mrf.mxu0
    %2399 = vdwg.mxu0
    %2400 = vmatpush.bf16.msra.mxu0 %v1889
    %2401 = vmatpush.bf16.msra.mxu0 %v1882
    %2402 = vmatpush.bf16.msra.mxu0 %v1875
    %2403 = vmatpush.bf16.msra.mxu0 %v1868
    %2404 = vmatpush.bf16.msra.mxu0 %v1861
    %2405 = vmatpush.bf16.msra.mxu0 %v1854
    %2406 = vmatpush.bf16.msra.mxu0 %v1847
    %2407 = vmatpush.bf16.msra.mxu0 %v1840
    %2408 = vmatmul.bf16.gmra.mxu0 %v584
    %v2409 = vpop.f32.mrf.mxu0
    %v2410 = vadd.f32 %v2397, %v2409
    %v2411 = vpop.f32.mrf.mxu0
    %2412 = vdwg.mxu0
    %2413 = vmatpush.bf16.msra.mxu0 %v1945
    %2414 = vmatpush.bf16.msra.mxu0 %v1938
    %2415 = vmatpush.bf16.msra.mxu0 %v1931
    %2416 = vmatpush.bf16.msra.mxu0 %v1924
    %2417 = vmatpush.bf16.msra.mxu0 %v1917
    %2418 = vmatpush.bf16.msra.mxu0 %v1910
    %2419 = vmatpush.bf16.msra.mxu0 %v1903
    %2420 = vmatpush.bf16.msra.mxu0 %v1896
    %2421 = vmatmul.bf16.gmra.mxu0 %v585
    %v2422 = vpop.f32.mrf.mxu0
    %v2423 = vadd.f32 %v2410, %v2422
    %v2424 = vpop.f32.mrf.mxu0
    %2425 = vdwg.mxu0
    %2426 = vmatpush.bf16.msra.mxu0 %v2001
    %2427 = vmatpush.bf16.msra.mxu0 %v1994
    %2428 = vmatpush.bf16.msra.mxu0 %v1987
    %2429 = vmatpush.bf16.msra.mxu0 %v1980
    %2430 = vmatpush.bf16.msra.mxu0 %v1973
    %2431 = vmatpush.bf16.msra.mxu0 %v1966
    %2432 = vmatpush.bf16.msra.mxu0 %v1959
    %2433 = vmatpush.bf16.msra.mxu0 %v1952
    %2434 = vmatmul.bf16.gmra.mxu0 %v586
    %v2435 = vpop.f32.mrf.mxu0
    %v2436 = vadd.f32 %v2423, %v2435
    %v2437 = vpop.f32.mrf.mxu0
    %2438 = vdwg.mxu0
    %2439 = vmatpush.bf16.msra.mxu0 0
    %2440 = vmatpush.bf16.msra.mxu0 0
    %2441 = vmatpush.bf16.msra.mxu0 0
    %2442 = vmatpush.bf16.msra.mxu0 0
    %2443 = vmatpush.bf16.msra.mxu0 0
    %2444 = vmatpush.bf16.msra.mxu0 0
    %2445 = vmatpush.bf16.msra.mxu0 0
    %2446 = vmatpush.bf16.msra.mxu0 %v2008
    %2447 = vmatmul.bf16.gmra.mxu0 %v2359
    %v2448 = vpop.f32.mrf.mxu0
    %v2449 = vadd.f32 %v2436, %v2448
    %v2450 = vpop.f32.mrf.mxu0
    %2451 = vdwg.mxu0
    %2452 = vmatpush.bf16.msra.mxu0 %v1722
    %2453 = vmatpush.bf16.msra.mxu0 %v1715
    %2454 = vmatpush.bf16.msra.mxu0 %v1708
    %2455 = vmatpush.bf16.msra.mxu0 %v1701
    %2456 = vmatpush.bf16.msra.mxu0 %v1694
    %2457 = vmatpush.bf16.msra.mxu0 %v1687
    %2458 = vmatpush.bf16.msra.mxu0 %v1680
    %2459 = vmatpush.bf16.msra.mxu0 %v1673
    %2460 = vmatmul.bf16.gmra.mxu0 %v581
    %v2461 = vpop.f32.mrf.mxu0
    %v2462 = vadd.f32 0.0, %v2461
    %v2463 = vpop.f32.mrf.mxu0
    %2464 = vdwg.mxu0
    %2465 = vmatpush.bf16.msra.mxu0 %v1778
    %2466 = vmatpush.bf16.msra.mxu0 %v1771
    %2467 = vmatpush.bf16.msra.mxu0 %v1764
    %2468 = vmatpush.bf16.msra.mxu0 %v1757
    %2469 = vmatpush.bf16.msra.mxu0 %v1750
    %2470 = vmatpush.bf16.msra.mxu0 %v1743
    %2471 = vmatpush.bf16.msra.mxu0 %v1736
    %2472 = vmatpush.bf16.msra.mxu0 %v1729
    %2473 = vmatmul.bf16.gmra.mxu0 %v582
    %v2474 = vpop.f32.mrf.mxu0
    %v2475 = vadd.f32 %v2462, %v2474
    %v2476 = vpop.f32.mrf.mxu0
    %2477 = vdwg.mxu0
    %2478 = vmatpush.bf16.msra.mxu0 %v1834
    %2479 = vmatpush.bf16.msra.mxu0 %v1827
    %2480 = vmatpush.bf16.msra.mxu0 %v1820
    %2481 = vmatpush.bf16.msra.mxu0 %v1813
    %2482 = vmatpush.bf16.msra.mxu0 %v1806
    %2483 = vmatpush.bf16.msra.mxu0 %v1799
    %2484 = vmatpush.bf16.msra.mxu0 %v1792
    %2485 = vmatpush.bf16.msra.mxu0 %v1785
    %2486 = vmatmul.bf16.gmra.mxu0 %v583
    %v2487 = vpop.f32.mrf.mxu0
    %v2488 = vadd.f32 %v2475, %v2487
    %v2489 = vpop.f32.mrf.mxu0
    %2490 = vdwg.mxu0
    %2491 = vmatpush.bf16.msra.mxu0 %v1890
    %2492 = vmatpush.bf16.msra.mxu0 %v1883
    %2493 = vmatpush.bf16.msra.mxu0 %v1876
    %2494 = vmatpush.bf16.msra.mxu0 %v1869
    %2495 = vmatpush.bf16.msra.mxu0 %v1862
    %2496 = vmatpush.bf16.msra.mxu0 %v1855
    %2497 = vmatpush.bf16.msra.mxu0 %v1848
    %2498 = vmatpush.bf16.msra.mxu0 %v1841
    %2499 = vmatmul.bf16.gmra.mxu0 %v584
    %v2500 = vpop.f32.mrf.mxu0
    %v2501 = vadd.f32 %v2488, %v2500
    %v2502 = vpop.f32.mrf.mxu0
    %2503 = vdwg.mxu0
    %2504 = vmatpush.bf16.msra.mxu0 %v1946
    %2505 = vmatpush.bf16.msra.mxu0 %v1939
    %2506 = vmatpush.bf16.msra.mxu0 %v1932
    %2507 = vmatpush.bf16.msra.mxu0 %v1925
    %2508 = vmatpush.bf16.msra.mxu0 %v1918
    %2509 = vmatpush.bf16.msra.mxu0 %v1911
    %2510 = vmatpush.bf16.msra.mxu0 %v1904
    %2511 = vmatpush.bf16.msra.mxu0 %v1897
    %2512 = vmatmul.bf16.gmra.mxu0 %v585
    %v2513 = vpop.f32.mrf.mxu0
    %v2514 = vadd.f32 %v2501, %v2513
    %v2515 = vpop.f32.mrf.mxu0
    %2516 = vdwg.mxu0
    %2517 = vmatpush.bf16.msra.mxu0 %v2002
    %2518 = vmatpush.bf16.msra.mxu0 %v1995
    %2519 = vmatpush.bf16.msra.mxu0 %v1988
    %2520 = vmatpush.bf16.msra.mxu0 %v1981
    %2521 = vmatpush.bf16.msra.mxu0 %v1974
    %2522 = vmatpush.bf16.msra.mxu0 %v1967
    %2523 = vmatpush.bf16.msra.mxu0 %v1960
    %2524 = vmatpush.bf16.msra.mxu0 %v1953
    %2525 = vmatmul.bf16.gmra.mxu0 %v586
    %v2526 = vpop.f32.mrf.mxu0
    %v2527 = vadd.f32 %v2514, %v2526
    %v2528 = vpop.f32.mrf.mxu0
    %2529 = vdwg.mxu0
    %2530 = vmatpush.bf16.msra.mxu0 0
    %2531 = vmatpush.bf16.msra.mxu0 0
    %2532 = vmatpush.bf16.msra.mxu0 0
    %2533 = vmatpush.bf16.msra.mxu0 0
    %2534 = vmatpush.bf16.msra.mxu0 0
    %2535 = vmatpush.bf16.msra.mxu0 0
    %2536 = vmatpush.bf16.msra.mxu0 0
    %2537 = vmatpush.bf16.msra.mxu0 %v2009
    %2538 = vmatmul.bf16.gmra.mxu0 %v2359
    %v2539 = vpop.f32.mrf.mxu0
    %v2540 = vadd.f32 %v2527, %v2539
    %v2541 = vpop.f32.mrf.mxu0
    %2542 = vdwg.mxu0
    %2543 = vmatpush.bf16.msra.mxu0 %v1723
    %2544 = vmatpush.bf16.msra.mxu0 %v1716
    %2545 = vmatpush.bf16.msra.mxu0 %v1709
    %2546 = vmatpush.bf16.msra.mxu0 %v1702
    %2547 = vmatpush.bf16.msra.mxu0 %v1695
    %2548 = vmatpush.bf16.msra.mxu0 %v1688
    %2549 = vmatpush.bf16.msra.mxu0 %v1681
    %2550 = vmatpush.bf16.msra.mxu0 %v1674
    %2551 = vmatmul.bf16.gmra.mxu0 %v581
    %v2552 = vpop.f32.mrf.mxu0
    %v2553 = vadd.f32 0.0, %v2552
    %v2554 = vpop.f32.mrf.mxu0
    %2555 = vdwg.mxu0
    %2556 = vmatpush.bf16.msra.mxu0 %v1779
    %2557 = vmatpush.bf16.msra.mxu0 %v1772
    %2558 = vmatpush.bf16.msra.mxu0 %v1765
    %2559 = vmatpush.bf16.msra.mxu0 %v1758
    %2560 = vmatpush.bf16.msra.mxu0 %v1751
    %2561 = vmatpush.bf16.msra.mxu0 %v1744
    %2562 = vmatpush.bf16.msra.mxu0 %v1737
    %2563 = vmatpush.bf16.msra.mxu0 %v1730
    %2564 = vmatmul.bf16.gmra.mxu0 %v582
    %v2565 = vpop.f32.mrf.mxu0
    %v2566 = vadd.f32 %v2553, %v2565
    %v2567 = vpop.f32.mrf.mxu0
    %2568 = vdwg.mxu0
    %2569 = vmatpush.bf16.msra.mxu0 %v1835
    %2570 = vmatpush.bf16.msra.mxu0 %v1828
    %2571 = vmatpush.bf16.msra.mxu0 %v1821
    %2572 = vmatpush.bf16.msra.mxu0 %v1814
    %2573 = vmatpush.bf16.msra.mxu0 %v1807
    %2574 = vmatpush.bf16.msra.mxu0 %v1800
    %2575 = vmatpush.bf16.msra.mxu0 %v1793
    %2576 = vmatpush.bf16.msra.mxu0 %v1786
    %2577 = vmatmul.bf16.gmra.mxu0 %v583
    %v2578 = vpop.f32.mrf.mxu0
    %v2579 = vadd.f32 %v2566, %v2578
    %v2580 = vpop.f32.mrf.mxu0
    %2581 = vdwg.mxu0
    %2582 = vmatpush.bf16.msra.mxu0 %v1891
    %2583 = vmatpush.bf16.msra.mxu0 %v1884
    %2584 = vmatpush.bf16.msra.mxu0 %v1877
    %2585 = vmatpush.bf16.msra.mxu0 %v1870
    %2586 = vmatpush.bf16.msra.mxu0 %v1863
    %2587 = vmatpush.bf16.msra.mxu0 %v1856
    %2588 = vmatpush.bf16.msra.mxu0 %v1849
    %2589 = vmatpush.bf16.msra.mxu0 %v1842
    %2590 = vmatmul.bf16.gmra.mxu0 %v584
    %v2591 = vpop.f32.mrf.mxu0
    %v2592 = vadd.f32 %v2579, %v2591
    %v2593 = vpop.f32.mrf.mxu0
    %2594 = vdwg.mxu0
    %2595 = vmatpush.bf16.msra.mxu0 %v1947
    %2596 = vmatpush.bf16.msra.mxu0 %v1940
    %2597 = vmatpush.bf16.msra.mxu0 %v1933
    %2598 = vmatpush.bf16.msra.mxu0 %v1926
    %2599 = vmatpush.bf16.msra.mxu0 %v1919
    %2600 = vmatpush.bf16.msra.mxu0 %v1912
    %2601 = vmatpush.bf16.msra.mxu0 %v1905
    %2602 = vmatpush.bf16.msra.mxu0 %v1898
    %2603 = vmatmul.bf16.gmra.mxu0 %v585
    %v2604 = vpop.f32.mrf.mxu0
    %v2605 = vadd.f32 %v2592, %v2604
    %v2606 = vpop.f32.mrf.mxu0
    %2607 = vdwg.mxu0
    %2608 = vmatpush.bf16.msra.mxu0 %v2003
    %2609 = vmatpush.bf16.msra.mxu0 %v1996
    %2610 = vmatpush.bf16.msra.mxu0 %v1989
    %2611 = vmatpush.bf16.msra.mxu0 %v1982
    %2612 = vmatpush.bf16.msra.mxu0 %v1975
    %2613 = vmatpush.bf16.msra.mxu0 %v1968
    %2614 = vmatpush.bf16.msra.mxu0 %v1961
    %2615 = vmatpush.bf16.msra.mxu0 %v1954
    %2616 = vmatmul.bf16.gmra.mxu0 %v586
    %v2617 = vpop.f32.mrf.mxu0
    %v2618 = vadd.f32 %v2605, %v2617
    %v2619 = vpop.f32.mrf.mxu0
    %2620 = vdwg.mxu0
    %2621 = vmatpush.bf16.msra.mxu0 0
    %2622 = vmatpush.bf16.msra.mxu0 0
    %2623 = vmatpush.bf16.msra.mxu0 0
    %2624 = vmatpush.bf16.msra.mxu0 0
    %2625 = vmatpush.bf16.msra.mxu0 0
    %2626 = vmatpush.bf16.msra.mxu0 0
    %2627 = vmatpush.bf16.msra.mxu0 0
    %2628 = vmatpush.bf16.msra.mxu0 %v2010
    %2629 = vmatmul.bf16.gmra.mxu0 %v2359
    %v2630 = vpop.f32.mrf.mxu0
    %v2631 = vadd.f32 %v2618, %v2630
    %v2632 = vpop.f32.mrf.mxu0
    %2633 = vdwg.mxu0
    %2634 = vmatpush.bf16.msra.mxu0 %v1724
    %2635 = vmatpush.bf16.msra.mxu0 %v1717
    %2636 = vmatpush.bf16.msra.mxu0 %v1710
    %2637 = vmatpush.bf16.msra.mxu0 %v1703
    %2638 = vmatpush.bf16.msra.mxu0 %v1696
    %2639 = vmatpush.bf16.msra.mxu0 %v1689
    %2640 = vmatpush.bf16.msra.mxu0 %v1682
    %2641 = vmatpush.bf16.msra.mxu0 %v1675
    %2642 = vmatmul.bf16.gmra.mxu0 %v581
    %v2643 = vpop.f32.mrf.mxu0
    %v2644 = vadd.f32 0.0, %v2643
    %v2645 = vpop.f32.mrf.mxu0
    %2646 = vdwg.mxu0
    %2647 = vmatpush.bf16.msra.mxu0 %v1780
    %2648 = vmatpush.bf16.msra.mxu0 %v1773
    %2649 = vmatpush.bf16.msra.mxu0 %v1766
    %2650 = vmatpush.bf16.msra.mxu0 %v1759
    %2651 = vmatpush.bf16.msra.mxu0 %v1752
    %2652 = vmatpush.bf16.msra.mxu0 %v1745
    %2653 = vmatpush.bf16.msra.mxu0 %v1738
    %2654 = vmatpush.bf16.msra.mxu0 %v1731
    %2655 = vmatmul.bf16.gmra.mxu0 %v582
    %v2656 = vpop.f32.mrf.mxu0
    %v2657 = vadd.f32 %v2644, %v2656
    %v2658 = vpop.f32.mrf.mxu0
    %2659 = vdwg.mxu0
    %2660 = vmatpush.bf16.msra.mxu0 %v1836
    %2661 = vmatpush.bf16.msra.mxu0 %v1829
    %2662 = vmatpush.bf16.msra.mxu0 %v1822
    %2663 = vmatpush.bf16.msra.mxu0 %v1815
    %2664 = vmatpush.bf16.msra.mxu0 %v1808
    %2665 = vmatpush.bf16.msra.mxu0 %v1801
    %2666 = vmatpush.bf16.msra.mxu0 %v1794
    %2667 = vmatpush.bf16.msra.mxu0 %v1787
    %2668 = vmatmul.bf16.gmra.mxu0 %v583
    %v2669 = vpop.f32.mrf.mxu0
    %v2670 = vadd.f32 %v2657, %v2669
    %v2671 = vpop.f32.mrf.mxu0
    %2672 = vdwg.mxu0
    %2673 = vmatpush.bf16.msra.mxu0 %v1892
    %2674 = vmatpush.bf16.msra.mxu0 %v1885
    %2675 = vmatpush.bf16.msra.mxu0 %v1878
    %2676 = vmatpush.bf16.msra.mxu0 %v1871
    %2677 = vmatpush.bf16.msra.mxu0 %v1864
    %2678 = vmatpush.bf16.msra.mxu0 %v1857
    %2679 = vmatpush.bf16.msra.mxu0 %v1850
    %2680 = vmatpush.bf16.msra.mxu0 %v1843
    %2681 = vmatmul.bf16.gmra.mxu0 %v584
    %v2682 = vpop.f32.mrf.mxu0
    %v2683 = vadd.f32 %v2670, %v2682
    %v2684 = vpop.f32.mrf.mxu0
    %2685 = vdwg.mxu0
    %2686 = vmatpush.bf16.msra.mxu0 %v1948
    %2687 = vmatpush.bf16.msra.mxu0 %v1941
    %2688 = vmatpush.bf16.msra.mxu0 %v1934
    %2689 = vmatpush.bf16.msra.mxu0 %v1927
    %2690 = vmatpush.bf16.msra.mxu0 %v1920
    %2691 = vmatpush.bf16.msra.mxu0 %v1913
    %2692 = vmatpush.bf16.msra.mxu0 %v1906
    %2693 = vmatpush.bf16.msra.mxu0 %v1899
    %2694 = vmatmul.bf16.gmra.mxu0 %v585
    %v2695 = vpop.f32.mrf.mxu0
    %v2696 = vadd.f32 %v2683, %v2695
    %v2697 = vpop.f32.mrf.mxu0
    %2698 = vdwg.mxu0
    %2699 = vmatpush.bf16.msra.mxu0 %v2004
    %2700 = vmatpush.bf16.msra.mxu0 %v1997
    %2701 = vmatpush.bf16.msra.mxu0 %v1990
    %2702 = vmatpush.bf16.msra.mxu0 %v1983
    %2703 = vmatpush.bf16.msra.mxu0 %v1976
    %2704 = vmatpush.bf16.msra.mxu0 %v1969
    %2705 = vmatpush.bf16.msra.mxu0 %v1962
    %2706 = vmatpush.bf16.msra.mxu0 %v1955
    %2707 = vmatmul.bf16.gmra.mxu0 %v586
    %v2708 = vpop.f32.mrf.mxu0
    %v2709 = vadd.f32 %v2696, %v2708
    %v2710 = vpop.f32.mrf.mxu0
    %2711 = vdwg.mxu0
    %2712 = vmatpush.bf16.msra.mxu0 0
    %2713 = vmatpush.bf16.msra.mxu0 0
    %2714 = vmatpush.bf16.msra.mxu0 0
    %2715 = vmatpush.bf16.msra.mxu0 0
    %2716 = vmatpush.bf16.msra.mxu0 0
    %2717 = vmatpush.bf16.msra.mxu0 0
    %2718 = vmatpush.bf16.msra.mxu0 0
    %2719 = vmatpush.bf16.msra.mxu0 %v2011
    %2720 = vmatmul.bf16.gmra.mxu0 %v2359
    %v2721 = vpop.f32.mrf.mxu0
    %v2722 = vadd.f32 %v2709, %v2721
    %v2723 = vpop.f32.mrf.mxu0
    %2724 = vdwg.mxu0
    %2725 = vmatpush.bf16.msra.mxu0 %v1725
    %2726 = vmatpush.bf16.msra.mxu0 %v1718
    %2727 = vmatpush.bf16.msra.mxu0 %v1711
    %2728 = vmatpush.bf16.msra.mxu0 %v1704
    %2729 = vmatpush.bf16.msra.mxu0 %v1697
    %2730 = vmatpush.bf16.msra.mxu0 %v1690
    %2731 = vmatpush.bf16.msra.mxu0 %v1683
    %2732 = vmatpush.bf16.msra.mxu0 %v1676
    %2733 = vmatmul.bf16.gmra.mxu0 %v581
    %v2734 = vpop.f32.mrf.mxu0
    %v2735 = vadd.f32 0.0, %v2734
    %v2736 = vpop.f32.mrf.mxu0
    %2737 = vdwg.mxu0
    %2738 = vmatpush.bf16.msra.mxu0 %v1781
    %2739 = vmatpush.bf16.msra.mxu0 %v1774
    %2740 = vmatpush.bf16.msra.mxu0 %v1767
    %2741 = vmatpush.bf16.msra.mxu0 %v1760
    %2742 = vmatpush.bf16.msra.mxu0 %v1753
    %2743 = vmatpush.bf16.msra.mxu0 %v1746
    %2744 = vmatpush.bf16.msra.mxu0 %v1739
    %2745 = vmatpush.bf16.msra.mxu0 %v1732
    %2746 = vmatmul.bf16.gmra.mxu0 %v582
    %v2747 = vpop.f32.mrf.mxu0
    %v2748 = vadd.f32 %v2735, %v2747
    %v2749 = vpop.f32.mrf.mxu0
    %2750 = vdwg.mxu0
    %2751 = vmatpush.bf16.msra.mxu0 %v1837
    %2752 = vmatpush.bf16.msra.mxu0 %v1830
    %2753 = vmatpush.bf16.msra.mxu0 %v1823
    %2754 = vmatpush.bf16.msra.mxu0 %v1816
    %2755 = vmatpush.bf16.msra.mxu0 %v1809
    %2756 = vmatpush.bf16.msra.mxu0 %v1802
    %2757 = vmatpush.bf16.msra.mxu0 %v1795
    %2758 = vmatpush.bf16.msra.mxu0 %v1788
    %2759 = vmatmul.bf16.gmra.mxu0 %v583
    %v2760 = vpop.f32.mrf.mxu0
    %v2761 = vadd.f32 %v2748, %v2760
    %v2762 = vpop.f32.mrf.mxu0
    %2763 = vdwg.mxu0
    %2764 = vmatpush.bf16.msra.mxu0 %v1893
    %2765 = vmatpush.bf16.msra.mxu0 %v1886
    %2766 = vmatpush.bf16.msra.mxu0 %v1879
    %2767 = vmatpush.bf16.msra.mxu0 %v1872
    %2768 = vmatpush.bf16.msra.mxu0 %v1865
    %2769 = vmatpush.bf16.msra.mxu0 %v1858
    %2770 = vmatpush.bf16.msra.mxu0 %v1851
    %2771 = vmatpush.bf16.msra.mxu0 %v1844
    %2772 = vmatmul.bf16.gmra.mxu0 %v584
    %v2773 = vpop.f32.mrf.mxu0
    %v2774 = vadd.f32 %v2761, %v2773
    %v2775 = vpop.f32.mrf.mxu0
    %2776 = vdwg.mxu0
    %2777 = vmatpush.bf16.msra.mxu0 %v1949
    %2778 = vmatpush.bf16.msra.mxu0 %v1942
    %2779 = vmatpush.bf16.msra.mxu0 %v1935
    %2780 = vmatpush.bf16.msra.mxu0 %v1928
    %2781 = vmatpush.bf16.msra.mxu0 %v1921
    %2782 = vmatpush.bf16.msra.mxu0 %v1914
    %2783 = vmatpush.bf16.msra.mxu0 %v1907
    %2784 = vmatpush.bf16.msra.mxu0 %v1900
    %2785 = vmatmul.bf16.gmra.mxu0 %v585
    %v2786 = vpop.f32.mrf.mxu0
    %v2787 = vadd.f32 %v2774, %v2786
    %v2788 = vpop.f32.mrf.mxu0
    %2789 = vdwg.mxu0
    %2790 = vmatpush.bf16.msra.mxu0 %v2005
    %2791 = vmatpush.bf16.msra.mxu0 %v1998
    %2792 = vmatpush.bf16.msra.mxu0 %v1991
    %2793 = vmatpush.bf16.msra.mxu0 %v1984
    %2794 = vmatpush.bf16.msra.mxu0 %v1977
    %2795 = vmatpush.bf16.msra.mxu0 %v1970
    %2796 = vmatpush.bf16.msra.mxu0 %v1963
    %2797 = vmatpush.bf16.msra.mxu0 %v1956
    %2798 = vmatmul.bf16.gmra.mxu0 %v586
    %v2799 = vpop.f32.mrf.mxu0
    %v2800 = vadd.f32 %v2787, %v2799
    %v2801 = vpop.f32.mrf.mxu0
    %2802 = vdwg.mxu0
    %2803 = vmatpush.bf16.msra.mxu0 0
    %2804 = vmatpush.bf16.msra.mxu0 0
    %2805 = vmatpush.bf16.msra.mxu0 0
    %2806 = vmatpush.bf16.msra.mxu0 0
    %2807 = vmatpush.bf16.msra.mxu0 0
    %2808 = vmatpush.bf16.msra.mxu0 0
    %2809 = vmatpush.bf16.msra.mxu0 0
    %2810 = vmatpush.bf16.msra.mxu0 %v2012
    %2811 = vmatmul.bf16.gmra.mxu0 %v2359
    %v2812 = vpop.f32.mrf.mxu0
    %v2813 = vadd.f32 %v2800, %v2812
    %v2814 = vpop.f32.mrf.mxu0
    %2815 = vdwg.mxu0
    %2816 = vmatpush.bf16.msra.mxu0 %v1726
    %2817 = vmatpush.bf16.msra.mxu0 %v1719
    %2818 = vmatpush.bf16.msra.mxu0 %v1712
    %2819 = vmatpush.bf16.msra.mxu0 %v1705
    %2820 = vmatpush.bf16.msra.mxu0 %v1698
    %2821 = vmatpush.bf16.msra.mxu0 %v1691
    %2822 = vmatpush.bf16.msra.mxu0 %v1684
    %2823 = vmatpush.bf16.msra.mxu0 %v1677
    %2824 = vmatmul.bf16.gmra.mxu0 %v581
    %v2825 = vpop.f32.mrf.mxu0
    %v2826 = vadd.f32 0.0, %v2825
    %v2827 = vpop.f32.mrf.mxu0
    %2828 = vdwg.mxu0
    %2829 = vmatpush.bf16.msra.mxu0 %v1782
    %2830 = vmatpush.bf16.msra.mxu0 %v1775
    %2831 = vmatpush.bf16.msra.mxu0 %v1768
    %2832 = vmatpush.bf16.msra.mxu0 %v1761
    %2833 = vmatpush.bf16.msra.mxu0 %v1754
    %2834 = vmatpush.bf16.msra.mxu0 %v1747
    %2835 = vmatpush.bf16.msra.mxu0 %v1740
    %2836 = vmatpush.bf16.msra.mxu0 %v1733
    %2837 = vmatmul.bf16.gmra.mxu0 %v582
    %v2838 = vpop.f32.mrf.mxu0
    %v2839 = vadd.f32 %v2826, %v2838
    %v2840 = vpop.f32.mrf.mxu0
    %2841 = vdwg.mxu0
    %2842 = vmatpush.bf16.msra.mxu0 %v1838
    %2843 = vmatpush.bf16.msra.mxu0 %v1831
    %2844 = vmatpush.bf16.msra.mxu0 %v1824
    %2845 = vmatpush.bf16.msra.mxu0 %v1817
    %2846 = vmatpush.bf16.msra.mxu0 %v1810
    %2847 = vmatpush.bf16.msra.mxu0 %v1803
    %2848 = vmatpush.bf16.msra.mxu0 %v1796
    %2849 = vmatpush.bf16.msra.mxu0 %v1789
    %2850 = vmatmul.bf16.gmra.mxu0 %v583
    %v2851 = vpop.f32.mrf.mxu0
    %v2852 = vadd.f32 %v2839, %v2851
    %v2853 = vpop.f32.mrf.mxu0
    %2854 = vdwg.mxu0
    %2855 = vmatpush.bf16.msra.mxu0 %v1894
    %2856 = vmatpush.bf16.msra.mxu0 %v1887
    %2857 = vmatpush.bf16.msra.mxu0 %v1880
    %2858 = vmatpush.bf16.msra.mxu0 %v1873
    %2859 = vmatpush.bf16.msra.mxu0 %v1866
    %2860 = vmatpush.bf16.msra.mxu0 %v1859
    %2861 = vmatpush.bf16.msra.mxu0 %v1852
    %2862 = vmatpush.bf16.msra.mxu0 %v1845
    %2863 = vmatmul.bf16.gmra.mxu0 %v584
    %v2864 = vpop.f32.mrf.mxu0
    %v2865 = vadd.f32 %v2852, %v2864
    %v2866 = vpop.f32.mrf.mxu0
    %2867 = vdwg.mxu0
    %2868 = vmatpush.bf16.msra.mxu0 %v1950
    %2869 = vmatpush.bf16.msra.mxu0 %v1943
    %2870 = vmatpush.bf16.msra.mxu0 %v1936
    %2871 = vmatpush.bf16.msra.mxu0 %v1929
    %2872 = vmatpush.bf16.msra.mxu0 %v1922
    %2873 = vmatpush.bf16.msra.mxu0 %v1915
    %2874 = vmatpush.bf16.msra.mxu0 %v1908
    %2875 = vmatpush.bf16.msra.mxu0 %v1901
    %2876 = vmatmul.bf16.gmra.mxu0 %v585
    %v2877 = vpop.f32.mrf.mxu0
    %v2878 = vadd.f32 %v2865, %v2877
    %v2879 = vpop.f32.mrf.mxu0
    %2880 = vdwg.mxu0
    %2881 = vmatpush.bf16.msra.mxu0 %v2006
    %2882 = vmatpush.bf16.msra.mxu0 %v1999
    %2883 = vmatpush.bf16.msra.mxu0 %v1992
    %2884 = vmatpush.bf16.msra.mxu0 %v1985
    %2885 = vmatpush.bf16.msra.mxu0 %v1978
    %2886 = vmatpush.bf16.msra.mxu0 %v1971
    %2887 = vmatpush.bf16.msra.mxu0 %v1964
    %2888 = vmatpush.bf16.msra.mxu0 %v1957
    %2889 = vmatmul.bf16.gmra.mxu0 %v586
    %v2890 = vpop.f32.mrf.mxu0
    %v2891 = vadd.f32 %v2878, %v2890
    %v2892 = vpop.f32.mrf.mxu0
    %2893 = vdwg.mxu0
    %2894 = vmatpush.bf16.msra.mxu0 0
    %2895 = vmatpush.bf16.msra.mxu0 0
    %2896 = vmatpush.bf16.msra.mxu0 0
    %2897 = vmatpush.bf16.msra.mxu0 0
    %2898 = vmatpush.bf16.msra.mxu0 0
    %2899 = vmatpush.bf16.msra.mxu0 0
    %2900 = vmatpush.bf16.msra.mxu0 0
    %2901 = vmatpush.bf16.msra.mxu0 %v2013
    %2902 = vmatmul.bf16.gmra.mxu0 %v2359
    %v2903 = vpop.f32.mrf.mxu0
    %v2904 = vadd.f32 %v2891, %v2903
    %v2905 = vpop.f32.mrf.mxu0
    %2906 = vdwg.mxu0
    %2907 = vmatpush.bf16.msra.mxu0 %v1727
    %2908 = vmatpush.bf16.msra.mxu0 %v1720
    %2909 = vmatpush.bf16.msra.mxu0 %v1713
    %2910 = vmatpush.bf16.msra.mxu0 %v1706
    %2911 = vmatpush.bf16.msra.mxu0 %v1699
    %2912 = vmatpush.bf16.msra.mxu0 %v1692
    %2913 = vmatpush.bf16.msra.mxu0 %v1685
    %2914 = vmatpush.bf16.msra.mxu0 %v1678
    %2915 = vmatmul.bf16.gmra.mxu0 %v581
    %v2916 = vpop.f32.mrf.mxu0
    %v2917 = vadd.f32 0.0, %v2916
    %v2918 = vpop.f32.mrf.mxu0
    %2919 = vdwg.mxu0
    %2920 = vmatpush.bf16.msra.mxu0 %v1783
    %2921 = vmatpush.bf16.msra.mxu0 %v1776
    %2922 = vmatpush.bf16.msra.mxu0 %v1769
    %2923 = vmatpush.bf16.msra.mxu0 %v1762
    %2924 = vmatpush.bf16.msra.mxu0 %v1755
    %2925 = vmatpush.bf16.msra.mxu0 %v1748
    %2926 = vmatpush.bf16.msra.mxu0 %v1741
    %2927 = vmatpush.bf16.msra.mxu0 %v1734
    %2928 = vmatmul.bf16.gmra.mxu0 %v582
    %v2929 = vpop.f32.mrf.mxu0
    %v2930 = vadd.f32 %v2917, %v2929
    %v2931 = vpop.f32.mrf.mxu0
    %2932 = vdwg.mxu0
    %2933 = vmatpush.bf16.msra.mxu0 %v1839
    %2934 = vmatpush.bf16.msra.mxu0 %v1832
    %2935 = vmatpush.bf16.msra.mxu0 %v1825
    %2936 = vmatpush.bf16.msra.mxu0 %v1818
    %2937 = vmatpush.bf16.msra.mxu0 %v1811
    %2938 = vmatpush.bf16.msra.mxu0 %v1804
    %2939 = vmatpush.bf16.msra.mxu0 %v1797
    %2940 = vmatpush.bf16.msra.mxu0 %v1790
    %2941 = vmatmul.bf16.gmra.mxu0 %v583
    %v2942 = vpop.f32.mrf.mxu0
    %v2943 = vadd.f32 %v2930, %v2942
    %v2944 = vpop.f32.mrf.mxu0
    %2945 = vdwg.mxu0
    %2946 = vmatpush.bf16.msra.mxu0 %v1895
    %2947 = vmatpush.bf16.msra.mxu0 %v1888
    %2948 = vmatpush.bf16.msra.mxu0 %v1881
    %2949 = vmatpush.bf16.msra.mxu0 %v1874
    %2950 = vmatpush.bf16.msra.mxu0 %v1867
    %2951 = vmatpush.bf16.msra.mxu0 %v1860
    %2952 = vmatpush.bf16.msra.mxu0 %v1853
    %2953 = vmatpush.bf16.msra.mxu0 %v1846
    %2954 = vmatmul.bf16.gmra.mxu0 %v584
    %v2955 = vpop.f32.mrf.mxu0
    %v2956 = vadd.f32 %v2943, %v2955
    %v2957 = vpop.f32.mrf.mxu0
    %2958 = vdwg.mxu0
    %2959 = vmatpush.bf16.msra.mxu0 %v1951
    %2960 = vmatpush.bf16.msra.mxu0 %v1944
    %2961 = vmatpush.bf16.msra.mxu0 %v1937
    %2962 = vmatpush.bf16.msra.mxu0 %v1930
    %2963 = vmatpush.bf16.msra.mxu0 %v1923
    %2964 = vmatpush.bf16.msra.mxu0 %v1916
    %2965 = vmatpush.bf16.msra.mxu0 %v1909
    %2966 = vmatpush.bf16.msra.mxu0 %v1902
    %2967 = vmatmul.bf16.gmra.mxu0 %v585
    %v2968 = vpop.f32.mrf.mxu0
    %v2969 = vadd.f32 %v2956, %v2968
    %v2970 = vpop.f32.mrf.mxu0
    %2971 = vdwg.mxu0
    %2972 = vmatpush.bf16.msra.mxu0 %v2007
    %2973 = vmatpush.bf16.msra.mxu0 %v2000
    %2974 = vmatpush.bf16.msra.mxu0 %v1993
    %2975 = vmatpush.bf16.msra.mxu0 %v1986
    %2976 = vmatpush.bf16.msra.mxu0 %v1979
    %2977 = vmatpush.bf16.msra.mxu0 %v1972
    %2978 = vmatpush.bf16.msra.mxu0 %v1965
    %2979 = vmatpush.bf16.msra.mxu0 %v1958
    %2980 = vmatmul.bf16.gmra.mxu0 %v586
    %v2981 = vpop.f32.mrf.mxu0
    %v2982 = vadd.f32 %v2969, %v2981
    %v2983 = vpop.f32.mrf.mxu0
    %2984 = vdwg.mxu0
    %2985 = vmatpush.bf16.msra.mxu0 0
    %2986 = vmatpush.bf16.msra.mxu0 0
    %2987 = vmatpush.bf16.msra.mxu0 0
    %2988 = vmatpush.bf16.msra.mxu0 0
    %2989 = vmatpush.bf16.msra.mxu0 0
    %2990 = vmatpush.bf16.msra.mxu0 0
    %2991 = vmatpush.bf16.msra.mxu0 0
    %2992 = vmatpush.bf16.msra.mxu0 %v2014
    %2993 = vmatmul.bf16.gmra.mxu0 %v2359
    %v2994 = vpop.f32.mrf.mxu0
    %v2995 = vadd.f32 %v2982, %v2994
    %v2996 = vpop.f32.mrf.mxu0
    %2997 = vdwg.mxu0
    %s2998 = scalar_lea.vmem [#allocation2], 2744
    %v2999 = vld [vmem:[%s2998] sm:$0xff]
    %v3000 = vld [vmem:[%s2998 + $0x8] sm:$0xff]
    %v3001 = vld [vmem:[%s2998 + $0x10] sm:$0xff]
    %v3002 = vld [vmem:[%s2998 + $0x18] sm:$0xf]
    %v3003 = vld [vmem:[%s2998 + $0x1c] sm:$0xff]
    %v3004 = vld [vmem:[%s2998 + $0x24] sm:$0xff]
    %v3005 = vld [vmem:[%s2998 + $0x2c] sm:$0xff]
    %v3006 = vld [vmem:[%s2998 + $0x34] sm:$0xf]
    %v3007 = vld [vmem:[%s2998 + $0x38] sm:$0xff]
    %v3008 = vld [vmem:[%s2998 + $0x40] sm:$0xff]
    %v3009 = vld [vmem:[%s2998 + $0x48] sm:$0xff]
    %v3010 = vld [vmem:[%s2998 + $0x50] sm:$0xf]
    %v3011 = vld [vmem:[%s2998 + $0x54] sm:$0xff]
    %v3012 = vld [vmem:[%s2998 + $0x5c] sm:$0xff]
    %v3013 = vld [vmem:[%s2998 + $0x64] sm:$0xff]
    %v3014 = vld [vmem:[%s2998 + $0x6c] sm:$0xf]
    %v3015 = vld [vmem:[%s2998 + $0x70] sm:$0xff]
    %v3016 = vld [vmem:[%s2998 + $0x78] sm:$0xff]
    %v3017 = vld [vmem:[%s2998 + $0x80] sm:$0xff]
    %v3018 = vld [vmem:[%s2998 + $0x88] sm:$0xf]
    %v3019 = vld [vmem:[%s2998 + $0x8c] sm:$0xff]
    %v3020 = vld [vmem:[%s2998 + $0x94] sm:$0xff]
    %v3021 = vld [vmem:[%s2998 + $0x9c] sm:$0xff]
    %v3022 = vld [vmem:[%s2998 + $0xa4] sm:$0xf]
    %v3023 = vld [vmem:[%s2998 + $0xa8] sm:$0xff]
    %v3024 = vld [vmem:[%s2998 + $0xb0] sm:$0xff]
    %v3025 = vld [vmem:[%s2998 + $0xb8] sm:$0xff]
    %v3026 = vld [vmem:[%s2998 + $0xc0] sm:$0xf]
    %v3027 = vld [vmem:[%s2998 + $0xc4] sm:$0xff]
    %v3028 = vld [vmem:[%s2998 + $0xcc] sm:$0xff]
    %v3029 = vld [vmem:[%s2998 + $0xd4] sm:$0xff]
    %v3030 = vld [vmem:[%s2998 + $0xdc] sm:$0xf]
    %v3031 = vld [vmem:[%s2998 + $0xe0] sm:$0xff]
    %v3032 = vld [vmem:[%s2998 + $0xe8] sm:$0xff]
    %v3033 = vld [vmem:[%s2998 + $0xf0] sm:$0xff]
    %v3034 = vld [vmem:[%s2998 + $0xf8] sm:$0xf]
    %v3035 = vld [vmem:[%s2998 + $0xfc] sm:$0xff]
    %v3036 = vld [vmem:[%s2998 + $0x104] sm:$0xff]
    %v3037 = vld [vmem:[%s2998 + $0x10c] sm:$0xff]
    %v3038 = vld [vmem:[%s2998 + $0x114] sm:$0xf]
    %v3039 = vld [vmem:[%s2998 + $0x118] sm:$0xff]
    %v3040 = vld [vmem:[%s2998 + $0x120] sm:$0xff]
    %v3041 = vld [vmem:[%s2998 + $0x128] sm:$0xff]
    %v3042 = vld [vmem:[%s2998 + $0x130] sm:$0xf]
    %v3043 = vld [vmem:[%s2998 + $0x134] sm:$0xff]
    %v3044 = vld [vmem:[%s2998 + $0x13c] sm:$0xff]
    %v3045 = vld [vmem:[%s2998 + $0x144] sm:$0xff]
    %v3046 = vld [vmem:[%s2998 + $0x14c] sm:$0xf]
    %v3047 = vld [vmem:[%s2998 + $0x150] sm:$0xff]
    %v3048 = vld [vmem:[%s2998 + $0x158] sm:$0xff]
    %v3049 = vld [vmem:[%s2998 + $0x160] sm:$0xff]
    %v3050 = vld [vmem:[%s2998 + $0x168] sm:$0xf]
    %v3051 = vld [vmem:[%s2998 + $0x16c] sm:$0xff]
    %v3052 = vld [vmem:[%s2998 + $0x174] sm:$0xff]
    %v3053 = vld [vmem:[%s2998 + $0x17c] sm:$0xff]
    %v3054 = vld [vmem:[%s2998 + $0x184] sm:$0xf]
    %v3055 = vld [vmem:[%s2998 + $0x188] sm:$0xff]
    %v3056 = vld [vmem:[%s2998 + $0x190] sm:$0xff]
    %v3057 = vld [vmem:[%s2998 + $0x198] sm:$0xff]
    %v3058 = vld [vmem:[%s2998 + $0x1a0] sm:$0xf]
    %v3059 = vld [vmem:[%s2998 + $0x1a4] sm:$0xff]
    %v3060 = vld [vmem:[%s2998 + $0x1ac] sm:$0xff]
    %v3061 = vld [vmem:[%s2998 + $0x1b4] sm:$0xff]
    %v3062 = vld [vmem:[%s2998 + $0x1bc] sm:$0xf]
    %v3063 = vld [vmem:[%s2998 + $0x1c0] sm:$0xff]
    %v3064 = vld [vmem:[%s2998 + $0x1c8] sm:$0xff]
    %v3065 = vld [vmem:[%s2998 + $0x1d0] sm:$0xff]
    %v3066 = vld [vmem:[%s2998 + $0x1d8] sm:$0xf]
    %v3067 = vld [vmem:[%s2998 + $0x1dc] sm:$0xff]
    %v3068 = vld [vmem:[%s2998 + $0x1e4] sm:$0xff]
    %v3069 = vld [vmem:[%s2998 + $0x1ec] sm:$0xff]
    %v3070 = vld [vmem:[%s2998 + $0x1f4] sm:$0xf]
    %v3071 = vld [vmem:[%s2998 + $0x1f8] sm:$0xff]
    %v3072 = vld [vmem:[%s2998 + $0x200] sm:$0xff]
    %v3073 = vld [vmem:[%s2998 + $0x208] sm:$0xff]
    %v3074 = vld [vmem:[%s2998 + $0x210] sm:$0xf]
    %v3075 = vld [vmem:[%s2998 + $0x214] sm:$0xff]
    %v3076 = vld [vmem:[%s2998 + $0x21c] sm:$0xff]
    %v3077 = vld [vmem:[%s2998 + $0x224] sm:$0xff]
    %v3078 = vld [vmem:[%s2998 + $0x22c] sm:$0xf]
    %v3079 = vld [vmem:[%s2998 + $0x230] sm:$0xff]
    %v3080 = vld [vmem:[%s2998 + $0x238] sm:$0xff]
    %v3081 = vld [vmem:[%s2998 + $0x240] sm:$0xff]
    %v3082 = vld [vmem:[%s2998 + $0x248] sm:$0xf]
    %v3083 = vld [vmem:[%s2998 + $0x24c] sm:$0xff]
    %v3084 = vld [vmem:[%s2998 + $0x254] sm:$0xff]
    %v3085 = vld [vmem:[%s2998 + $0x25c] sm:$0xff]
    %v3086 = vld [vmem:[%s2998 + $0x264] sm:$0xf]
    %v3087 = vld [vmem:[%s2998 + $0x268] sm:$0xff]
    %v3088 = vld [vmem:[%s2998 + $0x270] sm:$0xff]
    %v3089 = vld [vmem:[%s2998 + $0x278] sm:$0xff]
    %v3090 = vld [vmem:[%s2998 + $0x280] sm:$0xf]
    %v3091 = vld [vmem:[%s2998 + $0x284] sm:$0xff]
    %v3092 = vld [vmem:[%s2998 + $0x28c] sm:$0xff]
    %v3093 = vld [vmem:[%s2998 + $0x294] sm:$0xff]
    %v3094 = vld [vmem:[%s2998 + $0x29c] sm:$0xf]
    %v3095 = vld [vmem:[%s2998 + $0x2a0] sm:$0xff]
    %v3096 = vld [vmem:[%s2998 + $0x2a8] sm:$0xff]
    %v3097 = vld [vmem:[%s2998 + $0x2b0] sm:$0xff]
    %v3098 = vld [vmem:[%s2998 + $0x2b8] sm:$0xf]
    %v3099 = vld [vmem:[%s2998 + $0x2bc] sm:$0xff]
    %v3100 = vld [vmem:[%s2998 + $0x2c4] sm:$0xff]
    %v3101 = vld [vmem:[%s2998 + $0x2cc] sm:$0xff]
    %v3102 = vld [vmem:[%s2998 + $0x2d4] sm:$0xf]
    %v3103 = vld [vmem:[%s2998 + $0x2d8] sm:$0xff]
    %v3104 = vld [vmem:[%s2998 + $0x2e0] sm:$0xff]
    %v3105 = vld [vmem:[%s2998 + $0x2e8] sm:$0xff]
    %v3106 = vld [vmem:[%s2998 + $0x2f0] sm:$0xf]
    %v3107 = vld [vmem:[%s2998 + $0x2f4] sm:$0xff]
    %v3108 = vld [vmem:[%s2998 + $0x2fc] sm:$0xff]
    %v3109 = vld [vmem:[%s2998 + $0x304] sm:$0xff]
    %v3110 = vld [vmem:[%s2998 + $0x30c] sm:$0xf]
    %v3111 = vld [vmem:[%s2998 + $0x310] sm:$0xff]
    %v3112 = vld [vmem:[%s2998 + $0x318] sm:$0xff]
    %v3113 = vld [vmem:[%s2998 + $0x320] sm:$0xff]
    %v3114 = vld [vmem:[%s2998 + $0x328] sm:$0xf]
    %v3115 = vld [vmem:[%s2998 + $0x32c] sm:$0xff]
    %v3116 = vld [vmem:[%s2998 + $0x334] sm:$0xff]
    %v3117 = vld [vmem:[%s2998 + $0x33c] sm:$0xff]
    %v3118 = vld [vmem:[%s2998 + $0x344] sm:$0xf]
    %v3119 = vld [vmem:[%s2998 + $0x348] sm:$0xff]
    %v3120 = vld [vmem:[%s2998 + $0x350] sm:$0xff]
    %v3121 = vld [vmem:[%s2998 + $0x358] sm:$0xff]
    %v3122 = vld [vmem:[%s2998 + $0x360] sm:$0xf]
    %v3123 = vld [vmem:[%s2998 + $0x364] sm:$0xff]
    %v3124 = vld [vmem:[%s2998 + $0x36c] sm:$0xff]
    %v3125 = vld [vmem:[%s2998 + $0x374] sm:$0xff]
    %v3126 = vld [vmem:[%s2998 + $0x37c] sm:$0xf]
    %v3127 = vld [vmem:[%s2998 + $0x380] sm:$0xff]
    %v3128 = vld [vmem:[%s2998 + $0x388] sm:$0xff]
    %v3129 = vld [vmem:[%s2998 + $0x390] sm:$0xff]
    %v3130 = vld [vmem:[%s2998 + $0x398] sm:$0xf]
    %v3131 = vld [vmem:[%s2998 + $0x39c] sm:$0xff]
    %v3132 = vld [vmem:[%s2998 + $0x3a4] sm:$0xff]
    %v3133 = vld [vmem:[%s2998 + $0x3ac] sm:$0xff]
    %v3134 = vld [vmem:[%s2998 + $0x3b4] sm:$0xf]
    %v3135 = vld [vmem:[%s2998 + $0x3b8] sm:$0xff]
    %v3136 = vld [vmem:[%s2998 + $0x3c0] sm:$0xff]
    %v3137 = vld [vmem:[%s2998 + $0x3c8] sm:$0xff]
    %v3138 = vld [vmem:[%s2998 + $0x3d0] sm:$0xf]
    %v3139 = vld [vmem:[%s2998 + $0x3d4] sm:$0xff]
    %v3140 = vld [vmem:[%s2998 + $0x3dc] sm:$0xff]
    %v3141 = vld [vmem:[%s2998 + $0x3e4] sm:$0xff]
    %v3142 = vld [vmem:[%s2998 + $0x3ec] sm:$0xf]
    %v3143 = vld [vmem:[%s2998 + $0x3f0] sm:$0xff]
    %v3144 = vld [vmem:[%s2998 + $0x3f8] sm:$0xff]
    %v3145 = vld [vmem:[%s2998 + $0x400] sm:$0xff]
    %v3146 = vld [vmem:[%s2998 + $0x408] sm:$0xf]
    %v3147 = vld [vmem:[%s2998 + $0x40c] sm:$0xff]
    %v3148 = vld [vmem:[%s2998 + $0x414] sm:$0xff]
    %v3149 = vld [vmem:[%s2998 + $0x41c] sm:$0xff]
    %v3150 = vld [vmem:[%s2998 + $0x424] sm:$0xf]
    %v3151 = vld [vmem:[%s2998 + $0x428] sm:$0xff]
    %v3152 = vld [vmem:[%s2998 + $0x430] sm:$0xff]
    %v3153 = vld [vmem:[%s2998 + $0x438] sm:$0xff]
    %v3154 = vld [vmem:[%s2998 + $0x440] sm:$0xf]
    %v3155 = vld [vmem:[%s2998 + $0x444] sm:$0xff]
    %v3156 = vld [vmem:[%s2998 + $0x44c] sm:$0xff]
    %v3157 = vld [vmem:[%s2998 + $0x454] sm:$0xff]
    %v3158 = vld [vmem:[%s2998 + $0x45c] sm:$0xf]
    %v3159 = vld [vmem:[%s2998 + $0x460] sm:$0xff]
    %v3160 = vld [vmem:[%s2998 + $0x468] sm:$0xff]
    %v3161 = vld [vmem:[%s2998 + $0x470] sm:$0xff]
    %v3162 = vld [vmem:[%s2998 + $0x478] sm:$0xf]
    %v3163 = vld [vmem:[%s2998 + $0x47c] sm:$0xff]
    %v3164 = vld [vmem:[%s2998 + $0x484] sm:$0xff]
    %v3165 = vld [vmem:[%s2998 + $0x48c] sm:$0xff]
    %v3166 = vld [vmem:[%s2998 + $0x494] sm:$0xf]
    %v3167 = vld [vmem:[%s2998 + $0x498] sm:$0xff]
    %v3168 = vld [vmem:[%s2998 + $0x4a0] sm:$0xff]
    %v3169 = vld [vmem:[%s2998 + $0x4a8] sm:$0xff]
    %v3170 = vld [vmem:[%s2998 + $0x4b0] sm:$0xf]
    %v3171 = vld [vmem:[%s2998 + $0x4b4] sm:$0xff]
    %v3172 = vld [vmem:[%s2998 + $0x4bc] sm:$0xff]
    %v3173 = vld [vmem:[%s2998 + $0x4c4] sm:$0xff]
    %v3174 = vld [vmem:[%s2998 + $0x4cc] sm:$0xf]
    %v3175 = vld [vmem:[%s2998 + $0x4d0] sm:$0xff]
    %v3176 = vld [vmem:[%s2998 + $0x4d8] sm:$0xff]
    %v3177 = vld [vmem:[%s2998 + $0x4e0] sm:$0xff]
    %v3178 = vld [vmem:[%s2998 + $0x4e8] sm:$0xf]
    %v3179 = vld [vmem:[%s2998 + $0x4ec] sm:$0xff]
    %v3180 = vld [vmem:[%s2998 + $0x4f4] sm:$0xff]
    %v3181 = vld [vmem:[%s2998 + $0x4fc] sm:$0xff]
    %v3182 = vld [vmem:[%s2998 + $0x504] sm:$0xf]
    %v3183 = vld [vmem:[%s2998 + $0x508] sm:$0xff]
    %v3184 = vld [vmem:[%s2998 + $0x510] sm:$0xff]
    %v3185 = vld [vmem:[%s2998 + $0x518] sm:$0xff]
    %v3186 = vld [vmem:[%s2998 + $0x520] sm:$0xf]
    %v3187 = vld [vmem:[%s2998 + $0x524] sm:$0xff]
    %v3188 = vld [vmem:[%s2998 + $0x52c] sm:$0xff]
    %v3189 = vld [vmem:[%s2998 + $0x534] sm:$0xff]
    %v3190 = vld [vmem:[%s2998 + $0x53c] sm:$0xf]
    %v3191 = vld [vmem:[%s2998 + $0x540] sm:$0xff]
    %v3192 = vld [vmem:[%s2998 + $0x548] sm:$0xff]
    %v3193 = vld [vmem:[%s2998 + $0x550] sm:$0xff]
    %v3194 = vld [vmem:[%s2998 + $0x558] sm:$0xf]
    %v3195 = vld [vmem:[%s2998 + $0x55c] sm:$0xff]
    %v3196 = vld [vmem:[%s2998 + $0x564] sm:$0xff]
    %v3197 = vld [vmem:[%s2998 + $0x56c] sm:$0xff]
    %v3198 = vld [vmem:[%s2998 + $0x574] sm:$0xf]
    %v3199 = vld [vmem:[%s2998 + $0x578] sm:$0xff]
    %v3200 = vld [vmem:[%s2998 + $0x580] sm:$0xff]
    %v3201 = vld [vmem:[%s2998 + $0x588] sm:$0xff]
    %v3202 = vld [vmem:[%s2998 + $0x590] sm:$0xf]
    %v3203 = vld [vmem:[%s2998 + $0x594] sm:$0xff]
    %v3204 = vld [vmem:[%s2998 + $0x59c] sm:$0xff]
    %v3205 = vld [vmem:[%s2998 + $0x5a4] sm:$0xff]
    %v3206 = vld [vmem:[%s2998 + $0x5ac] sm:$0xf]
    %v3207 = vld [vmem:[%s2998 + $0x5b0] sm:$0xff]
    %v3208 = vld [vmem:[%s2998 + $0x5b8] sm:$0xff]
    %v3209 = vld [vmem:[%s2998 + $0x5c0] sm:$0xff]
    %v3210 = vld [vmem:[%s2998 + $0x5c8] sm:$0xf]
    %v3211 = vld [vmem:[%s2998 + $0x5cc] sm:$0xff]
    %v3212 = vld [vmem:[%s2998 + $0x5d4] sm:$0xff]
    %v3213 = vld [vmem:[%s2998 + $0x5dc] sm:$0xff]
    %v3214 = vld [vmem:[%s2998 + $0x5e4] sm:$0xf]
    %v3215 = vld [vmem:[%s2998 + $0x5e8] sm:$0xff]
    %v3216 = vld [vmem:[%s2998 + $0x5f0] sm:$0xff]
    %v3217 = vld [vmem:[%s2998 + $0x5f8] sm:$0xff]
    %v3218 = vld [vmem:[%s2998 + $0x600] sm:$0xf]
    %v3219 = vld [vmem:[%s2998 + $0x604] sm:$0xff]
    %v3220 = vld [vmem:[%s2998 + $0x60c] sm:$0xff]
    %v3221 = vld [vmem:[%s2998 + $0x614] sm:$0xff]
    %v3222 = vld [vmem:[%s2998 + $0x61c] sm:$0xf]
    %v3223 = vld [vmem:[%s2998 + $0x620] sm:$0xff]
    %v3224 = vld [vmem:[%s2998 + $0x628] sm:$0xff]
    %v3225 = vld [vmem:[%s2998 + $0x630] sm:$0xff]
    %v3226 = vld [vmem:[%s2998 + $0x638] sm:$0xf]
    %v3227 = vld [vmem:[%s2998 + $0x63c] sm:$0xff]
    %v3228 = vld [vmem:[%s2998 + $0x644] sm:$0xff]
    %v3229 = vld [vmem:[%s2998 + $0x64c] sm:$0xff]
    %v3230 = vld [vmem:[%s2998 + $0x654] sm:$0xf]
    %v3231 = vld [vmem:[%s2998 + $0x658] sm:$0xff]
    %v3232 = vld [vmem:[%s2998 + $0x660] sm:$0xff]
    %v3233 = vld [vmem:[%s2998 + $0x668] sm:$0xff]
    %v3234 = vld [vmem:[%s2998 + $0x670] sm:$0xf]
    %v3235 = vld [vmem:[%s2998 + $0x674] sm:$0xff]
    %v3236 = vld [vmem:[%s2998 + $0x67c] sm:$0xff]
    %v3237 = vld [vmem:[%s2998 + $0x684] sm:$0xff]
    %v3238 = vld [vmem:[%s2998 + $0x68c] sm:$0xf]
    %v3239 = vld [vmem:[%s2998 + $0x690] sm:$0xff]
    %v3240 = vld [vmem:[%s2998 + $0x698] sm:$0xff]
    %v3241 = vld [vmem:[%s2998 + $0x6a0] sm:$0xff]
    %v3242 = vld [vmem:[%s2998 + $0x6a8] sm:$0xf]
    %v3243 = vld [vmem:[%s2998 + $0x6ac] sm:$0xff]
    %v3244 = vld [vmem:[%s2998 + $0x6b4] sm:$0xff]
    %v3245 = vld [vmem:[%s2998 + $0x6bc] sm:$0xff]
    %v3246 = vld [vmem:[%s2998 + $0x6c4] sm:$0xf]
    %v3247 = vld [vmem:[%s2998 + $0x6c8] sm:$0xff]
    %v3248 = vld [vmem:[%s2998 + $0x6d0] sm:$0xff]
    %v3249 = vld [vmem:[%s2998 + $0x6d8] sm:$0xff]
    %v3250 = vld [vmem:[%s2998 + $0x6e0] sm:$0xf]
    %v3251 = vld [vmem:[%s2998 + $0x6e4] sm:$0xff]
    %v3252 = vld [vmem:[%s2998 + $0x6ec] sm:$0xff]
    %v3253 = vld [vmem:[%s2998 + $0x6f4] sm:$0xff]
    %v3254 = vld [vmem:[%s2998 + $0x6fc] sm:$0xf]
    %v3255 = vld [vmem:[%s2998 + $0x700] sm:$0xff]
    %v3256 = vld [vmem:[%s2998 + $0x708] sm:$0xff]
    %v3257 = vld [vmem:[%s2998 + $0x710] sm:$0xff]
    %v3258 = vld [vmem:[%s2998 + $0x718] sm:$0xf]
    %v3259 = vld [vmem:[%s2998 + $0x71c] sm:$0xff]
    %v3260 = vld [vmem:[%s2998 + $0x724] sm:$0xff]
    %v3261 = vld [vmem:[%s2998 + $0x72c] sm:$0xff]
    %v3262 = vld [vmem:[%s2998 + $0x734] sm:$0xf]
    %v3263 = vld [vmem:[%s2998 + $0x738] sm:$0xff]
    %v3264 = vld [vmem:[%s2998 + $0x740] sm:$0xff]
    %v3265 = vld [vmem:[%s2998 + $0x748] sm:$0xff]
    %v3266 = vld [vmem:[%s2998 + $0x750] sm:$0xf]
    %v3267 = vld [vmem:[%s2998 + $0x754] sm:$0xff]
    %v3268 = vld [vmem:[%s2998 + $0x75c] sm:$0xff]
    %v3269 = vld [vmem:[%s2998 + $0x764] sm:$0xff]
    %v3270 = vld [vmem:[%s2998 + $0x76c] sm:$0xf]
    %v3271 = vld [vmem:[%s2998 + $0x770] sm:$0xff]
    %v3272 = vld [vmem:[%s2998 + $0x778] sm:$0xff]
    %v3273 = vld [vmem:[%s2998 + $0x780] sm:$0xff]
    %v3274 = vld [vmem:[%s2998 + $0x788] sm:$0xf]
    %v3275 = vld [vmem:[%s2998 + $0x78c] sm:$0xff]
    %v3276 = vld [vmem:[%s2998 + $0x794] sm:$0xff]
    %v3277 = vld [vmem:[%s2998 + $0x79c] sm:$0xff]
    %v3278 = vld [vmem:[%s2998 + $0x7a4] sm:$0xf]
    %v3279 = vld [vmem:[%s2998 + $0x7a8] sm:$0xff]
    %v3280 = vld [vmem:[%s2998 + $0x7b0] sm:$0xff]
    %v3281 = vld [vmem:[%s2998 + $0x7b8] sm:$0xff]
    %v3282 = vld [vmem:[%s2998 + $0x7c0] sm:$0xf]
    %v3283 = vld [vmem:[%s2998 + $0x7c4] sm:$0xff]
    %v3284 = vld [vmem:[%s2998 + $0x7cc] sm:$0xff]
    %v3285 = vld [vmem:[%s2998 + $0x7d4] sm:$0xff]
    %v3286 = vld [vmem:[%s2998 + $0x7dc] sm:$0xf]
    %v3287 = vld [vmem:[%s2998 + $0x7e0] sm:$0xff]
    %v3288 = vld [vmem:[%s2998 + $0x7e8] sm:$0xff]
    %v3289 = vld [vmem:[%s2998 + $0x7f0] sm:$0xff]
    %v3290 = vld [vmem:[%s2998 + $0x7f8] sm:$0xf]
    %v3291 = vld [vmem:[%s2998 + $0x7fc] sm:$0xff]
    %v3292 = vld [vmem:[%s2998 + $0x804] sm:$0xff]
    %v3293 = vld [vmem:[%s2998 + $0x80c] sm:$0xff]
    %v3294 = vld [vmem:[%s2998 + $0x814] sm:$0xf]
    %v3295 = vld [vmem:[%s2998 + $0x818] sm:$0xff]
    %v3296 = vld [vmem:[%s2998 + $0x820] sm:$0xff]
    %v3297 = vld [vmem:[%s2998 + $0x828] sm:$0xff]
    %v3298 = vld [vmem:[%s2998 + $0x830] sm:$0xf]
    %v3299 = vld [vmem:[%s2998 + $0x834] sm:$0xff]
    %v3300 = vld [vmem:[%s2998 + $0x83c] sm:$0xff]
    %v3301 = vld [vmem:[%s2998 + $0x844] sm:$0xff]
    %v3302 = vld [vmem:[%s2998 + $0x84c] sm:$0xf]
    %v3303 = vld [vmem:[%s2998 + $0x850] sm:$0xff]
    %v3304 = vld [vmem:[%s2998 + $0x858] sm:$0xff]
    %v3305 = vld [vmem:[%s2998 + $0x860] sm:$0xff]
    %v3306 = vld [vmem:[%s2998 + $0x868] sm:$0xf]
    %v3307 = vld [vmem:[%s2998 + $0x86c] sm:$0xff]
    %v3308 = vld [vmem:[%s2998 + $0x874] sm:$0xff]
    %v3309 = vld [vmem:[%s2998 + $0x87c] sm:$0xff]
    %v3310 = vld [vmem:[%s2998 + $0x884] sm:$0xf]
    %v3311 = vld [vmem:[%s2998 + $0x888] sm:$0xff]
    %v3312 = vld [vmem:[%s2998 + $0x890] sm:$0xff]
    %v3313 = vld [vmem:[%s2998 + $0x898] sm:$0xff]
    %v3314 = vld [vmem:[%s2998 + $0x8a0] sm:$0xf]
    %v3315 = vld [vmem:[%s2998 + $0x8a4] sm:$0xff]
    %v3316 = vld [vmem:[%s2998 + $0x8ac] sm:$0xff]
    %v3317 = vld [vmem:[%s2998 + $0x8b4] sm:$0xff]
    %v3318 = vld [vmem:[%s2998 + $0x8bc] sm:$0xf]
    %v3319 = vld [vmem:[%s2998 + $0x8c0] sm:$0xff]
    %v3320 = vld [vmem:[%s2998 + $0x8c8] sm:$0xff]
    %v3321 = vld [vmem:[%s2998 + $0x8d0] sm:$0xff]
    %v3322 = vld [vmem:[%s2998 + $0x8d8] sm:$0xf]
    %v3323 = vld [vmem:[%s2998 + $0x8dc] sm:$0xff]
    %v3324 = vld [vmem:[%s2998 + $0x8e4] sm:$0xff]
    %v3325 = vld [vmem:[%s2998 + $0x8ec] sm:$0xff]
    %v3326 = vld [vmem:[%s2998 + $0x8f4] sm:$0xf]
    %v3327 = vld [vmem:[%s2998 + $0x8f8] sm:$0xff]
    %v3328 = vld [vmem:[%s2998 + $0x900] sm:$0xff]
    %v3329 = vld [vmem:[%s2998 + $0x908] sm:$0xff]
    %v3330 = vld [vmem:[%s2998 + $0x910] sm:$0xf]
    %v3331 = vld [vmem:[%s2998 + $0x914] sm:$0xff]
    %v3332 = vld [vmem:[%s2998 + $0x91c] sm:$0xff]
    %v3333 = vld [vmem:[%s2998 + $0x924] sm:$0xff]
    %v3334 = vld [vmem:[%s2998 + $0x92c] sm:$0xf]
    %v3335 = vld [vmem:[%s2998 + $0x930] sm:$0xff]
    %v3336 = vld [vmem:[%s2998 + $0x938] sm:$0xff]
    %v3337 = vld [vmem:[%s2998 + $0x940] sm:$0xff]
    %v3338 = vld [vmem:[%s2998 + $0x948] sm:$0xf]
    %v3339 = vld [vmem:[%s2998 + $0x94c] sm:$0xff]
    %v3340 = vld [vmem:[%s2998 + $0x954] sm:$0xff]
    %v3341 = vld [vmem:[%s2998 + $0x95c] sm:$0xff]
    %v3342 = vld [vmem:[%s2998 + $0x964] sm:$0xf]
    %v3343 = vld [vmem:[%s2998 + $0x968] sm:$0xff]
    %v3344 = vld [vmem:[%s2998 + $0x970] sm:$0xff]
    %v3345 = vld [vmem:[%s2998 + $0x978] sm:$0xff]
    %v3346 = vld [vmem:[%s2998 + $0x980] sm:$0xf]
    %v3347 = vld [vmem:[%s2998 + $0x984] sm:$0xff]
    %v3348 = vld [vmem:[%s2998 + $0x98c] sm:$0xff]
    %v3349 = vld [vmem:[%s2998 + $0x994] sm:$0xff]
    %v3350 = vld [vmem:[%s2998 + $0x99c] sm:$0xf]
    %v3351 = vld [vmem:[%s2998 + $0x9a0] sm:$0xff]
    %v3352 = vld [vmem:[%s2998 + $0x9a8] sm:$0xff]
    %v3353 = vld [vmem:[%s2998 + $0x9b0] sm:$0xff]
    %v3354 = vld [vmem:[%s2998 + $0x9b8] sm:$0xf]
    %v3355 = vld [vmem:[%s2998 + $0x9bc] sm:$0xff]
    %v3356 = vld [vmem:[%s2998 + $0x9c4] sm:$0xff]
    %v3357 = vld [vmem:[%s2998 + $0x9cc] sm:$0xff]
    %v3358 = vld [vmem:[%s2998 + $0x9d4] sm:$0xf]
    %v3359 = vld [vmem:[%s2998 + $0x9d8] sm:$0xff]
    %v3360 = vld [vmem:[%s2998 + $0x9e0] sm:$0xff]
    %v3361 = vld [vmem:[%s2998 + $0x9e8] sm:$0xff]
    %v3362 = vld [vmem:[%s2998 + $0x9f0] sm:$0xf]
    %v3363 = vld [vmem:[%s2998 + $0x9f4] sm:$0xff]
    %v3364 = vld [vmem:[%s2998 + $0x9fc] sm:$0xff]
    %v3365 = vld [vmem:[%s2998 + $0xa04] sm:$0xff]
    %v3366 = vld [vmem:[%s2998 + $0xa0c] sm:$0xf]
    %v3367 = vld [vmem:[%s2998 + $0xa10] sm:$0xff]
    %v3368 = vld [vmem:[%s2998 + $0xa18] sm:$0xff]
    %v3369 = vld [vmem:[%s2998 + $0xa20] sm:$0xff]
    %v3370 = vld [vmem:[%s2998 + $0xa28] sm:$0xf]
    %v3371 = vld [vmem:[%s2998 + $0xa2c] sm:$0xff]
    %v3372 = vld [vmem:[%s2998 + $0xa34] sm:$0xff]
    %v3373 = vld [vmem:[%s2998 + $0xa3c] sm:$0xff]
    %v3374 = vld [vmem:[%s2998 + $0xa44] sm:$0xf]
    %v3375 = vld [vmem:[%s2998 + $0xa48] sm:$0xff]
    %v3376 = vld [vmem:[%s2998 + $0xa50] sm:$0xff]
    %v3377 = vld [vmem:[%s2998 + $0xa58] sm:$0xff]
    %v3378 = vld [vmem:[%s2998 + $0xa60] sm:$0xf]
    %v3379 = vld [vmem:[%s2998 + $0xa64] sm:$0xff]
    %v3380 = vld [vmem:[%s2998 + $0xa6c] sm:$0xff]
    %v3381 = vld [vmem:[%s2998 + $0xa74] sm:$0xff]
    %v3382 = vld [vmem:[%s2998 + $0xa7c] sm:$0xf]
    %v3383 = vld [vmem:[%s2998 + $0xa80] sm:$0xff]
    %v3384 = vld [vmem:[%s2998 + $0xa88] sm:$0xff]
    %v3385 = vld [vmem:[%s2998 + $0xa90] sm:$0xff]
    %v3386 = vld [vmem:[%s2998 + $0xa98] sm:$0xf]
    %v3387 = vld [vmem:[%s2998 + $0xa9c] sm:$0xff]
    %v3388 = vld [vmem:[%s2998 + $0xaa4] sm:$0xff]
    %v3389 = vld [vmem:[%s2998 + $0xaac] sm:$0xff]
    %v3390 = vld [vmem:[%s2998 + $0xab4] sm:$0xf]
    %3391 = vst [vmem:[#allocation1] ss:$9 sm:$0xff] %v186
    %v3392 = vld [vmem:[#allocation1] sm:$0xff]
    %v3393 = vld [vmem:[#allocation1 + $0x9] sm:$0xff]
    %v3394 = vld [vmem:[#allocation1 + $0x12] sm:$0xff]
    %v3395 = vld [vmem:[#allocation1 + $0x1b] sm:$0xff]
    %v3396 = vld [vmem:[#allocation1 + $0x24] sm:$0xff]
    %v3397 = vld [vmem:[#allocation1 + $0x2d] sm:$0xff]
    %v3398 = vld [vmem:[#allocation1 + $0x36] sm:$0xff]
    %v3797 = vunpack.c.l.b16 %v2999
    %v3798 = vunpack.c.h.b16 %v2999
    %v3799 = vunpack.c.l.b16 %v3000
    %v3800 = vunpack.c.h.b16 %v3000
    %v3801 = vunpack.c.l.b16 %v3001
    %v3802 = vunpack.c.h.b16 %v3001
    %v3803 = vunpack.c.l.b16 %v3002
    %v3804 = vunpack.c.l.b16 %v3003
    %v3805 = vunpack.c.h.b16 %v3003
    %v3806 = vunpack.c.l.b16 %v3004
    %v3807 = vunpack.c.h.b16 %v3004
    %v3808 = vunpack.c.l.b16 %v3005
    %v3809 = vunpack.c.h.b16 %v3005
    %v3810 = vunpack.c.l.b16 %v3006
    %v3811 = vunpack.c.l.b16 %v3007
    %v3812 = vunpack.c.h.b16 %v3007
    %v3813 = vunpack.c.l.b16 %v3008
    %v3814 = vunpack.c.h.b16 %v3008
    %v3815 = vunpack.c.l.b16 %v3009
    %v3816 = vunpack.c.h.b16 %v3009
    %v3817 = vunpack.c.l.b16 %v3010
    %v3818 = vunpack.c.l.b16 %v3011
    %v3819 = vunpack.c.h.b16 %v3011
    %v3820 = vunpack.c.l.b16 %v3012
    %v3821 = vunpack.c.h.b16 %v3012
    %v3822 = vunpack.c.l.b16 %v3013
    %v3823 = vunpack.c.h.b16 %v3013
    %v3824 = vunpack.c.l.b16 %v3014
    %v3825 = vunpack.c.l.b16 %v3015
    %v3826 = vunpack.c.h.b16 %v3015
    %v3827 = vunpack.c.l.b16 %v3016
    %v3828 = vunpack.c.h.b16 %v3016
    %v3829 = vunpack.c.l.b16 %v3017
    %v3830 = vunpack.c.h.b16 %v3017
    %v3831 = vunpack.c.l.b16 %v3018
    %v3832 = vunpack.c.l.b16 %v3019
    %v3833 = vunpack.c.h.b16 %v3019
    %v3834 = vunpack.c.l.b16 %v3020
    %v3835 = vunpack.c.h.b16 %v3020
    %v3836 = vunpack.c.l.b16 %v3021
    %v3837 = vunpack.c.h.b16 %v3021
    %v3838 = vunpack.c.l.b16 %v3022
    %v3839 = vunpack.c.l.b16 %v3023
    %v3840 = vunpack.c.h.b16 %v3023
    %v3841 = vunpack.c.l.b16 %v3024
    %v3842 = vunpack.c.h.b16 %v3024
    %v3843 = vunpack.c.l.b16 %v3025
    %v3844 = vunpack.c.h.b16 %v3025
    %v3845 = vunpack.c.l.b16 %v3026
    %v3846 = vunpack.c.l.b16 %v3027
    %v3847 = vunpack.c.h.b16 %v3027
    %v3848 = vunpack.c.l.b16 %v3028
    %v3849 = vunpack.c.h.b16 %v3028
    %v3850 = vunpack.c.l.b16 %v3029
    %v3851 = vunpack.c.h.b16 %v3029
    %v3852 = vunpack.c.l.b16 %v3030
    %v3853 = vunpack.c.l.b16 %v3031
    %v3854 = vunpack.c.h.b16 %v3031
    %v3855 = vunpack.c.l.b16 %v3032
    %v3856 = vunpack.c.h.b16 %v3032
    %v3857 = vunpack.c.l.b16 %v3033
    %v3858 = vunpack.c.h.b16 %v3033
    %v3859 = vunpack.c.l.b16 %v3034
    %v3860 = vunpack.c.l.b16 %v3035
    %v3861 = vunpack.c.h.b16 %v3035
    %v3862 = vunpack.c.l.b16 %v3036
    %v3863 = vunpack.c.h.b16 %v3036
    %v3864 = vunpack.c.l.b16 %v3037
    %v3865 = vunpack.c.h.b16 %v3037
    %v3866 = vunpack.c.l.b16 %v3038
    %v3867 = vunpack.c.l.b16 %v3039
    %v3868 = vunpack.c.h.b16 %v3039
    %v3869 = vunpack.c.l.b16 %v3040
    %v3870 = vunpack.c.h.b16 %v3040
    %v3871 = vunpack.c.l.b16 %v3041
    %v3872 = vunpack.c.h.b16 %v3041
    %v3873 = vunpack.c.l.b16 %v3042
    %v3874 = vunpack.c.l.b16 %v3043
    %v3875 = vunpack.c.h.b16 %v3043
    %v3876 = vunpack.c.l.b16 %v3044
    %v3877 = vunpack.c.h.b16 %v3044
    %v3878 = vunpack.c.l.b16 %v3045
    %v3879 = vunpack.c.h.b16 %v3045
    %v3880 = vunpack.c.l.b16 %v3046
    %v3881 = vunpack.c.l.b16 %v3047
    %v3882 = vunpack.c.h.b16 %v3047
    %v3883 = vunpack.c.l.b16 %v3048
    %v3884 = vunpack.c.h.b16 %v3048
    %v3885 = vunpack.c.l.b16 %v3049
    %v3886 = vunpack.c.h.b16 %v3049
    %v3887 = vunpack.c.l.b16 %v3050
    %v3888 = vunpack.c.l.b16 %v3051
    %v3889 = vunpack.c.h.b16 %v3051
    %v3890 = vunpack.c.l.b16 %v3052
    %v3891 = vunpack.c.h.b16 %v3052
    %v3892 = vunpack.c.l.b16 %v3053
    %v3893 = vunpack.c.h.b16 %v3053
    %v3894 = vunpack.c.l.b16 %v3054
    %v3895 = vunpack.c.l.b16 %v3055
    %v3896 = vunpack.c.h.b16 %v3055
    %v3897 = vunpack.c.l.b16 %v3056
    %v3898 = vunpack.c.h.b16 %v3056
    %v3899 = vunpack.c.l.b16 %v3057
    %v3900 = vunpack.c.h.b16 %v3057
    %v3901 = vunpack.c.l.b16 %v3058
    %v3902 = vunpack.c.l.b16 %v3059
    %v3903 = vunpack.c.h.b16 %v3059
    %v3904 = vunpack.c.l.b16 %v3060
    %v3905 = vunpack.c.h.b16 %v3060
    %v3906 = vunpack.c.l.b16 %v3061
    %v3907 = vunpack.c.h.b16 %v3061
    %v3908 = vunpack.c.l.b16 %v3062
    %v3909 = vunpack.c.l.b16 %v3063
    %v3910 = vunpack.c.h.b16 %v3063
    %v3911 = vunpack.c.l.b16 %v3064
    %v3912 = vunpack.c.h.b16 %v3064
    %v3913 = vunpack.c.l.b16 %v3065
    %v3914 = vunpack.c.h.b16 %v3065
    %v3915 = vunpack.c.l.b16 %v3066
    %v3916 = vunpack.c.l.b16 %v3067
    %v3917 = vunpack.c.h.b16 %v3067
    %v3918 = vunpack.c.l.b16 %v3068
    %v3919 = vunpack.c.h.b16 %v3068
    %v3920 = vunpack.c.l.b16 %v3069
    %v3921 = vunpack.c.h.b16 %v3069
    %v3922 = vunpack.c.l.b16 %v3070
    %v3923 = vunpack.c.l.b16 %v3071
    %v3924 = vunpack.c.h.b16 %v3071
    %v3925 = vunpack.c.l.b16 %v3072
    %v3926 = vunpack.c.h.b16 %v3072
    %v3927 = vunpack.c.l.b16 %v3073
    %v3928 = vunpack.c.h.b16 %v3073
    %v3929 = vunpack.c.l.b16 %v3074
    %v3930 = vunpack.c.l.b16 %v3075
    %v3931 = vunpack.c.h.b16 %v3075
    %v3932 = vunpack.c.l.b16 %v3076
    %v3933 = vunpack.c.h.b16 %v3076
    %v3934 = vunpack.c.l.b16 %v3077
    %v3935 = vunpack.c.h.b16 %v3077
    %v3936 = vunpack.c.l.b16 %v3078
    %v3937 = vunpack.c.l.b16 %v3079
    %v3938 = vunpack.c.h.b16 %v3079
    %v3939 = vunpack.c.l.b16 %v3080
    %v3940 = vunpack.c.h.b16 %v3080
    %v3941 = vunpack.c.l.b16 %v3081
    %v3942 = vunpack.c.h.b16 %v3081
    %v3943 = vunpack.c.l.b16 %v3082
    %v3944 = vunpack.c.l.b16 %v3083
    %v3945 = vunpack.c.h.b16 %v3083
    %v3946 = vunpack.c.l.b16 %v3084
    %v3947 = vunpack.c.h.b16 %v3084
    %v3948 = vunpack.c.l.b16 %v3085
    %v3949 = vunpack.c.h.b16 %v3085
    %v3950 = vunpack.c.l.b16 %v3086
    %v3951 = vunpack.c.l.b16 %v3087
    %v3952 = vunpack.c.h.b16 %v3087
    %v3953 = vunpack.c.l.b16 %v3088
    %v3954 = vunpack.c.h.b16 %v3088
    %v3955 = vunpack.c.l.b16 %v3089
    %v3956 = vunpack.c.h.b16 %v3089
    %v3957 = vunpack.c.l.b16 %v3090
    %v3958 = vunpack.c.l.b16 %v3091
    %v3959 = vunpack.c.h.b16 %v3091
    %v3960 = vunpack.c.l.b16 %v3092
    %v3961 = vunpack.c.h.b16 %v3092
    %v3962 = vunpack.c.l.b16 %v3093
    %v3963 = vunpack.c.h.b16 %v3093
    %v3964 = vunpack.c.l.b16 %v3094
    %v3965 = vunpack.c.l.b16 %v3095
    %v3966 = vunpack.c.h.b16 %v3095
    %v3967 = vunpack.c.l.b16 %v3096
    %v3968 = vunpack.c.h.b16 %v3096
    %v3969 = vunpack.c.l.b16 %v3097
    %v3970 = vunpack.c.h.b16 %v3097
    %v3971 = vunpack.c.l.b16 %v3098
    %v3972 = vunpack.c.l.b16 %v3099
    %v3973 = vunpack.c.h.b16 %v3099
    %v3974 = vunpack.c.l.b16 %v3100
    %v3975 = vunpack.c.h.b16 %v3100
    %v3976 = vunpack.c.l.b16 %v3101
    %v3977 = vunpack.c.h.b16 %v3101
    %v3978 = vunpack.c.l.b16 %v3102
    %v3979 = vunpack.c.l.b16 %v3103
    %v3980 = vunpack.c.h.b16 %v3103
    %v3981 = vunpack.c.l.b16 %v3104
    %v3982 = vunpack.c.h.b16 %v3104
    %v3983 = vunpack.c.l.b16 %v3105
    %v3984 = vunpack.c.h.b16 %v3105
    %v3985 = vunpack.c.l.b16 %v3106
    %v3986 = vunpack.c.l.b16 %v3107
    %v3987 = vunpack.c.h.b16 %v3107
    %v3988 = vunpack.c.l.b16 %v3108
    %v3989 = vunpack.c.h.b16 %v3108
    %v3990 = vunpack.c.l.b16 %v3109
    %v3991 = vunpack.c.h.b16 %v3109
    %v3992 = vunpack.c.l.b16 %v3110
    %v3993 = vunpack.c.l.b16 %v3111
    %v3994 = vunpack.c.h.b16 %v3111
    %v3995 = vunpack.c.l.b16 %v3112
    %v3996 = vunpack.c.h.b16 %v3112
    %v3997 = vunpack.c.l.b16 %v3113
    %v3998 = vunpack.c.h.b16 %v3113
    %v3999 = vunpack.c.l.b16 %v3114
    %v4000 = vunpack.c.l.b16 %v3115
    %v4001 = vunpack.c.h.b16 %v3115
    %v4002 = vunpack.c.l.b16 %v3116
    %v4003 = vunpack.c.h.b16 %v3116
    %v4004 = vunpack.c.l.b16 %v3117
    %v4005 = vunpack.c.h.b16 %v3117
    %v4006 = vunpack.c.l.b16 %v3118
    %v4007 = vunpack.c.l.b16 %v3119
    %v4008 = vunpack.c.h.b16 %v3119
    %v4009 = vunpack.c.l.b16 %v3120
    %v4010 = vunpack.c.h.b16 %v3120
    %v4011 = vunpack.c.l.b16 %v3121
    %v4012 = vunpack.c.h.b16 %v3121
    %v4013 = vunpack.c.l.b16 %v3122
    %v4014 = vunpack.c.l.b16 %v3123
    %v4015 = vunpack.c.h.b16 %v3123
    %v4016 = vunpack.c.l.b16 %v3124
    %v4017 = vunpack.c.h.b16 %v3124
    %v4018 = vunpack.c.l.b16 %v3125
    %v4019 = vunpack.c.h.b16 %v3125
    %v4020 = vunpack.c.l.b16 %v3126
    %v4021 = vunpack.c.l.b16 %v3127
    %v4022 = vunpack.c.h.b16 %v3127
    %v4023 = vunpack.c.l.b16 %v3128
    %v4024 = vunpack.c.h.b16 %v3128
    %v4025 = vunpack.c.l.b16 %v3129
    %v4026 = vunpack.c.h.b16 %v3129
    %v4027 = vunpack.c.l.b16 %v3130
    %v4028 = vunpack.c.l.b16 %v3131
    %v4029 = vunpack.c.h.b16 %v3131
    %v4030 = vunpack.c.l.b16 %v3132
    %v4031 = vunpack.c.h.b16 %v3132
    %v4032 = vunpack.c.l.b16 %v3133
    %v4033 = vunpack.c.h.b16 %v3133
    %v4034 = vunpack.c.l.b16 %v3134
    %v4035 = vunpack.c.l.b16 %v3135
    %v4036 = vunpack.c.h.b16 %v3135
    %v4037 = vunpack.c.l.b16 %v3136
    %v4038 = vunpack.c.h.b16 %v3136
    %v4039 = vunpack.c.l.b16 %v3137
    %v4040 = vunpack.c.h.b16 %v3137
    %v4041 = vunpack.c.l.b16 %v3138
    %v4042 = vunpack.c.l.b16 %v3139
    %v4043 = vunpack.c.h.b16 %v3139
    %v4044 = vunpack.c.l.b16 %v3140
    %v4045 = vunpack.c.h.b16 %v3140
    %v4046 = vunpack.c.l.b16 %v3141
    %v4047 = vunpack.c.h.b16 %v3141
    %v4048 = vunpack.c.l.b16 %v3142
    %v4049 = vunpack.c.l.b16 %v3143
    %v4050 = vunpack.c.h.b16 %v3143
    %v4051 = vunpack.c.l.b16 %v3144
    %v4052 = vunpack.c.h.b16 %v3144
    %v4053 = vunpack.c.l.b16 %v3145
    %v4054 = vunpack.c.h.b16 %v3145
    %v4055 = vunpack.c.l.b16 %v3146
    %v4056 = vunpack.c.l.b16 %v3147
    %v4057 = vunpack.c.h.b16 %v3147
    %v4058 = vunpack.c.l.b16 %v3148
    %v4059 = vunpack.c.h.b16 %v3148
    %v4060 = vunpack.c.l.b16 %v3149
    %v4061 = vunpack.c.h.b16 %v3149
    %v4062 = vunpack.c.l.b16 %v3150
    %v4063 = vunpack.c.l.b16 %v3151
    %v4064 = vunpack.c.h.b16 %v3151
    %v4065 = vunpack.c.l.b16 %v3152
    %v4066 = vunpack.c.h.b16 %v3152
    %v4067 = vunpack.c.l.b16 %v3153
    %v4068 = vunpack.c.h.b16 %v3153
    %v4069 = vunpack.c.l.b16 %v3154
    %v4070 = vunpack.c.l.b16 %v3155
    %v4071 = vunpack.c.h.b16 %v3155
    %v4072 = vunpack.c.l.b16 %v3156
    %v4073 = vunpack.c.h.b16 %v3156
    %v4074 = vunpack.c.l.b16 %v3157
    %v4075 = vunpack.c.h.b16 %v3157
    %v4076 = vunpack.c.l.b16 %v3158
    %v4077 = vunpack.c.l.b16 %v3159
    %v4078 = vunpack.c.h.b16 %v3159
    %v4079 = vunpack.c.l.b16 %v3160
    %v4080 = vunpack.c.h.b16 %v3160
    %v4081 = vunpack.c.l.b16 %v3161
    %v4082 = vunpack.c.h.b16 %v3161
    %v4083 = vunpack.c.l.b16 %v3162
    %v4084 = vunpack.c.l.b16 %v3163
    %v4085 = vunpack.c.h.b16 %v3163
    %v4086 = vunpack.c.l.b16 %v3164
    %v4087 = vunpack.c.h.b16 %v3164
    %v4088 = vunpack.c.l.b16 %v3165
    %v4089 = vunpack.c.h.b16 %v3165
    %v4090 = vunpack.c.l.b16 %v3166
    %v4091 = vunpack.c.l.b16 %v3167
    %v4092 = vunpack.c.h.b16 %v3167
    %v4093 = vunpack.c.l.b16 %v3168
    %v4094 = vunpack.c.h.b16 %v3168
    %v4095 = vunpack.c.l.b16 %v3169
    %v4096 = vunpack.c.h.b16 %v3169
    %v4097 = vunpack.c.l.b16 %v3170
    %v4098 = vunpack.c.l.b16 %v3171
    %v4099 = vunpack.c.h.b16 %v3171
    %v4100 = vunpack.c.l.b16 %v3172
    %v4101 = vunpack.c.h.b16 %v3172
    %v4102 = vunpack.c.l.b16 %v3173
    %v4103 = vunpack.c.h.b16 %v3173
    %v4104 = vunpack.c.l.b16 %v3174
    %v4105 = vunpack.c.l.b16 %v3175
    %v4106 = vunpack.c.h.b16 %v3175
    %v4107 = vunpack.c.l.b16 %v3176
    %v4108 = vunpack.c.h.b16 %v3176
    %v4109 = vunpack.c.l.b16 %v3177
    %v4110 = vunpack.c.h.b16 %v3177
    %v4111 = vunpack.c.l.b16 %v3178
    %v4112 = vunpack.c.l.b16 %v3179
    %v4113 = vunpack.c.h.b16 %v3179
    %v4114 = vunpack.c.l.b16 %v3180
    %v4115 = vunpack.c.h.b16 %v3180
    %v4116 = vunpack.c.l.b16 %v3181
    %v4117 = vunpack.c.h.b16 %v3181
    %v4118 = vunpack.c.l.b16 %v3182
    %v4119 = vunpack.c.l.b16 %v3183
    %v4120 = vunpack.c.h.b16 %v3183
    %v4121 = vunpack.c.l.b16 %v3184
    %v4122 = vunpack.c.h.b16 %v3184
    %v4123 = vunpack.c.l.b16 %v3185
    %v4124 = vunpack.c.h.b16 %v3185
    %v4125 = vunpack.c.l.b16 %v3186
    %v4126 = vunpack.c.l.b16 %v3187
    %v4127 = vunpack.c.h.b16 %v3187
    %v4128 = vunpack.c.l.b16 %v3188
    %v4129 = vunpack.c.h.b16 %v3188
    %v4130 = vunpack.c.l.b16 %v3189
    %v4131 = vunpack.c.h.b16 %v3189
    %v4132 = vunpack.c.l.b16 %v3190
    %v4133 = vunpack.c.l.b16 %v3191
    %v4134 = vunpack.c.h.b16 %v3191
    %v4135 = vunpack.c.l.b16 %v3192
    %v4136 = vunpack.c.h.b16 %v3192
    %v4137 = vunpack.c.l.b16 %v3193
    %v4138 = vunpack.c.h.b16 %v3193
    %v4139 = vunpack.c.l.b16 %v3194
    %v4140 = vunpack.c.l.b16 %v3195
    %v4141 = vunpack.c.h.b16 %v3195
    %v4142 = vunpack.c.l.b16 %v3196
    %v4143 = vunpack.c.h.b16 %v3196
    %v4144 = vunpack.c.l.b16 %v3197
    %v4145 = vunpack.c.h.b16 %v3197
    %v4146 = vunpack.c.l.b16 %v3198
    %v4147 = vunpack.c.l.b16 %v3199
    %v4148 = vunpack.c.h.b16 %v3199
    %v4149 = vunpack.c.l.b16 %v3200
    %v4150 = vunpack.c.h.b16 %v3200
    %v4151 = vunpack.c.l.b16 %v3201
    %v4152 = vunpack.c.h.b16 %v3201
    %v4153 = vunpack.c.l.b16 %v3202
    %v4154 = vunpack.c.l.b16 %v3203
    %v4155 = vunpack.c.h.b16 %v3203
    %v4156 = vunpack.c.l.b16 %v3204
    %v4157 = vunpack.c.h.b16 %v3204
    %v4158 = vunpack.c.l.b16 %v3205
    %v4159 = vunpack.c.h.b16 %v3205
    %v4160 = vunpack.c.l.b16 %v3206
    %v4161 = vunpack.c.l.b16 %v3207
    %v4162 = vunpack.c.h.b16 %v3207
    %v4163 = vunpack.c.l.b16 %v3208
    %v4164 = vunpack.c.h.b16 %v3208
    %v4165 = vunpack.c.l.b16 %v3209
    %v4166 = vunpack.c.h.b16 %v3209
    %v4167 = vunpack.c.l.b16 %v3210
    %v4168 = vunpack.c.l.b16 %v3211
    %v4169 = vunpack.c.h.b16 %v3211
    %v4170 = vunpack.c.l.b16 %v3212
    %v4171 = vunpack.c.h.b16 %v3212
    %v4172 = vunpack.c.l.b16 %v3213
    %v4173 = vunpack.c.h.b16 %v3213
    %v4174 = vunpack.c.l.b16 %v3214
    %v4175 = vunpack.c.l.b16 %v3215
    %v4176 = vunpack.c.h.b16 %v3215
    %v4177 = vunpack.c.l.b16 %v3216
    %v4178 = vunpack.c.h.b16 %v3216
    %v4179 = vunpack.c.l.b16 %v3217
    %v4180 = vunpack.c.h.b16 %v3217
    %v4181 = vunpack.c.l.b16 %v3218
    %v4182 = vunpack.c.l.b16 %v3219
    %v4183 = vunpack.c.h.b16 %v3219
    %v4184 = vunpack.c.l.b16 %v3220
    %v4185 = vunpack.c.h.b16 %v3220
    %v4186 = vunpack.c.l.b16 %v3221
    %v4187 = vunpack.c.h.b16 %v3221
    %v4188 = vunpack.c.l.b16 %v3222
    %v4189 = vunpack.c.l.b16 %v3223
    %v4190 = vunpack.c.h.b16 %v3223
    %v4191 = vunpack.c.l.b16 %v3224
    %v4192 = vunpack.c.h.b16 %v3224
    %v4193 = vunpack.c.l.b16 %v3225
    %v4194 = vunpack.c.h.b16 %v3225
    %v4195 = vunpack.c.l.b16 %v3226
    %v4196 = vunpack.c.l.b16 %v3227
    %v4197 = vunpack.c.h.b16 %v3227
    %v4198 = vunpack.c.l.b16 %v3228
    %v4199 = vunpack.c.h.b16 %v3228
    %v4200 = vunpack.c.l.b16 %v3229
    %v4201 = vunpack.c.h.b16 %v3229
    %v4202 = vunpack.c.l.b16 %v3230
    %v4203 = vunpack.c.l.b16 %v3231
    %v4204 = vunpack.c.h.b16 %v3231
    %v4205 = vunpack.c.l.b16 %v3232
    %v4206 = vunpack.c.h.b16 %v3232
    %v4207 = vunpack.c.l.b16 %v3233
    %v4208 = vunpack.c.h.b16 %v3233
    %v4209 = vunpack.c.l.b16 %v3234
    %v4210 = vunpack.c.l.b16 %v3235
    %v4211 = vunpack.c.h.b16 %v3235
    %v4212 = vunpack.c.l.b16 %v3236
    %v4213 = vunpack.c.h.b16 %v3236
    %v4214 = vunpack.c.l.b16 %v3237
    %v4215 = vunpack.c.h.b16 %v3237
    %v4216 = vunpack.c.l.b16 %v3238
    %v4217 = vunpack.c.l.b16 %v3239
    %v4218 = vunpack.c.h.b16 %v3239
    %v4219 = vunpack.c.l.b16 %v3240
    %v4220 = vunpack.c.h.b16 %v3240
    %v4221 = vunpack.c.l.b16 %v3241
    %v4222 = vunpack.c.h.b16 %v3241
    %v4223 = vunpack.c.l.b16 %v3242
    %v4224 = vunpack.c.l.b16 %v3243
    %v4225 = vunpack.c.h.b16 %v3243
    %v4226 = vunpack.c.l.b16 %v3244
    %v4227 = vunpack.c.h.b16 %v3244
    %v4228 = vunpack.c.l.b16 %v3245
    %v4229 = vunpack.c.h.b16 %v3245
    %v4230 = vunpack.c.l.b16 %v3246
    %v4231 = vunpack.c.l.b16 %v3247
    %v4232 = vunpack.c.h.b16 %v3247
    %v4233 = vunpack.c.l.b16 %v3248
    %v4234 = vunpack.c.h.b16 %v3248
    %v4235 = vunpack.c.l.b16 %v3249
    %v4236 = vunpack.c.h.b16 %v3249
    %v4237 = vunpack.c.l.b16 %v3250
    %v4238 = vunpack.c.l.b16 %v3251
    %v4239 = vunpack.c.h.b16 %v3251
    %v4240 = vunpack.c.l.b16 %v3252
    %v4241 = vunpack.c.h.b16 %v3252
    %v4242 = vunpack.c.l.b16 %v3253
    %v4243 = vunpack.c.h.b16 %v3253
    %v4244 = vunpack.c.l.b16 %v3254
    %v4245 = vunpack.c.l.b16 %v3255
    %v4246 = vunpack.c.h.b16 %v3255
    %v4247 = vunpack.c.l.b16 %v3256
    %v4248 = vunpack.c.h.b16 %v3256
    %v4249 = vunpack.c.l.b16 %v3257
    %v4250 = vunpack.c.h.b16 %v3257
    %v4251 = vunpack.c.l.b16 %v3258
    %v4252 = vunpack.c.l.b16 %v3259
    %v4253 = vunpack.c.h.b16 %v3259
    %v4254 = vunpack.c.l.b16 %v3260
    %v4255 = vunpack.c.h.b16 %v3260
    %v4256 = vunpack.c.l.b16 %v3261
    %v4257 = vunpack.c.h.b16 %v3261
    %v4258 = vunpack.c.l.b16 %v3262
    %v4259 = vunpack.c.l.b16 %v3263
    %v4260 = vunpack.c.h.b16 %v3263
    %v4261 = vunpack.c.l.b16 %v3264
    %v4262 = vunpack.c.h.b16 %v3264
    %v4263 = vunpack.c.l.b16 %v3265
    %v4264 = vunpack.c.h.b16 %v3265
    %v4265 = vunpack.c.l.b16 %v3266
    %v4266 = vunpack.c.l.b16 %v3267
    %v4267 = vunpack.c.h.b16 %v3267
    %v4268 = vunpack.c.l.b16 %v3268
    %v4269 = vunpack.c.h.b16 %v3268
    %v4270 = vunpack.c.l.b16 %v3269
    %v4271 = vunpack.c.h.b16 %v3269
    %v4272 = vunpack.c.l.b16 %v3270
    %v4273 = vunpack.c.l.b16 %v3271
    %v4274 = vunpack.c.h.b16 %v3271
    %v4275 = vunpack.c.l.b16 %v3272
    %v4276 = vunpack.c.h.b16 %v3272
    %v4277 = vunpack.c.l.b16 %v3273
    %v4278 = vunpack.c.h.b16 %v3273
    %v4279 = vunpack.c.l.b16 %v3274
    %v4280 = vunpack.c.l.b16 %v3275
    %v4281 = vunpack.c.h.b16 %v3275
    %v4282 = vunpack.c.l.b16 %v3276
    %v4283 = vunpack.c.h.b16 %v3276
    %v4284 = vunpack.c.l.b16 %v3277
    %v4285 = vunpack.c.h.b16 %v3277
    %v4286 = vunpack.c.l.b16 %v3278
    %v4287 = vunpack.c.l.b16 %v3279
    %v4288 = vunpack.c.h.b16 %v3279
    %v4289 = vunpack.c.l.b16 %v3280
    %v4290 = vunpack.c.h.b16 %v3280
    %v4291 = vunpack.c.l.b16 %v3281
    %v4292 = vunpack.c.h.b16 %v3281
    %v4293 = vunpack.c.l.b16 %v3282
    %v4294 = vunpack.c.l.b16 %v3283
    %v4295 = vunpack.c.h.b16 %v3283
    %v4296 = vunpack.c.l.b16 %v3284
    %v4297 = vunpack.c.h.b16 %v3284
    %v4298 = vunpack.c.l.b16 %v3285
    %v4299 = vunpack.c.h.b16 %v3285
    %v4300 = vunpack.c.l.b16 %v3286
    %v4301 = vunpack.c.l.b16 %v3287
    %v4302 = vunpack.c.h.b16 %v3287
    %v4303 = vunpack.c.l.b16 %v3288
    %v4304 = vunpack.c.h.b16 %v3288
    %v4305 = vunpack.c.l.b16 %v3289
    %v4306 = vunpack.c.h.b16 %v3289
    %v4307 = vunpack.c.l.b16 %v3290
    %v4308 = vunpack.c.l.b16 %v3291
    %v4309 = vunpack.c.h.b16 %v3291
    %v4310 = vunpack.c.l.b16 %v3292
    %v4311 = vunpack.c.h.b16 %v3292
    %v4312 = vunpack.c.l.b16 %v3293
    %v4313 = vunpack.c.h.b16 %v3293
    %v4314 = vunpack.c.l.b16 %v3294
    %v4315 = vunpack.c.l.b16 %v3295
    %v4316 = vunpack.c.h.b16 %v3295
    %v4317 = vunpack.c.l.b16 %v3296
    %v4318 = vunpack.c.h.b16 %v3296
    %v4319 = vunpack.c.l.b16 %v3297
    %v4320 = vunpack.c.h.b16 %v3297
    %v4321 = vunpack.c.l.b16 %v3298
    %v4322 = vunpack.c.l.b16 %v3299
    %v4323 = vunpack.c.h.b16 %v3299
    %v4324 = vunpack.c.l.b16 %v3300
    %v4325 = vunpack.c.h.b16 %v3300
    %v4326 = vunpack.c.l.b16 %v3301
    %v4327 = vunpack.c.h.b16 %v3301
    %v4328 = vunpack.c.l.b16 %v3302
    %v4329 = vunpack.c.l.b16 %v3303
    %v4330 = vunpack.c.h.b16 %v3303
    %v4331 = vunpack.c.l.b16 %v3304
    %v4332 = vunpack.c.h.b16 %v3304
    %v4333 = vunpack.c.l.b16 %v3305
    %v4334 = vunpack.c.h.b16 %v3305
    %v4335 = vunpack.c.l.b16 %v3306
    %v4336 = vunpack.c.l.b16 %v3307
    %v4337 = vunpack.c.h.b16 %v3307
    %v4338 = vunpack.c.l.b16 %v3308
    %v4339 = vunpack.c.h.b16 %v3308
    %v4340 = vunpack.c.l.b16 %v3309
    %v4341 = vunpack.c.h.b16 %v3309
    %v4342 = vunpack.c.l.b16 %v3310
    %v4343 = vunpack.c.l.b16 %v3311
    %v4344 = vunpack.c.h.b16 %v3311
    %v4345 = vunpack.c.l.b16 %v3312
    %v4346 = vunpack.c.h.b16 %v3312
    %v4347 = vunpack.c.l.b16 %v3313
    %v4348 = vunpack.c.h.b16 %v3313
    %v4349 = vunpack.c.l.b16 %v3314
    %v4350 = vunpack.c.l.b16 %v3315
    %v4351 = vunpack.c.h.b16 %v3315
    %v4352 = vunpack.c.l.b16 %v3316
    %v4353 = vunpack.c.h.b16 %v3316
    %v4354 = vunpack.c.l.b16 %v3317
    %v4355 = vunpack.c.h.b16 %v3317
    %v4356 = vunpack.c.l.b16 %v3318
    %v4357 = vunpack.c.l.b16 %v3319
    %v4358 = vunpack.c.h.b16 %v3319
    %v4359 = vunpack.c.l.b16 %v3320
    %v4360 = vunpack.c.h.b16 %v3320
    %v4361 = vunpack.c.l.b16 %v3321
    %v4362 = vunpack.c.h.b16 %v3321
    %v4363 = vunpack.c.l.b16 %v3322
    %v4364 = vunpack.c.l.b16 %v3323
    %v4365 = vunpack.c.h.b16 %v3323
    %v4366 = vunpack.c.l.b16 %v3324
    %v4367 = vunpack.c.h.b16 %v3324
    %v4368 = vunpack.c.l.b16 %v3325
    %v4369 = vunpack.c.h.b16 %v3325
    %v4370 = vunpack.c.l.b16 %v3326
    %v4371 = vunpack.c.l.b16 %v3327
    %v4372 = vunpack.c.h.b16 %v3327
    %v4373 = vunpack.c.l.b16 %v3328
    %v4374 = vunpack.c.h.b16 %v3328
    %v4375 = vunpack.c.l.b16 %v3329
    %v4376 = vunpack.c.h.b16 %v3329
    %v4377 = vunpack.c.l.b16 %v3330
    %v4378 = vunpack.c.l.b16 %v3331
    %v4379 = vunpack.c.h.b16 %v3331
    %v4380 = vunpack.c.l.b16 %v3332
    %v4381 = vunpack.c.h.b16 %v3332
    %v4382 = vunpack.c.l.b16 %v3333
    %v4383 = vunpack.c.h.b16 %v3333
    %v4384 = vunpack.c.l.b16 %v3334
    %v4385 = vunpack.c.l.b16 %v3335
    %v4386 = vunpack.c.h.b16 %v3335
    %v4387 = vunpack.c.l.b16 %v3336
    %v4388 = vunpack.c.h.b16 %v3336
    %v4389 = vunpack.c.l.b16 %v3337
    %v4390 = vunpack.c.h.b16 %v3337
    %v4391 = vunpack.c.l.b16 %v3338
    %v4392 = vunpack.c.l.b16 %v3339
    %v4393 = vunpack.c.h.b16 %v3339
    %v4394 = vunpack.c.l.b16 %v3340
    %v4395 = vunpack.c.h.b16 %v3340
    %v4396 = vunpack.c.l.b16 %v3341
    %v4397 = vunpack.c.h.b16 %v3341
    %v4398 = vunpack.c.l.b16 %v3342
    %v4399 = vunpack.c.l.b16 %v3343
    %v4400 = vunpack.c.h.b16 %v3343
    %v4401 = vunpack.c.l.b16 %v3344
    %v4402 = vunpack.c.h.b16 %v3344
    %v4403 = vunpack.c.l.b16 %v3345
    %v4404 = vunpack.c.h.b16 %v3345
    %v4405 = vunpack.c.l.b16 %v3346
    %v4406 = vunpack.c.l.b16 %v3347
    %v4407 = vunpack.c.h.b16 %v3347
    %v4408 = vunpack.c.l.b16 %v3348
    %v4409 = vunpack.c.h.b16 %v3348
    %v4410 = vunpack.c.l.b16 %v3349
    %v4411 = vunpack.c.h.b16 %v3349
    %v4412 = vunpack.c.l.b16 %v3350
    %v4413 = vunpack.c.l.b16 %v3351
    %v4414 = vunpack.c.h.b16 %v3351
    %v4415 = vunpack.c.l.b16 %v3352
    %v4416 = vunpack.c.h.b16 %v3352
    %v4417 = vunpack.c.l.b16 %v3353
    %v4418 = vunpack.c.h.b16 %v3353
    %v4419 = vunpack.c.l.b16 %v3354
    %v4420 = vunpack.c.l.b16 %v3355
    %v4421 = vunpack.c.h.b16 %v3355
    %v4422 = vunpack.c.l.b16 %v3356
    %v4423 = vunpack.c.h.b16 %v3356
    %v4424 = vunpack.c.l.b16 %v3357
    %v4425 = vunpack.c.h.b16 %v3357
    %v4426 = vunpack.c.l.b16 %v3358
    %v4427 = vunpack.c.l.b16 %v3359
    %v4428 = vunpack.c.h.b16 %v3359
    %v4429 = vunpack.c.l.b16 %v3360
    %v4430 = vunpack.c.h.b16 %v3360
    %v4431 = vunpack.c.l.b16 %v3361
    %v4432 = vunpack.c.h.b16 %v3361
    %v4433 = vunpack.c.l.b16 %v3362
    %v4434 = vunpack.c.l.b16 %v3363
    %v4435 = vunpack.c.h.b16 %v3363
    %v4436 = vunpack.c.l.b16 %v3364
    %v4437 = vunpack.c.h.b16 %v3364
    %v4438 = vunpack.c.l.b16 %v3365
    %v4439 = vunpack.c.h.b16 %v3365
    %v4440 = vunpack.c.l.b16 %v3366
    %v4441 = vunpack.c.l.b16 %v3367
    %v4442 = vunpack.c.h.b16 %v3367
    %v4443 = vunpack.c.l.b16 %v3368
    %v4444 = vunpack.c.h.b16 %v3368
    %v4445 = vunpack.c.l.b16 %v3369
    %v4446 = vunpack.c.h.b16 %v3369
    %v4447 = vunpack.c.l.b16 %v3370
    %v4448 = vunpack.c.l.b16 %v3371
    %v4449 = vunpack.c.h.b16 %v3371
    %v4450 = vunpack.c.l.b16 %v3372
    %v4451 = vunpack.c.h.b16 %v3372
    %v4452 = vunpack.c.l.b16 %v3373
    %v4453 = vunpack.c.h.b16 %v3373
    %v4454 = vunpack.c.l.b16 %v3374
    %v4455 = vunpack.c.l.b16 %v3375
    %v4456 = vunpack.c.h.b16 %v3375
    %v4457 = vunpack.c.l.b16 %v3376
    %v4458 = vunpack.c.h.b16 %v3376
    %v4459 = vunpack.c.l.b16 %v3377
    %v4460 = vunpack.c.h.b16 %v3377
    %v4461 = vunpack.c.l.b16 %v3378
    %v4462 = vunpack.c.l.b16 %v3379
    %v4463 = vunpack.c.h.b16 %v3379
    %v4464 = vunpack.c.l.b16 %v3380
    %v4465 = vunpack.c.h.b16 %v3380
    %v4466 = vunpack.c.l.b16 %v3381
    %v4467 = vunpack.c.h.b16 %v3381
    %v4468 = vunpack.c.l.b16 %v3382
    %v4469 = vunpack.c.l.b16 %v3383
    %v4470 = vunpack.c.h.b16 %v3383
    %v4471 = vunpack.c.l.b16 %v3384
    %v4472 = vunpack.c.h.b16 %v3384
    %v4473 = vunpack.c.l.b16 %v3385
    %v4474 = vunpack.c.h.b16 %v3385
    %v4475 = vunpack.c.l.b16 %v3386
    %v4476 = vunpack.c.l.b16 %v3387
    %v4477 = vunpack.c.h.b16 %v3387
    %v4478 = vunpack.c.l.b16 %v3388
    %v4479 = vunpack.c.h.b16 %v3388
    %v4480 = vunpack.c.l.b16 %v3389
    %v4481 = vunpack.c.h.b16 %v3389
    %v4482 = vunpack.c.l.b16 %v3390
    %v4483 = vpack.c.b16 %v3804, %v3797
    %v4484 = vpack.c.b16 %v3805, %v3798
    %v4485 = vpack.c.b16 %v3806, %v3799
    %v4486 = vpack.c.b16 %v3807, %v3800
    %v4487 = vpack.c.b16 %v3808, %v3801
    %v4488 = vpack.c.b16 %v3809, %v3802
    %v4489 = vpack.c.b16 %v3810, %v3803
    %v4490 = vpack.c.b16 %v3818, %v3811
    %v4491 = vpack.c.b16 %v3819, %v3812
    %v4492 = vpack.c.b16 %v3820, %v3813
    %v4493 = vpack.c.b16 %v3821, %v3814
    %v4494 = vpack.c.b16 %v3822, %v3815
    %v4495 = vpack.c.b16 %v3823, %v3816
    %v4496 = vpack.c.b16 %v3824, %v3817
    %v4497 = vpack.c.b16 %v3832, %v3825
    %v4498 = vpack.c.b16 %v3833, %v3826
    %v4499 = vpack.c.b16 %v3834, %v3827
    %v4500 = vpack.c.b16 %v3835, %v3828
    %v4501 = vpack.c.b16 %v3836, %v3829
    %v4502 = vpack.c.b16 %v3837, %v3830
    %v4503 = vpack.c.b16 %v3838, %v3831
    %v4504 = vpack.c.b16 %v3846, %v3839
    %v4505 = vpack.c.b16 %v3847, %v3840
    %v4506 = vpack.c.b16 %v3848, %v3841
    %v4507 = vpack.c.b16 %v3849, %v3842
    %v4508 = vpack.c.b16 %v3850, %v3843
    %v4509 = vpack.c.b16 %v3851, %v3844
    %v4510 = vpack.c.b16 %v3852, %v3845
    %v4511 = vpack.c.b16 %v3860, %v3853
    %v4512 = vpack.c.b16 %v3861, %v3854
    %v4513 = vpack.c.b16 %v3862, %v3855
    %v4514 = vpack.c.b16 %v3863, %v3856
    %v4515 = vpack.c.b16 %v3864, %v3857
    %v4516 = vpack.c.b16 %v3865, %v3858
    %v4517 = vpack.c.b16 %v3866, %v3859
    %v4518 = vpack.c.b16 %v3874, %v3867
    %v4519 = vpack.c.b16 %v3875, %v3868
    %v4520 = vpack.c.b16 %v3876, %v3869
    %v4521 = vpack.c.b16 %v3877, %v3870
    %v4522 = vpack.c.b16 %v3878, %v3871
    %v4523 = vpack.c.b16 %v3879, %v3872
    %v4524 = vpack.c.b16 %v3880, %v3873
    %v4525 = vpack.c.b16 %v3888, %v3881
    %v4526 = vpack.c.b16 %v3889, %v3882
    %v4527 = vpack.c.b16 %v3890, %v3883
    %v4528 = vpack.c.b16 %v3891, %v3884
    %v4529 = vpack.c.b16 %v3892, %v3885
    %v4530 = vpack.c.b16 %v3893, %v3886
    %v4531 = vpack.c.b16 %v3894, %v3887
    %v4532 = vpack.c.b16 %v3902, %v3895
    %v4533 = vpack.c.b16 %v3903, %v3896
    %v4534 = vpack.c.b16 %v3904, %v3897
    %v4535 = vpack.c.b16 %v3905, %v3898
    %v4536 = vpack.c.b16 %v3906, %v3899
    %v4537 = vpack.c.b16 %v3907, %v3900
    %v4538 = vpack.c.b16 %v3908, %v3901
    %v4539 = vpack.c.b16 %v3916, %v3909
    %v4540 = vpack.c.b16 %v3917, %v3910
    %v4541 = vpack.c.b16 %v3918, %v3911
    %v4542 = vpack.c.b16 %v3919, %v3912
    %v4543 = vpack.c.b16 %v3920, %v3913
    %v4544 = vpack.c.b16 %v3921, %v3914
    %v4545 = vpack.c.b16 %v3922, %v3915
    %v4546 = vpack.c.b16 %v3930, %v3923
    %v4547 = vpack.c.b16 %v3931, %v3924
    %v4548 = vpack.c.b16 %v3932, %v3925
    %v4549 = vpack.c.b16 %v3933, %v3926
    %v4550 = vpack.c.b16 %v3934, %v3927
    %v4551 = vpack.c.b16 %v3935, %v3928
    %v4552 = vpack.c.b16 %v3936, %v3929
    %v4553 = vpack.c.b16 %v3944, %v3937
    %v4554 = vpack.c.b16 %v3945, %v3938
    %v4555 = vpack.c.b16 %v3946, %v3939
    %v4556 = vpack.c.b16 %v3947, %v3940
    %v4557 = vpack.c.b16 %v3948, %v3941
    %v4558 = vpack.c.b16 %v3949, %v3942
    %v4559 = vpack.c.b16 %v3950, %v3943
    %v4560 = vpack.c.b16 %v3958, %v3951
    %v4561 = vpack.c.b16 %v3959, %v3952
    %v4562 = vpack.c.b16 %v3960, %v3953
    %v4563 = vpack.c.b16 %v3961, %v3954
    %v4564 = vpack.c.b16 %v3962, %v3955
    %v4565 = vpack.c.b16 %v3963, %v3956
    %v4566 = vpack.c.b16 %v3964, %v3957
    %v4567 = vpack.c.b16 %v3972, %v3965
    %v4568 = vpack.c.b16 %v3973, %v3966
    %v4569 = vpack.c.b16 %v3974, %v3967
    %v4570 = vpack.c.b16 %v3975, %v3968
    %v4571 = vpack.c.b16 %v3976, %v3969
    %v4572 = vpack.c.b16 %v3977, %v3970
    %v4573 = vpack.c.b16 %v3978, %v3971
    %v4574 = vpack.c.b16 %v3986, %v3979
    %v4575 = vpack.c.b16 %v3987, %v3980
    %v4576 = vpack.c.b16 %v3988, %v3981
    %v4577 = vpack.c.b16 %v3989, %v3982
    %v4578 = vpack.c.b16 %v3990, %v3983
    %v4579 = vpack.c.b16 %v3991, %v3984
    %v4580 = vpack.c.b16 %v3992, %v3985
    %v4581 = vpack.c.b16 %v4000, %v3993
    %v4582 = vpack.c.b16 %v4001, %v3994
    %v4583 = vpack.c.b16 %v4002, %v3995
    %v4584 = vpack.c.b16 %v4003, %v3996
    %v4585 = vpack.c.b16 %v4004, %v3997
    %v4586 = vpack.c.b16 %v4005, %v3998
    %v4587 = vpack.c.b16 %v4006, %v3999
    %v4588 = vpack.c.b16 %v4014, %v4007
    %v4589 = vpack.c.b16 %v4015, %v4008
    %v4590 = vpack.c.b16 %v4016, %v4009
    %v4591 = vpack.c.b16 %v4017, %v4010
    %v4592 = vpack.c.b16 %v4018, %v4011
    %v4593 = vpack.c.b16 %v4019, %v4012
    %v4594 = vpack.c.b16 %v4020, %v4013
    %v4595 = vpack.c.b16 %v4028, %v4021
    %v4596 = vpack.c.b16 %v4029, %v4022
    %v4597 = vpack.c.b16 %v4030, %v4023
    %v4598 = vpack.c.b16 %v4031, %v4024
    %v4599 = vpack.c.b16 %v4032, %v4025
    %v4600 = vpack.c.b16 %v4033, %v4026
    %v4601 = vpack.c.b16 %v4034, %v4027
    %v4602 = vpack.c.b16 %v4042, %v4035
    %v4603 = vpack.c.b16 %v4043, %v4036
    %v4604 = vpack.c.b16 %v4044, %v4037
    %v4605 = vpack.c.b16 %v4045, %v4038
    %v4606 = vpack.c.b16 %v4046, %v4039
    %v4607 = vpack.c.b16 %v4047, %v4040
    %v4608 = vpack.c.b16 %v4048, %v4041
    %v4609 = vpack.c.b16 %v4056, %v4049
    %v4610 = vpack.c.b16 %v4057, %v4050
    %v4611 = vpack.c.b16 %v4058, %v4051
    %v4612 = vpack.c.b16 %v4059, %v4052
    %v4613 = vpack.c.b16 %v4060, %v4053
    %v4614 = vpack.c.b16 %v4061, %v4054
    %v4615 = vpack.c.b16 %v4062, %v4055
    %v4616 = vpack.c.b16 %v4070, %v4063
    %v4617 = vpack.c.b16 %v4071, %v4064
    %v4618 = vpack.c.b16 %v4072, %v4065
    %v4619 = vpack.c.b16 %v4073, %v4066
    %v4620 = vpack.c.b16 %v4074, %v4067
    %v4621 = vpack.c.b16 %v4075, %v4068
    %v4622 = vpack.c.b16 %v4076, %v4069
    %v4623 = vpack.c.b16 %v4084, %v4077
    %v4624 = vpack.c.b16 %v4085, %v4078
    %v4625 = vpack.c.b16 %v4086, %v4079
    %v4626 = vpack.c.b16 %v4087, %v4080
    %v4627 = vpack.c.b16 %v4088, %v4081
    %v4628 = vpack.c.b16 %v4089, %v4082
    %v4629 = vpack.c.b16 %v4090, %v4083
    %v4630 = vpack.c.b16 %v4098, %v4091
    %v4631 = vpack.c.b16 %v4099, %v4092
    %v4632 = vpack.c.b16 %v4100, %v4093
    %v4633 = vpack.c.b16 %v4101, %v4094
    %v4634 = vpack.c.b16 %v4102, %v4095
    %v4635 = vpack.c.b16 %v4103, %v4096
    %v4636 = vpack.c.b16 %v4104, %v4097
    %v4637 = vpack.c.b16 %v4112, %v4105
    %v4638 = vpack.c.b16 %v4113, %v4106
    %v4639 = vpack.c.b16 %v4114, %v4107
    %v4640 = vpack.c.b16 %v4115, %v4108
    %v4641 = vpack.c.b16 %v4116, %v4109
    %v4642 = vpack.c.b16 %v4117, %v4110
    %v4643 = vpack.c.b16 %v4118, %v4111
    %v4644 = vpack.c.b16 %v4126, %v4119
    %v4645 = vpack.c.b16 %v4127, %v4120
    %v4646 = vpack.c.b16 %v4128, %v4121
    %v4647 = vpack.c.b16 %v4129, %v4122
    %v4648 = vpack.c.b16 %v4130, %v4123
    %v4649 = vpack.c.b16 %v4131, %v4124
    %v4650 = vpack.c.b16 %v4132, %v4125
    %v4651 = vpack.c.b16 %v4140, %v4133
    %v4652 = vpack.c.b16 %v4141, %v4134
    %v4653 = vpack.c.b16 %v4142, %v4135
    %v4654 = vpack.c.b16 %v4143, %v4136
    %v4655 = vpack.c.b16 %v4144, %v4137
    %v4656 = vpack.c.b16 %v4145, %v4138
    %v4657 = vpack.c.b16 %v4146, %v4139
    %v4658 = vpack.c.b16 %v4154, %v4147
    %v4659 = vpack.c.b16 %v4155, %v4148
    %v4660 = vpack.c.b16 %v4156, %v4149
    %v4661 = vpack.c.b16 %v4157, %v4150
    %v4662 = vpack.c.b16 %v4158, %v4151
    %v4663 = vpack.c.b16 %v4159, %v4152
    %v4664 = vpack.c.b16 %v4160, %v4153
    %v4665 = vpack.c.b16 %v4168, %v4161
    %v4666 = vpack.c.b16 %v4169, %v4162
    %v4667 = vpack.c.b16 %v4170, %v4163
    %v4668 = vpack.c.b16 %v4171, %v4164
    %v4669 = vpack.c.b16 %v4172, %v4165
    %v4670 = vpack.c.b16 %v4173, %v4166
    %v4671 = vpack.c.b16 %v4174, %v4167
    %v4672 = vpack.c.b16 %v4182, %v4175
    %v4673 = vpack.c.b16 %v4183, %v4176
    %v4674 = vpack.c.b16 %v4184, %v4177
    %v4675 = vpack.c.b16 %v4185, %v4178
    %v4676 = vpack.c.b16 %v4186, %v4179
    %v4677 = vpack.c.b16 %v4187, %v4180
    %v4678 = vpack.c.b16 %v4188, %v4181
    %v4679 = vpack.c.b16 %v4196, %v4189
    %v4680 = vpack.c.b16 %v4197, %v4190
    %v4681 = vpack.c.b16 %v4198, %v4191
    %v4682 = vpack.c.b16 %v4199, %v4192
    %v4683 = vpack.c.b16 %v4200, %v4193
    %v4684 = vpack.c.b16 %v4201, %v4194
    %v4685 = vpack.c.b16 %v4202, %v4195
    %v4686 = vpack.c.b16 %v4210, %v4203
    %v4687 = vpack.c.b16 %v4211, %v4204
    %v4688 = vpack.c.b16 %v4212, %v4205
    %v4689 = vpack.c.b16 %v4213, %v4206
    %v4690 = vpack.c.b16 %v4214, %v4207
    %v4691 = vpack.c.b16 %v4215, %v4208
    %v4692 = vpack.c.b16 %v4216, %v4209
    %v4693 = vpack.c.b16 %v4224, %v4217
    %v4694 = vpack.c.b16 %v4225, %v4218
    %v4695 = vpack.c.b16 %v4226, %v4219
    %v4696 = vpack.c.b16 %v4227, %v4220
    %v4697 = vpack.c.b16 %v4228, %v4221
    %v4698 = vpack.c.b16 %v4229, %v4222
    %v4699 = vpack.c.b16 %v4230, %v4223
    %v4700 = vpack.c.b16 %v4238, %v4231
    %v4701 = vpack.c.b16 %v4239, %v4232
    %v4702 = vpack.c.b16 %v4240, %v4233
    %v4703 = vpack.c.b16 %v4241, %v4234
    %v4704 = vpack.c.b16 %v4242, %v4235
    %v4705 = vpack.c.b16 %v4243, %v4236
    %v4706 = vpack.c.b16 %v4244, %v4237
    %v4707 = vpack.c.b16 %v4252, %v4245
    %v4708 = vpack.c.b16 %v4253, %v4246
    %v4709 = vpack.c.b16 %v4254, %v4247
    %v4710 = vpack.c.b16 %v4255, %v4248
    %v4711 = vpack.c.b16 %v4256, %v4249
    %v4712 = vpack.c.b16 %v4257, %v4250
    %v4713 = vpack.c.b16 %v4258, %v4251
    %v4714 = vpack.c.b16 %v4266, %v4259
    %v4715 = vpack.c.b16 %v4267, %v4260
    %v4716 = vpack.c.b16 %v4268, %v4261
    %v4717 = vpack.c.b16 %v4269, %v4262
    %v4718 = vpack.c.b16 %v4270, %v4263
    %v4719 = vpack.c.b16 %v4271, %v4264
    %v4720 = vpack.c.b16 %v4272, %v4265
    %v4721 = vpack.c.b16 %v4280, %v4273
    %v4722 = vpack.c.b16 %v4281, %v4274
    %v4723 = vpack.c.b16 %v4282, %v4275
    %v4724 = vpack.c.b16 %v4283, %v4276
    %v4725 = vpack.c.b16 %v4284, %v4277
    %v4726 = vpack.c.b16 %v4285, %v4278
    %v4727 = vpack.c.b16 %v4286, %v4279
    %v4728 = vpack.c.b16 %v4294, %v4287
    %v4729 = vpack.c.b16 %v4295, %v4288
    %v4730 = vpack.c.b16 %v4296, %v4289
    %v4731 = vpack.c.b16 %v4297, %v4290
    %v4732 = vpack.c.b16 %v4298, %v4291
    %v4733 = vpack.c.b16 %v4299, %v4292
    %v4734 = vpack.c.b16 %v4300, %v4293
    %v4735 = vpack.c.b16 %v4308, %v4301
    %v4736 = vpack.c.b16 %v4309, %v4302
    %v4737 = vpack.c.b16 %v4310, %v4303
    %v4738 = vpack.c.b16 %v4311, %v4304
    %v4739 = vpack.c.b16 %v4312, %v4305
    %v4740 = vpack.c.b16 %v4313, %v4306
    %v4741 = vpack.c.b16 %v4314, %v4307
    %v4742 = vpack.c.b16 %v4322, %v4315
    %v4743 = vpack.c.b16 %v4323, %v4316
    %v4744 = vpack.c.b16 %v4324, %v4317
    %v4745 = vpack.c.b16 %v4325, %v4318
    %v4746 = vpack.c.b16 %v4326, %v4319
    %v4747 = vpack.c.b16 %v4327, %v4320
    %v4748 = vpack.c.b16 %v4328, %v4321
    %v4749 = vpack.c.b16 %v4336, %v4329
    %v4750 = vpack.c.b16 %v4337, %v4330
    %v4751 = vpack.c.b16 %v4338, %v4331
    %v4752 = vpack.c.b16 %v4339, %v4332
    %v4753 = vpack.c.b16 %v4340, %v4333
    %v4754 = vpack.c.b16 %v4341, %v4334
    %v4755 = vpack.c.b16 %v4342, %v4335
    %v4756 = vpack.c.b16 %v4350, %v4343
    %v4757 = vpack.c.b16 %v4351, %v4344
    %v4758 = vpack.c.b16 %v4352, %v4345
    %v4759 = vpack.c.b16 %v4353, %v4346
    %v4760 = vpack.c.b16 %v4354, %v4347
    %v4761 = vpack.c.b16 %v4355, %v4348
    %v4762 = vpack.c.b16 %v4356, %v4349
    %v4763 = vpack.c.b16 %v4364, %v4357
    %v4764 = vpack.c.b16 %v4365, %v4358
    %v4765 = vpack.c.b16 %v4366, %v4359
    %v4766 = vpack.c.b16 %v4367, %v4360
    %v4767 = vpack.c.b16 %v4368, %v4361
    %v4768 = vpack.c.b16 %v4369, %v4362
    %v4769 = vpack.c.b16 %v4370, %v4363
    %v4770 = vpack.c.b16 %v4378, %v4371
    %v4771 = vpack.c.b16 %v4379, %v4372
    %v4772 = vpack.c.b16 %v4380, %v4373
    %v4773 = vpack.c.b16 %v4381, %v4374
    %v4774 = vpack.c.b16 %v4382, %v4375
    %v4775 = vpack.c.b16 %v4383, %v4376
    %v4776 = vpack.c.b16 %v4384, %v4377
    %v4777 = vpack.c.b16 %v4392, %v4385
    %v4778 = vpack.c.b16 %v4393, %v4386
    %v4779 = vpack.c.b16 %v4394, %v4387
    %v4780 = vpack.c.b16 %v4395, %v4388
    %v4781 = vpack.c.b16 %v4396, %v4389
    %v4782 = vpack.c.b16 %v4397, %v4390
    %v4783 = vpack.c.b16 %v4398, %v4391
    %v4784 = vpack.c.b16 %v4406, %v4399
    %v4785 = vpack.c.b16 %v4407, %v4400
    %v4786 = vpack.c.b16 %v4408, %v4401
    %v4787 = vpack.c.b16 %v4409, %v4402
    %v4788 = vpack.c.b16 %v4410, %v4403
    %v4789 = vpack.c.b16 %v4411, %v4404
    %v4790 = vpack.c.b16 %v4412, %v4405
    %v4791 = vpack.c.b16 %v4420, %v4413
    %v4792 = vpack.c.b16 %v4421, %v4414
    %v4793 = vpack.c.b16 %v4422, %v4415
    %v4794 = vpack.c.b16 %v4423, %v4416
    %v4795 = vpack.c.b16 %v4424, %v4417
    %v4796 = vpack.c.b16 %v4425, %v4418
    %v4797 = vpack.c.b16 %v4426, %v4419
    %v4798 = vpack.c.b16 %v4434, %v4427
    %v4799 = vpack.c.b16 %v4435, %v4428
    %v4800 = vpack.c.b16 %v4436, %v4429
    %v4801 = vpack.c.b16 %v4437, %v4430
    %v4802 = vpack.c.b16 %v4438, %v4431
    %v4803 = vpack.c.b16 %v4439, %v4432
    %v4804 = vpack.c.b16 %v4440, %v4433
    %v4805 = vpack.c.b16 %v4448, %v4441
    %v4806 = vpack.c.b16 %v4449, %v4442
    %v4807 = vpack.c.b16 %v4450, %v4443
    %v4808 = vpack.c.b16 %v4451, %v4444
    %v4809 = vpack.c.b16 %v4452, %v4445
    %v4810 = vpack.c.b16 %v4453, %v4446
    %v4811 = vpack.c.b16 %v4454, %v4447
    %v4812 = vpack.c.b16 %v4462, %v4455
    %v4813 = vpack.c.b16 %v4463, %v4456
    %v4814 = vpack.c.b16 %v4464, %v4457
    %v4815 = vpack.c.b16 %v4465, %v4458
    %v4816 = vpack.c.b16 %v4466, %v4459
    %v4817 = vpack.c.b16 %v4467, %v4460
    %v4818 = vpack.c.b16 %v4468, %v4461
    %v4819 = vpack.c.b16 %v4476, %v4469
    %v4820 = vpack.c.b16 %v4477, %v4470
    %v4821 = vpack.c.b16 %v4478, %v4471
    %v4822 = vpack.c.b16 %v4479, %v4472
    %v4823 = vpack.c.b16 %v4480, %v4473
    %v4824 = vpack.c.b16 %v4481, %v4474
    %v4825 = vpack.c.b16 %v4482, %v4475
    %v5169 = vsel %vm2358, %v3398, 0
    %5171 = vmatpush.bf16.msra.mxu0 %v4532
    %5172 = vmatpush.bf16.msra.mxu0 %v4525
    %5173 = vmatpush.bf16.msra.mxu0 %v4518
    %5174 = vmatpush.bf16.msra.mxu0 %v4511
    %5175 = vmatpush.bf16.msra.mxu0 %v4504
    %5176 = vmatpush.bf16.msra.mxu0 %v4497
    %5177 = vmatpush.bf16.msra.mxu0 %v4490
    %5178 = vmatpush.bf16.msra.mxu0 %v4483
    %5179 = vmatmul.bf16.gmra.mxu0 %v3392
    %v5180 = vpop.f32.mrf.mxu0
    %v5181 = vadd.f32 0.0, %v5180
    %v5182 = vpop.f32.mrf.mxu0
    %5183 = vdwg.mxu0
    %5184 = vmatpush.bf16.msra.mxu0 %v4588
    %5185 = vmatpush.bf16.msra.mxu0 %v4581
    %5186 = vmatpush.bf16.msra.mxu0 %v4574
    %5187 = vmatpush.bf16.msra.mxu0 %v4567
    %5188 = vmatpush.bf16.msra.mxu0 %v4560
    %5189 = vmatpush.bf16.msra.mxu0 %v4553
    %5190 = vmatpush.bf16.msra.mxu0 %v4546
    %5191 = vmatpush.bf16.msra.mxu0 %v4539
    %5192 = vmatmul.bf16.gmra.mxu0 %v3393
    %v5193 = vpop.f32.mrf.mxu0
    %v5194 = vadd.f32 %v5181, %v5193
    %v5195 = vpop.f32.mrf.mxu0
    %5196 = vdwg.mxu0
    %5197 = vmatpush.bf16.msra.mxu0 %v4644
    %5198 = vmatpush.bf16.msra.mxu0 %v4637
    %5199 = vmatpush.bf16.msra.mxu0 %v4630
    %5200 = vmatpush.bf16.msra.mxu0 %v4623
    %5201 = vmatpush.bf16.msra.mxu0 %v4616
    %5202 = vmatpush.bf16.msra.mxu0 %v4609
    %5203 = vmatpush.bf16.msra.mxu0 %v4602
    %5204 = vmatpush.bf16.msra.mxu0 %v4595
    %5205 = vmatmul.bf16.gmra.mxu0 %v3394
    %v5206 = vpop.f32.mrf.mxu0
    %v5207 = vadd.f32 %v5194, %v5206
    %v5208 = vpop.f32.mrf.mxu0
    %5209 = vdwg.mxu0
    %5210 = vmatpush.bf16.msra.mxu0 %v4700
    %5211 = vmatpush.bf16.msra.mxu0 %v4693
    %5212 = vmatpush.bf16.msra.mxu0 %v4686
    %5213 = vmatpush.bf16.msra.mxu0 %v4679
    %5214 = vmatpush.bf16.msra.mxu0 %v4672
    %5215 = vmatpush.bf16.msra.mxu0 %v4665
    %5216 = vmatpush.bf16.msra.mxu0 %v4658
    %5217 = vmatpush.bf16.msra.mxu0 %v4651
    %5218 = vmatmul.bf16.gmra.mxu0 %v3395
    %v5219 = vpop.f32.mrf.mxu0
    %v5220 = vadd.f32 %v5207, %v5219
    %v5221 = vpop.f32.mrf.mxu0
    %5222 = vdwg.mxu0
    %5223 = vmatpush.bf16.msra.mxu0 %v4756
    %5224 = vmatpush.bf16.msra.mxu0 %v4749
    %5225 = vmatpush.bf16.msra.mxu0 %v4742
    %5226 = vmatpush.bf16.msra.mxu0 %v4735
    %5227 = vmatpush.bf16.msra.mxu0 %v4728
    %5228 = vmatpush.bf16.msra.mxu0 %v4721
    %5229 = vmatpush.bf16.msra.mxu0 %v4714
    %5230 = vmatpush.bf16.msra.mxu0 %v4707
    %5231 = vmatmul.bf16.gmra.mxu0 %v3396
    %v5232 = vpop.f32.mrf.mxu0
    %v5233 = vadd.f32 %v5220, %v5232
    %v5234 = vpop.f32.mrf.mxu0
    %5235 = vdwg.mxu0
    %5236 = vmatpush.bf16.msra.mxu0 %v4812
    %5237 = vmatpush.bf16.msra.mxu0 %v4805
    %5238 = vmatpush.bf16.msra.mxu0 %v4798
    %5239 = vmatpush.bf16.msra.mxu0 %v4791
    %5240 = vmatpush.bf16.msra.mxu0 %v4784
    %5241 = vmatpush.bf16.msra.mxu0 %v4777
    %5242 = vmatpush.bf16.msra.mxu0 %v4770
    %5243 = vmatpush.bf16.msra.mxu0 %v4763
    %5244 = vmatmul.bf16.gmra.mxu0 %v3397
    %v5245 = vpop.f32.mrf.mxu0
    %v5246 = vadd.f32 %v5233, %v5245
    %v5247 = vpop.f32.mrf.mxu0
    %5248 = vdwg.mxu0
    %5249 = vmatpush.bf16.msra.mxu0 0
    %5250 = vmatpush.bf16.msra.mxu0 0
    %5251 = vmatpush.bf16.msra.mxu0 0
    %5252 = vmatpush.bf16.msra.mxu0 0
    %5253 = vmatpush.bf16.msra.mxu0 0
    %5254 = vmatpush.bf16.msra.mxu0 0
    %5255 = vmatpush.bf16.msra.mxu0 0
    %5256 = vmatpush.bf16.msra.mxu0 %v4819
    %5257 = vmatmul.bf16.gmra.mxu0 %v5169
    %v5258 = vpop.f32.mrf.mxu0
    %v5259 = vadd.f32 %v5246, %v5258
    %v5260 = vpop.f32.mrf.mxu0
    %5261 = vdwg.mxu0
    %5262 = vmatpush.bf16.msra.mxu0 %v4533
    %5263 = vmatpush.bf16.msra.mxu0 %v4526
    %5264 = vmatpush.bf16.msra.mxu0 %v4519
    %5265 = vmatpush.bf16.msra.mxu0 %v4512
    %5266 = vmatpush.bf16.msra.mxu0 %v4505
    %5267 = vmatpush.bf16.msra.mxu0 %v4498
    %5268 = vmatpush.bf16.msra.mxu0 %v4491
    %5269 = vmatpush.bf16.msra.mxu0 %v4484
    %5270 = vmatmul.bf16.gmra.mxu0 %v3392
    %v5271 = vpop.f32.mrf.mxu0
    %v5272 = vadd.f32 0.0, %v5271
    %v5273 = vpop.f32.mrf.mxu0
    %5274 = vdwg.mxu0
    %5275 = vmatpush.bf16.msra.mxu0 %v4589
    %5276 = vmatpush.bf16.msra.mxu0 %v4582
    %5277 = vmatpush.bf16.msra.mxu0 %v4575
    %5278 = vmatpush.bf16.msra.mxu0 %v4568
    %5279 = vmatpush.bf16.msra.mxu0 %v4561
    %5280 = vmatpush.bf16.msra.mxu0 %v4554
    %5281 = vmatpush.bf16.msra.mxu0 %v4547
    %5282 = vmatpush.bf16.msra.mxu0 %v4540
    %5283 = vmatmul.bf16.gmra.mxu0 %v3393
    %v5284 = vpop.f32.mrf.mxu0
    %v5285 = vadd.f32 %v5272, %v5284
    %v5286 = vpop.f32.mrf.mxu0
    %5287 = vdwg.mxu0
    %5288 = vmatpush.bf16.msra.mxu0 %v4645
    %5289 = vmatpush.bf16.msra.mxu0 %v4638
    %5290 = vmatpush.bf16.msra.mxu0 %v4631
    %5291 = vmatpush.bf16.msra.mxu0 %v4624
    %5292 = vmatpush.bf16.msra.mxu0 %v4617
    %5293 = vmatpush.bf16.msra.mxu0 %v4610
    %5294 = vmatpush.bf16.msra.mxu0 %v4603
    %5295 = vmatpush.bf16.msra.mxu0 %v4596
    %5296 = vmatmul.bf16.gmra.mxu0 %v3394
    %v5297 = vpop.f32.mrf.mxu0
    %v5298 = vadd.f32 %v5285, %v5297
    %v5299 = vpop.f32.mrf.mxu0
    %5300 = vdwg.mxu0
    %5301 = vmatpush.bf16.msra.mxu0 %v4701
    %5302 = vmatpush.bf16.msra.mxu0 %v4694
    %5303 = vmatpush.bf16.msra.mxu0 %v4687
    %5304 = vmatpush.bf16.msra.mxu0 %v4680
    %5305 = vmatpush.bf16.msra.mxu0 %v4673
    %5306 = vmatpush.bf16.msra.mxu0 %v4666
    %5307 = vmatpush.bf16.msra.mxu0 %v4659
    %5308 = vmatpush.bf16.msra.mxu0 %v4652
    %5309 = vmatmul.bf16.gmra.mxu0 %v3395
    %v5310 = vpop.f32.mrf.mxu0
    %v5311 = vadd.f32 %v5298, %v5310
    %v5312 = vpop.f32.mrf.mxu0
    %5313 = vdwg.mxu0
    %5314 = vmatpush.bf16.msra.mxu0 %v4757
    %5315 = vmatpush.bf16.msra.mxu0 %v4750
    %5316 = vmatpush.bf16.msra.mxu0 %v4743
    %5317 = vmatpush.bf16.msra.mxu0 %v4736
    %5318 = vmatpush.bf16.msra.mxu0 %v4729
    %5319 = vmatpush.bf16.msra.mxu0 %v4722
    %5320 = vmatpush.bf16.msra.mxu0 %v4715
    %5321 = vmatpush.bf16.msra.mxu0 %v4708
    %5322 = vmatmul.bf16.gmra.mxu0 %v3396
    %v5323 = vpop.f32.mrf.mxu0
    %v5324 = vadd.f32 %v5311, %v5323
    %v5325 = vpop.f32.mrf.mxu0
    %5326 = vdwg.mxu0
    %5327 = vmatpush.bf16.msra.mxu0 %v4813
    %5328 = vmatpush.bf16.msra.mxu0 %v4806
    %5329 = vmatpush.bf16.msra.mxu0 %v4799
    %5330 = vmatpush.bf16.msra.mxu0 %v4792
    %5331 = vmatpush.bf16.msra.mxu0 %v4785
    %5332 = vmatpush.bf16.msra.mxu0 %v4778
    %5333 = vmatpush.bf16.msra.mxu0 %v4771
    %5334 = vmatpush.bf16.msra.mxu0 %v4764
    %5335 = vmatmul.bf16.gmra.mxu0 %v3397
    %v5336 = vpop.f32.mrf.mxu0
    %v5337 = vadd.f32 %v5324, %v5336
    %v5338 = vpop.f32.mrf.mxu0
    %5339 = vdwg.mxu0
    %5340 = vmatpush.bf16.msra.mxu0 0
    %5341 = vmatpush.bf16.msra.mxu0 0
    %5342 = vmatpush.bf16.msra.mxu0 0
    %5343 = vmatpush.bf16.msra.mxu0 0
    %5344 = vmatpush.bf16.msra.mxu0 0
    %5345 = vmatpush.bf16.msra.mxu0 0
    %5346 = vmatpush.bf16.msra.mxu0 0
    %5347 = vmatpush.bf16.msra.mxu0 %v4820
    %5348 = vmatmul.bf16.gmra.mxu0 %v5169
    %v5349 = vpop.f32.mrf.mxu0
    %v5350 = vadd.f32 %v5337, %v5349
    %v5351 = vpop.f32.mrf.mxu0
    %5352 = vdwg.mxu0
    %5353 = vmatpush.bf16.msra.mxu0 %v4534
    %5354 = vmatpush.bf16.msra.mxu0 %v4527
    %5355 = vmatpush.bf16.msra.mxu0 %v4520
    %5356 = vmatpush.bf16.msra.mxu0 %v4513
    %5357 = vmatpush.bf16.msra.mxu0 %v4506
    %5358 = vmatpush.bf16.msra.mxu0 %v4499
    %5359 = vmatpush.bf16.msra.mxu0 %v4492
    %5360 = vmatpush.bf16.msra.mxu0 %v4485
    %5361 = vmatmul.bf16.gmra.mxu0 %v3392
    %v5362 = vpop.f32.mrf.mxu0
    %v5363 = vadd.f32 0.0, %v5362
    %v5364 = vpop.f32.mrf.mxu0
    %5365 = vdwg.mxu0
    %5366 = vmatpush.bf16.msra.mxu0 %v4590
    %5367 = vmatpush.bf16.msra.mxu0 %v4583
    %5368 = vmatpush.bf16.msra.mxu0 %v4576
    %5369 = vmatpush.bf16.msra.mxu0 %v4569
    %5370 = vmatpush.bf16.msra.mxu0 %v4562
    %5371 = vmatpush.bf16.msra.mxu0 %v4555
    %5372 = vmatpush.bf16.msra.mxu0 %v4548
    %5373 = vmatpush.bf16.msra.mxu0 %v4541
    %5374 = vmatmul.bf16.gmra.mxu0 %v3393
    %v5375 = vpop.f32.mrf.mxu0
    %v5376 = vadd.f32 %v5363, %v5375
    %v5377 = vpop.f32.mrf.mxu0
    %5378 = vdwg.mxu0
    %5379 = vmatpush.bf16.msra.mxu0 %v4646
    %5380 = vmatpush.bf16.msra.mxu0 %v4639
    %5381 = vmatpush.bf16.msra.mxu0 %v4632
    %5382 = vmatpush.bf16.msra.mxu0 %v4625
    %5383 = vmatpush.bf16.msra.mxu0 %v4618
    %5384 = vmatpush.bf16.msra.mxu0 %v4611
    %5385 = vmatpush.bf16.msra.mxu0 %v4604
    %5386 = vmatpush.bf16.msra.mxu0 %v4597
    %5387 = vmatmul.bf16.gmra.mxu0 %v3394
    %v5388 = vpop.f32.mrf.mxu0
    %v5389 = vadd.f32 %v5376, %v5388
    %v5390 = vpop.f32.mrf.mxu0
    %5391 = vdwg.mxu0
    %5392 = vmatpush.bf16.msra.mxu0 %v4702
    %5393 = vmatpush.bf16.msra.mxu0 %v4695
    %5394 = vmatpush.bf16.msra.mxu0 %v4688
    %5395 = vmatpush.bf16.msra.mxu0 %v4681
    %5396 = vmatpush.bf16.msra.mxu0 %v4674
    %5397 = vmatpush.bf16.msra.mxu0 %v4667
    %5398 = vmatpush.bf16.msra.mxu0 %v4660
    %5399 = vmatpush.bf16.msra.mxu0 %v4653
    %5400 = vmatmul.bf16.gmra.mxu0 %v3395
    %v5401 = vpop.f32.mrf.mxu0
    %v5402 = vadd.f32 %v5389, %v5401
    %v5403 = vpop.f32.mrf.mxu0
    %5404 = vdwg.mxu0
    %5405 = vmatpush.bf16.msra.mxu0 %v4758
    %5406 = vmatpush.bf16.msra.mxu0 %v4751
    %5407 = vmatpush.bf16.msra.mxu0 %v4744
    %5408 = vmatpush.bf16.msra.mxu0 %v4737
    %5409 = vmatpush.bf16.msra.mxu0 %v4730
    %5410 = vmatpush.bf16.msra.mxu0 %v4723
    %5411 = vmatpush.bf16.msra.mxu0 %v4716
    %5412 = vmatpush.bf16.msra.mxu0 %v4709
    %5413 = vmatmul.bf16.gmra.mxu0 %v3396
    %v5414 = vpop.f32.mrf.mxu0
    %v5415 = vadd.f32 %v5402, %v5414
    %v5416 = vpop.f32.mrf.mxu0
    %5417 = vdwg.mxu0
    %5418 = vmatpush.bf16.msra.mxu0 %v4814
    %5419 = vmatpush.bf16.msra.mxu0 %v4807
    %5420 = vmatpush.bf16.msra.mxu0 %v4800
    %5421 = vmatpush.bf16.msra.mxu0 %v4793
    %5422 = vmatpush.bf16.msra.mxu0 %v4786
    %5423 = vmatpush.bf16.msra.mxu0 %v4779
    %5424 = vmatpush.bf16.msra.mxu0 %v4772
    %5425 = vmatpush.bf16.msra.mxu0 %v4765
    %5426 = vmatmul.bf16.gmra.mxu0 %v3397
    %v5427 = vpop.f32.mrf.mxu0
    %v5428 = vadd.f32 %v5415, %v5427
    %v5429 = vpop.f32.mrf.mxu0
    %5430 = vdwg.mxu0
    %5431 = vmatpush.bf16.msra.mxu0 0
    %5432 = vmatpush.bf16.msra.mxu0 0
    %5433 = vmatpush.bf16.msra.mxu0 0
    %5434 = vmatpush.bf16.msra.mxu0 0
    %5435 = vmatpush.bf16.msra.mxu0 0
    %5436 = vmatpush.bf16.msra.mxu0 0
    %5437 = vmatpush.bf16.msra.mxu0 0
    %5438 = vmatpush.bf16.msra.mxu0 %v4821
    %5439 = vmatmul.bf16.gmra.mxu0 %v5169
    %v5440 = vpop.f32.mrf.mxu0
    %v5441 = vadd.f32 %v5428, %v5440
    %v5442 = vpop.f32.mrf.mxu0
    %5443 = vdwg.mxu0
    %5444 = vmatpush.bf16.msra.mxu0 %v4535
    %5445 = vmatpush.bf16.msra.mxu0 %v4528
    %5446 = vmatpush.bf16.msra.mxu0 %v4521
    %5447 = vmatpush.bf16.msra.mxu0 %v4514
    %5448 = vmatpush.bf16.msra.mxu0 %v4507
    %5449 = vmatpush.bf16.msra.mxu0 %v4500
    %5450 = vmatpush.bf16.msra.mxu0 %v4493
    %5451 = vmatpush.bf16.msra.mxu0 %v4486
    %5452 = vmatmul.bf16.gmra.mxu0 %v3392
    %v5453 = vpop.f32.mrf.mxu0
    %v5454 = vadd.f32 0.0, %v5453
    %v5455 = vpop.f32.mrf.mxu0
    %5456 = vdwg.mxu0
    %5457 = vmatpush.bf16.msra.mxu0 %v4591
    %5458 = vmatpush.bf16.msra.mxu0 %v4584
    %5459 = vmatpush.bf16.msra.mxu0 %v4577
    %5460 = vmatpush.bf16.msra.mxu0 %v4570
    %5461 = vmatpush.bf16.msra.mxu0 %v4563
    %5462 = vmatpush.bf16.msra.mxu0 %v4556
    %5463 = vmatpush.bf16.msra.mxu0 %v4549
    %5464 = vmatpush.bf16.msra.mxu0 %v4542
    %5465 = vmatmul.bf16.gmra.mxu0 %v3393
    %v5466 = vpop.f32.mrf.mxu0
    %v5467 = vadd.f32 %v5454, %v5466
    %v5468 = vpop.f32.mrf.mxu0
    %5469 = vdwg.mxu0
    %5470 = vmatpush.bf16.msra.mxu0 %v4647
    %5471 = vmatpush.bf16.msra.mxu0 %v4640
    %5472 = vmatpush.bf16.msra.mxu0 %v4633
    %5473 = vmatpush.bf16.msra.mxu0 %v4626
    %5474 = vmatpush.bf16.msra.mxu0 %v4619
    %5475 = vmatpush.bf16.msra.mxu0 %v4612
    %5476 = vmatpush.bf16.msra.mxu0 %v4605
    %5477 = vmatpush.bf16.msra.mxu0 %v4598
    %5478 = vmatmul.bf16.gmra.mxu0 %v3394
    %v5479 = vpop.f32.mrf.mxu0
    %v5480 = vadd.f32 %v5467, %v5479
    %v5481 = vpop.f32.mrf.mxu0
    %5482 = vdwg.mxu0
    %5483 = vmatpush.bf16.msra.mxu0 %v4703
    %5484 = vmatpush.bf16.msra.mxu0 %v4696
    %5485 = vmatpush.bf16.msra.mxu0 %v4689
    %5486 = vmatpush.bf16.msra.mxu0 %v4682
    %5487 = vmatpush.bf16.msra.mxu0 %v4675
    %5488 = vmatpush.bf16.msra.mxu0 %v4668
    %5489 = vmatpush.bf16.msra.mxu0 %v4661
    %5490 = vmatpush.bf16.msra.mxu0 %v4654
    %5491 = vmatmul.bf16.gmra.mxu0 %v3395
    %v5492 = vpop.f32.mrf.mxu0
    %v5493 = vadd.f32 %v5480, %v5492
    %v5494 = vpop.f32.mrf.mxu0
    %5495 = vdwg.mxu0
    %5496 = vmatpush.bf16.msra.mxu0 %v4759
    %5497 = vmatpush.bf16.msra.mxu0 %v4752
    %5498 = vmatpush.bf16.msra.mxu0 %v4745
    %5499 = vmatpush.bf16.msra.mxu0 %v4738
    %5500 = vmatpush.bf16.msra.mxu0 %v4731
    %5501 = vmatpush.bf16.msra.mxu0 %v4724
    %5502 = vmatpush.bf16.msra.mxu0 %v4717
    %5503 = vmatpush.bf16.msra.mxu0 %v4710
    %5504 = vmatmul.bf16.gmra.mxu0 %v3396
    %v5505 = vpop.f32.mrf.mxu0
    %v5506 = vadd.f32 %v5493, %v5505
    %v5507 = vpop.f32.mrf.mxu0
    %5508 = vdwg.mxu0
    %5509 = vmatpush.bf16.msra.mxu0 %v4815
    %5510 = vmatpush.bf16.msra.mxu0 %v4808
    %5511 = vmatpush.bf16.msra.mxu0 %v4801
    %5512 = vmatpush.bf16.msra.mxu0 %v4794
    %5513 = vmatpush.bf16.msra.mxu0 %v4787
    %5514 = vmatpush.bf16.msra.mxu0 %v4780
    %5515 = vmatpush.bf16.msra.mxu0 %v4773
    %5516 = vmatpush.bf16.msra.mxu0 %v4766
    %5517 = vmatmul.bf16.gmra.mxu0 %v3397
    %v5518 = vpop.f32.mrf.mxu0
    %v5519 = vadd.f32 %v5506, %v5518
    %v5520 = vpop.f32.mrf.mxu0
    %5521 = vdwg.mxu0
    %5522 = vmatpush.bf16.msra.mxu0 0
    %5523 = vmatpush.bf16.msra.mxu0 0
    %5524 = vmatpush.bf16.msra.mxu0 0
    %5525 = vmatpush.bf16.msra.mxu0 0
    %5526 = vmatpush.bf16.msra.mxu0 0
    %5527 = vmatpush.bf16.msra.mxu0 0
    %5528 = vmatpush.bf16.msra.mxu0 0
    %5529 = vmatpush.bf16.msra.mxu0 %v4822
    %5530 = vmatmul.bf16.gmra.mxu0 %v5169
    %v5531 = vpop.f32.mrf.mxu0
    %v5532 = vadd.f32 %v5519, %v5531
    %v5533 = vpop.f32.mrf.mxu0
    %5534 = vdwg.mxu0
    %5535 = vmatpush.bf16.msra.mxu0 %v4536
    %5536 = vmatpush.bf16.msra.mxu0 %v4529
    %5537 = vmatpush.bf16.msra.mxu0 %v4522
    %5538 = vmatpush.bf16.msra.mxu0 %v4515
    %5539 = vmatpush.bf16.msra.mxu0 %v4508
    %5540 = vmatpush.bf16.msra.mxu0 %v4501
    %5541 = vmatpush.bf16.msra.mxu0 %v4494
    %5542 = vmatpush.bf16.msra.mxu0 %v4487
    %5543 = vmatmul.bf16.gmra.mxu0 %v3392
    %v5544 = vpop.f32.mrf.mxu0
    %v5545 = vadd.f32 0.0, %v5544
    %v5546 = vpop.f32.mrf.mxu0
    %5547 = vdwg.mxu0
    %5548 = vmatpush.bf16.msra.mxu0 %v4592
    %5549 = vmatpush.bf16.msra.mxu0 %v4585
    %5550 = vmatpush.bf16.msra.mxu0 %v4578
    %5551 = vmatpush.bf16.msra.mxu0 %v4571
    %5552 = vmatpush.bf16.msra.mxu0 %v4564
    %5553 = vmatpush.bf16.msra.mxu0 %v4557
    %5554 = vmatpush.bf16.msra.mxu0 %v4550
    %5555 = vmatpush.bf16.msra.mxu0 %v4543
    %5556 = vmatmul.bf16.gmra.mxu0 %v3393
    %v5557 = vpop.f32.mrf.mxu0
    %v5558 = vadd.f32 %v5545, %v5557
    %v5559 = vpop.f32.mrf.mxu0
    %5560 = vdwg.mxu0
    %5561 = vmatpush.bf16.msra.mxu0 %v4648
    %5562 = vmatpush.bf16.msra.mxu0 %v4641
    %5563 = vmatpush.bf16.msra.mxu0 %v4634
    %5564 = vmatpush.bf16.msra.mxu0 %v4627
    %5565 = vmatpush.bf16.msra.mxu0 %v4620
    %5566 = vmatpush.bf16.msra.mxu0 %v4613
    %5567 = vmatpush.bf16.msra.mxu0 %v4606
    %5568 = vmatpush.bf16.msra.mxu0 %v4599
    %5569 = vmatmul.bf16.gmra.mxu0 %v3394
    %v5570 = vpop.f32.mrf.mxu0
    %v5571 = vadd.f32 %v5558, %v5570
    %v5572 = vpop.f32.mrf.mxu0
    %5573 = vdwg.mxu0
    %5574 = vmatpush.bf16.msra.mxu0 %v4704
    %5575 = vmatpush.bf16.msra.mxu0 %v4697
    %5576 = vmatpush.bf16.msra.mxu0 %v4690
    %5577 = vmatpush.bf16.msra.mxu0 %v4683
    %5578 = vmatpush.bf16.msra.mxu0 %v4676
    %5579 = vmatpush.bf16.msra.mxu0 %v4669
    %5580 = vmatpush.bf16.msra.mxu0 %v4662
    %5581 = vmatpush.bf16.msra.mxu0 %v4655
    %5582 = vmatmul.bf16.gmra.mxu0 %v3395
    %v5583 = vpop.f32.mrf.mxu0
    %v5584 = vadd.f32 %v5571, %v5583
    %v5585 = vpop.f32.mrf.mxu0
    %5586 = vdwg.mxu0
    %5587 = vmatpush.bf16.msra.mxu0 %v4760
    %5588 = vmatpush.bf16.msra.mxu0 %v4753
    %5589 = vmatpush.bf16.msra.mxu0 %v4746
    %5590 = vmatpush.bf16.msra.mxu0 %v4739
    %5591 = vmatpush.bf16.msra.mxu0 %v4732
    %5592 = vmatpush.bf16.msra.mxu0 %v4725
    %5593 = vmatpush.bf16.msra.mxu0 %v4718
    %5594 = vmatpush.bf16.msra.mxu0 %v4711
    %5595 = vmatmul.bf16.gmra.mxu0 %v3396
    %v5596 = vpop.f32.mrf.mxu0
    %v5597 = vadd.f32 %v5584, %v5596
    %v5598 = vpop.f32.mrf.mxu0
    %5599 = vdwg.mxu0
    %5600 = vmatpush.bf16.msra.mxu0 %v4816
    %5601 = vmatpush.bf16.msra.mxu0 %v4809
    %5602 = vmatpush.bf16.msra.mxu0 %v4802
    %5603 = vmatpush.bf16.msra.mxu0 %v4795
    %5604 = vmatpush.bf16.msra.mxu0 %v4788
    %5605 = vmatpush.bf16.msra.mxu0 %v4781
    %5606 = vmatpush.bf16.msra.mxu0 %v4774
    %5607 = vmatpush.bf16.msra.mxu0 %v4767
    %5608 = vmatmul.bf16.gmra.mxu0 %v3397
    %v5609 = vpop.f32.mrf.mxu0
    %v5610 = vadd.f32 %v5597, %v5609
    %v5611 = vpop.f32.mrf.mxu0
    %5612 = vdwg.mxu0
    %5613 = vmatpush.bf16.msra.mxu0 0
    %5614 = vmatpush.bf16.msra.mxu0 0
    %5615 = vmatpush.bf16.msra.mxu0 0
    %5616 = vmatpush.bf16.msra.mxu0 0
    %5617 = vmatpush.bf16.msra.mxu0 0
    %5618 = vmatpush.bf16.msra.mxu0 0
    %5619 = vmatpush.bf16.msra.mxu0 0
    %5620 = vmatpush.bf16.msra.mxu0 %v4823
    %5621 = vmatmul.bf16.gmra.mxu0 %v5169
    %v5622 = vpop.f32.mrf.mxu0
    %v5623 = vadd.f32 %v5610, %v5622
    %v5624 = vpop.f32.mrf.mxu0
    %5625 = vdwg.mxu0
    %5626 = vmatpush.bf16.msra.mxu0 %v4537
    %5627 = vmatpush.bf16.msra.mxu0 %v4530
    %5628 = vmatpush.bf16.msra.mxu0 %v4523
    %5629 = vmatpush.bf16.msra.mxu0 %v4516
    %5630 = vmatpush.bf16.msra.mxu0 %v4509
    %5631 = vmatpush.bf16.msra.mxu0 %v4502
    %5632 = vmatpush.bf16.msra.mxu0 %v4495
    %5633 = vmatpush.bf16.msra.mxu0 %v4488
    %5634 = vmatmul.bf16.gmra.mxu0 %v3392
    %v5635 = vpop.f32.mrf.mxu0
    %v5636 = vadd.f32 0.0, %v5635
    %v5637 = vpop.f32.mrf.mxu0
    %5638 = vdwg.mxu0
    %5639 = vmatpush.bf16.msra.mxu0 %v4593
    %5640 = vmatpush.bf16.msra.mxu0 %v4586
    %5641 = vmatpush.bf16.msra.mxu0 %v4579
    %5642 = vmatpush.bf16.msra.mxu0 %v4572
    %5643 = vmatpush.bf16.msra.mxu0 %v4565
    %5644 = vmatpush.bf16.msra.mxu0 %v4558
    %5645 = vmatpush.bf16.msra.mxu0 %v4551
    %5646 = vmatpush.bf16.msra.mxu0 %v4544
    %5647 = vmatmul.bf16.gmra.mxu0 %v3393
    %v5648 = vpop.f32.mrf.mxu0
    %v5649 = vadd.f32 %v5636, %v5648
    %v5650 = vpop.f32.mrf.mxu0
    %5651 = vdwg.mxu0
    %5652 = vmatpush.bf16.msra.mxu0 %v4649
    %5653 = vmatpush.bf16.msra.mxu0 %v4642
    %5654 = vmatpush.bf16.msra.mxu0 %v4635
    %5655 = vmatpush.bf16.msra.mxu0 %v4628
    %5656 = vmatpush.bf16.msra.mxu0 %v4621
    %5657 = vmatpush.bf16.msra.mxu0 %v4614
    %5658 = vmatpush.bf16.msra.mxu0 %v4607
    %5659 = vmatpush.bf16.msra.mxu0 %v4600
    %5660 = vmatmul.bf16.gmra.mxu0 %v3394
    %v5661 = vpop.f32.mrf.mxu0
    %v5662 = vadd.f32 %v5649, %v5661
    %v5663 = vpop.f32.mrf.mxu0
    %5664 = vdwg.mxu0
    %5665 = vmatpush.bf16.msra.mxu0 %v4705
    %5666 = vmatpush.bf16.msra.mxu0 %v4698
    %5667 = vmatpush.bf16.msra.mxu0 %v4691
    %5668 = vmatpush.bf16.msra.mxu0 %v4684
    %5669 = vmatpush.bf16.msra.mxu0 %v4677
    %5670 = vmatpush.bf16.msra.mxu0 %v4670
    %5671 = vmatpush.bf16.msra.mxu0 %v4663
    %5672 = vmatpush.bf16.msra.mxu0 %v4656
    %5673 = vmatmul.bf16.gmra.mxu0 %v3395
    %v5674 = vpop.f32.mrf.mxu0
    %v5675 = vadd.f32 %v5662, %v5674
    %v5676 = vpop.f32.mrf.mxu0
    %5677 = vdwg.mxu0
    %5678 = vmatpush.bf16.msra.mxu0 %v4761
    %5679 = vmatpush.bf16.msra.mxu0 %v4754
    %5680 = vmatpush.bf16.msra.mxu0 %v4747
    %5681 = vmatpush.bf16.msra.mxu0 %v4740
    %5682 = vmatpush.bf16.msra.mxu0 %v4733
    %5683 = vmatpush.bf16.msra.mxu0 %v4726
    %5684 = vmatpush.bf16.msra.mxu0 %v4719
    %5685 = vmatpush.bf16.msra.mxu0 %v4712
    %5686 = vmatmul.bf16.gmra.mxu0 %v3396
    %v5687 = vpop.f32.mrf.mxu0
    %v5688 = vadd.f32 %v5675, %v5687
    %v5689 = vpop.f32.mrf.mxu0
    %5690 = vdwg.mxu0
    %5691 = vmatpush.bf16.msra.mxu0 %v4817
    %5692 = vmatpush.bf16.msra.mxu0 %v4810
    %5693 = vmatpush.bf16.msra.mxu0 %v4803
    %5694 = vmatpush.bf16.msra.mxu0 %v4796
    %5695 = vmatpush.bf16.msra.mxu0 %v4789
    %5696 = vmatpush.bf16.msra.mxu0 %v4782
    %5697 = vmatpush.bf16.msra.mxu0 %v4775
    %5698 = vmatpush.bf16.msra.mxu0 %v4768
    %5699 = vmatmul.bf16.gmra.mxu0 %v3397
    %v5700 = vpop.f32.mrf.mxu0
    %v5701 = vadd.f32 %v5688, %v5700
    %v5702 = vpop.f32.mrf.mxu0
    %5703 = vdwg.mxu0
    %5704 = vmatpush.bf16.msra.mxu0 0
    %5705 = vmatpush.bf16.msra.mxu0 0
    %5706 = vmatpush.bf16.msra.mxu0 0
    %5707 = vmatpush.bf16.msra.mxu0 0
    %5708 = vmatpush.bf16.msra.mxu0 0
    %5709 = vmatpush.bf16.msra.mxu0 0
    %5710 = vmatpush.bf16.msra.mxu0 0
    %5711 = vmatpush.bf16.msra.mxu0 %v4824
    %5712 = vmatmul.bf16.gmra.mxu0 %v5169
    %v5713 = vpop.f32.mrf.mxu0
    %v5714 = vadd.f32 %v5701, %v5713
    %v5715 = vpop.f32.mrf.mxu0
    %5716 = vdwg.mxu0
    %5717 = vmatpush.bf16.msra.mxu0 %v4538
    %5718 = vmatpush.bf16.msra.mxu0 %v4531
    %5719 = vmatpush.bf16.msra.mxu0 %v4524
    %5720 = vmatpush.bf16.msra.mxu0 %v4517
    %5721 = vmatpush.bf16.msra.mxu0 %v4510
    %5722 = vmatpush.bf16.msra.mxu0 %v4503
    %5723 = vmatpush.bf16.msra.mxu0 %v4496
    %5724 = vmatpush.bf16.msra.mxu0 %v4489
    %5725 = vmatmul.bf16.gmra.mxu0 %v3392
    %v5726 = vpop.f32.mrf.mxu0
    %v5727 = vadd.f32 0.0, %v5726
    %v5728 = vpop.f32.mrf.mxu0
    %5729 = vdwg.mxu0
    %5730 = vmatpush.bf16.msra.mxu0 %v4594
    %5731 = vmatpush.bf16.msra.mxu0 %v4587
    %5732 = vmatpush.bf16.msra.mxu0 %v4580
    %5733 = vmatpush.bf16.msra.mxu0 %v4573
    %5734 = vmatpush.bf16.msra.mxu0 %v4566
    %5735 = vmatpush.bf16.msra.mxu0 %v4559
    %5736 = vmatpush.bf16.msra.mxu0 %v4552
    %5737 = vmatpush.bf16.msra.mxu0 %v4545
    %5738 = vmatmul.bf16.gmra.mxu0 %v3393
    %v5739 = vpop.f32.mrf.mxu0
    %v5740 = vadd.f32 %v5727, %v5739
    %v5741 = vpop.f32.mrf.mxu0
    %5742 = vdwg.mxu0
    %5743 = vmatpush.bf16.msra.mxu0 %v4650
    %5744 = vmatpush.bf16.msra.mxu0 %v4643
    %5745 = vmatpush.bf16.msra.mxu0 %v4636
    %5746 = vmatpush.bf16.msra.mxu0 %v4629
    %5747 = vmatpush.bf16.msra.mxu0 %v4622
    %5748 = vmatpush.bf16.msra.mxu0 %v4615
    %5749 = vmatpush.bf16.msra.mxu0 %v4608
    %5750 = vmatpush.bf16.msra.mxu0 %v4601
    %5751 = vmatmul.bf16.gmra.mxu0 %v3394
    %v5752 = vpop.f32.mrf.mxu0
    %v5753 = vadd.f32 %v5740, %v5752
    %v5754 = vpop.f32.mrf.mxu0
    %5755 = vdwg.mxu0
    %5756 = vmatpush.bf16.msra.mxu0 %v4706
    %5757 = vmatpush.bf16.msra.mxu0 %v4699
    %5758 = vmatpush.bf16.msra.mxu0 %v4692
    %5759 = vmatpush.bf16.msra.mxu0 %v4685
    %5760 = vmatpush.bf16.msra.mxu0 %v4678
    %5761 = vmatpush.bf16.msra.mxu0 %v4671
    %5762 = vmatpush.bf16.msra.mxu0 %v4664
    %5763 = vmatpush.bf16.msra.mxu0 %v4657
    %5764 = vmatmul.bf16.gmra.mxu0 %v3395
    %v5765 = vpop.f32.mrf.mxu0
    %v5766 = vadd.f32 %v5753, %v5765
    %v5767 = vpop.f32.mrf.mxu0
    %5768 = vdwg.mxu0
    %5769 = vmatpush.bf16.msra.mxu0 %v4762
    %5770 = vmatpush.bf16.msra.mxu0 %v4755
    %5771 = vmatpush.bf16.msra.mxu0 %v4748
    %5772 = vmatpush.bf16.msra.mxu0 %v4741
    %5773 = vmatpush.bf16.msra.mxu0 %v4734
    %5774 = vmatpush.bf16.msra.mxu0 %v4727
    %5775 = vmatpush.bf16.msra.mxu0 %v4720
    %5776 = vmatpush.bf16.msra.mxu0 %v4713
    %5777 = vmatmul.bf16.gmra.mxu0 %v3396
    %v5778 = vpop.f32.mrf.mxu0
    %v5779 = vadd.f32 %v5766, %v5778
    %v5780 = vpop.f32.mrf.mxu0
    %5781 = vdwg.mxu0
    %5782 = vmatpush.bf16.msra.mxu0 %v4818
    %5783 = vmatpush.bf16.msra.mxu0 %v4811
    %5784 = vmatpush.bf16.msra.mxu0 %v4804
    %5785 = vmatpush.bf16.msra.mxu0 %v4797
    %5786 = vmatpush.bf16.msra.mxu0 %v4790
    %5787 = vmatpush.bf16.msra.mxu0 %v4783
    %5788 = vmatpush.bf16.msra.mxu0 %v4776
    %5789 = vmatpush.bf16.msra.mxu0 %v4769
    %5790 = vmatmul.bf16.gmra.mxu0 %v3397
    %v5791 = vpop.f32.mrf.mxu0
    %v5792 = vadd.f32 %v5779, %v5791
    %v5793 = vpop.f32.mrf.mxu0
    %5794 = vdwg.mxu0
    %5795 = vmatpush.bf16.msra.mxu0 0
    %5796 = vmatpush.bf16.msra.mxu0 0
    %5797 = vmatpush.bf16.msra.mxu0 0
    %5798 = vmatpush.bf16.msra.mxu0 0
    %5799 = vmatpush.bf16.msra.mxu0 0
    %5800 = vmatpush.bf16.msra.mxu0 0
    %5801 = vmatpush.bf16.msra.mxu0 0
    %5802 = vmatpush.bf16.msra.mxu0 %v4825
    %5803 = vmatmul.bf16.gmra.mxu0 %v5169
    %v5804 = vpop.f32.mrf.mxu0
    %v5805 = vadd.f32 %v5792, %v5804
    %v5806 = vpop.f32.mrf.mxu0
    %5807 = vdwg.mxu0
    %v5808 = vmax.f32 %v2449, %v5259
    %v5809 = vmax.f32 %v2540, %v5350
    %v5810 = vmax.f32 %v2631, %v5441
    %v5811 = vmax.f32 %v2722, %v5532
    %v5812 = vmax.f32 %v2813, %v5623
    %v5813 = vmax.f32 %v2904, %v5714
    %v5814 = vmax.f32 %v2995, %v5805
    %s5815 = scalar_lea.vmem [#allocation2], 5488
    %v5816 = vld [vmem:[%s5815] sm:$0xff]
    %v5817 = vld [vmem:[%s5815 + $0x8] sm:$0xff]
    %v5818 = vld [vmem:[%s5815 + $0x10] sm:$0xff]
    %v5819 = vld [vmem:[%s5815 + $0x18] sm:$0xf]
    %v5820 = vld [vmem:[%s5815 + $0x1c] sm:$0xff]
    %v5821 = vld [vmem:[%s5815 + $0x24] sm:$0xff]
    %v5822 = vld [vmem:[%s5815 + $0x2c] sm:$0xff]
    %v5823 = vld [vmem:[%s5815 + $0x34] sm:$0xf]
    %v5824 = vld [vmem:[%s5815 + $0x38] sm:$0xff]
    %v5825 = vld [vmem:[%s5815 + $0x40] sm:$0xff]
    %v5826 = vld [vmem:[%s5815 + $0x48] sm:$0xff]
    %v5827 = vld [vmem:[%s5815 + $0x50] sm:$0xf]
    %v5828 = vld [vmem:[%s5815 + $0x54] sm:$0xff]
    %v5829 = vld [vmem:[%s5815 + $0x5c] sm:$0xff]
    %v5830 = vld [vmem:[%s5815 + $0x64] sm:$0xff]
    %v5831 = vld [vmem:[%s5815 + $0x6c] sm:$0xf]
    %v5832 = vld [vmem:[%s5815 + $0x70] sm:$0xff]
    %v5833 = vld [vmem:[%s5815 + $0x78] sm:$0xff]
    %v5834 = vld [vmem:[%s5815 + $0x80] sm:$0xff]
    %v5835 = vld [vmem:[%s5815 + $0x88] sm:$0xf]
    %v5836 = vld [vmem:[%s5815 + $0x8c] sm:$0xff]
    %v5837 = vld [vmem:[%s5815 + $0x94] sm:$0xff]
    %v5838 = vld [vmem:[%s5815 + $0x9c] sm:$0xff]
    %v5839 = vld [vmem:[%s5815 + $0xa4] sm:$0xf]
    %v5840 = vld [vmem:[%s5815 + $0xa8] sm:$0xff]
    %v5841 = vld [vmem:[%s5815 + $0xb0] sm:$0xff]
    %v5842 = vld [vmem:[%s5815 + $0xb8] sm:$0xff]
    %v5843 = vld [vmem:[%s5815 + $0xc0] sm:$0xf]
    %v5844 = vld [vmem:[%s5815 + $0xc4] sm:$0xff]
    %v5845 = vld [vmem:[%s5815 + $0xcc] sm:$0xff]
    %v5846 = vld [vmem:[%s5815 + $0xd4] sm:$0xff]
    %v5847 = vld [vmem:[%s5815 + $0xdc] sm:$0xf]
    %v5848 = vld [vmem:[%s5815 + $0xe0] sm:$0xff]
    %v5849 = vld [vmem:[%s5815 + $0xe8] sm:$0xff]
    %v5850 = vld [vmem:[%s5815 + $0xf0] sm:$0xff]
    %v5851 = vld [vmem:[%s5815 + $0xf8] sm:$0xf]
    %v5852 = vld [vmem:[%s5815 + $0xfc] sm:$0xff]
    %v5853 = vld [vmem:[%s5815 + $0x104] sm:$0xff]
    %v5854 = vld [vmem:[%s5815 + $0x10c] sm:$0xff]
    %v5855 = vld [vmem:[%s5815 + $0x114] sm:$0xf]
    %v5856 = vld [vmem:[%s5815 + $0x118] sm:$0xff]
    %v5857 = vld [vmem:[%s5815 + $0x120] sm:$0xff]
    %v5858 = vld [vmem:[%s5815 + $0x128] sm:$0xff]
    %v5859 = vld [vmem:[%s5815 + $0x130] sm:$0xf]
    %v5860 = vld [vmem:[%s5815 + $0x134] sm:$0xff]
    %v5861 = vld [vmem:[%s5815 + $0x13c] sm:$0xff]
    %v5862 = vld [vmem:[%s5815 + $0x144] sm:$0xff]
    %v5863 = vld [vmem:[%s5815 + $0x14c] sm:$0xf]
    %v5864 = vld [vmem:[%s5815 + $0x150] sm:$0xff]
    %v5865 = vld [vmem:[%s5815 + $0x158] sm:$0xff]
    %v5866 = vld [vmem:[%s5815 + $0x160] sm:$0xff]
    %v5867 = vld [vmem:[%s5815 + $0x168] sm:$0xf]
    %v5868 = vld [vmem:[%s5815 + $0x16c] sm:$0xff]
    %v5869 = vld [vmem:[%s5815 + $0x174] sm:$0xff]
    %v5870 = vld [vmem:[%s5815 + $0x17c] sm:$0xff]
    %v5871 = vld [vmem:[%s5815 + $0x184] sm:$0xf]
    %v5872 = vld [vmem:[%s5815 + $0x188] sm:$0xff]
    %v5873 = vld [vmem:[%s5815 + $0x190] sm:$0xff]
    %v5874 = vld [vmem:[%s5815 + $0x198] sm:$0xff]
    %v5875 = vld [vmem:[%s5815 + $0x1a0] sm:$0xf]
    %v5876 = vld [vmem:[%s5815 + $0x1a4] sm:$0xff]
    %v5877 = vld [vmem:[%s5815 + $0x1ac] sm:$0xff]
    %v5878 = vld [vmem:[%s5815 + $0x1b4] sm:$0xff]
    %v5879 = vld [vmem:[%s5815 + $0x1bc] sm:$0xf]
    %v5880 = vld [vmem:[%s5815 + $0x1c0] sm:$0xff]
    %v5881 = vld [vmem:[%s5815 + $0x1c8] sm:$0xff]
    %v5882 = vld [vmem:[%s5815 + $0x1d0] sm:$0xff]
    %v5883 = vld [vmem:[%s5815 + $0x1d8] sm:$0xf]
    %v5884 = vld [vmem:[%s5815 + $0x1dc] sm:$0xff]
    %v5885 = vld [vmem:[%s5815 + $0x1e4] sm:$0xff]
    %v5886 = vld [vmem:[%s5815 + $0x1ec] sm:$0xff]
    %v5887 = vld [vmem:[%s5815 + $0x1f4] sm:$0xf]
    %v5888 = vld [vmem:[%s5815 + $0x1f8] sm:$0xff]
    %v5889 = vld [vmem:[%s5815 + $0x200] sm:$0xff]
    %v5890 = vld [vmem:[%s5815 + $0x208] sm:$0xff]
    %v5891 = vld [vmem:[%s5815 + $0x210] sm:$0xf]
    %v5892 = vld [vmem:[%s5815 + $0x214] sm:$0xff]
    %v5893 = vld [vmem:[%s5815 + $0x21c] sm:$0xff]
    %v5894 = vld [vmem:[%s5815 + $0x224] sm:$0xff]
    %v5895 = vld [vmem:[%s5815 + $0x22c] sm:$0xf]
    %v5896 = vld [vmem:[%s5815 + $0x230] sm:$0xff]
    %v5897 = vld [vmem:[%s5815 + $0x238] sm:$0xff]
    %v5898 = vld [vmem:[%s5815 + $0x240] sm:$0xff]
    %v5899 = vld [vmem:[%s5815 + $0x248] sm:$0xf]
    %v5900 = vld [vmem:[%s5815 + $0x24c] sm:$0xff]
    %v5901 = vld [vmem:[%s5815 + $0x254] sm:$0xff]
    %v5902 = vld [vmem:[%s5815 + $0x25c] sm:$0xff]
    %v5903 = vld [vmem:[%s5815 + $0x264] sm:$0xf]
    %v5904 = vld [vmem:[%s5815 + $0x268] sm:$0xff]
    %v5905 = vld [vmem:[%s5815 + $0x270] sm:$0xff]
    %v5906 = vld [vmem:[%s5815 + $0x278] sm:$0xff]
    %v5907 = vld [vmem:[%s5815 + $0x280] sm:$0xf]
    %v5908 = vld [vmem:[%s5815 + $0x284] sm:$0xff]
    %v5909 = vld [vmem:[%s5815 + $0x28c] sm:$0xff]
    %v5910 = vld [vmem:[%s5815 + $0x294] sm:$0xff]
    %v5911 = vld [vmem:[%s5815 + $0x29c] sm:$0xf]
    %v5912 = vld [vmem:[%s5815 + $0x2a0] sm:$0xff]
    %v5913 = vld [vmem:[%s5815 + $0x2a8] sm:$0xff]
    %v5914 = vld [vmem:[%s5815 + $0x2b0] sm:$0xff]
    %v5915 = vld [vmem:[%s5815 + $0x2b8] sm:$0xf]
    %v5916 = vld [vmem:[%s5815 + $0x2bc] sm:$0xff]
    %v5917 = vld [vmem:[%s5815 + $0x2c4] sm:$0xff]
    %v5918 = vld [vmem:[%s5815 + $0x2cc] sm:$0xff]
    %v5919 = vld [vmem:[%s5815 + $0x2d4] sm:$0xf]
    %v5920 = vld [vmem:[%s5815 + $0x2d8] sm:$0xff]
    %v5921 = vld [vmem:[%s5815 + $0x2e0] sm:$0xff]
    %v5922 = vld [vmem:[%s5815 + $0x2e8] sm:$0xff]
    %v5923 = vld [vmem:[%s5815 + $0x2f0] sm:$0xf]
    %v5924 = vld [vmem:[%s5815 + $0x2f4] sm:$0xff]
    %v5925 = vld [vmem:[%s5815 + $0x2fc] sm:$0xff]
    %v5926 = vld [vmem:[%s5815 + $0x304] sm:$0xff]
    %v5927 = vld [vmem:[%s5815 + $0x30c] sm:$0xf]
    %v5928 = vld [vmem:[%s5815 + $0x310] sm:$0xff]
    %v5929 = vld [vmem:[%s5815 + $0x318] sm:$0xff]
    %v5930 = vld [vmem:[%s5815 + $0x320] sm:$0xff]
    %v5931 = vld [vmem:[%s5815 + $0x328] sm:$0xf]
    %v5932 = vld [vmem:[%s5815 + $0x32c] sm:$0xff]
    %v5933 = vld [vmem:[%s5815 + $0x334] sm:$0xff]
    %v5934 = vld [vmem:[%s5815 + $0x33c] sm:$0xff]
    %v5935 = vld [vmem:[%s5815 + $0x344] sm:$0xf]
    %v5936 = vld [vmem:[%s5815 + $0x348] sm:$0xff]
    %v5937 = vld [vmem:[%s5815 + $0x350] sm:$0xff]
    %v5938 = vld [vmem:[%s5815 + $0x358] sm:$0xff]
    %v5939 = vld [vmem:[%s5815 + $0x360] sm:$0xf]
    %v5940 = vld [vmem:[%s5815 + $0x364] sm:$0xff]
    %v5941 = vld [vmem:[%s5815 + $0x36c] sm:$0xff]
    %v5942 = vld [vmem:[%s5815 + $0x374] sm:$0xff]
    %v5943 = vld [vmem:[%s5815 + $0x37c] sm:$0xf]
    %v5944 = vld [vmem:[%s5815 + $0x380] sm:$0xff]
    %v5945 = vld [vmem:[%s5815 + $0x388] sm:$0xff]
    %v5946 = vld [vmem:[%s5815 + $0x390] sm:$0xff]
    %v5947 = vld [vmem:[%s5815 + $0x398] sm:$0xf]
    %v5948 = vld [vmem:[%s5815 + $0x39c] sm:$0xff]
    %v5949 = vld [vmem:[%s5815 + $0x3a4] sm:$0xff]
    %v5950 = vld [vmem:[%s5815 + $0x3ac] sm:$0xff]
    %v5951 = vld [vmem:[%s5815 + $0x3b4] sm:$0xf]
    %v5952 = vld [vmem:[%s5815 + $0x3b8] sm:$0xff]
    %v5953 = vld [vmem:[%s5815 + $0x3c0] sm:$0xff]
    %v5954 = vld [vmem:[%s5815 + $0x3c8] sm:$0xff]
    %v5955 = vld [vmem:[%s5815 + $0x3d0] sm:$0xf]
    %v5956 = vld [vmem:[%s5815 + $0x3d4] sm:$0xff]
    %v5957 = vld [vmem:[%s5815 + $0x3dc] sm:$0xff]
    %v5958 = vld [vmem:[%s5815 + $0x3e4] sm:$0xff]
    %v5959 = vld [vmem:[%s5815 + $0x3ec] sm:$0xf]
    %v5960 = vld [vmem:[%s5815 + $0x3f0] sm:$0xff]
    %v5961 = vld [vmem:[%s5815 + $0x3f8] sm:$0xff]
    %v5962 = vld [vmem:[%s5815 + $0x400] sm:$0xff]
    %v5963 = vld [vmem:[%s5815 + $0x408] sm:$0xf]
    %v5964 = vld [vmem:[%s5815 + $0x40c] sm:$0xff]
    %v5965 = vld [vmem:[%s5815 + $0x414] sm:$0xff]
    %v5966 = vld [vmem:[%s5815 + $0x41c] sm:$0xff]
    %v5967 = vld [vmem:[%s5815 + $0x424] sm:$0xf]
    %v5968 = vld [vmem:[%s5815 + $0x428] sm:$0xff]
    %v5969 = vld [vmem:[%s5815 + $0x430] sm:$0xff]
    %v5970 = vld [vmem:[%s5815 + $0x438] sm:$0xff]
    %v5971 = vld [vmem:[%s5815 + $0x440] sm:$0xf]
    %v5972 = vld [vmem:[%s5815 + $0x444] sm:$0xff]
    %v5973 = vld [vmem:[%s5815 + $0x44c] sm:$0xff]
    %v5974 = vld [vmem:[%s5815 + $0x454] sm:$0xff]
    %v5975 = vld [vmem:[%s5815 + $0x45c] sm:$0xf]
    %v5976 = vld [vmem:[%s5815 + $0x460] sm:$0xff]
    %v5977 = vld [vmem:[%s5815 + $0x468] sm:$0xff]
    %v5978 = vld [vmem:[%s5815 + $0x470] sm:$0xff]
    %v5979 = vld [vmem:[%s5815 + $0x478] sm:$0xf]
    %v5980 = vld [vmem:[%s5815 + $0x47c] sm:$0xff]
    %v5981 = vld [vmem:[%s5815 + $0x484] sm:$0xff]
    %v5982 = vld [vmem:[%s5815 + $0x48c] sm:$0xff]
    %v5983 = vld [vmem:[%s5815 + $0x494] sm:$0xf]
    %v5984 = vld [vmem:[%s5815 + $0x498] sm:$0xff]
    %v5985 = vld [vmem:[%s5815 + $0x4a0] sm:$0xff]
    %v5986 = vld [vmem:[%s5815 + $0x4a8] sm:$0xff]
    %v5987 = vld [vmem:[%s5815 + $0x4b0] sm:$0xf]
    %v5988 = vld [vmem:[%s5815 + $0x4b4] sm:$0xff]
    %v5989 = vld [vmem:[%s5815 + $0x4bc] sm:$0xff]
    %v5990 = vld [vmem:[%s5815 + $0x4c4] sm:$0xff]
    %v5991 = vld [vmem:[%s5815 + $0x4cc] sm:$0xf]
    %v5992 = vld [vmem:[%s5815 + $0x4d0] sm:$0xff]
    %v5993 = vld [vmem:[%s5815 + $0x4d8] sm:$0xff]
    %v5994 = vld [vmem:[%s5815 + $0x4e0] sm:$0xff]
    %v5995 = vld [vmem:[%s5815 + $0x4e8] sm:$0xf]
    %v5996 = vld [vmem:[%s5815 + $0x4ec] sm:$0xff]
    %v5997 = vld [vmem:[%s5815 + $0x4f4] sm:$0xff]
    %v5998 = vld [vmem:[%s5815 + $0x4fc] sm:$0xff]
    %v5999 = vld [vmem:[%s5815 + $0x504] sm:$0xf]
    %v6000 = vld [vmem:[%s5815 + $0x508] sm:$0xff]
    %v6001 = vld [vmem:[%s5815 + $0x510] sm:$0xff]
    %v6002 = vld [vmem:[%s5815 + $0x518] sm:$0xff]
    %v6003 = vld [vmem:[%s5815 + $0x520] sm:$0xf]
    %v6004 = vld [vmem:[%s5815 + $0x524] sm:$0xff]
    %v6005 = vld [vmem:[%s5815 + $0x52c] sm:$0xff]
    %v6006 = vld [vmem:[%s5815 + $0x534] sm:$0xff]
    %v6007 = vld [vmem:[%s5815 + $0x53c] sm:$0xf]
    %v6008 = vld [vmem:[%s5815 + $0x540] sm:$0xff]
    %v6009 = vld [vmem:[%s5815 + $0x548] sm:$0xff]
    %v6010 = vld [vmem:[%s5815 + $0x550] sm:$0xff]
    %v6011 = vld [vmem:[%s5815 + $0x558] sm:$0xf]
    %v6012 = vld [vmem:[%s5815 + $0x55c] sm:$0xff]
    %v6013 = vld [vmem:[%s5815 + $0x564] sm:$0xff]
    %v6014 = vld [vmem:[%s5815 + $0x56c] sm:$0xff]
    %v6015 = vld [vmem:[%s5815 + $0x574] sm:$0xf]
    %v6016 = vld [vmem:[%s5815 + $0x578] sm:$0xff]
    %v6017 = vld [vmem:[%s5815 + $0x580] sm:$0xff]
    %v6018 = vld [vmem:[%s5815 + $0x588] sm:$0xff]
    %v6019 = vld [vmem:[%s5815 + $0x590] sm:$0xf]
    %v6020 = vld [vmem:[%s5815 + $0x594] sm:$0xff]
    %v6021 = vld [vmem:[%s5815 + $0x59c] sm:$0xff]
    %v6022 = vld [vmem:[%s5815 + $0x5a4] sm:$0xff]
    %v6023 = vld [vmem:[%s5815 + $0x5ac] sm:$0xf]
    %v6024 = vld [vmem:[%s5815 + $0x5b0] sm:$0xff]
    %v6025 = vld [vmem:[%s5815 + $0x5b8] sm:$0xff]
    %v6026 = vld [vmem:[%s5815 + $0x5c0] sm:$0xff]
    %v6027 = vld [vmem:[%s5815 + $0x5c8] sm:$0xf]
    %v6028 = vld [vmem:[%s5815 + $0x5cc] sm:$0xff]
    %v6029 = vld [vmem:[%s5815 + $0x5d4] sm:$0xff]
    %v6030 = vld [vmem:[%s5815 + $0x5dc] sm:$0xff]
    %v6031 = vld [vmem:[%s5815 + $0x5e4] sm:$0xf]
    %v6032 = vld [vmem:[%s5815 + $0x5e8] sm:$0xff]
    %v6033 = vld [vmem:[%s5815 + $0x5f0] sm:$0xff]
    %v6034 = vld [vmem:[%s5815 + $0x5f8] sm:$0xff]
    %v6035 = vld [vmem:[%s5815 + $0x600] sm:$0xf]
    %v6036 = vld [vmem:[%s5815 + $0x604] sm:$0xff]
    %v6037 = vld [vmem:[%s5815 + $0x60c] sm:$0xff]
    %v6038 = vld [vmem:[%s5815 + $0x614] sm:$0xff]
    %v6039 = vld [vmem:[%s5815 + $0x61c] sm:$0xf]
    %v6040 = vld [vmem:[%s5815 + $0x620] sm:$0xff]
    %v6041 = vld [vmem:[%s5815 + $0x628] sm:$0xff]
    %v6042 = vld [vmem:[%s5815 + $0x630] sm:$0xff]
    %v6043 = vld [vmem:[%s5815 + $0x638] sm:$0xf]
    %v6044 = vld [vmem:[%s5815 + $0x63c] sm:$0xff]
    %v6045 = vld [vmem:[%s5815 + $0x644] sm:$0xff]
    %v6046 = vld [vmem:[%s5815 + $0x64c] sm:$0xff]
    %v6047 = vld [vmem:[%s5815 + $0x654] sm:$0xf]
    %v6048 = vld [vmem:[%s5815 + $0x658] sm:$0xff]
    %v6049 = vld [vmem:[%s5815 + $0x660] sm:$0xff]
    %v6050 = vld [vmem:[%s5815 + $0x668] sm:$0xff]
    %v6051 = vld [vmem:[%s5815 + $0x670] sm:$0xf]
    %v6052 = vld [vmem:[%s5815 + $0x674] sm:$0xff]
    %v6053 = vld [vmem:[%s5815 + $0x67c] sm:$0xff]
    %v6054 = vld [vmem:[%s5815 + $0x684] sm:$0xff]
    %v6055 = vld [vmem:[%s5815 + $0x68c] sm:$0xf]
    %v6056 = vld [vmem:[%s5815 + $0x690] sm:$0xff]
    %v6057 = vld [vmem:[%s5815 + $0x698] sm:$0xff]
    %v6058 = vld [vmem:[%s5815 + $0x6a0] sm:$0xff]
    %v6059 = vld [vmem:[%s5815 + $0x6a8] sm:$0xf]
    %v6060 = vld [vmem:[%s5815 + $0x6ac] sm:$0xff]
    %v6061 = vld [vmem:[%s5815 + $0x6b4] sm:$0xff]
    %v6062 = vld [vmem:[%s5815 + $0x6bc] sm:$0xff]
    %v6063 = vld [vmem:[%s5815 + $0x6c4] sm:$0xf]
    %v6064 = vld [vmem:[%s5815 + $0x6c8] sm:$0xff]
    %v6065 = vld [vmem:[%s5815 + $0x6d0] sm:$0xff]
    %v6066 = vld [vmem:[%s5815 + $0x6d8] sm:$0xff]
    %v6067 = vld [vmem:[%s5815 + $0x6e0] sm:$0xf]
    %v6068 = vld [vmem:[%s5815 + $0x6e4] sm:$0xff]
    %v6069 = vld [vmem:[%s5815 + $0x6ec] sm:$0xff]
    %v6070 = vld [vmem:[%s5815 + $0x6f4] sm:$0xff]
    %v6071 = vld [vmem:[%s5815 + $0x6fc] sm:$0xf]
    %v6072 = vld [vmem:[%s5815 + $0x700] sm:$0xff]
    %v6073 = vld [vmem:[%s5815 + $0x708] sm:$0xff]
    %v6074 = vld [vmem:[%s5815 + $0x710] sm:$0xff]
    %v6075 = vld [vmem:[%s5815 + $0x718] sm:$0xf]
    %v6076 = vld [vmem:[%s5815 + $0x71c] sm:$0xff]
    %v6077 = vld [vmem:[%s5815 + $0x724] sm:$0xff]
    %v6078 = vld [vmem:[%s5815 + $0x72c] sm:$0xff]
    %v6079 = vld [vmem:[%s5815 + $0x734] sm:$0xf]
    %v6080 = vld [vmem:[%s5815 + $0x738] sm:$0xff]
    %v6081 = vld [vmem:[%s5815 + $0x740] sm:$0xff]
    %v6082 = vld [vmem:[%s5815 + $0x748] sm:$0xff]
    %v6083 = vld [vmem:[%s5815 + $0x750] sm:$0xf]
    %v6084 = vld [vmem:[%s5815 + $0x754] sm:$0xff]
    %v6085 = vld [vmem:[%s5815 + $0x75c] sm:$0xff]
    %v6086 = vld [vmem:[%s5815 + $0x764] sm:$0xff]
    %v6087 = vld [vmem:[%s5815 + $0x76c] sm:$0xf]
    %v6088 = vld [vmem:[%s5815 + $0x770] sm:$0xff]
    %v6089 = vld [vmem:[%s5815 + $0x778] sm:$0xff]
    %v6090 = vld [vmem:[%s5815 + $0x780] sm:$0xff]
    %v6091 = vld [vmem:[%s5815 + $0x788] sm:$0xf]
    %v6092 = vld [vmem:[%s5815 + $0x78c] sm:$0xff]
    %v6093 = vld [vmem:[%s5815 + $0x794] sm:$0xff]
    %v6094 = vld [vmem:[%s5815 + $0x79c] sm:$0xff]
    %v6095 = vld [vmem:[%s5815 + $0x7a4] sm:$0xf]
    %v6096 = vld [vmem:[%s5815 + $0x7a8] sm:$0xff]
    %v6097 = vld [vmem:[%s5815 + $0x7b0] sm:$0xff]
    %v6098 = vld [vmem:[%s5815 + $0x7b8] sm:$0xff]
    %v6099 = vld [vmem:[%s5815 + $0x7c0] sm:$0xf]
    %v6100 = vld [vmem:[%s5815 + $0x7c4] sm:$0xff]
    %v6101 = vld [vmem:[%s5815 + $0x7cc] sm:$0xff]
    %v6102 = vld [vmem:[%s5815 + $0x7d4] sm:$0xff]
    %v6103 = vld [vmem:[%s5815 + $0x7dc] sm:$0xf]
    %v6104 = vld [vmem:[%s5815 + $0x7e0] sm:$0xff]
    %v6105 = vld [vmem:[%s5815 + $0x7e8] sm:$0xff]
    %v6106 = vld [vmem:[%s5815 + $0x7f0] sm:$0xff]
    %v6107 = vld [vmem:[%s5815 + $0x7f8] sm:$0xf]
    %v6108 = vld [vmem:[%s5815 + $0x7fc] sm:$0xff]
    %v6109 = vld [vmem:[%s5815 + $0x804] sm:$0xff]
    %v6110 = vld [vmem:[%s5815 + $0x80c] sm:$0xff]
    %v6111 = vld [vmem:[%s5815 + $0x814] sm:$0xf]
    %v6112 = vld [vmem:[%s5815 + $0x818] sm:$0xff]
    %v6113 = vld [vmem:[%s5815 + $0x820] sm:$0xff]
    %v6114 = vld [vmem:[%s5815 + $0x828] sm:$0xff]
    %v6115 = vld [vmem:[%s5815 + $0x830] sm:$0xf]
    %v6116 = vld [vmem:[%s5815 + $0x834] sm:$0xff]
    %v6117 = vld [vmem:[%s5815 + $0x83c] sm:$0xff]
    %v6118 = vld [vmem:[%s5815 + $0x844] sm:$0xff]
    %v6119 = vld [vmem:[%s5815 + $0x84c] sm:$0xf]
    %v6120 = vld [vmem:[%s5815 + $0x850] sm:$0xff]
    %v6121 = vld [vmem:[%s5815 + $0x858] sm:$0xff]
    %v6122 = vld [vmem:[%s5815 + $0x860] sm:$0xff]
    %v6123 = vld [vmem:[%s5815 + $0x868] sm:$0xf]
    %v6124 = vld [vmem:[%s5815 + $0x86c] sm:$0xff]
    %v6125 = vld [vmem:[%s5815 + $0x874] sm:$0xff]
    %v6126 = vld [vmem:[%s5815 + $0x87c] sm:$0xff]
    %v6127 = vld [vmem:[%s5815 + $0x884] sm:$0xf]
    %v6128 = vld [vmem:[%s5815 + $0x888] sm:$0xff]
    %v6129 = vld [vmem:[%s5815 + $0x890] sm:$0xff]
    %v6130 = vld [vmem:[%s5815 + $0x898] sm:$0xff]
    %v6131 = vld [vmem:[%s5815 + $0x8a0] sm:$0xf]
    %v6132 = vld [vmem:[%s5815 + $0x8a4] sm:$0xff]
    %v6133 = vld [vmem:[%s5815 + $0x8ac] sm:$0xff]
    %v6134 = vld [vmem:[%s5815 + $0x8b4] sm:$0xff]
    %v6135 = vld [vmem:[%s5815 + $0x8bc] sm:$0xf]
    %v6136 = vld [vmem:[%s5815 + $0x8c0] sm:$0xff]
    %v6137 = vld [vmem:[%s5815 + $0x8c8] sm:$0xff]
    %v6138 = vld [vmem:[%s5815 + $0x8d0] sm:$0xff]
    %v6139 = vld [vmem:[%s5815 + $0x8d8] sm:$0xf]
    %v6140 = vld [vmem:[%s5815 + $0x8dc] sm:$0xff]
    %v6141 = vld [vmem:[%s5815 + $0x8e4] sm:$0xff]
    %v6142 = vld [vmem:[%s5815 + $0x8ec] sm:$0xff]
    %v6143 = vld [vmem:[%s5815 + $0x8f4] sm:$0xf]
    %v6144 = vld [vmem:[%s5815 + $0x8f8] sm:$0xff]
    %v6145 = vld [vmem:[%s5815 + $0x900] sm:$0xff]
    %v6146 = vld [vmem:[%s5815 + $0x908] sm:$0xff]
    %v6147 = vld [vmem:[%s5815 + $0x910] sm:$0xf]
    %v6148 = vld [vmem:[%s5815 + $0x914] sm:$0xff]
    %v6149 = vld [vmem:[%s5815 + $0x91c] sm:$0xff]
    %v6150 = vld [vmem:[%s5815 + $0x924] sm:$0xff]
    %v6151 = vld [vmem:[%s5815 + $0x92c] sm:$0xf]
    %v6152 = vld [vmem:[%s5815 + $0x930] sm:$0xff]
    %v6153 = vld [vmem:[%s5815 + $0x938] sm:$0xff]
    %v6154 = vld [vmem:[%s5815 + $0x940] sm:$0xff]
    %v6155 = vld [vmem:[%s5815 + $0x948] sm:$0xf]
    %v6156 = vld [vmem:[%s5815 + $0x94c] sm:$0xff]
    %v6157 = vld [vmem:[%s5815 + $0x954] sm:$0xff]
    %v6158 = vld [vmem:[%s5815 + $0x95c] sm:$0xff]
    %v6159 = vld [vmem:[%s5815 + $0x964] sm:$0xf]
    %v6160 = vld [vmem:[%s5815 + $0x968] sm:$0xff]
    %v6161 = vld [vmem:[%s5815 + $0x970] sm:$0xff]
    %v6162 = vld [vmem:[%s5815 + $0x978] sm:$0xff]
    %v6163 = vld [vmem:[%s5815 + $0x980] sm:$0xf]
    %v6164 = vld [vmem:[%s5815 + $0x984] sm:$0xff]
    %v6165 = vld [vmem:[%s5815 + $0x98c] sm:$0xff]
    %v6166 = vld [vmem:[%s5815 + $0x994] sm:$0xff]
    %v6167 = vld [vmem:[%s5815 + $0x99c] sm:$0xf]
    %v6168 = vld [vmem:[%s5815 + $0x9a0] sm:$0xff]
    %v6169 = vld [vmem:[%s5815 + $0x9a8] sm:$0xff]
    %v6170 = vld [vmem:[%s5815 + $0x9b0] sm:$0xff]
    %v6171 = vld [vmem:[%s5815 + $0x9b8] sm:$0xf]
    %v6172 = vld [vmem:[%s5815 + $0x9bc] sm:$0xff]
    %v6173 = vld [vmem:[%s5815 + $0x9c4] sm:$0xff]
    %v6174 = vld [vmem:[%s5815 + $0x9cc] sm:$0xff]
    %v6175 = vld [vmem:[%s5815 + $0x9d4] sm:$0xf]
    %v6176 = vld [vmem:[%s5815 + $0x9d8] sm:$0xff]
    %v6177 = vld [vmem:[%s5815 + $0x9e0] sm:$0xff]
    %v6178 = vld [vmem:[%s5815 + $0x9e8] sm:$0xff]
    %v6179 = vld [vmem:[%s5815 + $0x9f0] sm:$0xf]
    %v6180 = vld [vmem:[%s5815 + $0x9f4] sm:$0xff]
    %v6181 = vld [vmem:[%s5815 + $0x9fc] sm:$0xff]
    %v6182 = vld [vmem:[%s5815 + $0xa04] sm:$0xff]
    %v6183 = vld [vmem:[%s5815 + $0xa0c] sm:$0xf]
    %v6184 = vld [vmem:[%s5815 + $0xa10] sm:$0xff]
    %v6185 = vld [vmem:[%s5815 + $0xa18] sm:$0xff]
    %v6186 = vld [vmem:[%s5815 + $0xa20] sm:$0xff]
    %v6187 = vld [vmem:[%s5815 + $0xa28] sm:$0xf]
    %v6188 = vld [vmem:[%s5815 + $0xa2c] sm:$0xff]
    %v6189 = vld [vmem:[%s5815 + $0xa34] sm:$0xff]
    %v6190 = vld [vmem:[%s5815 + $0xa3c] sm:$0xff]
    %v6191 = vld [vmem:[%s5815 + $0xa44] sm:$0xf]
    %v6192 = vld [vmem:[%s5815 + $0xa48] sm:$0xff]
    %v6193 = vld [vmem:[%s5815 + $0xa50] sm:$0xff]
    %v6194 = vld [vmem:[%s5815 + $0xa58] sm:$0xff]
    %v6195 = vld [vmem:[%s5815 + $0xa60] sm:$0xf]
    %v6196 = vld [vmem:[%s5815 + $0xa64] sm:$0xff]
    %v6197 = vld [vmem:[%s5815 + $0xa6c] sm:$0xff]
    %v6198 = vld [vmem:[%s5815 + $0xa74] sm:$0xff]
    %v6199 = vld [vmem:[%s5815 + $0xa7c] sm:$0xf]
    %v6200 = vld [vmem:[%s5815 + $0xa80] sm:$0xff]
    %v6201 = vld [vmem:[%s5815 + $0xa88] sm:$0xff]
    %v6202 = vld [vmem:[%s5815 + $0xa90] sm:$0xff]
    %v6203 = vld [vmem:[%s5815 + $0xa98] sm:$0xf]
    %v6204 = vld [vmem:[%s5815 + $0xa9c] sm:$0xff]
    %v6205 = vld [vmem:[%s5815 + $0xaa4] sm:$0xff]
    %v6206 = vld [vmem:[%s5815 + $0xaac] sm:$0xff]
    %v6207 = vld [vmem:[%s5815 + $0xab4] sm:$0xf]
    %6208 = vst [vmem:[#allocation1] ss:$9 sm:$0xff] %v186
    %v6209 = vld [vmem:[#allocation1] sm:$0xff]
    %v6210 = vld [vmem:[#allocation1 + $0x9] sm:$0xff]
    %v6211 = vld [vmem:[#allocation1 + $0x12] sm:$0xff]
    %v6212 = vld [vmem:[#allocation1 + $0x1b] sm:$0xff]
    %v6213 = vld [vmem:[#allocation1 + $0x24] sm:$0xff]
    %v6214 = vld [vmem:[#allocation1 + $0x2d] sm:$0xff]
    %v6215 = vld [vmem:[#allocation1 + $0x36] sm:$0xff]
    %v6614 = vunpack.c.l.b16 %v5816
    %v6615 = vunpack.c.h.b16 %v5816
    %v6616 = vunpack.c.l.b16 %v5817
    %v6617 = vunpack.c.h.b16 %v5817
    %v6618 = vunpack.c.l.b16 %v5818
    %v6619 = vunpack.c.h.b16 %v5818
    %v6620 = vunpack.c.l.b16 %v5819
    %v6621 = vunpack.c.l.b16 %v5820
    %v6622 = vunpack.c.h.b16 %v5820
    %v6623 = vunpack.c.l.b16 %v5821
    %v6624 = vunpack.c.h.b16 %v5821
    %v6625 = vunpack.c.l.b16 %v5822
    %v6626 = vunpack.c.h.b16 %v5822
    %v6627 = vunpack.c.l.b16 %v5823
    %v6628 = vunpack.c.l.b16 %v5824
    %v6629 = vunpack.c.h.b16 %v5824
    %v6630 = vunpack.c.l.b16 %v5825
    %v6631 = vunpack.c.h.b16 %v5825
    %v6632 = vunpack.c.l.b16 %v5826
    %v6633 = vunpack.c.h.b16 %v5826
    %v6634 = vunpack.c.l.b16 %v5827
    %v6635 = vunpack.c.l.b16 %v5828
    %v6636 = vunpack.c.h.b16 %v5828
    %v6637 = vunpack.c.l.b16 %v5829
    %v6638 = vunpack.c.h.b16 %v5829
    %v6639 = vunpack.c.l.b16 %v5830
    %v6640 = vunpack.c.h.b16 %v5830
    %v6641 = vunpack.c.l.b16 %v5831
    %v6642 = vunpack.c.l.b16 %v5832
    %v6643 = vunpack.c.h.b16 %v5832
    %v6644 = vunpack.c.l.b16 %v5833
    %v6645 = vunpack.c.h.b16 %v5833
    %v6646 = vunpack.c.l.b16 %v5834
    %v6647 = vunpack.c.h.b16 %v5834
    %v6648 = vunpack.c.l.b16 %v5835
    %v6649 = vunpack.c.l.b16 %v5836
    %v6650 = vunpack.c.h.b16 %v5836
    %v6651 = vunpack.c.l.b16 %v5837
    %v6652 = vunpack.c.h.b16 %v5837
    %v6653 = vunpack.c.l.b16 %v5838
    %v6654 = vunpack.c.h.b16 %v5838
    %v6655 = vunpack.c.l.b16 %v5839
    %v6656 = vunpack.c.l.b16 %v5840
    %v6657 = vunpack.c.h.b16 %v5840
    %v6658 = vunpack.c.l.b16 %v5841
    %v6659 = vunpack.c.h.b16 %v5841
    %v6660 = vunpack.c.l.b16 %v5842
    %v6661 = vunpack.c.h.b16 %v5842
    %v6662 = vunpack.c.l.b16 %v5843
    %v6663 = vunpack.c.l.b16 %v5844
    %v6664 = vunpack.c.h.b16 %v5844
    %v6665 = vunpack.c.l.b16 %v5845
    %v6666 = vunpack.c.h.b16 %v5845
    %v6667 = vunpack.c.l.b16 %v5846
    %v6668 = vunpack.c.h.b16 %v5846
    %v6669 = vunpack.c.l.b16 %v5847
    %v6670 = vunpack.c.l.b16 %v5848
    %v6671 = vunpack.c.h.b16 %v5848
    %v6672 = vunpack.c.l.b16 %v5849
    %v6673 = vunpack.c.h.b16 %v5849
    %v6674 = vunpack.c.l.b16 %v5850
    %v6675 = vunpack.c.h.b16 %v5850
    %v6676 = vunpack.c.l.b16 %v5851
    %v6677 = vunpack.c.l.b16 %v5852
    %v6678 = vunpack.c.h.b16 %v5852
    %v6679 = vunpack.c.l.b16 %v5853
    %v6680 = vunpack.c.h.b16 %v5853
    %v6681 = vunpack.c.l.b16 %v5854
    %v6682 = vunpack.c.h.b16 %v5854
    %v6683 = vunpack.c.l.b16 %v5855
    %v6684 = vunpack.c.l.b16 %v5856
    %v6685 = vunpack.c.h.b16 %v5856
    %v6686 = vunpack.c.l.b16 %v5857
    %v6687 = vunpack.c.h.b16 %v5857
    %v6688 = vunpack.c.l.b16 %v5858
    %v6689 = vunpack.c.h.b16 %v5858
    %v6690 = vunpack.c.l.b16 %v5859
    %v6691 = vunpack.c.l.b16 %v5860
    %v6692 = vunpack.c.h.b16 %v5860
    %v6693 = vunpack.c.l.b16 %v5861
    %v6694 = vunpack.c.h.b16 %v5861
    %v6695 = vunpack.c.l.b16 %v5862
    %v6696 = vunpack.c.h.b16 %v5862
    %v6697 = vunpack.c.l.b16 %v5863
    %v6698 = vunpack.c.l.b16 %v5864
    %v6699 = vunpack.c.h.b16 %v5864
    %v6700 = vunpack.c.l.b16 %v5865
    %v6701 = vunpack.c.h.b16 %v5865
    %v6702 = vunpack.c.l.b16 %v5866
    %v6703 = vunpack.c.h.b16 %v5866
    %v6704 = vunpack.c.l.b16 %v5867
    %v6705 = vunpack.c.l.b16 %v5868
    %v6706 = vunpack.c.h.b16 %v5868
    %v6707 = vunpack.c.l.b16 %v5869
    %v6708 = vunpack.c.h.b16 %v5869
    %v6709 = vunpack.c.l.b16 %v5870
    %v6710 = vunpack.c.h.b16 %v5870
    %v6711 = vunpack.c.l.b16 %v5871
    %v6712 = vunpack.c.l.b16 %v5872
    %v6713 = vunpack.c.h.b16 %v5872
    %v6714 = vunpack.c.l.b16 %v5873
    %v6715 = vunpack.c.h.b16 %v5873
    %v6716 = vunpack.c.l.b16 %v5874
    %v6717 = vunpack.c.h.b16 %v5874
    %v6718 = vunpack.c.l.b16 %v5875
    %v6719 = vunpack.c.l.b16 %v5876
    %v6720 = vunpack.c.h.b16 %v5876
    %v6721 = vunpack.c.l.b16 %v5877
    %v6722 = vunpack.c.h.b16 %v5877
    %v6723 = vunpack.c.l.b16 %v5878
    %v6724 = vunpack.c.h.b16 %v5878
    %v6725 = vunpack.c.l.b16 %v5879
    %v6726 = vunpack.c.l.b16 %v5880
    %v6727 = vunpack.c.h.b16 %v5880
    %v6728 = vunpack.c.l.b16 %v5881
    %v6729 = vunpack.c.h.b16 %v5881
    %v6730 = vunpack.c.l.b16 %v5882
    %v6731 = vunpack.c.h.b16 %v5882
    %v6732 = vunpack.c.l.b16 %v5883
    %v6733 = vunpack.c.l.b16 %v5884
    %v6734 = vunpack.c.h.b16 %v5884
    %v6735 = vunpack.c.l.b16 %v5885
    %v6736 = vunpack.c.h.b16 %v5885
    %v6737 = vunpack.c.l.b16 %v5886
    %v6738 = vunpack.c.h.b16 %v5886
    %v6739 = vunpack.c.l.b16 %v5887
    %v6740 = vunpack.c.l.b16 %v5888
    %v6741 = vunpack.c.h.b16 %v5888
    %v6742 = vunpack.c.l.b16 %v5889
    %v6743 = vunpack.c.h.b16 %v5889
    %v6744 = vunpack.c.l.b16 %v5890
    %v6745 = vunpack.c.h.b16 %v5890
    %v6746 = vunpack.c.l.b16 %v5891
    %v6747 = vunpack.c.l.b16 %v5892
    %v6748 = vunpack.c.h.b16 %v5892
    %v6749 = vunpack.c.l.b16 %v5893
    %v6750 = vunpack.c.h.b16 %v5893
    %v6751 = vunpack.c.l.b16 %v5894
    %v6752 = vunpack.c.h.b16 %v5894
    %v6753 = vunpack.c.l.b16 %v5895
    %v6754 = vunpack.c.l.b16 %v5896
    %v6755 = vunpack.c.h.b16 %v5896
    %v6756 = vunpack.c.l.b16 %v5897
    %v6757 = vunpack.c.h.b16 %v5897
    %v6758 = vunpack.c.l.b16 %v5898
    %v6759 = vunpack.c.h.b16 %v5898
    %v6760 = vunpack.c.l.b16 %v5899
    %v6761 = vunpack.c.l.b16 %v5900
    %v6762 = vunpack.c.h.b16 %v5900
    %v6763 = vunpack.c.l.b16 %v5901
    %v6764 = vunpack.c.h.b16 %v5901
    %v6765 = vunpack.c.l.b16 %v5902
    %v6766 = vunpack.c.h.b16 %v5902
    %v6767 = vunpack.c.l.b16 %v5903
    %v6768 = vunpack.c.l.b16 %v5904
    %v6769 = vunpack.c.h.b16 %v5904
    %v6770 = vunpack.c.l.b16 %v5905
    %v6771 = vunpack.c.h.b16 %v5905
    %v6772 = vunpack.c.l.b16 %v5906
    %v6773 = vunpack.c.h.b16 %v5906
    %v6774 = vunpack.c.l.b16 %v5907
    %v6775 = vunpack.c.l.b16 %v5908
    %v6776 = vunpack.c.h.b16 %v5908
    %v6777 = vunpack.c.l.b16 %v5909
    %v6778 = vunpack.c.h.b16 %v5909
    %v6779 = vunpack.c.l.b16 %v5910
    %v6780 = vunpack.c.h.b16 %v5910
    %v6781 = vunpack.c.l.b16 %v5911
    %v6782 = vunpack.c.l.b16 %v5912
    %v6783 = vunpack.c.h.b16 %v5912
    %v6784 = vunpack.c.l.b16 %v5913
    %v6785 = vunpack.c.h.b16 %v5913
    %v6786 = vunpack.c.l.b16 %v5914
    %v6787 = vunpack.c.h.b16 %v5914
    %v6788 = vunpack.c.l.b16 %v5915
    %v6789 = vunpack.c.l.b16 %v5916
    %v6790 = vunpack.c.h.b16 %v5916
    %v6791 = vunpack.c.l.b16 %v5917
    %v6792 = vunpack.c.h.b16 %v5917
    %v6793 = vunpack.c.l.b16 %v5918
    %v6794 = vunpack.c.h.b16 %v5918
    %v6795 = vunpack.c.l.b16 %v5919
    %v6796 = vunpack.c.l.b16 %v5920
    %v6797 = vunpack.c.h.b16 %v5920
    %v6798 = vunpack.c.l.b16 %v5921
    %v6799 = vunpack.c.h.b16 %v5921
    %v6800 = vunpack.c.l.b16 %v5922
    %v6801 = vunpack.c.h.b16 %v5922
    %v6802 = vunpack.c.l.b16 %v5923
    %v6803 = vunpack.c.l.b16 %v5924
    %v6804 = vunpack.c.h.b16 %v5924
    %v6805 = vunpack.c.l.b16 %v5925
    %v6806 = vunpack.c.h.b16 %v5925
    %v6807 = vunpack.c.l.b16 %v5926
    %v6808 = vunpack.c.h.b16 %v5926
    %v6809 = vunpack.c.l.b16 %v5927
    %v6810 = vunpack.c.l.b16 %v5928
    %v6811 = vunpack.c.h.b16 %v5928
    %v6812 = vunpack.c.l.b16 %v5929
    %v6813 = vunpack.c.h.b16 %v5929
    %v6814 = vunpack.c.l.b16 %v5930
    %v6815 = vunpack.c.h.b16 %v5930
    %v6816 = vunpack.c.l.b16 %v5931
    %v6817 = vunpack.c.l.b16 %v5932
    %v6818 = vunpack.c.h.b16 %v5932
    %v6819 = vunpack.c.l.b16 %v5933
    %v6820 = vunpack.c.h.b16 %v5933
    %v6821 = vunpack.c.l.b16 %v5934
    %v6822 = vunpack.c.h.b16 %v5934
    %v6823 = vunpack.c.l.b16 %v5935
    %v6824 = vunpack.c.l.b16 %v5936
    %v6825 = vunpack.c.h.b16 %v5936
    %v6826 = vunpack.c.l.b16 %v5937
    %v6827 = vunpack.c.h.b16 %v5937
    %v6828 = vunpack.c.l.b16 %v5938
    %v6829 = vunpack.c.h.b16 %v5938
    %v6830 = vunpack.c.l.b16 %v5939
    %v6831 = vunpack.c.l.b16 %v5940
    %v6832 = vunpack.c.h.b16 %v5940
    %v6833 = vunpack.c.l.b16 %v5941
    %v6834 = vunpack.c.h.b16 %v5941
    %v6835 = vunpack.c.l.b16 %v5942
    %v6836 = vunpack.c.h.b16 %v5942
    %v6837 = vunpack.c.l.b16 %v5943
    %v6838 = vunpack.c.l.b16 %v5944
    %v6839 = vunpack.c.h.b16 %v5944
    %v6840 = vunpack.c.l.b16 %v5945
    %v6841 = vunpack.c.h.b16 %v5945
    %v6842 = vunpack.c.l.b16 %v5946
    %v6843 = vunpack.c.h.b16 %v5946
    %v6844 = vunpack.c.l.b16 %v5947
    %v6845 = vunpack.c.l.b16 %v5948
    %v6846 = vunpack.c.h.b16 %v5948
    %v6847 = vunpack.c.l.b16 %v5949
    %v6848 = vunpack.c.h.b16 %v5949
    %v6849 = vunpack.c.l.b16 %v5950
    %v6850 = vunpack.c.h.b16 %v5950
    %v6851 = vunpack.c.l.b16 %v5951
    %v6852 = vunpack.c.l.b16 %v5952
    %v6853 = vunpack.c.h.b16 %v5952
    %v6854 = vunpack.c.l.b16 %v5953
    %v6855 = vunpack.c.h.b16 %v5953
    %v6856 = vunpack.c.l.b16 %v5954
    %v6857 = vunpack.c.h.b16 %v5954
    %v6858 = vunpack.c.l.b16 %v5955
    %v6859 = vunpack.c.l.b16 %v5956
    %v6860 = vunpack.c.h.b16 %v5956
    %v6861 = vunpack.c.l.b16 %v5957
    %v6862 = vunpack.c.h.b16 %v5957
    %v6863 = vunpack.c.l.b16 %v5958
    %v6864 = vunpack.c.h.b16 %v5958
    %v6865 = vunpack.c.l.b16 %v5959
    %v6866 = vunpack.c.l.b16 %v5960
    %v6867 = vunpack.c.h.b16 %v5960
    %v6868 = vunpack.c.l.b16 %v5961
    %v6869 = vunpack.c.h.b16 %v5961
    %v6870 = vunpack.c.l.b16 %v5962
    %v6871 = vunpack.c.h.b16 %v5962
    %v6872 = vunpack.c.l.b16 %v5963
    %v6873 = vunpack.c.l.b16 %v5964
    %v6874 = vunpack.c.h.b16 %v5964
    %v6875 = vunpack.c.l.b16 %v5965
    %v6876 = vunpack.c.h.b16 %v5965
    %v6877 = vunpack.c.l.b16 %v5966
    %v6878 = vunpack.c.h.b16 %v5966
    %v6879 = vunpack.c.l.b16 %v5967
    %v6880 = vunpack.c.l.b16 %v5968
    %v6881 = vunpack.c.h.b16 %v5968
    %v6882 = vunpack.c.l.b16 %v5969
    %v6883 = vunpack.c.h.b16 %v5969
    %v6884 = vunpack.c.l.b16 %v5970
    %v6885 = vunpack.c.h.b16 %v5970
    %v6886 = vunpack.c.l.b16 %v5971
    %v6887 = vunpack.c.l.b16 %v5972
    %v6888 = vunpack.c.h.b16 %v5972
    %v6889 = vunpack.c.l.b16 %v5973
    %v6890 = vunpack.c.h.b16 %v5973
    %v6891 = vunpack.c.l.b16 %v5974
    %v6892 = vunpack.c.h.b16 %v5974
    %v6893 = vunpack.c.l.b16 %v5975
    %v6894 = vunpack.c.l.b16 %v5976
    %v6895 = vunpack.c.h.b16 %v5976
    %v6896 = vunpack.c.l.b16 %v5977
    %v6897 = vunpack.c.h.b16 %v5977
    %v6898 = vunpack.c.l.b16 %v5978
    %v6899 = vunpack.c.h.b16 %v5978
    %v6900 = vunpack.c.l.b16 %v5979
    %v6901 = vunpack.c.l.b16 %v5980
    %v6902 = vunpack.c.h.b16 %v5980
    %v6903 = vunpack.c.l.b16 %v5981
    %v6904 = vunpack.c.h.b16 %v5981
    %v6905 = vunpack.c.l.b16 %v5982
    %v6906 = vunpack.c.h.b16 %v5982
    %v6907 = vunpack.c.l.b16 %v5983
    %v6908 = vunpack.c.l.b16 %v5984
    %v6909 = vunpack.c.h.b16 %v5984
    %v6910 = vunpack.c.l.b16 %v5985
    %v6911 = vunpack.c.h.b16 %v5985
    %v6912 = vunpack.c.l.b16 %v5986
    %v6913 = vunpack.c.h.b16 %v5986
    %v6914 = vunpack.c.l.b16 %v5987
    %v6915 = vunpack.c.l.b16 %v5988
    %v6916 = vunpack.c.h.b16 %v5988
    %v6917 = vunpack.c.l.b16 %v5989
    %v6918 = vunpack.c.h.b16 %v5989
    %v6919 = vunpack.c.l.b16 %v5990
    %v6920 = vunpack.c.h.b16 %v5990
    %v6921 = vunpack.c.l.b16 %v5991
    %v6922 = vunpack.c.l.b16 %v5992
    %v6923 = vunpack.c.h.b16 %v5992
    %v6924 = vunpack.c.l.b16 %v5993
    %v6925 = vunpack.c.h.b16 %v5993
    %v6926 = vunpack.c.l.b16 %v5994
    %v6927 = vunpack.c.h.b16 %v5994
    %v6928 = vunpack.c.l.b16 %v5995
    %v6929 = vunpack.c.l.b16 %v5996
    %v6930 = vunpack.c.h.b16 %v5996
    %v6931 = vunpack.c.l.b16 %v5997
    %v6932 = vunpack.c.h.b16 %v5997
    %v6933 = vunpack.c.l.b16 %v5998
    %v6934 = vunpack.c.h.b16 %v5998
    %v6935 = vunpack.c.l.b16 %v5999
    %v6936 = vunpack.c.l.b16 %v6000
    %v6937 = vunpack.c.h.b16 %v6000
    %v6938 = vunpack.c.l.b16 %v6001
    %v6939 = vunpack.c.h.b16 %v6001
    %v6940 = vunpack.c.l.b16 %v6002
    %v6941 = vunpack.c.h.b16 %v6002
    %v6942 = vunpack.c.l.b16 %v6003
    %v6943 = vunpack.c.l.b16 %v6004
    %v6944 = vunpack.c.h.b16 %v6004
    %v6945 = vunpack.c.l.b16 %v6005
    %v6946 = vunpack.c.h.b16 %v6005
    %v6947 = vunpack.c.l.b16 %v6006
    %v6948 = vunpack.c.h.b16 %v6006
    %v6949 = vunpack.c.l.b16 %v6007
    %v6950 = vunpack.c.l.b16 %v6008
    %v6951 = vunpack.c.h.b16 %v6008
    %v6952 = vunpack.c.l.b16 %v6009
    %v6953 = vunpack.c.h.b16 %v6009
    %v6954 = vunpack.c.l.b16 %v6010
    %v6955 = vunpack.c.h.b16 %v6010
    %v6956 = vunpack.c.l.b16 %v6011
    %v6957 = vunpack.c.l.b16 %v6012
    %v6958 = vunpack.c.h.b16 %v6012
    %v6959 = vunpack.c.l.b16 %v6013
    %v6960 = vunpack.c.h.b16 %v6013
    %v6961 = vunpack.c.l.b16 %v6014
    %v6962 = vunpack.c.h.b16 %v6014
    %v6963 = vunpack.c.l.b16 %v6015
    %v6964 = vunpack.c.l.b16 %v6016
    %v6965 = vunpack.c.h.b16 %v6016
    %v6966 = vunpack.c.l.b16 %v6017
    %v6967 = vunpack.c.h.b16 %v6017
    %v6968 = vunpack.c.l.b16 %v6018
    %v6969 = vunpack.c.h.b16 %v6018
    %v6970 = vunpack.c.l.b16 %v6019
    %v6971 = vunpack.c.l.b16 %v6020
    %v6972 = vunpack.c.h.b16 %v6020
    %v6973 = vunpack.c.l.b16 %v6021
    %v6974 = vunpack.c.h.b16 %v6021
    %v6975 = vunpack.c.l.b16 %v6022
    %v6976 = vunpack.c.h.b16 %v6022
    %v6977 = vunpack.c.l.b16 %v6023
    %v6978 = vunpack.c.l.b16 %v6024
    %v6979 = vunpack.c.h.b16 %v6024
    %v6980 = vunpack.c.l.b16 %v6025
    %v6981 = vunpack.c.h.b16 %v6025
    %v6982 = vunpack.c.l.b16 %v6026
    %v6983 = vunpack.c.h.b16 %v6026
    %v6984 = vunpack.c.l.b16 %v6027
    %v6985 = vunpack.c.l.b16 %v6028
    %v6986 = vunpack.c.h.b16 %v6028
    %v6987 = vunpack.c.l.b16 %v6029
    %v6988 = vunpack.c.h.b16 %v6029
    %v6989 = vunpack.c.l.b16 %v6030
    %v6990 = vunpack.c.h.b16 %v6030
    %v6991 = vunpack.c.l.b16 %v6031
    %v6992 = vunpack.c.l.b16 %v6032
    %v6993 = vunpack.c.h.b16 %v6032
    %v6994 = vunpack.c.l.b16 %v6033
    %v6995 = vunpack.c.h.b16 %v6033
    %v6996 = vunpack.c.l.b16 %v6034
    %v6997 = vunpack.c.h.b16 %v6034
    %v6998 = vunpack.c.l.b16 %v6035
    %v6999 = vunpack.c.l.b16 %v6036
    %v7000 = vunpack.c.h.b16 %v6036
    %v7001 = vunpack.c.l.b16 %v6037
    %v7002 = vunpack.c.h.b16 %v6037
    %v7003 = vunpack.c.l.b16 %v6038
    %v7004 = vunpack.c.h.b16 %v6038
    %v7005 = vunpack.c.l.b16 %v6039
    %v7006 = vunpack.c.l.b16 %v6040
    %v7007 = vunpack.c.h.b16 %v6040
    %v7008 = vunpack.c.l.b16 %v6041
    %v7009 = vunpack.c.h.b16 %v6041
    %v7010 = vunpack.c.l.b16 %v6042
    %v7011 = vunpack.c.h.b16 %v6042
    %v7012 = vunpack.c.l.b16 %v6043
    %v7013 = vunpack.c.l.b16 %v6044
    %v7014 = vunpack.c.h.b16 %v6044
    %v7015 = vunpack.c.l.b16 %v6045
    %v7016 = vunpack.c.h.b16 %v6045
    %v7017 = vunpack.c.l.b16 %v6046
    %v7018 = vunpack.c.h.b16 %v6046
    %v7019 = vunpack.c.l.b16 %v6047
    %v7020 = vunpack.c.l.b16 %v6048
    %v7021 = vunpack.c.h.b16 %v6048
    %v7022 = vunpack.c.l.b16 %v6049
    %v7023 = vunpack.c.h.b16 %v6049
    %v7024 = vunpack.c.l.b16 %v6050
    %v7025 = vunpack.c.h.b16 %v6050
    %v7026 = vunpack.c.l.b16 %v6051
    %v7027 = vunpack.c.l.b16 %v6052
    %v7028 = vunpack.c.h.b16 %v6052
    %v7029 = vunpack.c.l.b16 %v6053
    %v7030 = vunpack.c.h.b16 %v6053
    %v7031 = vunpack.c.l.b16 %v6054
    %v7032 = vunpack.c.h.b16 %v6054
    %v7033 = vunpack.c.l.b16 %v6055
    %v7034 = vunpack.c.l.b16 %v6056
    %v7035 = vunpack.c.h.b16 %v6056
    %v7036 = vunpack.c.l.b16 %v6057
    %v7037 = vunpack.c.h.b16 %v6057
    %v7038 = vunpack.c.l.b16 %v6058
    %v7039 = vunpack.c.h.b16 %v6058
    %v7040 = vunpack.c.l.b16 %v6059
    %v7041 = vunpack.c.l.b16 %v6060
    %v7042 = vunpack.c.h.b16 %v6060
    %v7043 = vunpack.c.l.b16 %v6061
    %v7044 = vunpack.c.h.b16 %v6061
    %v7045 = vunpack.c.l.b16 %v6062
    %v7046 = vunpack.c.h.b16 %v6062
    %v7047 = vunpack.c.l.b16 %v6063
    %v7048 = vunpack.c.l.b16 %v6064
    %v7049 = vunpack.c.h.b16 %v6064
    %v7050 = vunpack.c.l.b16 %v6065
    %v7051 = vunpack.c.h.b16 %v6065
    %v7052 = vunpack.c.l.b16 %v6066
    %v7053 = vunpack.c.h.b16 %v6066
    %v7054 = vunpack.c.l.b16 %v6067
    %v7055 = vunpack.c.l.b16 %v6068
    %v7056 = vunpack.c.h.b16 %v6068
    %v7057 = vunpack.c.l.b16 %v6069
    %v7058 = vunpack.c.h.b16 %v6069
    %v7059 = vunpack.c.l.b16 %v6070
    %v7060 = vunpack.c.h.b16 %v6070
    %v7061 = vunpack.c.l.b16 %v6071
    %v7062 = vunpack.c.l.b16 %v6072
    %v7063 = vunpack.c.h.b16 %v6072
    %v7064 = vunpack.c.l.b16 %v6073
    %v7065 = vunpack.c.h.b16 %v6073
    %v7066 = vunpack.c.l.b16 %v6074
    %v7067 = vunpack.c.h.b16 %v6074
    %v7068 = vunpack.c.l.b16 %v6075
    %v7069 = vunpack.c.l.b16 %v6076
    %v7070 = vunpack.c.h.b16 %v6076
    %v7071 = vunpack.c.l.b16 %v6077
    %v7072 = vunpack.c.h.b16 %v6077
    %v7073 = vunpack.c.l.b16 %v6078
    %v7074 = vunpack.c.h.b16 %v6078
    %v7075 = vunpack.c.l.b16 %v6079
    %v7076 = vunpack.c.l.b16 %v6080
    %v7077 = vunpack.c.h.b16 %v6080
    %v7078 = vunpack.c.l.b16 %v6081
    %v7079 = vunpack.c.h.b16 %v6081
    %v7080 = vunpack.c.l.b16 %v6082
    %v7081 = vunpack.c.h.b16 %v6082
    %v7082 = vunpack.c.l.b16 %v6083
    %v7083 = vunpack.c.l.b16 %v6084
    %v7084 = vunpack.c.h.b16 %v6084
    %v7085 = vunpack.c.l.b16 %v6085
    %v7086 = vunpack.c.h.b16 %v6085
    %v7087 = vunpack.c.l.b16 %v6086
    %v7088 = vunpack.c.h.b16 %v6086
    %v7089 = vunpack.c.l.b16 %v6087
    %v7090 = vunpack.c.l.b16 %v6088
    %v7091 = vunpack.c.h.b16 %v6088
    %v7092 = vunpack.c.l.b16 %v6089
    %v7093 = vunpack.c.h.b16 %v6089
    %v7094 = vunpack.c.l.b16 %v6090
    %v7095 = vunpack.c.h.b16 %v6090
    %v7096 = vunpack.c.l.b16 %v6091
    %v7097 = vunpack.c.l.b16 %v6092
    %v7098 = vunpack.c.h.b16 %v6092
    %v7099 = vunpack.c.l.b16 %v6093
    %v7100 = vunpack.c.h.b16 %v6093
    %v7101 = vunpack.c.l.b16 %v6094
    %v7102 = vunpack.c.h.b16 %v6094
    %v7103 = vunpack.c.l.b16 %v6095
    %v7104 = vunpack.c.l.b16 %v6096
    %v7105 = vunpack.c.h.b16 %v6096
    %v7106 = vunpack.c.l.b16 %v6097
    %v7107 = vunpack.c.h.b16 %v6097
    %v7108 = vunpack.c.l.b16 %v6098
    %v7109 = vunpack.c.h.b16 %v6098
    %v7110 = vunpack.c.l.b16 %v6099
    %v7111 = vunpack.c.l.b16 %v6100
    %v7112 = vunpack.c.h.b16 %v6100
    %v7113 = vunpack.c.l.b16 %v6101
    %v7114 = vunpack.c.h.b16 %v6101
    %v7115 = vunpack.c.l.b16 %v6102
    %v7116 = vunpack.c.h.b16 %v6102
    %v7117 = vunpack.c.l.b16 %v6103
    %v7118 = vunpack.c.l.b16 %v6104
    %v7119 = vunpack.c.h.b16 %v6104
    %v7120 = vunpack.c.l.b16 %v6105
    %v7121 = vunpack.c.h.b16 %v6105
    %v7122 = vunpack.c.l.b16 %v6106
    %v7123 = vunpack.c.h.b16 %v6106
    %v7124 = vunpack.c.l.b16 %v6107
    %v7125 = vunpack.c.l.b16 %v6108
    %v7126 = vunpack.c.h.b16 %v6108
    %v7127 = vunpack.c.l.b16 %v6109
    %v7128 = vunpack.c.h.b16 %v6109
    %v7129 = vunpack.c.l.b16 %v6110
    %v7130 = vunpack.c.h.b16 %v6110
    %v7131 = vunpack.c.l.b16 %v6111
    %v7132 = vunpack.c.l.b16 %v6112
    %v7133 = vunpack.c.h.b16 %v6112
    %v7134 = vunpack.c.l.b16 %v6113
    %v7135 = vunpack.c.h.b16 %v6113
    %v7136 = vunpack.c.l.b16 %v6114
    %v7137 = vunpack.c.h.b16 %v6114
    %v7138 = vunpack.c.l.b16 %v6115
    %v7139 = vunpack.c.l.b16 %v6116
    %v7140 = vunpack.c.h.b16 %v6116
    %v7141 = vunpack.c.l.b16 %v6117
    %v7142 = vunpack.c.h.b16 %v6117
    %v7143 = vunpack.c.l.b16 %v6118
    %v7144 = vunpack.c.h.b16 %v6118
    %v7145 = vunpack.c.l.b16 %v6119
    %v7146 = vunpack.c.l.b16 %v6120
    %v7147 = vunpack.c.h.b16 %v6120
    %v7148 = vunpack.c.l.b16 %v6121
    %v7149 = vunpack.c.h.b16 %v6121
    %v7150 = vunpack.c.l.b16 %v6122
    %v7151 = vunpack.c.h.b16 %v6122
    %v7152 = vunpack.c.l.b16 %v6123
    %v7153 = vunpack.c.l.b16 %v6124
    %v7154 = vunpack.c.h.b16 %v6124
    %v7155 = vunpack.c.l.b16 %v6125
    %v7156 = vunpack.c.h.b16 %v6125
    %v7157 = vunpack.c.l.b16 %v6126
    %v7158 = vunpack.c.h.b16 %v6126
    %v7159 = vunpack.c.l.b16 %v6127
    %v7160 = vunpack.c.l.b16 %v6128
    %v7161 = vunpack.c.h.b16 %v6128
    %v7162 = vunpack.c.l.b16 %v6129
    %v7163 = vunpack.c.h.b16 %v6129
    %v7164 = vunpack.c.l.b16 %v6130
    %v7165 = vunpack.c.h.b16 %v6130
    %v7166 = vunpack.c.l.b16 %v6131
    %v7167 = vunpack.c.l.b16 %v6132
    %v7168 = vunpack.c.h.b16 %v6132
    %v7169 = vunpack.c.l.b16 %v6133
    %v7170 = vunpack.c.h.b16 %v6133
    %v7171 = vunpack.c.l.b16 %v6134
    %v7172 = vunpack.c.h.b16 %v6134
    %v7173 = vunpack.c.l.b16 %v6135
    %v7174 = vunpack.c.l.b16 %v6136
    %v7175 = vunpack.c.h.b16 %v6136
    %v7176 = vunpack.c.l.b16 %v6137
    %v7177 = vunpack.c.h.b16 %v6137
    %v7178 = vunpack.c.l.b16 %v6138
    %v7179 = vunpack.c.h.b16 %v6138
    %v7180 = vunpack.c.l.b16 %v6139
    %v7181 = vunpack.c.l.b16 %v6140
    %v7182 = vunpack.c.h.b16 %v6140
    %v7183 = vunpack.c.l.b16 %v6141
    %v7184 = vunpack.c.h.b16 %v6141
    %v7185 = vunpack.c.l.b16 %v6142
    %v7186 = vunpack.c.h.b16 %v6142
    %v7187 = vunpack.c.l.b16 %v6143
    %v7188 = vunpack.c.l.b16 %v6144
    %v7189 = vunpack.c.h.b16 %v6144
    %v7190 = vunpack.c.l.b16 %v6145
    %v7191 = vunpack.c.h.b16 %v6145
    %v7192 = vunpack.c.l.b16 %v6146
    %v7193 = vunpack.c.h.b16 %v6146
    %v7194 = vunpack.c.l.b16 %v6147
    %v7195 = vunpack.c.l.b16 %v6148
    %v7196 = vunpack.c.h.b16 %v6148
    %v7197 = vunpack.c.l.b16 %v6149
    %v7198 = vunpack.c.h.b16 %v6149
    %v7199 = vunpack.c.l.b16 %v6150
    %v7200 = vunpack.c.h.b16 %v6150
    %v7201 = vunpack.c.l.b16 %v6151
    %v7202 = vunpack.c.l.b16 %v6152
    %v7203 = vunpack.c.h.b16 %v6152
    %v7204 = vunpack.c.l.b16 %v6153
    %v7205 = vunpack.c.h.b16 %v6153
    %v7206 = vunpack.c.l.b16 %v6154
    %v7207 = vunpack.c.h.b16 %v6154
    %v7208 = vunpack.c.l.b16 %v6155
    %v7209 = vunpack.c.l.b16 %v6156
    %v7210 = vunpack.c.h.b16 %v6156
    %v7211 = vunpack.c.l.b16 %v6157
    %v7212 = vunpack.c.h.b16 %v6157
    %v7213 = vunpack.c.l.b16 %v6158
    %v7214 = vunpack.c.h.b16 %v6158
    %v7215 = vunpack.c.l.b16 %v6159
    %v7216 = vunpack.c.l.b16 %v6160
    %v7217 = vunpack.c.h.b16 %v6160
    %v7218 = vunpack.c.l.b16 %v6161
    %v7219 = vunpack.c.h.b16 %v6161
    %v7220 = vunpack.c.l.b16 %v6162
    %v7221 = vunpack.c.h.b16 %v6162
    %v7222 = vunpack.c.l.b16 %v6163
    %v7223 = vunpack.c.l.b16 %v6164
    %v7224 = vunpack.c.h.b16 %v6164
    %v7225 = vunpack.c.l.b16 %v6165
    %v7226 = vunpack.c.h.b16 %v6165
    %v7227 = vunpack.c.l.b16 %v6166
    %v7228 = vunpack.c.h.b16 %v6166
    %v7229 = vunpack.c.l.b16 %v6167
    %v7230 = vunpack.c.l.b16 %v6168
    %v7231 = vunpack.c.h.b16 %v6168
    %v7232 = vunpack.c.l.b16 %v6169
    %v7233 = vunpack.c.h.b16 %v6169
    %v7234 = vunpack.c.l.b16 %v6170
    %v7235 = vunpack.c.h.b16 %v6170
    %v7236 = vunpack.c.l.b16 %v6171
    %v7237 = vunpack.c.l.b16 %v6172
    %v7238 = vunpack.c.h.b16 %v6172
    %v7239 = vunpack.c.l.b16 %v6173
    %v7240 = vunpack.c.h.b16 %v6173
    %v7241 = vunpack.c.l.b16 %v6174
    %v7242 = vunpack.c.h.b16 %v6174
    %v7243 = vunpack.c.l.b16 %v6175
    %v7244 = vunpack.c.l.b16 %v6176
    %v7245 = vunpack.c.h.b16 %v6176
    %v7246 = vunpack.c.l.b16 %v6177
    %v7247 = vunpack.c.h.b16 %v6177
    %v7248 = vunpack.c.l.b16 %v6178
    %v7249 = vunpack.c.h.b16 %v6178
    %v7250 = vunpack.c.l.b16 %v6179
    %v7251 = vunpack.c.l.b16 %v6180
    %v7252 = vunpack.c.h.b16 %v6180
    %v7253 = vunpack.c.l.b16 %v6181
    %v7254 = vunpack.c.h.b16 %v6181
    %v7255 = vunpack.c.l.b16 %v6182
    %v7256 = vunpack.c.h.b16 %v6182
    %v7257 = vunpack.c.l.b16 %v6183
    %v7258 = vunpack.c.l.b16 %v6184
    %v7259 = vunpack.c.h.b16 %v6184
    %v7260 = vunpack.c.l.b16 %v6185
    %v7261 = vunpack.c.h.b16 %v6185
    %v7262 = vunpack.c.l.b16 %v6186
    %v7263 = vunpack.c.h.b16 %v6186
    %v7264 = vunpack.c.l.b16 %v6187
    %v7265 = vunpack.c.l.b16 %v6188
    %v7266 = vunpack.c.h.b16 %v6188
    %v7267 = vunpack.c.l.b16 %v6189
    %v7268 = vunpack.c.h.b16 %v6189
    %v7269 = vunpack.c.l.b16 %v6190
    %v7270 = vunpack.c.h.b16 %v6190
    %v7271 = vunpack.c.l.b16 %v6191
    %v7272 = vunpack.c.l.b16 %v6192
    %v7273 = vunpack.c.h.b16 %v6192
    %v7274 = vunpack.c.l.b16 %v6193
    %v7275 = vunpack.c.h.b16 %v6193
    %v7276 = vunpack.c.l.b16 %v6194
    %v7277 = vunpack.c.h.b16 %v6194
    %v7278 = vunpack.c.l.b16 %v6195
    %v7279 = vunpack.c.l.b16 %v6196
    %v7280 = vunpack.c.h.b16 %v6196
    %v7281 = vunpack.c.l.b16 %v6197
    %v7282 = vunpack.c.h.b16 %v6197
    %v7283 = vunpack.c.l.b16 %v6198
    %v7284 = vunpack.c.h.b16 %v6198
    %v7285 = vunpack.c.l.b16 %v6199
    %v7286 = vunpack.c.l.b16 %v6200
    %v7287 = vunpack.c.h.b16 %v6200
    %v7288 = vunpack.c.l.b16 %v6201
    %v7289 = vunpack.c.h.b16 %v6201
    %v7290 = vunpack.c.l.b16 %v6202
    %v7291 = vunpack.c.h.b16 %v6202
    %v7292 = vunpack.c.l.b16 %v6203
    %v7293 = vunpack.c.l.b16 %v6204
    %v7294 = vunpack.c.h.b16 %v6204
    %v7295 = vunpack.c.l.b16 %v6205
    %v7296 = vunpack.c.h.b16 %v6205
    %v7297 = vunpack.c.l.b16 %v6206
    %v7298 = vunpack.c.h.b16 %v6206
    %v7299 = vunpack.c.l.b16 %v6207
    %v7300 = vpack.c.b16 %v6621, %v6614
    %v7301 = vpack.c.b16 %v6622, %v6615
    %v7302 = vpack.c.b16 %v6623, %v6616
    %v7303 = vpack.c.b16 %v6624, %v6617
    %v7304 = vpack.c.b16 %v6625, %v6618
    %v7305 = vpack.c.b16 %v6626, %v6619
    %v7306 = vpack.c.b16 %v6627, %v6620
    %v7307 = vpack.c.b16 %v6635, %v6628
    %v7308 = vpack.c.b16 %v6636, %v6629
    %v7309 = vpack.c.b16 %v6637, %v6630
    %v7310 = vpack.c.b16 %v6638, %v6631
    %v7311 = vpack.c.b16 %v6639, %v6632
    %v7312 = vpack.c.b16 %v6640, %v6633
    %v7313 = vpack.c.b16 %v6641, %v6634
    %v7314 = vpack.c.b16 %v6649, %v6642
    %v7315 = vpack.c.b16 %v6650, %v6643
    %v7316 = vpack.c.b16 %v6651, %v6644
    %v7317 = vpack.c.b16 %v6652, %v6645
    %v7318 = vpack.c.b16 %v6653, %v6646
    %v7319 = vpack.c.b16 %v6654, %v6647
    %v7320 = vpack.c.b16 %v6655, %v6648
    %v7321 = vpack.c.b16 %v6663, %v6656
    %v7322 = vpack.c.b16 %v6664, %v6657
    %v7323 = vpack.c.b16 %v6665, %v6658
    %v7324 = vpack.c.b16 %v6666, %v6659
    %v7325 = vpack.c.b16 %v6667, %v6660
    %v7326 = vpack.c.b16 %v6668, %v6661
    %v7327 = vpack.c.b16 %v6669, %v6662
    %v7328 = vpack.c.b16 %v6677, %v6670
    %v7329 = vpack.c.b16 %v6678, %v6671
    %v7330 = vpack.c.b16 %v6679, %v6672
    %v7331 = vpack.c.b16 %v6680, %v6673
    %v7332 = vpack.c.b16 %v6681, %v6674
    %v7333 = vpack.c.b16 %v6682, %v6675
    %v7334 = vpack.c.b16 %v6683, %v6676
    %v7335 = vpack.c.b16 %v6691, %v6684
    %v7336 = vpack.c.b16 %v6692, %v6685
    %v7337 = vpack.c.b16 %v6693, %v6686
    %v7338 = vpack.c.b16 %v6694, %v6687
    %v7339 = vpack.c.b16 %v6695, %v6688
    %v7340 = vpack.c.b16 %v6696, %v6689
    %v7341 = vpack.c.b16 %v6697, %v6690
    %v7342 = vpack.c.b16 %v6705, %v6698
    %v7343 = vpack.c.b16 %v6706, %v6699
    %v7344 = vpack.c.b16 %v6707, %v6700
    %v7345 = vpack.c.b16 %v6708, %v6701
    %v7346 = vpack.c.b16 %v6709, %v6702
    %v7347 = vpack.c.b16 %v6710, %v6703
    %v7348 = vpack.c.b16 %v6711, %v6704
    %v7349 = vpack.c.b16 %v6719, %v6712
    %v7350 = vpack.c.b16 %v6720, %v6713
    %v7351 = vpack.c.b16 %v6721, %v6714
    %v7352 = vpack.c.b16 %v6722, %v6715
    %v7353 = vpack.c.b16 %v6723, %v6716
    %v7354 = vpack.c.b16 %v6724, %v6717
    %v7355 = vpack.c.b16 %v6725, %v6718
    %v7356 = vpack.c.b16 %v6733, %v6726
    %v7357 = vpack.c.b16 %v6734, %v6727
    %v7358 = vpack.c.b16 %v6735, %v6728
    %v7359 = vpack.c.b16 %v6736, %v6729
    %v7360 = vpack.c.b16 %v6737, %v6730
    %v7361 = vpack.c.b16 %v6738, %v6731
    %v7362 = vpack.c.b16 %v6739, %v6732
    %v7363 = vpack.c.b16 %v6747, %v6740
    %v7364 = vpack.c.b16 %v6748, %v6741
    %v7365 = vpack.c.b16 %v6749, %v6742
    %v7366 = vpack.c.b16 %v6750, %v6743
    %v7367 = vpack.c.b16 %v6751, %v6744
    %v7368 = vpack.c.b16 %v6752, %v6745
    %v7369 = vpack.c.b16 %v6753, %v6746
    %v7370 = vpack.c.b16 %v6761, %v6754
    %v7371 = vpack.c.b16 %v6762, %v6755
    %v7372 = vpack.c.b16 %v6763, %v6756
    %v7373 = vpack.c.b16 %v6764, %v6757
    %v7374 = vpack.c.b16 %v6765, %v6758
    %v7375 = vpack.c.b16 %v6766, %v6759
    %v7376 = vpack.c.b16 %v6767, %v6760
    %v7377 = vpack.c.b16 %v6775, %v6768
    %v7378 = vpack.c.b16 %v6776, %v6769
    %v7379 = vpack.c.b16 %v6777, %v6770
    %v7380 = vpack.c.b16 %v6778, %v6771
    %v7381 = vpack.c.b16 %v6779, %v6772
    %v7382 = vpack.c.b16 %v6780, %v6773
    %v7383 = vpack.c.b16 %v6781, %v6774
    %v7384 = vpack.c.b16 %v6789, %v6782
    %v7385 = vpack.c.b16 %v6790, %v6783
    %v7386 = vpack.c.b16 %v6791, %v6784
    %v7387 = vpack.c.b16 %v6792, %v6785
    %v7388 = vpack.c.b16 %v6793, %v6786
    %v7389 = vpack.c.b16 %v6794, %v6787
    %v7390 = vpack.c.b16 %v6795, %v6788
    %v7391 = vpack.c.b16 %v6803, %v6796
    %v7392 = vpack.c.b16 %v6804, %v6797
    %v7393 = vpack.c.b16 %v6805, %v6798
    %v7394 = vpack.c.b16 %v6806, %v6799
    %v7395 = vpack.c.b16 %v6807, %v6800
    %v7396 = vpack.c.b16 %v6808, %v6801
    %v7397 = vpack.c.b16 %v6809, %v6802
    %v7398 = vpack.c.b16 %v6817, %v6810
    %v7399 = vpack.c.b16 %v6818, %v6811
    %v7400 = vpack.c.b16 %v6819, %v6812
    %v7401 = vpack.c.b16 %v6820, %v6813
    %v7402 = vpack.c.b16 %v6821, %v6814
    %v7403 = vpack.c.b16 %v6822, %v6815
    %v7404 = vpack.c.b16 %v6823, %v6816
    %v7405 = vpack.c.b16 %v6831, %v6824
    %v7406 = vpack.c.b16 %v6832, %v6825
    %v7407 = vpack.c.b16 %v6833, %v6826
    %v7408 = vpack.c.b16 %v6834, %v6827
    %v7409 = vpack.c.b16 %v6835, %v6828
    %v7410 = vpack.c.b16 %v6836, %v6829
    %v7411 = vpack.c.b16 %v6837, %v6830
    %v7412 = vpack.c.b16 %v6845, %v6838
    %v7413 = vpack.c.b16 %v6846, %v6839
    %v7414 = vpack.c.b16 %v6847, %v6840
    %v7415 = vpack.c.b16 %v6848, %v6841
    %v7416 = vpack.c.b16 %v6849, %v6842
    %v7417 = vpack.c.b16 %v6850, %v6843
    %v7418 = vpack.c.b16 %v6851, %v6844
    %v7419 = vpack.c.b16 %v6859, %v6852
    %v7420 = vpack.c.b16 %v6860, %v6853
    %v7421 = vpack.c.b16 %v6861, %v6854
    %v7422 = vpack.c.b16 %v6862, %v6855
    %v7423 = vpack.c.b16 %v6863, %v6856
    %v7424 = vpack.c.b16 %v6864, %v6857
    %v7425 = vpack.c.b16 %v6865, %v6858
    %v7426 = vpack.c.b16 %v6873, %v6866
    %v7427 = vpack.c.b16 %v6874, %v6867
    %v7428 = vpack.c.b16 %v6875, %v6868
    %v7429 = vpack.c.b16 %v6876, %v6869
    %v7430 = vpack.c.b16 %v6877, %v6870
    %v7431 = vpack.c.b16 %v6878, %v6871
    %v7432 = vpack.c.b16 %v6879, %v6872
    %v7433 = vpack.c.b16 %v6887, %v6880
    %v7434 = vpack.c.b16 %v6888, %v6881
    %v7435 = vpack.c.b16 %v6889, %v6882
    %v7436 = vpack.c.b16 %v6890, %v6883
    %v7437 = vpack.c.b16 %v6891, %v6884
    %v7438 = vpack.c.b16 %v6892, %v6885
    %v7439 = vpack.c.b16 %v6893, %v6886
    %v7440 = vpack.c.b16 %v6901, %v6894
    %v7441 = vpack.c.b16 %v6902, %v6895
    %v7442 = vpack.c.b16 %v6903, %v6896
    %v7443 = vpack.c.b16 %v6904, %v6897
    %v7444 = vpack.c.b16 %v6905, %v6898
    %v7445 = vpack.c.b16 %v6906, %v6899
    %v7446 = vpack.c.b16 %v6907, %v6900
    %v7447 = vpack.c.b16 %v6915, %v6908
    %v7448 = vpack.c.b16 %v6916, %v6909
    %v7449 = vpack.c.b16 %v6917, %v6910
    %v7450 = vpack.c.b16 %v6918, %v6911
    %v7451 = vpack.c.b16 %v6919, %v6912
    %v7452 = vpack.c.b16 %v6920, %v6913
    %v7453 = vpack.c.b16 %v6921, %v6914
    %v7454 = vpack.c.b16 %v6929, %v6922
    %v7455 = vpack.c.b16 %v6930, %v6923
    %v7456 = vpack.c.b16 %v6931, %v6924
    %v7457 = vpack.c.b16 %v6932, %v6925
    %v7458 = vpack.c.b16 %v6933, %v6926
    %v7459 = vpack.c.b16 %v6934, %v6927
    %v7460 = vpack.c.b16 %v6935, %v6928
    %v7461 = vpack.c.b16 %v6943, %v6936
    %v7462 = vpack.c.b16 %v6944, %v6937
    %v7463 = vpack.c.b16 %v6945, %v6938
    %v7464 = vpack.c.b16 %v6946, %v6939
    %v7465 = vpack.c.b16 %v6947, %v6940
    %v7466 = vpack.c.b16 %v6948, %v6941
    %v7467 = vpack.c.b16 %v6949, %v6942
    %v7468 = vpack.c.b16 %v6957, %v6950
    %v7469 = vpack.c.b16 %v6958, %v6951
    %v7470 = vpack.c.b16 %v6959, %v6952
    %v7471 = vpack.c.b16 %v6960, %v6953
    %v7472 = vpack.c.b16 %v6961, %v6954
    %v7473 = vpack.c.b16 %v6962, %v6955
    %v7474 = vpack.c.b16 %v6963, %v6956
    %v7475 = vpack.c.b16 %v6971, %v6964
    %v7476 = vpack.c.b16 %v6972, %v6965
    %v7477 = vpack.c.b16 %v6973, %v6966
    %v7478 = vpack.c.b16 %v6974, %v6967
    %v7479 = vpack.c.b16 %v6975, %v6968
    %v7480 = vpack.c.b16 %v6976, %v6969
    %v7481 = vpack.c.b16 %v6977, %v6970
    %v7482 = vpack.c.b16 %v6985, %v6978
    %v7483 = vpack.c.b16 %v6986, %v6979
    %v7484 = vpack.c.b16 %v6987, %v6980
    %v7485 = vpack.c.b16 %v6988, %v6981
    %v7486 = vpack.c.b16 %v6989, %v6982
    %v7487 = vpack.c.b16 %v6990, %v6983
    %v7488 = vpack.c.b16 %v6991, %v6984
    %v7489 = vpack.c.b16 %v6999, %v6992
    %v7490 = vpack.c.b16 %v7000, %v6993
    %v7491 = vpack.c.b16 %v7001, %v6994
    %v7492 = vpack.c.b16 %v7002, %v6995
    %v7493 = vpack.c.b16 %v7003, %v6996
    %v7494 = vpack.c.b16 %v7004, %v6997
    %v7495 = vpack.c.b16 %v7005, %v6998
    %v7496 = vpack.c.b16 %v7013, %v7006
    %v7497 = vpack.c.b16 %v7014, %v7007
    %v7498 = vpack.c.b16 %v7015, %v7008
    %v7499 = vpack.c.b16 %v7016, %v7009
    %v7500 = vpack.c.b16 %v7017, %v7010
    %v7501 = vpack.c.b16 %v7018, %v7011
    %v7502 = vpack.c.b16 %v7019, %v7012
    %v7503 = vpack.c.b16 %v7027, %v7020
    %v7504 = vpack.c.b16 %v7028, %v7021
    %v7505 = vpack.c.b16 %v7029, %v7022
    %v7506 = vpack.c.b16 %v7030, %v7023
    %v7507 = vpack.c.b16 %v7031, %v7024
    %v7508 = vpack.c.b16 %v7032, %v7025
    %v7509 = vpack.c.b16 %v7033, %v7026
    %v7510 = vpack.c.b16 %v7041, %v7034
    %v7511 = vpack.c.b16 %v7042, %v7035
    %v7512 = vpack.c.b16 %v7043, %v7036
    %v7513 = vpack.c.b16 %v7044, %v7037
    %v7514 = vpack.c.b16 %v7045, %v7038
    %v7515 = vpack.c.b16 %v7046, %v7039
    %v7516 = vpack.c.b16 %v7047, %v7040
    %v7517 = vpack.c.b16 %v7055, %v7048
    %v7518 = vpack.c.b16 %v7056, %v7049
    %v7519 = vpack.c.b16 %v7057, %v7050
    %v7520 = vpack.c.b16 %v7058, %v7051
    %v7521 = vpack.c.b16 %v7059, %v7052
    %v7522 = vpack.c.b16 %v7060, %v7053
    %v7523 = vpack.c.b16 %v7061, %v7054
    %v7524 = vpack.c.b16 %v7069, %v7062
    %v7525 = vpack.c.b16 %v7070, %v7063
    %v7526 = vpack.c.b16 %v7071, %v7064
    %v7527 = vpack.c.b16 %v7072, %v7065
    %v7528 = vpack.c.b16 %v7073, %v7066
    %v7529 = vpack.c.b16 %v7074, %v7067
    %v7530 = vpack.c.b16 %v7075, %v7068
    %v7531 = vpack.c.b16 %v7083, %v7076
    %v7532 = vpack.c.b16 %v7084, %v7077
    %v7533 = vpack.c.b16 %v7085, %v7078
    %v7534 = vpack.c.b16 %v7086, %v7079
    %v7535 = vpack.c.b16 %v7087, %v7080
    %v7536 = vpack.c.b16 %v7088, %v7081
    %v7537 = vpack.c.b16 %v7089, %v7082
    %v7538 = vpack.c.b16 %v7097, %v7090
    %v7539 = vpack.c.b16 %v7098, %v7091
    %v7540 = vpack.c.b16 %v7099, %v7092
    %v7541 = vpack.c.b16 %v7100, %v7093
    %v7542 = vpack.c.b16 %v7101, %v7094
    %v7543 = vpack.c.b16 %v7102, %v7095
    %v7544 = vpack.c.b16 %v7103, %v7096
    %v7545 = vpack.c.b16 %v7111, %v7104
    %v7546 = vpack.c.b16 %v7112, %v7105
    %v7547 = vpack.c.b16 %v7113, %v7106
    %v7548 = vpack.c.b16 %v7114, %v7107
    %v7549 = vpack.c.b16 %v7115, %v7108
    %v7550 = vpack.c.b16 %v7116, %v7109
    %v7551 = vpack.c.b16 %v7117, %v7110
    %v7552 = vpack.c.b16 %v7125, %v7118
    %v7553 = vpack.c.b16 %v7126, %v7119
    %v7554 = vpack.c.b16 %v7127, %v7120
    %v7555 = vpack.c.b16 %v7128, %v7121
    %v7556 = vpack.c.b16 %v7129, %v7122
    %v7557 = vpack.c.b16 %v7130, %v7123
    %v7558 = vpack.c.b16 %v7131, %v7124
    %v7559 = vpack.c.b16 %v7139, %v7132
    %v7560 = vpack.c.b16 %v7140, %v7133
    %v7561 = vpack.c.b16 %v7141, %v7134
    %v7562 = vpack.c.b16 %v7142, %v7135
    %v7563 = vpack.c.b16 %v7143, %v7136
    %v7564 = vpack.c.b16 %v7144, %v7137
    %v7565 = vpack.c.b16 %v7145, %v7138
    %v7566 = vpack.c.b16 %v7153, %v7146
    %v7567 = vpack.c.b16 %v7154, %v7147
    %v7568 = vpack.c.b16 %v7155, %v7148
    %v7569 = vpack.c.b16 %v7156, %v7149
    %v7570 = vpack.c.b16 %v7157, %v7150
    %v7571 = vpack.c.b16 %v7158, %v7151
    %v7572 = vpack.c.b16 %v7159, %v7152
    %v7573 = vpack.c.b16 %v7167, %v7160
    %v7574 = vpack.c.b16 %v7168, %v7161
    %v7575 = vpack.c.b16 %v7169, %v7162
    %v7576 = vpack.c.b16 %v7170, %v7163
    %v7577 = vpack.c.b16 %v7171, %v7164
    %v7578 = vpack.c.b16 %v7172, %v7165
    %v7579 = vpack.c.b16 %v7173, %v7166
    %v7580 = vpack.c.b16 %v7181, %v7174
    %v7581 = vpack.c.b16 %v7182, %v7175
    %v7582 = vpack.c.b16 %v7183, %v7176
    %v7583 = vpack.c.b16 %v7184, %v7177
    %v7584 = vpack.c.b16 %v7185, %v7178
    %v7585 = vpack.c.b16 %v7186, %v7179
    %v7586 = vpack.c.b16 %v7187, %v7180
    %v7587 = vpack.c.b16 %v7195, %v7188
    %v7588 = vpack.c.b16 %v7196, %v7189
    %v7589 = vpack.c.b16 %v7197, %v7190
    %v7590 = vpack.c.b16 %v7198, %v7191
    %v7591 = vpack.c.b16 %v7199, %v7192
    %v7592 = vpack.c.b16 %v7200, %v7193
    %v7593 = vpack.c.b16 %v7201, %v7194
    %v7594 = vpack.c.b16 %v7209, %v7202
    %v7595 = vpack.c.b16 %v7210, %v7203
    %v7596 = vpack.c.b16 %v7211, %v7204
    %v7597 = vpack.c.b16 %v7212, %v7205
    %v7598 = vpack.c.b16 %v7213, %v7206
    %v7599 = vpack.c.b16 %v7214, %v7207
    %v7600 = vpack.c.b16 %v7215, %v7208
    %v7601 = vpack.c.b16 %v7223, %v7216
    %v7602 = vpack.c.b16 %v7224, %v7217
    %v7603 = vpack.c.b16 %v7225, %v7218
    %v7604 = vpack.c.b16 %v7226, %v7219
    %v7605 = vpack.c.b16 %v7227, %v7220
    %v7606 = vpack.c.b16 %v7228, %v7221
    %v7607 = vpack.c.b16 %v7229, %v7222
    %v7608 = vpack.c.b16 %v7237, %v7230
    %v7609 = vpack.c.b16 %v7238, %v7231
    %v7610 = vpack.c.b16 %v7239, %v7232
    %v7611 = vpack.c.b16 %v7240, %v7233
    %v7612 = vpack.c.b16 %v7241, %v7234
    %v7613 = vpack.c.b16 %v7242, %v7235
    %v7614 = vpack.c.b16 %v7243, %v7236
    %v7615 = vpack.c.b16 %v7251, %v7244
    %v7616 = vpack.c.b16 %v7252, %v7245
    %v7617 = vpack.c.b16 %v7253, %v7246
    %v7618 = vpack.c.b16 %v7254, %v7247
    %v7619 = vpack.c.b16 %v7255, %v7248
    %v7620 = vpack.c.b16 %v7256, %v7249
    %v7621 = vpack.c.b16 %v7257, %v7250
    %v7622 = vpack.c.b16 %v7265, %v7258
    %v7623 = vpack.c.b16 %v7266, %v7259
    %v7624 = vpack.c.b16 %v7267, %v7260
    %v7625 = vpack.c.b16 %v7268, %v7261
    %v7626 = vpack.c.b16 %v7269, %v7262
    %v7627 = vpack.c.b16 %v7270, %v7263
    %v7628 = vpack.c.b16 %v7271, %v7264
    %v7629 = vpack.c.b16 %v7279, %v7272
    %v7630 = vpack.c.b16 %v7280, %v7273
    %v7631 = vpack.c.b16 %v7281, %v7274
    %v7632 = vpack.c.b16 %v7282, %v7275
    %v7633 = vpack.c.b16 %v7283, %v7276
    %v7634 = vpack.c.b16 %v7284, %v7277
    %v7635 = vpack.c.b16 %v7285, %v7278
    %v7636 = vpack.c.b16 %v7293, %v7286
    %v7637 = vpack.c.b16 %v7294, %v7287
    %v7638 = vpack.c.b16 %v7295, %v7288
    %v7639 = vpack.c.b16 %v7296, %v7289
    %v7640 = vpack.c.b16 %v7297, %v7290
    %v7641 = vpack.c.b16 %v7298, %v7291
    %v7642 = vpack.c.b16 %v7299, %v7292
    %v7986 = vsel %vm2358, %v6215, 0
    %7988 = vmatpush.bf16.msra.mxu0 %v7349
    %7989 = vmatpush.bf16.msra.mxu0 %v7342
    %7990 = vmatpush.bf16.msra.mxu0 %v7335
    %7991 = vmatpush.bf16.msra.mxu0 %v7328
    %7992 = vmatpush.bf16.msra.mxu0 %v7321
    %7993 = vmatpush.bf16.msra.mxu0 %v7314
    %7994 = vmatpush.bf16.msra.mxu0 %v7307
    %7995 = vmatpush.bf16.msra.mxu0 %v7300
    %7996 = vmatmul.bf16.gmra.mxu0 %v6209
    %v7997 = vpop.f32.mrf.mxu0
    %v7998 = vadd.f32 0.0, %v7997
    %v7999 = vpop.f32.mrf.mxu0
    %8000 = vdwg.mxu0
    %8001 = vmatpush.bf16.msra.mxu0 %v7405
    %8002 = vmatpush.bf16.msra.mxu0 %v7398
    %8003 = vmatpush.bf16.msra.mxu0 %v7391
    %8004 = vmatpush.bf16.msra.mxu0 %v7384
    %8005 = vmatpush.bf16.msra.mxu0 %v7377
    %8006 = vmatpush.bf16.msra.mxu0 %v7370
    %8007 = vmatpush.bf16.msra.mxu0 %v7363
    %8008 = vmatpush.bf16.msra.mxu0 %v7356
    %8009 = vmatmul.bf16.gmra.mxu0 %v6210
    %v8010 = vpop.f32.mrf.mxu0
    %v8011 = vadd.f32 %v7998, %v8010
    %v8012 = vpop.f32.mrf.mxu0
    %8013 = vdwg.mxu0
    %8014 = vmatpush.bf16.msra.mxu0 %v7461
    %8015 = vmatpush.bf16.msra.mxu0 %v7454
    %8016 = vmatpush.bf16.msra.mxu0 %v7447
    %8017 = vmatpush.bf16.msra.mxu0 %v7440
    %8018 = vmatpush.bf16.msra.mxu0 %v7433
    %8019 = vmatpush.bf16.msra.mxu0 %v7426
    %8020 = vmatpush.bf16.msra.mxu0 %v7419
    %8021 = vmatpush.bf16.msra.mxu0 %v7412
    %8022 = vmatmul.bf16.gmra.mxu0 %v6211
    %v8023 = vpop.f32.mrf.mxu0
    %v8024 = vadd.f32 %v8011, %v8023
    %v8025 = vpop.f32.mrf.mxu0
    %8026 = vdwg.mxu0
    %8027 = vmatpush.bf16.msra.mxu0 %v7517
    %8028 = vmatpush.bf16.msra.mxu0 %v7510
    %8029 = vmatpush.bf16.msra.mxu0 %v7503
    %8030 = vmatpush.bf16.msra.mxu0 %v7496
    %8031 = vmatpush.bf16.msra.mxu0 %v7489
    %8032 = vmatpush.bf16.msra.mxu0 %v7482
    %8033 = vmatpush.bf16.msra.mxu0 %v7475
    %8034 = vmatpush.bf16.msra.mxu0 %v7468
    %8035 = vmatmul.bf16.gmra.mxu0 %v6212
    %v8036 = vpop.f32.mrf.mxu0
    %v8037 = vadd.f32 %v8024, %v8036
    %v8038 = vpop.f32.mrf.mxu0
    %8039 = vdwg.mxu0
    %8040 = vmatpush.bf16.msra.mxu0 %v7573
    %8041 = vmatpush.bf16.msra.mxu0 %v7566
    %8042 = vmatpush.bf16.msra.mxu0 %v7559
    %8043 = vmatpush.bf16.msra.mxu0 %v7552
    %8044 = vmatpush.bf16.msra.mxu0 %v7545
    %8045 = vmatpush.bf16.msra.mxu0 %v7538
    %8046 = vmatpush.bf16.msra.mxu0 %v7531
    %8047 = vmatpush.bf16.msra.mxu0 %v7524
    %8048 = vmatmul.bf16.gmra.mxu0 %v6213
    %v8049 = vpop.f32.mrf.mxu0
    %v8050 = vadd.f32 %v8037, %v8049
    %v8051 = vpop.f32.mrf.mxu0
    %8052 = vdwg.mxu0
    %8053 = vmatpush.bf16.msra.mxu0 %v7629
    %8054 = vmatpush.bf16.msra.mxu0 %v7622
    %8055 = vmatpush.bf16.msra.mxu0 %v7615
    %8056 = vmatpush.bf16.msra.mxu0 %v7608
    %8057 = vmatpush.bf16.msra.mxu0 %v7601
    %8058 = vmatpush.bf16.msra.mxu0 %v7594
    %8059 = vmatpush.bf16.msra.mxu0 %v7587
    %8060 = vmatpush.bf16.msra.mxu0 %v7580
    %8061 = vmatmul.bf16.gmra.mxu0 %v6214
    %v8062 = vpop.f32.mrf.mxu0
    %v8063 = vadd.f32 %v8050, %v8062
    %v8064 = vpop.f32.mrf.mxu0
    %8065 = vdwg.mxu0
    %8066 = vmatpush.bf16.msra.mxu0 0
    %8067 = vmatpush.bf16.msra.mxu0 0
    %8068 = vmatpush.bf16.msra.mxu0 0
    %8069 = vmatpush.bf16.msra.mxu0 0
    %8070 = vmatpush.bf16.msra.mxu0 0
    %8071 = vmatpush.bf16.msra.mxu0 0
    %8072 = vmatpush.bf16.msra.mxu0 0
    %8073 = vmatpush.bf16.msra.mxu0 %v7636
    %8074 = vmatmul.bf16.gmra.mxu0 %v7986
    %v8075 = vpop.f32.mrf.mxu0
    %v8076 = vadd.f32 %v8063, %v8075
    %v8077 = vpop.f32.mrf.mxu0
    %8078 = vdwg.mxu0
    %8079 = vmatpush.bf16.msra.mxu0 %v7350
    %8080 = vmatpush.bf16.msra.mxu0 %v7343
    %8081 = vmatpush.bf16.msra.mxu0 %v7336
    %8082 = vmatpush.bf16.msra.mxu0 %v7329
    %8083 = vmatpush.bf16.msra.mxu0 %v7322
    %8084 = vmatpush.bf16.msra.mxu0 %v7315
    %8085 = vmatpush.bf16.msra.mxu0 %v7308
    %8086 = vmatpush.bf16.msra.mxu0 %v7301
    %8087 = vmatmul.bf16.gmra.mxu0 %v6209
    %v8088 = vpop.f32.mrf.mxu0
    %v8089 = vadd.f32 0.0, %v8088
    %v8090 = vpop.f32.mrf.mxu0
    %8091 = vdwg.mxu0
    %8092 = vmatpush.bf16.msra.mxu0 %v7406
    %8093 = vmatpush.bf16.msra.mxu0 %v7399
    %8094 = vmatpush.bf16.msra.mxu0 %v7392
    %8095 = vmatpush.bf16.msra.mxu0 %v7385
    %8096 = vmatpush.bf16.msra.mxu0 %v7378
    %8097 = vmatpush.bf16.msra.mxu0 %v7371
    %8098 = vmatpush.bf16.msra.mxu0 %v7364
    %8099 = vmatpush.bf16.msra.mxu0 %v7357
    %8100 = vmatmul.bf16.gmra.mxu0 %v6210
    %v8101 = vpop.f32.mrf.mxu0
    %v8102 = vadd.f32 %v8089, %v8101
    %v8103 = vpop.f32.mrf.mxu0
    %8104 = vdwg.mxu0
    %8105 = vmatpush.bf16.msra.mxu0 %v7462
    %8106 = vmatpush.bf16.msra.mxu0 %v7455
    %8107 = vmatpush.bf16.msra.mxu0 %v7448
    %8108 = vmatpush.bf16.msra.mxu0 %v7441
    %8109 = vmatpush.bf16.msra.mxu0 %v7434
    %8110 = vmatpush.bf16.msra.mxu0 %v7427
    %8111 = vmatpush.bf16.msra.mxu0 %v7420
    %8112 = vmatpush.bf16.msra.mxu0 %v7413
    %8113 = vmatmul.bf16.gmra.mxu0 %v6211
    %v8114 = vpop.f32.mrf.mxu0
    %v8115 = vadd.f32 %v8102, %v8114
    %v8116 = vpop.f32.mrf.mxu0
    %8117 = vdwg.mxu0
    %8118 = vmatpush.bf16.msra.mxu0 %v7518
    %8119 = vmatpush.bf16.msra.mxu0 %v7511
    %8120 = vmatpush.bf16.msra.mxu0 %v7504
    %8121 = vmatpush.bf16.msra.mxu0 %v7497
    %8122 = vmatpush.bf16.msra.mxu0 %v7490
    %8123 = vmatpush.bf16.msra.mxu0 %v7483
    %8124 = vmatpush.bf16.msra.mxu0 %v7476
    %8125 = vmatpush.bf16.msra.mxu0 %v7469
    %8126 = vmatmul.bf16.gmra.mxu0 %v6212
    %v8127 = vpop.f32.mrf.mxu0
    %v8128 = vadd.f32 %v8115, %v8127
    %v8129 = vpop.f32.mrf.mxu0
    %8130 = vdwg.mxu0
    %8131 = vmatpush.bf16.msra.mxu0 %v7574
    %8132 = vmatpush.bf16.msra.mxu0 %v7567
    %8133 = vmatpush.bf16.msra.mxu0 %v7560
    %8134 = vmatpush.bf16.msra.mxu0 %v7553
    %8135 = vmatpush.bf16.msra.mxu0 %v7546
    %8136 = vmatpush.bf16.msra.mxu0 %v7539
    %8137 = vmatpush.bf16.msra.mxu0 %v7532
    %8138 = vmatpush.bf16.msra.mxu0 %v7525
    %8139 = vmatmul.bf16.gmra.mxu0 %v6213
    %v8140 = vpop.f32.mrf.mxu0
    %v8141 = vadd.f32 %v8128, %v8140
    %v8142 = vpop.f32.mrf.mxu0
    %8143 = vdwg.mxu0
    %8144 = vmatpush.bf16.msra.mxu0 %v7630
    %8145 = vmatpush.bf16.msra.mxu0 %v7623
    %8146 = vmatpush.bf16.msra.mxu0 %v7616
    %8147 = vmatpush.bf16.msra.mxu0 %v7609
    %8148 = vmatpush.bf16.msra.mxu0 %v7602
    %8149 = vmatpush.bf16.msra.mxu0 %v7595
    %8150 = vmatpush.bf16.msra.mxu0 %v7588
    %8151 = vmatpush.bf16.msra.mxu0 %v7581
    %8152 = vmatmul.bf16.gmra.mxu0 %v6214
    %v8153 = vpop.f32.mrf.mxu0
    %v8154 = vadd.f32 %v8141, %v8153
    %v8155 = vpop.f32.mrf.mxu0
    %8156 = vdwg.mxu0
    %8157 = vmatpush.bf16.msra.mxu0 0
    %8158 = vmatpush.bf16.msra.mxu0 0
    %8159 = vmatpush.bf16.msra.mxu0 0
    %8160 = vmatpush.bf16.msra.mxu0 0
    %8161 = vmatpush.bf16.msra.mxu0 0
    %8162 = vmatpush.bf16.msra.mxu0 0
    %8163 = vmatpush.bf16.msra.mxu0 0
    %8164 = vmatpush.bf16.msra.mxu0 %v7637
    %8165 = vmatmul.bf16.gmra.mxu0 %v7986
    %v8166 = vpop.f32.mrf.mxu0
    %v8167 = vadd.f32 %v8154, %v8166
    %v8168 = vpop.f32.mrf.mxu0
    %8169 = vdwg.mxu0
    %8170 = vmatpush.bf16.msra.mxu0 %v7351
    %8171 = vmatpush.bf16.msra.mxu0 %v7344
    %8172 = vmatpush.bf16.msra.mxu0 %v7337
    %8173 = vmatpush.bf16.msra.mxu0 %v7330
    %8174 = vmatpush.bf16.msra.mxu0 %v7323
    %8175 = vmatpush.bf16.msra.mxu0 %v7316
    %8176 = vmatpush.bf16.msra.mxu0 %v7309
    %8177 = vmatpush.bf16.msra.mxu0 %v7302
    %8178 = vmatmul.bf16.gmra.mxu0 %v6209
    %v8179 = vpop.f32.mrf.mxu0
    %v8180 = vadd.f32 0.0, %v8179
    %v8181 = vpop.f32.mrf.mxu0
    %8182 = vdwg.mxu0
    %8183 = vmatpush.bf16.msra.mxu0 %v7407
    %8184 = vmatpush.bf16.msra.mxu0 %v7400
    %8185 = vmatpush.bf16.msra.mxu0 %v7393
    %8186 = vmatpush.bf16.msra.mxu0 %v7386
    %8187 = vmatpush.bf16.msra.mxu0 %v7379
    %8188 = vmatpush.bf16.msra.mxu0 %v7372
    %8189 = vmatpush.bf16.msra.mxu0 %v7365
    %8190 = vmatpush.bf16.msra.mxu0 %v7358
    %8191 = vmatmul.bf16.gmra.mxu0 %v6210
    %v8192 = vpop.f32.mrf.mxu0
    %v8193 = vadd.f32 %v8180, %v8192
    %v8194 = vpop.f32.mrf.mxu0
    %8195 = vdwg.mxu0
    %8196 = vmatpush.bf16.msra.mxu0 %v7463
    %8197 = vmatpush.bf16.msra.mxu0 %v7456
    %8198 = vmatpush.bf16.msra.mxu0 %v7449
    %8199 = vmatpush.bf16.msra.mxu0 %v7442
    %8200 = vmatpush.bf16.msra.mxu0 %v7435
    %8201 = vmatpush.bf16.msra.mxu0 %v7428
    %8202 = vmatpush.bf16.msra.mxu0 %v7421
    %8203 = vmatpush.bf16.msra.mxu0 %v7414
    %8204 = vmatmul.bf16.gmra.mxu0 %v6211
    %v8205 = vpop.f32.mrf.mxu0
    %v8206 = vadd.f32 %v8193, %v8205
    %v8207 = vpop.f32.mrf.mxu0
    %8208 = vdwg.mxu0
    %8209 = vmatpush.bf16.msra.mxu0 %v7519
    %8210 = vmatpush.bf16.msra.mxu0 %v7512
    %8211 = vmatpush.bf16.msra.mxu0 %v7505
    %8212 = vmatpush.bf16.msra.mxu0 %v7498
    %8213 = vmatpush.bf16.msra.mxu0 %v7491
    %8214 = vmatpush.bf16.msra.mxu0 %v7484
    %8215 = vmatpush.bf16.msra.mxu0 %v7477
    %8216 = vmatpush.bf16.msra.mxu0 %v7470
    %8217 = vmatmul.bf16.gmra.mxu0 %v6212
    %v8218 = vpop.f32.mrf.mxu0
    %v8219 = vadd.f32 %v8206, %v8218
    %v8220 = vpop.f32.mrf.mxu0
    %8221 = vdwg.mxu0
    %8222 = vmatpush.bf16.msra.mxu0 %v7575
    %8223 = vmatpush.bf16.msra.mxu0 %v7568
    %8224 = vmatpush.bf16.msra.mxu0 %v7561
    %8225 = vmatpush.bf16.msra.mxu0 %v7554
    %8226 = vmatpush.bf16.msra.mxu0 %v7547
    %8227 = vmatpush.bf16.msra.mxu0 %v7540
    %8228 = vmatpush.bf16.msra.mxu0 %v7533
    %8229 = vmatpush.bf16.msra.mxu0 %v7526
    %8230 = vmatmul.bf16.gmra.mxu0 %v6213
    %v8231 = vpop.f32.mrf.mxu0
    %v8232 = vadd.f32 %v8219, %v8231
    %v8233 = vpop.f32.mrf.mxu0
    %8234 = vdwg.mxu0
    %8235 = vmatpush.bf16.msra.mxu0 %v7631
    %8236 = vmatpush.bf16.msra.mxu0 %v7624
    %8237 = vmatpush.bf16.msra.mxu0 %v7617
    %8238 = vmatpush.bf16.msra.mxu0 %v7610
    %8239 = vmatpush.bf16.msra.mxu0 %v7603
    %8240 = vmatpush.bf16.msra.mxu0 %v7596
    %8241 = vmatpush.bf16.msra.mxu0 %v7589
    %8242 = vmatpush.bf16.msra.mxu0 %v7582
    %8243 = vmatmul.bf16.gmra.mxu0 %v6214
    %v8244 = vpop.f32.mrf.mxu0
    %v8245 = vadd.f32 %v8232, %v8244
    %v8246 = vpop.f32.mrf.mxu0
    %8247 = vdwg.mxu0
    %8248 = vmatpush.bf16.msra.mxu0 0
    %8249 = vmatpush.bf16.msra.mxu0 0
    %8250 = vmatpush.bf16.msra.mxu0 0
    %8251 = vmatpush.bf16.msra.mxu0 0
    %8252 = vmatpush.bf16.msra.mxu0 0
    %8253 = vmatpush.bf16.msra.mxu0 0
    %8254 = vmatpush.bf16.msra.mxu0 0
    %8255 = vmatpush.bf16.msra.mxu0 %v7638
    %8256 = vmatmul.bf16.gmra.mxu0 %v7986
    %v8257 = vpop.f32.mrf.mxu0
    %v8258 = vadd.f32 %v8245, %v8257
    %v8259 = vpop.f32.mrf.mxu0
    %8260 = vdwg.mxu0
    %8261 = vmatpush.bf16.msra.mxu0 %v7352
    %8262 = vmatpush.bf16.msra.mxu0 %v7345
    %8263 = vmatpush.bf16.msra.mxu0 %v7338
    %8264 = vmatpush.bf16.msra.mxu0 %v7331
    %8265 = vmatpush.bf16.msra.mxu0 %v7324
    %8266 = vmatpush.bf16.msra.mxu0 %v7317
    %8267 = vmatpush.bf16.msra.mxu0 %v7310
    %8268 = vmatpush.bf16.msra.mxu0 %v7303
    %8269 = vmatmul.bf16.gmra.mxu0 %v6209
    %v8270 = vpop.f32.mrf.mxu0
    %v8271 = vadd.f32 0.0, %v8270
    %v8272 = vpop.f32.mrf.mxu0
    %8273 = vdwg.mxu0
    %8274 = vmatpush.bf16.msra.mxu0 %v7408
    %8275 = vmatpush.bf16.msra.mxu0 %v7401
    %8276 = vmatpush.bf16.msra.mxu0 %v7394
    %8277 = vmatpush.bf16.msra.mxu0 %v7387
    %8278 = vmatpush.bf16.msra.mxu0 %v7380
    %8279 = vmatpush.bf16.msra.mxu0 %v7373
    %8280 = vmatpush.bf16.msra.mxu0 %v7366
    %8281 = vmatpush.bf16.msra.mxu0 %v7359
    %8282 = vmatmul.bf16.gmra.mxu0 %v6210
    %v8283 = vpop.f32.mrf.mxu0
    %v8284 = vadd.f32 %v8271, %v8283
    %v8285 = vpop.f32.mrf.mxu0
    %8286 = vdwg.mxu0
    %8287 = vmatpush.bf16.msra.mxu0 %v7464
    %8288 = vmatpush.bf16.msra.mxu0 %v7457
    %8289 = vmatpush.bf16.msra.mxu0 %v7450
    %8290 = vmatpush.bf16.msra.mxu0 %v7443
    %8291 = vmatpush.bf16.msra.mxu0 %v7436
    %8292 = vmatpush.bf16.msra.mxu0 %v7429
    %8293 = vmatpush.bf16.msra.mxu0 %v7422
    %8294 = vmatpush.bf16.msra.mxu0 %v7415
    %8295 = vmatmul.bf16.gmra.mxu0 %v6211
    %v8296 = vpop.f32.mrf.mxu0
    %v8297 = vadd.f32 %v8284, %v8296
    %v8298 = vpop.f32.mrf.mxu0
    %8299 = vdwg.mxu0
    %8300 = vmatpush.bf16.msra.mxu0 %v7520
    %8301 = vmatpush.bf16.msra.mxu0 %v7513
    %8302 = vmatpush.bf16.msra.mxu0 %v7506
    %8303 = vmatpush.bf16.msra.mxu0 %v7499
    %8304 = vmatpush.bf16.msra.mxu0 %v7492
    %8305 = vmatpush.bf16.msra.mxu0 %v7485
    %8306 = vmatpush.bf16.msra.mxu0 %v7478
    %8307 = vmatpush.bf16.msra.mxu0 %v7471
    %8308 = vmatmul.bf16.gmra.mxu0 %v6212
    %v8309 = vpop.f32.mrf.mxu0
    %v8310 = vadd.f32 %v8297, %v8309
    %v8311 = vpop.f32.mrf.mxu0
    %8312 = vdwg.mxu0
    %8313 = vmatpush.bf16.msra.mxu0 %v7576
    %8314 = vmatpush.bf16.msra.mxu0 %v7569
    %8315 = vmatpush.bf16.msra.mxu0 %v7562
    %8316 = vmatpush.bf16.msra.mxu0 %v7555
    %8317 = vmatpush.bf16.msra.mxu0 %v7548
    %8318 = vmatpush.bf16.msra.mxu0 %v7541
    %8319 = vmatpush.bf16.msra.mxu0 %v7534
    %8320 = vmatpush.bf16.msra.mxu0 %v7527
    %8321 = vmatmul.bf16.gmra.mxu0 %v6213
    %v8322 = vpop.f32.mrf.mxu0
    %v8323 = vadd.f32 %v8310, %v8322
    %v8324 = vpop.f32.mrf.mxu0
    %8325 = vdwg.mxu0
    %8326 = vmatpush.bf16.msra.mxu0 %v7632
    %8327 = vmatpush.bf16.msra.mxu0 %v7625
    %8328 = vmatpush.bf16.msra.mxu0 %v7618
    %8329 = vmatpush.bf16.msra.mxu0 %v7611
    %8330 = vmatpush.bf16.msra.mxu0 %v7604
    %8331 = vmatpush.bf16.msra.mxu0 %v7597
    %8332 = vmatpush.bf16.msra.mxu0 %v7590
    %8333 = vmatpush.bf16.msra.mxu0 %v7583
    %8334 = vmatmul.bf16.gmra.mxu0 %v6214
    %v8335 = vpop.f32.mrf.mxu0
    %v8336 = vadd.f32 %v8323, %v8335
    %v8337 = vpop.f32.mrf.mxu0
    %8338 = vdwg.mxu0
    %8339 = vmatpush.bf16.msra.mxu0 0
    %8340 = vmatpush.bf16.msra.mxu0 0
    %8341 = vmatpush.bf16.msra.mxu0 0
    %8342 = vmatpush.bf16.msra.mxu0 0
    %8343 = vmatpush.bf16.msra.mxu0 0
    %8344 = vmatpush.bf16.msra.mxu0 0
    %8345 = vmatpush.bf16.msra.mxu0 0
    %8346 = vmatpush.bf16.msra.mxu0 %v7639
    %8347 = vmatmul.bf16.gmra.mxu0 %v7986
    %v8348 = vpop.f32.mrf.mxu0
    %v8349 = vadd.f32 %v8336, %v8348
    %v8350 = vpop.f32.mrf.mxu0
    %8351 = vdwg.mxu0
    %8352 = vmatpush.bf16.msra.mxu0 %v7353
    %8353 = vmatpush.bf16.msra.mxu0 %v7346
    %8354 = vmatpush.bf16.msra.mxu0 %v7339
    %8355 = vmatpush.bf16.msra.mxu0 %v7332
    %8356 = vmatpush.bf16.msra.mxu0 %v7325
    %8357 = vmatpush.bf16.msra.mxu0 %v7318
    %8358 = vmatpush.bf16.msra.mxu0 %v7311
    %8359 = vmatpush.bf16.msra.mxu0 %v7304
    %8360 = vmatmul.bf16.gmra.mxu0 %v6209
    %v8361 = vpop.f32.mrf.mxu0
    %v8362 = vadd.f32 0.0, %v8361
    %v8363 = vpop.f32.mrf.mxu0
    %8364 = vdwg.mxu0
    %8365 = vmatpush.bf16.msra.mxu0 %v7409
    %8366 = vmatpush.bf16.msra.mxu0 %v7402
    %8367 = vmatpush.bf16.msra.mxu0 %v7395
    %8368 = vmatpush.bf16.msra.mxu0 %v7388
    %8369 = vmatpush.bf16.msra.mxu0 %v7381
    %8370 = vmatpush.bf16.msra.mxu0 %v7374
    %8371 = vmatpush.bf16.msra.mxu0 %v7367
    %8372 = vmatpush.bf16.msra.mxu0 %v7360
    %8373 = vmatmul.bf16.gmra.mxu0 %v6210
    %v8374 = vpop.f32.mrf.mxu0
    %v8375 = vadd.f32 %v8362, %v8374
    %v8376 = vpop.f32.mrf.mxu0
    %8377 = vdwg.mxu0
    %8378 = vmatpush.bf16.msra.mxu0 %v7465
    %8379 = vmatpush.bf16.msra.mxu0 %v7458
    %8380 = vmatpush.bf16.msra.mxu0 %v7451
    %8381 = vmatpush.bf16.msra.mxu0 %v7444
    %8382 = vmatpush.bf16.msra.mxu0 %v7437
    %8383 = vmatpush.bf16.msra.mxu0 %v7430
    %8384 = vmatpush.bf16.msra.mxu0 %v7423
    %8385 = vmatpush.bf16.msra.mxu0 %v7416
    %8386 = vmatmul.bf16.gmra.mxu0 %v6211
    %v8387 = vpop.f32.mrf.mxu0
    %v8388 = vadd.f32 %v8375, %v8387
    %v8389 = vpop.f32.mrf.mxu0
    %8390 = vdwg.mxu0
    %8391 = vmatpush.bf16.msra.mxu0 %v7521
    %8392 = vmatpush.bf16.msra.mxu0 %v7514
    %8393 = vmatpush.bf16.msra.mxu0 %v7507
    %8394 = vmatpush.bf16.msra.mxu0 %v7500
    %8395 = vmatpush.bf16.msra.mxu0 %v7493
    %8396 = vmatpush.bf16.msra.mxu0 %v7486
    %8397 = vmatpush.bf16.msra.mxu0 %v7479
    %8398 = vmatpush.bf16.msra.mxu0 %v7472
    %8399 = vmatmul.bf16.gmra.mxu0 %v6212
    %v8400 = vpop.f32.mrf.mxu0
    %v8401 = vadd.f32 %v8388, %v8400
    %v8402 = vpop.f32.mrf.mxu0
    %8403 = vdwg.mxu0
    %8404 = vmatpush.bf16.msra.mxu0 %v7577
    %8405 = vmatpush.bf16.msra.mxu0 %v7570
    %8406 = vmatpush.bf16.msra.mxu0 %v7563
    %8407 = vmatpush.bf16.msra.mxu0 %v7556
    %8408 = vmatpush.bf16.msra.mxu0 %v7549
    %8409 = vmatpush.bf16.msra.mxu0 %v7542
    %8410 = vmatpush.bf16.msra.mxu0 %v7535
    %8411 = vmatpush.bf16.msra.mxu0 %v7528
    %8412 = vmatmul.bf16.gmra.mxu0 %v6213
    %v8413 = vpop.f32.mrf.mxu0
    %v8414 = vadd.f32 %v8401, %v8413
    %v8415 = vpop.f32.mrf.mxu0
    %8416 = vdwg.mxu0
    %8417 = vmatpush.bf16.msra.mxu0 %v7633
    %8418 = vmatpush.bf16.msra.mxu0 %v7626
    %8419 = vmatpush.bf16.msra.mxu0 %v7619
    %8420 = vmatpush.bf16.msra.mxu0 %v7612
    %8421 = vmatpush.bf16.msra.mxu0 %v7605
    %8422 = vmatpush.bf16.msra.mxu0 %v7598
    %8423 = vmatpush.bf16.msra.mxu0 %v7591
    %8424 = vmatpush.bf16.msra.mxu0 %v7584
    %8425 = vmatmul.bf16.gmra.mxu0 %v6214
    %v8426 = vpop.f32.mrf.mxu0
    %v8427 = vadd.f32 %v8414, %v8426
    %v8428 = vpop.f32.mrf.mxu0
    %8429 = vdwg.mxu0
    %8430 = vmatpush.bf16.msra.mxu0 0
    %8431 = vmatpush.bf16.msra.mxu0 0
    %8432 = vmatpush.bf16.msra.mxu0 0
    %8433 = vmatpush.bf16.msra.mxu0 0
    %8434 = vmatpush.bf16.msra.mxu0 0
    %8435 = vmatpush.bf16.msra.mxu0 0
    %8436 = vmatpush.bf16.msra.mxu0 0
    %8437 = vmatpush.bf16.msra.mxu0 %v7640
    %8438 = vmatmul.bf16.gmra.mxu0 %v7986
    %v8439 = vpop.f32.mrf.mxu0
    %v8440 = vadd.f32 %v8427, %v8439
    %v8441 = vpop.f32.mrf.mxu0
    %8442 = vdwg.mxu0
    %8443 = vmatpush.bf16.msra.mxu0 %v7354
    %8444 = vmatpush.bf16.msra.mxu0 %v7347
    %8445 = vmatpush.bf16.msra.mxu0 %v7340
    %8446 = vmatpush.bf16.msra.mxu0 %v7333
    %8447 = vmatpush.bf16.msra.mxu0 %v7326
    %8448 = vmatpush.bf16.msra.mxu0 %v7319
    %8449 = vmatpush.bf16.msra.mxu0 %v7312
    %8450 = vmatpush.bf16.msra.mxu0 %v7305
    %8451 = vmatmul.bf16.gmra.mxu0 %v6209
    %v8452 = vpop.f32.mrf.mxu0
    %v8453 = vadd.f32 0.0, %v8452
    %v8454 = vpop.f32.mrf.mxu0
    %8455 = vdwg.mxu0
    %8456 = vmatpush.bf16.msra.mxu0 %v7410
    %8457 = vmatpush.bf16.msra.mxu0 %v7403
    %8458 = vmatpush.bf16.msra.mxu0 %v7396
    %8459 = vmatpush.bf16.msra.mxu0 %v7389
    %8460 = vmatpush.bf16.msra.mxu0 %v7382
    %8461 = vmatpush.bf16.msra.mxu0 %v7375
    %8462 = vmatpush.bf16.msra.mxu0 %v7368
    %8463 = vmatpush.bf16.msra.mxu0 %v7361
    %8464 = vmatmul.bf16.gmra.mxu0 %v6210
    %v8465 = vpop.f32.mrf.mxu0
    %v8466 = vadd.f32 %v8453, %v8465
    %v8467 = vpop.f32.mrf.mxu0
    %8468 = vdwg.mxu0
    %8469 = vmatpush.bf16.msra.mxu0 %v7466
    %8470 = vmatpush.bf16.msra.mxu0 %v7459
    %8471 = vmatpush.bf16.msra.mxu0 %v7452
    %8472 = vmatpush.bf16.msra.mxu0 %v7445
    %8473 = vmatpush.bf16.msra.mxu0 %v7438
    %8474 = vmatpush.bf16.msra.mxu0 %v7431
    %8475 = vmatpush.bf16.msra.mxu0 %v7424
    %8476 = vmatpush.bf16.msra.mxu0 %v7417
    %8477 = vmatmul.bf16.gmra.mxu0 %v6211
    %v8478 = vpop.f32.mrf.mxu0
    %v8479 = vadd.f32 %v8466, %v8478
    %v8480 = vpop.f32.mrf.mxu0
    %8481 = vdwg.mxu0
    %8482 = vmatpush.bf16.msra.mxu0 %v7522
    %8483 = vmatpush.bf16.msra.mxu0 %v7515
    %8484 = vmatpush.bf16.msra.mxu0 %v7508
    %8485 = vmatpush.bf16.msra.mxu0 %v7501
    %8486 = vmatpush.bf16.msra.mxu0 %v7494
    %8487 = vmatpush.bf16.msra.mxu0 %v7487
    %8488 = vmatpush.bf16.msra.mxu0 %v7480
    %8489 = vmatpush.bf16.msra.mxu0 %v7473
    %8490 = vmatmul.bf16.gmra.mxu0 %v6212
    %v8491 = vpop.f32.mrf.mxu0
    %v8492 = vadd.f32 %v8479, %v8491
    %v8493 = vpop.f32.mrf.mxu0
    %8494 = vdwg.mxu0
    %8495 = vmatpush.bf16.msra.mxu0 %v7578
    %8496 = vmatpush.bf16.msra.mxu0 %v7571
    %8497 = vmatpush.bf16.msra.mxu0 %v7564
    %8498 = vmatpush.bf16.msra.mxu0 %v7557
    %8499 = vmatpush.bf16.msra.mxu0 %v7550
    %8500 = vmatpush.bf16.msra.mxu0 %v7543
    %8501 = vmatpush.bf16.msra.mxu0 %v7536
    %8502 = vmatpush.bf16.msra.mxu0 %v7529
    %8503 = vmatmul.bf16.gmra.mxu0 %v6213
    %v8504 = vpop.f32.mrf.mxu0
    %v8505 = vadd.f32 %v8492, %v8504
    %v8506 = vpop.f32.mrf.mxu0
    %8507 = vdwg.mxu0
    %8508 = vmatpush.bf16.msra.mxu0 %v7634
    %8509 = vmatpush.bf16.msra.mxu0 %v7627
    %8510 = vmatpush.bf16.msra.mxu0 %v7620
    %8511 = vmatpush.bf16.msra.mxu0 %v7613
    %8512 = vmatpush.bf16.msra.mxu0 %v7606
    %8513 = vmatpush.bf16.msra.mxu0 %v7599
    %8514 = vmatpush.bf16.msra.mxu0 %v7592
    %8515 = vmatpush.bf16.msra.mxu0 %v7585
    %8516 = vmatmul.bf16.gmra.mxu0 %v6214
    %v8517 = vpop.f32.mrf.mxu0
    %v8518 = vadd.f32 %v8505, %v8517
    %v8519 = vpop.f32.mrf.mxu0
    %8520 = vdwg.mxu0
    %8521 = vmatpush.bf16.msra.mxu0 0
    %8522 = vmatpush.bf16.msra.mxu0 0
    %8523 = vmatpush.bf16.msra.mxu0 0
    %8524 = vmatpush.bf16.msra.mxu0 0
    %8525 = vmatpush.bf16.msra.mxu0 0
    %8526 = vmatpush.bf16.msra.mxu0 0
    %8527 = vmatpush.bf16.msra.mxu0 0
    %8528 = vmatpush.bf16.msra.mxu0 %v7641
    %8529 = vmatmul.bf16.gmra.mxu0 %v7986
    %v8530 = vpop.f32.mrf.mxu0
    %v8531 = vadd.f32 %v8518, %v8530
    %v8532 = vpop.f32.mrf.mxu0
    %8533 = vdwg.mxu0
    %8534 = vmatpush.bf16.msra.mxu0 %v7355
    %8535 = vmatpush.bf16.msra.mxu0 %v7348
    %8536 = vmatpush.bf16.msra.mxu0 %v7341
    %8537 = vmatpush.bf16.msra.mxu0 %v7334
    %8538 = vmatpush.bf16.msra.mxu0 %v7327
    %8539 = vmatpush.bf16.msra.mxu0 %v7320
    %8540 = vmatpush.bf16.msra.mxu0 %v7313
    %8541 = vmatpush.bf16.msra.mxu0 %v7306
    %8542 = vmatmul.bf16.gmra.mxu0 %v6209
    %v8543 = vpop.f32.mrf.mxu0
    %v8544 = vadd.f32 0.0, %v8543
    %v8545 = vpop.f32.mrf.mxu0
    %8546 = vdwg.mxu0
    %8547 = vmatpush.bf16.msra.mxu0 %v7411
    %8548 = vmatpush.bf16.msra.mxu0 %v7404
    %8549 = vmatpush.bf16.msra.mxu0 %v7397
    %8550 = vmatpush.bf16.msra.mxu0 %v7390
    %8551 = vmatpush.bf16.msra.mxu0 %v7383
    %8552 = vmatpush.bf16.msra.mxu0 %v7376
    %8553 = vmatpush.bf16.msra.mxu0 %v7369
    %8554 = vmatpush.bf16.msra.mxu0 %v7362
    %8555 = vmatmul.bf16.gmra.mxu0 %v6210
    %v8556 = vpop.f32.mrf.mxu0
    %v8557 = vadd.f32 %v8544, %v8556
    %v8558 = vpop.f32.mrf.mxu0
    %8559 = vdwg.mxu0
    %8560 = vmatpush.bf16.msra.mxu0 %v7467
    %8561 = vmatpush.bf16.msra.mxu0 %v7460
    %8562 = vmatpush.bf16.msra.mxu0 %v7453
    %8563 = vmatpush.bf16.msra.mxu0 %v7446
    %8564 = vmatpush.bf16.msra.mxu0 %v7439
    %8565 = vmatpush.bf16.msra.mxu0 %v7432
    %8566 = vmatpush.bf16.msra.mxu0 %v7425
    %8567 = vmatpush.bf16.msra.mxu0 %v7418
    %8568 = vmatmul.bf16.gmra.mxu0 %v6211
    %v8569 = vpop.f32.mrf.mxu0
    %v8570 = vadd.f32 %v8557, %v8569
    %v8571 = vpop.f32.mrf.mxu0
    %8572 = vdwg.mxu0
    %8573 = vmatpush.bf16.msra.mxu0 %v7523
    %8574 = vmatpush.bf16.msra.mxu0 %v7516
    %8575 = vmatpush.bf16.msra.mxu0 %v7509
    %8576 = vmatpush.bf16.msra.mxu0 %v7502
    %8577 = vmatpush.bf16.msra.mxu0 %v7495
    %8578 = vmatpush.bf16.msra.mxu0 %v7488
    %8579 = vmatpush.bf16.msra.mxu0 %v7481
    %8580 = vmatpush.bf16.msra.mxu0 %v7474
    %8581 = vmatmul.bf16.gmra.mxu0 %v6212
    %v8582 = vpop.f32.mrf.mxu0
    %v8583 = vadd.f32 %v8570, %v8582
    %v8584 = vpop.f32.mrf.mxu0
    %8585 = vdwg.mxu0
    %8586 = vmatpush.bf16.msra.mxu0 %v7579
    %8587 = vmatpush.bf16.msra.mxu0 %v7572
    %8588 = vmatpush.bf16.msra.mxu0 %v7565
    %8589 = vmatpush.bf16.msra.mxu0 %v7558
    %8590 = vmatpush.bf16.msra.mxu0 %v7551
    %8591 = vmatpush.bf16.msra.mxu0 %v7544
    %8592 = vmatpush.bf16.msra.mxu0 %v7537
    %8593 = vmatpush.bf16.msra.mxu0 %v7530
    %8594 = vmatmul.bf16.gmra.mxu0 %v6213
    %v8595 = vpop.f32.mrf.mxu0
    %v8596 = vadd.f32 %v8583, %v8595
    %v8597 = vpop.f32.mrf.mxu0
    %8598 = vdwg.mxu0
    %8599 = vmatpush.bf16.msra.mxu0 %v7635
    %8600 = vmatpush.bf16.msra.mxu0 %v7628
    %8601 = vmatpush.bf16.msra.mxu0 %v7621
    %8602 = vmatpush.bf16.msra.mxu0 %v7614
    %8603 = vmatpush.bf16.msra.mxu0 %v7607
    %8604 = vmatpush.bf16.msra.mxu0 %v7600
    %8605 = vmatpush.bf16.msra.mxu0 %v7593
    %8606 = vmatpush.bf16.msra.mxu0 %v7586
    %8607 = vmatmul.bf16.gmra.mxu0 %v6214
    %v8608 = vpop.f32.mrf.mxu0
    %v8609 = vadd.f32 %v8596, %v8608
    %v8610 = vpop.f32.mrf.mxu0
    %8611 = vdwg.mxu0
    %8612 = vmatpush.bf16.msra.mxu0 0
    %8613 = vmatpush.bf16.msra.mxu0 0
    %8614 = vmatpush.bf16.msra.mxu0 0
    %8615 = vmatpush.bf16.msra.mxu0 0
    %8616 = vmatpush.bf16.msra.mxu0 0
    %8617 = vmatpush.bf16.msra.mxu0 0
    %8618 = vmatpush.bf16.msra.mxu0 0
    %8619 = vmatpush.bf16.msra.mxu0 %v7642
    %8620 = vmatmul.bf16.gmra.mxu0 %v7986
    %v8621 = vpop.f32.mrf.mxu0
    %v8622 = vadd.f32 %v8609, %v8621
    %v8623 = vpop.f32.mrf.mxu0
    %8624 = vdwg.mxu0
    %v8625 = vmax.f32 %v5808, %v8076
    %v8626 = vmax.f32 %v5809, %v8167
    %v8627 = vmax.f32 %v5810, %v8258
    %v8628 = vmax.f32 %v5811, %v8349
    %v8629 = vmax.f32 %v5812, %v8440
    %v8630 = vmax.f32 %v5813, %v8531
    %v8631 = vmax.f32 %v5814, %v8622
    %s8632 = scalar_lea.vmem [#allocation2], 8232
    %v8633 = vld [vmem:[%s8632] sm:$0xff]
    %v8634 = vld [vmem:[%s8632 + $0x8] sm:$0xff]
    %v8635 = vld [vmem:[%s8632 + $0x10] sm:$0xff]
    %v8636 = vld [vmem:[%s8632 + $0x18] sm:$0xf]
    %v8637 = vld [vmem:[%s8632 + $0x1c] sm:$0xff]
    %v8638 = vld [vmem:[%s8632 + $0x24] sm:$0xff]
    %v8639 = vld [vmem:[%s8632 + $0x2c] sm:$0xff]
    %v8640 = vld [vmem:[%s8632 + $0x34] sm:$0xf]
    %v8641 = vld [vmem:[%s8632 + $0x38] sm:$0xff]
    %v8642 = vld [vmem:[%s8632 + $0x40] sm:$0xff]
    %v8643 = vld [vmem:[%s8632 + $0x48] sm:$0xff]
    %v8644 = vld [vmem:[%s8632 + $0x50] sm:$0xf]
    %v8645 = vld [vmem:[%s8632 + $0x54] sm:$0xff]
    %v8646 = vld [vmem:[%s8632 + $0x5c] sm:$0xff]
    %v8647 = vld [vmem:[%s8632 + $0x64] sm:$0xff]
    %v8648 = vld [vmem:[%s8632 + $0x6c] sm:$0xf]
    %v8649 = vld [vmem:[%s8632 + $0x70] sm:$0xff]
    %v8650 = vld [vmem:[%s8632 + $0x78] sm:$0xff]
    %v8651 = vld [vmem:[%s8632 + $0x80] sm:$0xff]
    %v8652 = vld [vmem:[%s8632 + $0x88] sm:$0xf]
    %v8653 = vld [vmem:[%s8632 + $0x8c] sm:$0xff]
    %v8654 = vld [vmem:[%s8632 + $0x94] sm:$0xff]
    %v8655 = vld [vmem:[%s8632 + $0x9c] sm:$0xff]
    %v8656 = vld [vmem:[%s8632 + $0xa4] sm:$0xf]
    %v8657 = vld [vmem:[%s8632 + $0xa8] sm:$0xff]
    %v8658 = vld [vmem:[%s8632 + $0xb0] sm:$0xff]
    %v8659 = vld [vmem:[%s8632 + $0xb8] sm:$0xff]
    %v8660 = vld [vmem:[%s8632 + $0xc0] sm:$0xf]
    %v8661 = vld [vmem:[%s8632 + $0xc4] sm:$0xff]
    %v8662 = vld [vmem:[%s8632 + $0xcc] sm:$0xff]
    %v8663 = vld [vmem:[%s8632 + $0xd4] sm:$0xff]
    %v8664 = vld [vmem:[%s8632 + $0xdc] sm:$0xf]
    %v8665 = vld [vmem:[%s8632 + $0xe0] sm:$0xff]
    %v8666 = vld [vmem:[%s8632 + $0xe8] sm:$0xff]
    %v8667 = vld [vmem:[%s8632 + $0xf0] sm:$0xff]
    %v8668 = vld [vmem:[%s8632 + $0xf8] sm:$0xf]
    %v8669 = vld [vmem:[%s8632 + $0xfc] sm:$0xff]
    %v8670 = vld [vmem:[%s8632 + $0x104] sm:$0xff]
    %v8671 = vld [vmem:[%s8632 + $0x10c] sm:$0xff]
    %v8672 = vld [vmem:[%s8632 + $0x114] sm:$0xf]
    %v8673 = vld [vmem:[%s8632 + $0x118] sm:$0xff]
    %v8674 = vld [vmem:[%s8632 + $0x120] sm:$0xff]
    %v8675 = vld [vmem:[%s8632 + $0x128] sm:$0xff]
    %v8676 = vld [vmem:[%s8632 + $0x130] sm:$0xf]
    %v8677 = vld [vmem:[%s8632 + $0x134] sm:$0xff]
    %v8678 = vld [vmem:[%s8632 + $0x13c] sm:$0xff]
    %v8679 = vld [vmem:[%s8632 + $0x144] sm:$0xff]
    %v8680 = vld [vmem:[%s8632 + $0x14c] sm:$0xf]
    %v8681 = vld [vmem:[%s8632 + $0x150] sm:$0xff]
    %v8682 = vld [vmem:[%s8632 + $0x158] sm:$0xff]
    %v8683 = vld [vmem:[%s8632 + $0x160] sm:$0xff]
    %v8684 = vld [vmem:[%s8632 + $0x168] sm:$0xf]
    %v8685 = vld [vmem:[%s8632 + $0x16c] sm:$0xff]
    %v8686 = vld [vmem:[%s8632 + $0x174] sm:$0xff]
    %v8687 = vld [vmem:[%s8632 + $0x17c] sm:$0xff]
    %v8688 = vld [vmem:[%s8632 + $0x184] sm:$0xf]
    %v8689 = vld [vmem:[%s8632 + $0x188] sm:$0xff]
    %v8690 = vld [vmem:[%s8632 + $0x190] sm:$0xff]
    %v8691 = vld [vmem:[%s8632 + $0x198] sm:$0xff]
    %v8692 = vld [vmem:[%s8632 + $0x1a0] sm:$0xf]
    %v8693 = vld [vmem:[%s8632 + $0x1a4] sm:$0xff]
    %v8694 = vld [vmem:[%s8632 + $0x1ac] sm:$0xff]
    %v8695 = vld [vmem:[%s8632 + $0x1b4] sm:$0xff]
    %v8696 = vld [vmem:[%s8632 + $0x1bc] sm:$0xf]
    %v8697 = vld [vmem:[%s8632 + $0x1c0] sm:$0xff]
    %v8698 = vld [vmem:[%s8632 + $0x1c8] sm:$0xff]
    %v8699 = vld [vmem:[%s8632 + $0x1d0] sm:$0xff]
    %v8700 = vld [vmem:[%s8632 + $0x1d8] sm:$0xf]
    %v8701 = vld [vmem:[%s8632 + $0x1dc] sm:$0xff]
    %v8702 = vld [vmem:[%s8632 + $0x1e4] sm:$0xff]
    %v8703 = vld [vmem:[%s8632 + $0x1ec] sm:$0xff]
    %v8704 = vld [vmem:[%s8632 + $0x1f4] sm:$0xf]
    %v8705 = vld [vmem:[%s8632 + $0x1f8] sm:$0xff]
    %v8706 = vld [vmem:[%s8632 + $0x200] sm:$0xff]
    %v8707 = vld [vmem:[%s8632 + $0x208] sm:$0xff]
    %v8708 = vld [vmem:[%s8632 + $0x210] sm:$0xf]
    %v8709 = vld [vmem:[%s8632 + $0x214] sm:$0xff]
    %v8710 = vld [vmem:[%s8632 + $0x21c] sm:$0xff]
    %v8711 = vld [vmem:[%s8632 + $0x224] sm:$0xff]
    %v8712 = vld [vmem:[%s8632 + $0x22c] sm:$0xf]
    %v8713 = vld [vmem:[%s8632 + $0x230] sm:$0xff]
    %v8714 = vld [vmem:[%s8632 + $0x238] sm:$0xff]
    %v8715 = vld [vmem:[%s8632 + $0x240] sm:$0xff]
    %v8716 = vld [vmem:[%s8632 + $0x248] sm:$0xf]
    %v8717 = vld [vmem:[%s8632 + $0x24c] sm:$0xff]
    %v8718 = vld [vmem:[%s8632 + $0x254] sm:$0xff]
    %v8719 = vld [vmem:[%s8632 + $0x25c] sm:$0xff]
    %v8720 = vld [vmem:[%s8632 + $0x264] sm:$0xf]
    %v8721 = vld [vmem:[%s8632 + $0x268] sm:$0xff]
    %v8722 = vld [vmem:[%s8632 + $0x270] sm:$0xff]
    %v8723 = vld [vmem:[%s8632 + $0x278] sm:$0xff]
    %v8724 = vld [vmem:[%s8632 + $0x280] sm:$0xf]
    %v8725 = vld [vmem:[%s8632 + $0x284] sm:$0xff]
    %v8726 = vld [vmem:[%s8632 + $0x28c] sm:$0xff]
    %v8727 = vld [vmem:[%s8632 + $0x294] sm:$0xff]
    %v8728 = vld [vmem:[%s8632 + $0x29c] sm:$0xf]
    %v8729 = vld [vmem:[%s8632 + $0x2a0] sm:$0xff]
    %v8730 = vld [vmem:[%s8632 + $0x2a8] sm:$0xff]
    %v8731 = vld [vmem:[%s8632 + $0x2b0] sm:$0xff]
    %v8732 = vld [vmem:[%s8632 + $0x2b8] sm:$0xf]
    %v8733 = vld [vmem:[%s8632 + $0x2bc] sm:$0xff]
    %v8734 = vld [vmem:[%s8632 + $0x2c4] sm:$0xff]
    %v8735 = vld [vmem:[%s8632 + $0x2cc] sm:$0xff]
    %v8736 = vld [vmem:[%s8632 + $0x2d4] sm:$0xf]
    %v8737 = vld [vmem:[%s8632 + $0x2d8] sm:$0xff]
    %v8738 = vld [vmem:[%s8632 + $0x2e0] sm:$0xff]
    %v8739 = vld [vmem:[%s8632 + $0x2e8] sm:$0xff]
    %v8740 = vld [vmem:[%s8632 + $0x2f0] sm:$0xf]
    %v8741 = vld [vmem:[%s8632 + $0x2f4] sm:$0xff]
    %v8742 = vld [vmem:[%s8632 + $0x2fc] sm:$0xff]
    %v8743 = vld [vmem:[%s8632 + $0x304] sm:$0xff]
    %v8744 = vld [vmem:[%s8632 + $0x30c] sm:$0xf]
    %v8745 = vld [vmem:[%s8632 + $0x310] sm:$0xff]
    %v8746 = vld [vmem:[%s8632 + $0x318] sm:$0xff]
    %v8747 = vld [vmem:[%s8632 + $0x320] sm:$0xff]
    %v8748 = vld [vmem:[%s8632 + $0x328] sm:$0xf]
    %v8749 = vld [vmem:[%s8632 + $0x32c] sm:$0xff]
    %v8750 = vld [vmem:[%s8632 + $0x334] sm:$0xff]
    %v8751 = vld [vmem:[%s8632 + $0x33c] sm:$0xff]
    %v8752 = vld [vmem:[%s8632 + $0x344] sm:$0xf]
    %v8753 = vld [vmem:[%s8632 + $0x348] sm:$0xff]
    %v8754 = vld [vmem:[%s8632 + $0x350] sm:$0xff]
    %v8755 = vld [vmem:[%s8632 + $0x358] sm:$0xff]
    %v8756 = vld [vmem:[%s8632 + $0x360] sm:$0xf]
    %v8757 = vld [vmem:[%s8632 + $0x364] sm:$0xff]
    %v8758 = vld [vmem:[%s8632 + $0x36c] sm:$0xff]
    %v8759 = vld [vmem:[%s8632 + $0x374] sm:$0xff]
    %v8760 = vld [vmem:[%s8632 + $0x37c] sm:$0xf]
    %v8761 = vld [vmem:[%s8632 + $0x380] sm:$0xff]
    %v8762 = vld [vmem:[%s8632 + $0x388] sm:$0xff]
    %v8763 = vld [vmem:[%s8632 + $0x390] sm:$0xff]
    %v8764 = vld [vmem:[%s8632 + $0x398] sm:$0xf]
    %v8765 = vld [vmem:[%s8632 + $0x39c] sm:$0xff]
    %v8766 = vld [vmem:[%s8632 + $0x3a4] sm:$0xff]
    %v8767 = vld [vmem:[%s8632 + $0x3ac] sm:$0xff]
    %v8768 = vld [vmem:[%s8632 + $0x3b4] sm:$0xf]
    %v8769 = vld [vmem:[%s8632 + $0x3b8] sm:$0xff]
    %v8770 = vld [vmem:[%s8632 + $0x3c0] sm:$0xff]
    %v8771 = vld [vmem:[%s8632 + $0x3c8] sm:$0xff]
    %v8772 = vld [vmem:[%s8632 + $0x3d0] sm:$0xf]
    %v8773 = vld [vmem:[%s8632 + $0x3d4] sm:$0xff]
    %v8774 = vld [vmem:[%s8632 + $0x3dc] sm:$0xff]
    %v8775 = vld [vmem:[%s8632 + $0x3e4] sm:$0xff]
    %v8776 = vld [vmem:[%s8632 + $0x3ec] sm:$0xf]
    %v8777 = vld [vmem:[%s8632 + $0x3f0] sm:$0xff]
    %v8778 = vld [vmem:[%s8632 + $0x3f8] sm:$0xff]
    %v8779 = vld [vmem:[%s8632 + $0x400] sm:$0xff]
    %v8780 = vld [vmem:[%s8632 + $0x408] sm:$0xf]
    %v8781 = vld [vmem:[%s8632 + $0x40c] sm:$0xff]
    %v8782 = vld [vmem:[%s8632 + $0x414] sm:$0xff]
    %v8783 = vld [vmem:[%s8632 + $0x41c] sm:$0xff]
    %v8784 = vld [vmem:[%s8632 + $0x424] sm:$0xf]
    %v8785 = vld [vmem:[%s8632 + $0x428] sm:$0xff]
    %v8786 = vld [vmem:[%s8632 + $0x430] sm:$0xff]
    %v8787 = vld [vmem:[%s8632 + $0x438] sm:$0xff]
    %v8788 = vld [vmem:[%s8632 + $0x440] sm:$0xf]
    %v8789 = vld [vmem:[%s8632 + $0x444] sm:$0xff]
    %v8790 = vld [vmem:[%s8632 + $0x44c] sm:$0xff]
    %v8791 = vld [vmem:[%s8632 + $0x454] sm:$0xff]
    %v8792 = vld [vmem:[%s8632 + $0x45c] sm:$0xf]
    %v8793 = vld [vmem:[%s8632 + $0x460] sm:$0xff]
    %v8794 = vld [vmem:[%s8632 + $0x468] sm:$0xff]
    %v8795 = vld [vmem:[%s8632 + $0x470] sm:$0xff]
    %v8796 = vld [vmem:[%s8632 + $0x478] sm:$0xf]
    %v8797 = vld [vmem:[%s8632 + $0x47c] sm:$0xff]
    %v8798 = vld [vmem:[%s8632 + $0x484] sm:$0xff]
    %v8799 = vld [vmem:[%s8632 + $0x48c] sm:$0xff]
    %v8800 = vld [vmem:[%s8632 + $0x494] sm:$0xf]
    %v8801 = vld [vmem:[%s8632 + $0x498] sm:$0xff]
    %v8802 = vld [vmem:[%s8632 + $0x4a0] sm:$0xff]
    %v8803 = vld [vmem:[%s8632 + $0x4a8] sm:$0xff]
    %v8804 = vld [vmem:[%s8632 + $0x4b0] sm:$0xf]
    %v8805 = vld [vmem:[%s8632 + $0x4b4] sm:$0xff]
    %v8806 = vld [vmem:[%s8632 + $0x4bc] sm:$0xff]
    %v8807 = vld [vmem:[%s8632 + $0x4c4] sm:$0xff]
    %v8808 = vld [vmem:[%s8632 + $0x4cc] sm:$0xf]
    %v8809 = vld [vmem:[%s8632 + $0x4d0] sm:$0xff]
    %v8810 = vld [vmem:[%s8632 + $0x4d8] sm:$0xff]
    %v8811 = vld [vmem:[%s8632 + $0x4e0] sm:$0xff]
    %v8812 = vld [vmem:[%s8632 + $0x4e8] sm:$0xf]
    %v8813 = vld [vmem:[%s8632 + $0x4ec] sm:$0xff]
    %v8814 = vld [vmem:[%s8632 + $0x4f4] sm:$0xff]
    %v8815 = vld [vmem:[%s8632 + $0x4fc] sm:$0xff]
    %v8816 = vld [vmem:[%s8632 + $0x504] sm:$0xf]
    %v8817 = vld [vmem:[%s8632 + $0x508] sm:$0xff]
    %v8818 = vld [vmem:[%s8632 + $0x510] sm:$0xff]
    %v8819 = vld [vmem:[%s8632 + $0x518] sm:$0xff]
    %v8820 = vld [vmem:[%s8632 + $0x520] sm:$0xf]
    %v8821 = vld [vmem:[%s8632 + $0x524] sm:$0xff]
    %v8822 = vld [vmem:[%s8632 + $0x52c] sm:$0xff]
    %v8823 = vld [vmem:[%s8632 + $0x534] sm:$0xff]
    %v8824 = vld [vmem:[%s8632 + $0x53c] sm:$0xf]
    %v8825 = vld [vmem:[%s8632 + $0x540] sm:$0xff]
    %v8826 = vld [vmem:[%s8632 + $0x548] sm:$0xff]
    %v8827 = vld [vmem:[%s8632 + $0x550] sm:$0xff]
    %v8828 = vld [vmem:[%s8632 + $0x558] sm:$0xf]
    %v8829 = vld [vmem:[%s8632 + $0x55c] sm:$0xff]
    %v8830 = vld [vmem:[%s8632 + $0x564] sm:$0xff]
    %v8831 = vld [vmem:[%s8632 + $0x56c] sm:$0xff]
    %v8832 = vld [vmem:[%s8632 + $0x574] sm:$0xf]
    %v8833 = vld [vmem:[%s8632 + $0x578] sm:$0xff]
    %v8834 = vld [vmem:[%s8632 + $0x580] sm:$0xff]
    %v8835 = vld [vmem:[%s8632 + $0x588] sm:$0xff]
    %v8836 = vld [vmem:[%s8632 + $0x590] sm:$0xf]
    %v8837 = vld [vmem:[%s8632 + $0x594] sm:$0xff]
    %v8838 = vld [vmem:[%s8632 + $0x59c] sm:$0xff]
    %v8839 = vld [vmem:[%s8632 + $0x5a4] sm:$0xff]
    %v8840 = vld [vmem:[%s8632 + $0x5ac] sm:$0xf]
    %v8841 = vld [vmem:[%s8632 + $0x5b0] sm:$0xff]
    %v8842 = vld [vmem:[%s8632 + $0x5b8] sm:$0xff]
    %v8843 = vld [vmem:[%s8632 + $0x5c0] sm:$0xff]
    %v8844 = vld [vmem:[%s8632 + $0x5c8] sm:$0xf]
    %v8845 = vld [vmem:[%s8632 + $0x5cc] sm:$0xff]
    %v8846 = vld [vmem:[%s8632 + $0x5d4] sm:$0xff]
    %v8847 = vld [vmem:[%s8632 + $0x5dc] sm:$0xff]
    %v8848 = vld [vmem:[%s8632 + $0x5e4] sm:$0xf]
    %v8849 = vld [vmem:[%s8632 + $0x5e8] sm:$0xff]
    %v8850 = vld [vmem:[%s8632 + $0x5f0] sm:$0xff]
    %v8851 = vld [vmem:[%s8632 + $0x5f8] sm:$0xff]
    %v8852 = vld [vmem:[%s8632 + $0x600] sm:$0xf]
    %v8853 = vld [vmem:[%s8632 + $0x604] sm:$0xff]
    %v8854 = vld [vmem:[%s8632 + $0x60c] sm:$0xff]
    %v8855 = vld [vmem:[%s8632 + $0x614] sm:$0xff]
    %v8856 = vld [vmem:[%s8632 + $0x61c] sm:$0xf]
    %v8857 = vld [vmem:[%s8632 + $0x620] sm:$0xff]
    %v8858 = vld [vmem:[%s8632 + $0x628] sm:$0xff]
    %v8859 = vld [vmem:[%s8632 + $0x630] sm:$0xff]
    %v8860 = vld [vmem:[%s8632 + $0x638] sm:$0xf]
    %v8861 = vld [vmem:[%s8632 + $0x63c] sm:$0xff]
    %v8862 = vld [vmem:[%s8632 + $0x644] sm:$0xff]
    %v8863 = vld [vmem:[%s8632 + $0x64c] sm:$0xff]
    %v8864 = vld [vmem:[%s8632 + $0x654] sm:$0xf]
    %v8865 = vld [vmem:[%s8632 + $0x658] sm:$0xff]
    %v8866 = vld [vmem:[%s8632 + $0x660] sm:$0xff]
    %v8867 = vld [vmem:[%s8632 + $0x668] sm:$0xff]
    %v8868 = vld [vmem:[%s8632 + $0x670] sm:$0xf]
    %v8869 = vld [vmem:[%s8632 + $0x674] sm:$0xff]
    %v8870 = vld [vmem:[%s8632 + $0x67c] sm:$0xff]
    %v8871 = vld [vmem:[%s8632 + $0x684] sm:$0xff]
    %v8872 = vld [vmem:[%s8632 + $0x68c] sm:$0xf]
    %v8873 = vld [vmem:[%s8632 + $0x690] sm:$0xff]
    %v8874 = vld [vmem:[%s8632 + $0x698] sm:$0xff]
    %v8875 = vld [vmem:[%s8632 + $0x6a0] sm:$0xff]
    %v8876 = vld [vmem:[%s8632 + $0x6a8] sm:$0xf]
    %v8877 = vld [vmem:[%s8632 + $0x6ac] sm:$0xff]
    %v8878 = vld [vmem:[%s8632 + $0x6b4] sm:$0xff]
    %v8879 = vld [vmem:[%s8632 + $0x6bc] sm:$0xff]
    %v8880 = vld [vmem:[%s8632 + $0x6c4] sm:$0xf]
    %v8881 = vld [vmem:[%s8632 + $0x6c8] sm:$0xff]
    %v8882 = vld [vmem:[%s8632 + $0x6d0] sm:$0xff]
    %v8883 = vld [vmem:[%s8632 + $0x6d8] sm:$0xff]
    %v8884 = vld [vmem:[%s8632 + $0x6e0] sm:$0xf]
    %v8885 = vld [vmem:[%s8632 + $0x6e4] sm:$0xff]
    %v8886 = vld [vmem:[%s8632 + $0x6ec] sm:$0xff]
    %v8887 = vld [vmem:[%s8632 + $0x6f4] sm:$0xff]
    %v8888 = vld [vmem:[%s8632 + $0x6fc] sm:$0xf]
    %v8889 = vld [vmem:[%s8632 + $0x700] sm:$0xff]
    %v8890 = vld [vmem:[%s8632 + $0x708] sm:$0xff]
    %v8891 = vld [vmem:[%s8632 + $0x710] sm:$0xff]
    %v8892 = vld [vmem:[%s8632 + $0x718] sm:$0xf]
    %v8893 = vld [vmem:[%s8632 + $0x71c] sm:$0xff]
    %v8894 = vld [vmem:[%s8632 + $0x724] sm:$0xff]
    %v8895 = vld [vmem:[%s8632 + $0x72c] sm:$0xff]
    %v8896 = vld [vmem:[%s8632 + $0x734] sm:$0xf]
    %v8897 = vld [vmem:[%s8632 + $0x738] sm:$0xff]
    %v8898 = vld [vmem:[%s8632 + $0x740] sm:$0xff]
    %v8899 = vld [vmem:[%s8632 + $0x748] sm:$0xff]
    %v8900 = vld [vmem:[%s8632 + $0x750] sm:$0xf]
    %v8901 = vld [vmem:[%s8632 + $0x754] sm:$0xff]
    %v8902 = vld [vmem:[%s8632 + $0x75c] sm:$0xff]
    %v8903 = vld [vmem:[%s8632 + $0x764] sm:$0xff]
    %v8904 = vld [vmem:[%s8632 + $0x76c] sm:$0xf]
    %v8905 = vld [vmem:[%s8632 + $0x770] sm:$0xff]
    %v8906 = vld [vmem:[%s8632 + $0x778] sm:$0xff]
    %v8907 = vld [vmem:[%s8632 + $0x780] sm:$0xff]
    %v8908 = vld [vmem:[%s8632 + $0x788] sm:$0xf]
    %v8909 = vld [vmem:[%s8632 + $0x78c] sm:$0xff]
    %v8910 = vld [vmem:[%s8632 + $0x794] sm:$0xff]
    %v8911 = vld [vmem:[%s8632 + $0x79c] sm:$0xff]
    %v8912 = vld [vmem:[%s8632 + $0x7a4] sm:$0xf]
    %v8913 = vld [vmem:[%s8632 + $0x7a8] sm:$0xff]
    %v8914 = vld [vmem:[%s8632 + $0x7b0] sm:$0xff]
    %v8915 = vld [vmem:[%s8632 + $0x7b8] sm:$0xff]
    %v8916 = vld [vmem:[%s8632 + $0x7c0] sm:$0xf]
    %v8917 = vld [vmem:[%s8632 + $0x7c4] sm:$0xff]
    %v8918 = vld [vmem:[%s8632 + $0x7cc] sm:$0xff]
    %v8919 = vld [vmem:[%s8632 + $0x7d4] sm:$0xff]
    %v8920 = vld [vmem:[%s8632 + $0x7dc] sm:$0xf]
    %v8921 = vld [vmem:[%s8632 + $0x7e0] sm:$0xff]
    %v8922 = vld [vmem:[%s8632 + $0x7e8] sm:$0xff]
    %v8923 = vld [vmem:[%s8632 + $0x7f0] sm:$0xff]
    %v8924 = vld [vmem:[%s8632 + $0x7f8] sm:$0xf]
    %v8925 = vld [vmem:[%s8632 + $0x7fc] sm:$0xff]
    %v8926 = vld [vmem:[%s8632 + $0x804] sm:$0xff]
    %v8927 = vld [vmem:[%s8632 + $0x80c] sm:$0xff]
    %v8928 = vld [vmem:[%s8632 + $0x814] sm:$0xf]
    %v8929 = vld [vmem:[%s8632 + $0x818] sm:$0xff]
    %v8930 = vld [vmem:[%s8632 + $0x820] sm:$0xff]
    %v8931 = vld [vmem:[%s8632 + $0x828] sm:$0xff]
    %v8932 = vld [vmem:[%s8632 + $0x830] sm:$0xf]
    %v8933 = vld [vmem:[%s8632 + $0x834] sm:$0xff]
    %v8934 = vld [vmem:[%s8632 + $0x83c] sm:$0xff]
    %v8935 = vld [vmem:[%s8632 + $0x844] sm:$0xff]
    %v8936 = vld [vmem:[%s8632 + $0x84c] sm:$0xf]
    %v8937 = vld [vmem:[%s8632 + $0x850] sm:$0xff]
    %v8938 = vld [vmem:[%s8632 + $0x858] sm:$0xff]
    %v8939 = vld [vmem:[%s8632 + $0x860] sm:$0xff]
    %v8940 = vld [vmem:[%s8632 + $0x868] sm:$0xf]
    %v8941 = vld [vmem:[%s8632 + $0x86c] sm:$0xff]
    %v8942 = vld [vmem:[%s8632 + $0x874] sm:$0xff]
    %v8943 = vld [vmem:[%s8632 + $0x87c] sm:$0xff]
    %v8944 = vld [vmem:[%s8632 + $0x884] sm:$0xf]
    %v8945 = vld [vmem:[%s8632 + $0x888] sm:$0xff]
    %v8946 = vld [vmem:[%s8632 + $0x890] sm:$0xff]
    %v8947 = vld [vmem:[%s8632 + $0x898] sm:$0xff]
    %v8948 = vld [vmem:[%s8632 + $0x8a0] sm:$0xf]
    %v8949 = vld [vmem:[%s8632 + $0x8a4] sm:$0xff]
    %v8950 = vld [vmem:[%s8632 + $0x8ac] sm:$0xff]
    %v8951 = vld [vmem:[%s8632 + $0x8b4] sm:$0xff]
    %v8952 = vld [vmem:[%s8632 + $0x8bc] sm:$0xf]
    %v8953 = vld [vmem:[%s8632 + $0x8c0] sm:$0xff]
    %v8954 = vld [vmem:[%s8632 + $0x8c8] sm:$0xff]
    %v8955 = vld [vmem:[%s8632 + $0x8d0] sm:$0xff]
    %v8956 = vld [vmem:[%s8632 + $0x8d8] sm:$0xf]
    %v8957 = vld [vmem:[%s8632 + $0x8dc] sm:$0xff]
    %v8958 = vld [vmem:[%s8632 + $0x8e4] sm:$0xff]
    %v8959 = vld [vmem:[%s8632 + $0x8ec] sm:$0xff]
    %v8960 = vld [vmem:[%s8632 + $0x8f4] sm:$0xf]
    %v8961 = vld [vmem:[%s8632 + $0x8f8] sm:$0xff]
    %v8962 = vld [vmem:[%s8632 + $0x900] sm:$0xff]
    %v8963 = vld [vmem:[%s8632 + $0x908] sm:$0xff]
    %v8964 = vld [vmem:[%s8632 + $0x910] sm:$0xf]
    %v8965 = vld [vmem:[%s8632 + $0x914] sm:$0xff]
    %v8966 = vld [vmem:[%s8632 + $0x91c] sm:$0xff]
    %v8967 = vld [vmem:[%s8632 + $0x924] sm:$0xff]
    %v8968 = vld [vmem:[%s8632 + $0x92c] sm:$0xf]
    %v8969 = vld [vmem:[%s8632 + $0x930] sm:$0xff]
    %v8970 = vld [vmem:[%s8632 + $0x938] sm:$0xff]
    %v8971 = vld [vmem:[%s8632 + $0x940] sm:$0xff]
    %v8972 = vld [vmem:[%s8632 + $0x948] sm:$0xf]
    %v8973 = vld [vmem:[%s8632 + $0x94c] sm:$0xff]
    %v8974 = vld [vmem:[%s8632 + $0x954] sm:$0xff]
    %v8975 = vld [vmem:[%s8632 + $0x95c] sm:$0xff]
    %v8976 = vld [vmem:[%s8632 + $0x964] sm:$0xf]
    %v8977 = vld [vmem:[%s8632 + $0x968] sm:$0xff]
    %v8978 = vld [vmem:[%s8632 + $0x970] sm:$0xff]
    %v8979 = vld [vmem:[%s8632 + $0x978] sm:$0xff]
    %v8980 = vld [vmem:[%s8632 + $0x980] sm:$0xf]
    %v8981 = vld [vmem:[%s8632 + $0x984] sm:$0xff]
    %v8982 = vld [vmem:[%s8632 + $0x98c] sm:$0xff]
    %v8983 = vld [vmem:[%s8632 + $0x994] sm:$0xff]
    %v8984 = vld [vmem:[%s8632 + $0x99c] sm:$0xf]
    %v8985 = vld [vmem:[%s8632 + $0x9a0] sm:$0xff]
    %v8986 = vld [vmem:[%s8632 + $0x9a8] sm:$0xff]
    %v8987 = vld [vmem:[%s8632 + $0x9b0] sm:$0xff]
    %v8988 = vld [vmem:[%s8632 + $0x9b8] sm:$0xf]
    %v8989 = vld [vmem:[%s8632 + $0x9bc] sm:$0xff]
    %v8990 = vld [vmem:[%s8632 + $0x9c4] sm:$0xff]
    %v8991 = vld [vmem:[%s8632 + $0x9cc] sm:$0xff]
    %v8992 = vld [vmem:[%s8632 + $0x9d4] sm:$0xf]
    %v8993 = vld [vmem:[%s8632 + $0x9d8] sm:$0xff]
    %v8994 = vld [vmem:[%s8632 + $0x9e0] sm:$0xff]
    %v8995 = vld [vmem:[%s8632 + $0x9e8] sm:$0xff]
    %v8996 = vld [vmem:[%s8632 + $0x9f0] sm:$0xf]
    %v8997 = vld [vmem:[%s8632 + $0x9f4] sm:$0xff]
    %v8998 = vld [vmem:[%s8632 + $0x9fc] sm:$0xff]
    %v8999 = vld [vmem:[%s8632 + $0xa04] sm:$0xff]
    %v9000 = vld [vmem:[%s8632 + $0xa0c] sm:$0xf]
    %v9001 = vld [vmem:[%s8632 + $0xa10] sm:$0xff]
    %v9002 = vld [vmem:[%s8632 + $0xa18] sm:$0xff]
    %v9003 = vld [vmem:[%s8632 + $0xa20] sm:$0xff]
    %v9004 = vld [vmem:[%s8632 + $0xa28] sm:$0xf]
    %v9005 = vld [vmem:[%s8632 + $0xa2c] sm:$0xff]
    %v9006 = vld [vmem:[%s8632 + $0xa34] sm:$0xff]
    %v9007 = vld [vmem:[%s8632 + $0xa3c] sm:$0xff]
    %v9008 = vld [vmem:[%s8632 + $0xa44] sm:$0xf]
    %v9009 = vld [vmem:[%s8632 + $0xa48] sm:$0xff]
    %v9010 = vld [vmem:[%s8632 + $0xa50] sm:$0xff]
    %v9011 = vld [vmem:[%s8632 + $0xa58] sm:$0xff]
    %v9012 = vld [vmem:[%s8632 + $0xa60] sm:$0xf]
    %v9013 = vld [vmem:[%s8632 + $0xa64] sm:$0xff]
    %v9014 = vld [vmem:[%s8632 + $0xa6c] sm:$0xff]
    %v9015 = vld [vmem:[%s8632 + $0xa74] sm:$0xff]
    %v9016 = vld [vmem:[%s8632 + $0xa7c] sm:$0xf]
    %v9017 = vld [vmem:[%s8632 + $0xa80] sm:$0xff]
    %v9018 = vld [vmem:[%s8632 + $0xa88] sm:$0xff]
    %v9019 = vld [vmem:[%s8632 + $0xa90] sm:$0xff]
    %v9020 = vld [vmem:[%s8632 + $0xa98] sm:$0xf]
    %v9021 = vld [vmem:[%s8632 + $0xa9c] sm:$0xff]
    %v9022 = vld [vmem:[%s8632 + $0xaa4] sm:$0xff]
    %v9023 = vld [vmem:[%s8632 + $0xaac] sm:$0xff]
    %v9024 = vld [vmem:[%s8632 + $0xab4] sm:$0xf]
    %9025 = vst [vmem:[#allocation1] ss:$9 sm:$0xff] %v186
    %v9026 = vld [vmem:[#allocation1] sm:$0xff]
    %v9027 = vld [vmem:[#allocation1 + $0x9] sm:$0xff]
    %v9028 = vld [vmem:[#allocation1 + $0x12] sm:$0xff]
    %v9029 = vld [vmem:[#allocation1 + $0x1b] sm:$0xff]
    %v9030 = vld [vmem:[#allocation1 + $0x24] sm:$0xff]
    %v9031 = vld [vmem:[#allocation1 + $0x2d] sm:$0xff]
    %v9032 = vld [vmem:[#allocation1 + $0x36] sm:$0xff]
    %v9431 = vunpack.c.l.b16 %v8633
    %v9432 = vunpack.c.h.b16 %v8633
    %v9433 = vunpack.c.l.b16 %v8634
    %v9434 = vunpack.c.h.b16 %v8634
    %v9435 = vunpack.c.l.b16 %v8635
    %v9436 = vunpack.c.h.b16 %v8635
    %v9437 = vunpack.c.l.b16 %v8636
    %v9438 = vunpack.c.l.b16 %v8637
    %v9439 = vunpack.c.h.b16 %v8637
    %v9440 = vunpack.c.l.b16 %v8638
    %v9441 = vunpack.c.h.b16 %v8638
    %v9442 = vunpack.c.l.b16 %v8639
    %v9443 = vunpack.c.h.b16 %v8639
    %v9444 = vunpack.c.l.b16 %v8640
    %v9445 = vunpack.c.l.b16 %v8641
    %v9446 = vunpack.c.h.b16 %v8641
    %v9447 = vunpack.c.l.b16 %v8642
    %v9448 = vunpack.c.h.b16 %v8642
    %v9449 = vunpack.c.l.b16 %v8643
    %v9450 = vunpack.c.h.b16 %v8643
    %v9451 = vunpack.c.l.b16 %v8644
    %v9452 = vunpack.c.l.b16 %v8645
    %v9453 = vunpack.c.h.b16 %v8645
    %v9454 = vunpack.c.l.b16 %v8646
    %v9455 = vunpack.c.h.b16 %v8646
    %v9456 = vunpack.c.l.b16 %v8647
    %v9457 = vunpack.c.h.b16 %v8647
    %v9458 = vunpack.c.l.b16 %v8648
    %v9459 = vunpack.c.l.b16 %v8649
    %v9460 = vunpack.c.h.b16 %v8649
    %v9461 = vunpack.c.l.b16 %v8650
    %v9462 = vunpack.c.h.b16 %v8650
    %v9463 = vunpack.c.l.b16 %v8651
    %v9464 = vunpack.c.h.b16 %v8651
    %v9465 = vunpack.c.l.b16 %v8652
    %v9466 = vunpack.c.l.b16 %v8653
    %v9467 = vunpack.c.h.b16 %v8653
    %v9468 = vunpack.c.l.b16 %v8654
    %v9469 = vunpack.c.h.b16 %v8654
    %v9470 = vunpack.c.l.b16 %v8655
    %v9471 = vunpack.c.h.b16 %v8655
    %v9472 = vunpack.c.l.b16 %v8656
    %v9473 = vunpack.c.l.b16 %v8657
    %v9474 = vunpack.c.h.b16 %v8657
    %v9475 = vunpack.c.l.b16 %v8658
    %v9476 = vunpack.c.h.b16 %v8658
    %v9477 = vunpack.c.l.b16 %v8659
    %v9478 = vunpack.c.h.b16 %v8659
    %v9479 = vunpack.c.l.b16 %v8660
    %v9480 = vunpack.c.l.b16 %v8661
    %v9481 = vunpack.c.h.b16 %v8661
    %v9482 = vunpack.c.l.b16 %v8662
    %v9483 = vunpack.c.h.b16 %v8662
    %v9484 = vunpack.c.l.b16 %v8663
    %v9485 = vunpack.c.h.b16 %v8663
    %v9486 = vunpack.c.l.b16 %v8664
    %v9487 = vunpack.c.l.b16 %v8665
    %v9488 = vunpack.c.h.b16 %v8665
    %v9489 = vunpack.c.l.b16 %v8666
    %v9490 = vunpack.c.h.b16 %v8666
    %v9491 = vunpack.c.l.b16 %v8667
    %v9492 = vunpack.c.h.b16 %v8667
    %v9493 = vunpack.c.l.b16 %v8668
    %v9494 = vunpack.c.l.b16 %v8669
    %v9495 = vunpack.c.h.b16 %v8669
    %v9496 = vunpack.c.l.b16 %v8670
    %v9497 = vunpack.c.h.b16 %v8670
    %v9498 = vunpack.c.l.b16 %v8671
    %v9499 = vunpack.c.h.b16 %v8671
    %v9500 = vunpack.c.l.b16 %v8672
    %v9501 = vunpack.c.l.b16 %v8673
    %v9502 = vunpack.c.h.b16 %v8673
    %v9503 = vunpack.c.l.b16 %v8674
    %v9504 = vunpack.c.h.b16 %v8674
    %v9505 = vunpack.c.l.b16 %v8675
    %v9506 = vunpack.c.h.b16 %v8675
    %v9507 = vunpack.c.l.b16 %v8676
    %v9508 = vunpack.c.l.b16 %v8677
    %v9509 = vunpack.c.h.b16 %v8677
    %v9510 = vunpack.c.l.b16 %v8678
    %v9511 = vunpack.c.h.b16 %v8678
    %v9512 = vunpack.c.l.b16 %v8679
    %v9513 = vunpack.c.h.b16 %v8679
    %v9514 = vunpack.c.l.b16 %v8680
    %v9515 = vunpack.c.l.b16 %v8681
    %v9516 = vunpack.c.h.b16 %v8681
    %v9517 = vunpack.c.l.b16 %v8682
    %v9518 = vunpack.c.h.b16 %v8682
    %v9519 = vunpack.c.l.b16 %v8683
    %v9520 = vunpack.c.h.b16 %v8683
    %v9521 = vunpack.c.l.b16 %v8684
    %v9522 = vunpack.c.l.b16 %v8685
    %v9523 = vunpack.c.h.b16 %v8685
    %v9524 = vunpack.c.l.b16 %v8686
    %v9525 = vunpack.c.h.b16 %v8686
    %v9526 = vunpack.c.l.b16 %v8687
    %v9527 = vunpack.c.h.b16 %v8687
    %v9528 = vunpack.c.l.b16 %v8688
    %v9529 = vunpack.c.l.b16 %v8689
    %v9530 = vunpack.c.h.b16 %v8689
    %v9531 = vunpack.c.l.b16 %v8690
    %v9532 = vunpack.c.h.b16 %v8690
    %v9533 = vunpack.c.l.b16 %v8691
    %v9534 = vunpack.c.h.b16 %v8691
    %v9535 = vunpack.c.l.b16 %v8692
    %v9536 = vunpack.c.l.b16 %v8693
    %v9537 = vunpack.c.h.b16 %v8693
    %v9538 = vunpack.c.l.b16 %v8694
    %v9539 = vunpack.c.h.b16 %v8694
    %v9540 = vunpack.c.l.b16 %v8695
    %v9541 = vunpack.c.h.b16 %v8695
    %v9542 = vunpack.c.l.b16 %v8696
    %v9543 = vunpack.c.l.b16 %v8697
    %v9544 = vunpack.c.h.b16 %v8697
    %v9545 = vunpack.c.l.b16 %v8698
    %v9546 = vunpack.c.h.b16 %v8698
    %v9547 = vunpack.c.l.b16 %v8699
    %v9548 = vunpack.c.h.b16 %v8699
    %v9549 = vunpack.c.l.b16 %v8700
    %v9550 = vunpack.c.l.b16 %v8701
    %v9551 = vunpack.c.h.b16 %v8701
    %v9552 = vunpack.c.l.b16 %v8702
    %v9553 = vunpack.c.h.b16 %v8702
    %v9554 = vunpack.c.l.b16 %v8703
    %v9555 = vunpack.c.h.b16 %v8703
    %v9556 = vunpack.c.l.b16 %v8704
    %v9557 = vunpack.c.l.b16 %v8705
    %v9558 = vunpack.c.h.b16 %v8705
    %v9559 = vunpack.c.l.b16 %v8706
    %v9560 = vunpack.c.h.b16 %v8706
    %v9561 = vunpack.c.l.b16 %v8707
    %v9562 = vunpack.c.h.b16 %v8707
    %v9563 = vunpack.c.l.b16 %v8708
    %v9564 = vunpack.c.l.b16 %v8709
    %v9565 = vunpack.c.h.b16 %v8709
    %v9566 = vunpack.c.l.b16 %v8710
    %v9567 = vunpack.c.h.b16 %v8710
    %v9568 = vunpack.c.l.b16 %v8711
    %v9569 = vunpack.c.h.b16 %v8711
    %v9570 = vunpack.c.l.b16 %v8712
    %v9571 = vunpack.c.l.b16 %v8713
    %v9572 = vunpack.c.h.b16 %v8713
    %v9573 = vunpack.c.l.b16 %v8714
    %v9574 = vunpack.c.h.b16 %v8714
    %v9575 = vunpack.c.l.b16 %v8715
    %v9576 = vunpack.c.h.b16 %v8715
    %v9577 = vunpack.c.l.b16 %v8716
    %v9578 = vunpack.c.l.b16 %v8717
    %v9579 = vunpack.c.h.b16 %v8717
    %v9580 = vunpack.c.l.b16 %v8718
    %v9581 = vunpack.c.h.b16 %v8718
    %v9582 = vunpack.c.l.b16 %v8719
    %v9583 = vunpack.c.h.b16 %v8719
    %v9584 = vunpack.c.l.b16 %v8720
    %v9585 = vunpack.c.l.b16 %v8721
    %v9586 = vunpack.c.h.b16 %v8721
    %v9587 = vunpack.c.l.b16 %v8722
    %v9588 = vunpack.c.h.b16 %v8722
    %v9589 = vunpack.c.l.b16 %v8723
    %v9590 = vunpack.c.h.b16 %v8723
    %v9591 = vunpack.c.l.b16 %v8724
    %v9592 = vunpack.c.l.b16 %v8725
    %v9593 = vunpack.c.h.b16 %v8725
    %v9594 = vunpack.c.l.b16 %v8726
    %v9595 = vunpack.c.h.b16 %v8726
    %v9596 = vunpack.c.l.b16 %v8727
    %v9597 = vunpack.c.h.b16 %v8727
    %v9598 = vunpack.c.l.b16 %v8728
    %v9599 = vunpack.c.l.b16 %v8729
    %v9600 = vunpack.c.h.b16 %v8729
    %v9601 = vunpack.c.l.b16 %v8730
    %v9602 = vunpack.c.h.b16 %v8730
    %v9603 = vunpack.c.l.b16 %v8731
    %v9604 = vunpack.c.h.b16 %v8731
    %v9605 = vunpack.c.l.b16 %v8732
    %v9606 = vunpack.c.l.b16 %v8733
    %v9607 = vunpack.c.h.b16 %v8733
    %v9608 = vunpack.c.l.b16 %v8734
    %v9609 = vunpack.c.h.b16 %v8734
    %v9610 = vunpack.c.l.b16 %v8735
    %v9611 = vunpack.c.h.b16 %v8735
    %v9612 = vunpack.c.l.b16 %v8736
    %v9613 = vunpack.c.l.b16 %v8737
    %v9614 = vunpack.c.h.b16 %v8737
    %v9615 = vunpack.c.l.b16 %v8738
    %v9616 = vunpack.c.h.b16 %v8738
    %v9617 = vunpack.c.l.b16 %v8739
    %v9618 = vunpack.c.h.b16 %v8739
    %v9619 = vunpack.c.l.b16 %v8740
    %v9620 = vunpack.c.l.b16 %v8741
    %v9621 = vunpack.c.h.b16 %v8741
    %v9622 = vunpack.c.l.b16 %v8742
    %v9623 = vunpack.c.h.b16 %v8742
    %v9624 = vunpack.c.l.b16 %v8743
    %v9625 = vunpack.c.h.b16 %v8743
    %v9626 = vunpack.c.l.b16 %v8744
    %v9627 = vunpack.c.l.b16 %v8745
    %v9628 = vunpack.c.h.b16 %v8745
    %v9629 = vunpack.c.l.b16 %v8746
    %v9630 = vunpack.c.h.b16 %v8746
    %v9631 = vunpack.c.l.b16 %v8747
    %v9632 = vunpack.c.h.b16 %v8747
    %v9633 = vunpack.c.l.b16 %v8748
    %v9634 = vunpack.c.l.b16 %v8749
    %v9635 = vunpack.c.h.b16 %v8749
    %v9636 = vunpack.c.l.b16 %v8750
    %v9637 = vunpack.c.h.b16 %v8750
    %v9638 = vunpack.c.l.b16 %v8751
    %v9639 = vunpack.c.h.b16 %v8751
    %v9640 = vunpack.c.l.b16 %v8752
    %v9641 = vunpack.c.l.b16 %v8753
    %v9642 = vunpack.c.h.b16 %v8753
    %v9643 = vunpack.c.l.b16 %v8754
    %v9644 = vunpack.c.h.b16 %v8754
    %v9645 = vunpack.c.l.b16 %v8755
    %v9646 = vunpack.c.h.b16 %v8755
    %v9647 = vunpack.c.l.b16 %v8756
    %v9648 = vunpack.c.l.b16 %v8757
    %v9649 = vunpack.c.h.b16 %v8757
    %v9650 = vunpack.c.l.b16 %v8758
    %v9651 = vunpack.c.h.b16 %v8758
    %v9652 = vunpack.c.l.b16 %v8759
    %v9653 = vunpack.c.h.b16 %v8759
    %v9654 = vunpack.c.l.b16 %v8760
    %v9655 = vunpack.c.l.b16 %v8761
    %v9656 = vunpack.c.h.b16 %v8761
    %v9657 = vunpack.c.l.b16 %v8762
    %v9658 = vunpack.c.h.b16 %v8762
    %v9659 = vunpack.c.l.b16 %v8763
    %v9660 = vunpack.c.h.b16 %v8763
    %v9661 = vunpack.c.l.b16 %v8764
    %v9662 = vunpack.c.l.b16 %v8765
    %v9663 = vunpack.c.h.b16 %v8765
    %v9664 = vunpack.c.l.b16 %v8766
    %v9665 = vunpack.c.h.b16 %v8766
    %v9666 = vunpack.c.l.b16 %v8767
    %v9667 = vunpack.c.h.b16 %v8767
    %v9668 = vunpack.c.l.b16 %v8768
    %v9669 = vunpack.c.l.b16 %v8769
    %v9670 = vunpack.c.h.b16 %v8769
    %v9671 = vunpack.c.l.b16 %v8770
    %v9672 = vunpack.c.h.b16 %v8770
    %v9673 = vunpack.c.l.b16 %v8771
    %v9674 = vunpack.c.h.b16 %v8771
    %v9675 = vunpack.c.l.b16 %v8772
    %v9676 = vunpack.c.l.b16 %v8773
    %v9677 = vunpack.c.h.b16 %v8773
    %v9678 = vunpack.c.l.b16 %v8774
    %v9679 = vunpack.c.h.b16 %v8774
    %v9680 = vunpack.c.l.b16 %v8775
    %v9681 = vunpack.c.h.b16 %v8775
    %v9682 = vunpack.c.l.b16 %v8776
    %v9683 = vunpack.c.l.b16 %v8777
    %v9684 = vunpack.c.h.b16 %v8777
    %v9685 = vunpack.c.l.b16 %v8778
    %v9686 = vunpack.c.h.b16 %v8778
    %v9687 = vunpack.c.l.b16 %v8779
    %v9688 = vunpack.c.h.b16 %v8779
    %v9689 = vunpack.c.l.b16 %v8780
    %v9690 = vunpack.c.l.b16 %v8781
    %v9691 = vunpack.c.h.b16 %v8781
    %v9692 = vunpack.c.l.b16 %v8782
    %v9693 = vunpack.c.h.b16 %v8782
    %v9694 = vunpack.c.l.b16 %v8783
    %v9695 = vunpack.c.h.b16 %v8783
    %v9696 = vunpack.c.l.b16 %v8784
    %v9697 = vunpack.c.l.b16 %v8785
    %v9698 = vunpack.c.h.b16 %v8785
    %v9699 = vunpack.c.l.b16 %v8786
    %v9700 = vunpack.c.h.b16 %v8786
    %v9701 = vunpack.c.l.b16 %v8787
    %v9702 = vunpack.c.h.b16 %v8787
    %v9703 = vunpack.c.l.b16 %v8788
    %v9704 = vunpack.c.l.b16 %v8789
    %v9705 = vunpack.c.h.b16 %v8789
    %v9706 = vunpack.c.l.b16 %v8790
    %v9707 = vunpack.c.h.b16 %v8790
    %v9708 = vunpack.c.l.b16 %v8791
    %v9709 = vunpack.c.h.b16 %v8791
    %v9710 = vunpack.c.l.b16 %v8792
    %v9711 = vunpack.c.l.b16 %v8793
    %v9712 = vunpack.c.h.b16 %v8793
    %v9713 = vunpack.c.l.b16 %v8794
    %v9714 = vunpack.c.h.b16 %v8794
    %v9715 = vunpack.c.l.b16 %v8795
    %v9716 = vunpack.c.h.b16 %v8795
    %v9717 = vunpack.c.l.b16 %v8796
    %v9718 = vunpack.c.l.b16 %v8797
    %v9719 = vunpack.c.h.b16 %v8797
    %v9720 = vunpack.c.l.b16 %v8798
    %v9721 = vunpack.c.h.b16 %v8798
    %v9722 = vunpack.c.l.b16 %v8799
    %v9723 = vunpack.c.h.b16 %v8799
    %v9724 = vunpack.c.l.b16 %v8800
    %v9725 = vunpack.c.l.b16 %v8801
    %v9726 = vunpack.c.h.b16 %v8801
    %v9727 = vunpack.c.l.b16 %v8802
    %v9728 = vunpack.c.h.b16 %v8802
    %v9729 = vunpack.c.l.b16 %v8803
    %v9730 = vunpack.c.h.b16 %v8803
    %v9731 = vunpack.c.l.b16 %v8804
    %v9732 = vunpack.c.l.b16 %v8805
    %v9733 = vunpack.c.h.b16 %v8805
    %v9734 = vunpack.c.l.b16 %v8806
    %v9735 = vunpack.c.h.b16 %v8806
    %v9736 = vunpack.c.l.b16 %v8807
    %v9737 = vunpack.c.h.b16 %v8807
    %v9738 = vunpack.c.l.b16 %v8808
    %v9739 = vunpack.c.l.b16 %v8809
    %v9740 = vunpack.c.h.b16 %v8809
    %v9741 = vunpack.c.l.b16 %v8810
    %v9742 = vunpack.c.h.b16 %v8810
    %v9743 = vunpack.c.l.b16 %v8811
    %v9744 = vunpack.c.h.b16 %v8811
    %v9745 = vunpack.c.l.b16 %v8812
    %v9746 = vunpack.c.l.b16 %v8813
    %v9747 = vunpack.c.h.b16 %v8813
    %v9748 = vunpack.c.l.b16 %v8814
    %v9749 = vunpack.c.h.b16 %v8814
    %v9750 = vunpack.c.l.b16 %v8815
    %v9751 = vunpack.c.h.b16 %v8815
    %v9752 = vunpack.c.l.b16 %v8816
    %v9753 = vunpack.c.l.b16 %v8817
    %v9754 = vunpack.c.h.b16 %v8817
    %v9755 = vunpack.c.l.b16 %v8818
    %v9756 = vunpack.c.h.b16 %v8818
    %v9757 = vunpack.c.l.b16 %v8819
    %v9758 = vunpack.c.h.b16 %v8819
    %v9759 = vunpack.c.l.b16 %v8820
    %v9760 = vunpack.c.l.b16 %v8821
    %v9761 = vunpack.c.h.b16 %v8821
    %v9762 = vunpack.c.l.b16 %v8822
    %v9763 = vunpack.c.h.b16 %v8822
    %v9764 = vunpack.c.l.b16 %v8823
    %v9765 = vunpack.c.h.b16 %v8823
    %v9766 = vunpack.c.l.b16 %v8824
    %v9767 = vunpack.c.l.b16 %v8825
    %v9768 = vunpack.c.h.b16 %v8825
    %v9769 = vunpack.c.l.b16 %v8826
    %v9770 = vunpack.c.h.b16 %v8826
    %v9771 = vunpack.c.l.b16 %v8827
    %v9772 = vunpack.c.h.b16 %v8827
    %v9773 = vunpack.c.l.b16 %v8828
    %v9774 = vunpack.c.l.b16 %v8829
    %v9775 = vunpack.c.h.b16 %v8829
    %v9776 = vunpack.c.l.b16 %v8830
    %v9777 = vunpack.c.h.b16 %v8830
    %v9778 = vunpack.c.l.b16 %v8831
    %v9779 = vunpack.c.h.b16 %v8831
    %v9780 = vunpack.c.l.b16 %v8832
    %v9781 = vunpack.c.l.b16 %v8833
    %v9782 = vunpack.c.h.b16 %v8833
    %v9783 = vunpack.c.l.b16 %v8834
    %v9784 = vunpack.c.h.b16 %v8834
    %v9785 = vunpack.c.l.b16 %v8835
    %v9786 = vunpack.c.h.b16 %v8835
    %v9787 = vunpack.c.l.b16 %v8836
    %v9788 = vunpack.c.l.b16 %v8837
    %v9789 = vunpack.c.h.b16 %v8837
    %v9790 = vunpack.c.l.b16 %v8838
    %v9791 = vunpack.c.h.b16 %v8838
    %v9792 = vunpack.c.l.b16 %v8839
    %v9793 = vunpack.c.h.b16 %v8839
    %v9794 = vunpack.c.l.b16 %v8840
    %v9795 = vunpack.c.l.b16 %v8841
    %v9796 = vunpack.c.h.b16 %v8841
    %v9797 = vunpack.c.l.b16 %v8842
    %v9798 = vunpack.c.h.b16 %v8842
    %v9799 = vunpack.c.l.b16 %v8843
    %v9800 = vunpack.c.h.b16 %v8843
    %v9801 = vunpack.c.l.b16 %v8844
    %v9802 = vunpack.c.l.b16 %v8845
    %v9803 = vunpack.c.h.b16 %v8845
    %v9804 = vunpack.c.l.b16 %v8846
    %v9805 = vunpack.c.h.b16 %v8846
    %v9806 = vunpack.c.l.b16 %v8847
    %v9807 = vunpack.c.h.b16 %v8847
    %v9808 = vunpack.c.l.b16 %v8848
    %v9809 = vunpack.c.l.b16 %v8849
    %v9810 = vunpack.c.h.b16 %v8849
    %v9811 = vunpack.c.l.b16 %v8850
    %v9812 = vunpack.c.h.b16 %v8850
    %v9813 = vunpack.c.l.b16 %v8851
    %v9814 = vunpack.c.h.b16 %v8851
    %v9815 = vunpack.c.l.b16 %v8852
    %v9816 = vunpack.c.l.b16 %v8853
    %v9817 = vunpack.c.h.b16 %v8853
    %v9818 = vunpack.c.l.b16 %v8854
    %v9819 = vunpack.c.h.b16 %v8854
    %v9820 = vunpack.c.l.b16 %v8855
    %v9821 = vunpack.c.h.b16 %v8855
    %v9822 = vunpack.c.l.b16 %v8856
    %v9823 = vunpack.c.l.b16 %v8857
    %v9824 = vunpack.c.h.b16 %v8857
    %v9825 = vunpack.c.l.b16 %v8858
    %v9826 = vunpack.c.h.b16 %v8858
    %v9827 = vunpack.c.l.b16 %v8859
    %v9828 = vunpack.c.h.b16 %v8859
    %v9829 = vunpack.c.l.b16 %v8860
    %v9830 = vunpack.c.l.b16 %v8861
    %v9831 = vunpack.c.h.b16 %v8861
    %v9832 = vunpack.c.l.b16 %v8862
    %v9833 = vunpack.c.h.b16 %v8862
    %v9834 = vunpack.c.l.b16 %v8863
    %v9835 = vunpack.c.h.b16 %v8863
    %v9836 = vunpack.c.l.b16 %v8864
    %v9837 = vunpack.c.l.b16 %v8865
    %v9838 = vunpack.c.h.b16 %v8865
    %v9839 = vunpack.c.l.b16 %v8866
    %v9840 = vunpack.c.h.b16 %v8866
    %v9841 = vunpack.c.l.b16 %v8867
    %v9842 = vunpack.c.h.b16 %v8867
    %v9843 = vunpack.c.l.b16 %v8868
    %v9844 = vunpack.c.l.b16 %v8869
    %v9845 = vunpack.c.h.b16 %v8869
    %v9846 = vunpack.c.l.b16 %v8870
    %v9847 = vunpack.c.h.b16 %v8870
    %v9848 = vunpack.c.l.b16 %v8871
    %v9849 = vunpack.c.h.b16 %v8871
    %v9850 = vunpack.c.l.b16 %v8872
    %v9851 = vunpack.c.l.b16 %v8873
    %v9852 = vunpack.c.h.b16 %v8873
    %v9853 = vunpack.c.l.b16 %v8874
    %v9854 = vunpack.c.h.b16 %v8874
    %v9855 = vunpack.c.l.b16 %v8875
    %v9856 = vunpack.c.h.b16 %v8875
    %v9857 = vunpack.c.l.b16 %v8876
    %v9858 = vunpack.c.l.b16 %v8877
    %v9859 = vunpack.c.h.b16 %v8877
    %v9860 = vunpack.c.l.b16 %v8878
    %v9861 = vunpack.c.h.b16 %v8878
    %v9862 = vunpack.c.l.b16 %v8879
    %v9863 = vunpack.c.h.b16 %v8879
    %v9864 = vunpack.c.l.b16 %v8880
    %v9865 = vunpack.c.l.b16 %v8881
    %v9866 = vunpack.c.h.b16 %v8881
    %v9867 = vunpack.c.l.b16 %v8882
    %v9868 = vunpack.c.h.b16 %v8882
    %v9869 = vunpack.c.l.b16 %v8883
    %v9870 = vunpack.c.h.b16 %v8883
    %v9871 = vunpack.c.l.b16 %v8884
    %v9872 = vunpack.c.l.b16 %v8885
    %v9873 = vunpack.c.h.b16 %v8885
    %v9874 = vunpack.c.l.b16 %v8886
    %v9875 = vunpack.c.h.b16 %v8886
    %v9876 = vunpack.c.l.b16 %v8887
    %v9877 = vunpack.c.h.b16 %v8887
    %v9878 = vunpack.c.l.b16 %v8888
    %v9879 = vunpack.c.l.b16 %v8889
    %v9880 = vunpack.c.h.b16 %v8889
    %v9881 = vunpack.c.l.b16 %v8890
    %v9882 = vunpack.c.h.b16 %v8890
    %v9883 = vunpack.c.l.b16 %v8891
    %v9884 = vunpack.c.h.b16 %v8891
    %v9885 = vunpack.c.l.b16 %v8892
    %v9886 = vunpack.c.l.b16 %v8893
    %v9887 = vunpack.c.h.b16 %v8893
    %v9888 = vunpack.c.l.b16 %v8894
    %v9889 = vunpack.c.h.b16 %v8894
    %v9890 = vunpack.c.l.b16 %v8895
    %v9891 = vunpack.c.h.b16 %v8895
    %v9892 = vunpack.c.l.b16 %v8896
    %v9893 = vunpack.c.l.b16 %v8897
    %v9894 = vunpack.c.h.b16 %v8897
    %v9895 = vunpack.c.l.b16 %v8898
    %v9896 = vunpack.c.h.b16 %v8898
    %v9897 = vunpack.c.l.b16 %v8899
    %v9898 = vunpack.c.h.b16 %v8899
    %v9899 = vunpack.c.l.b16 %v8900
    %v9900 = vunpack.c.l.b16 %v8901
    %v9901 = vunpack.c.h.b16 %v8901
    %v9902 = vunpack.c.l.b16 %v8902
    %v9903 = vunpack.c.h.b16 %v8902
    %v9904 = vunpack.c.l.b16 %v8903
    %v9905 = vunpack.c.h.b16 %v8903
    %v9906 = vunpack.c.l.b16 %v8904
    %v9907 = vunpack.c.l.b16 %v8905
    %v9908 = vunpack.c.h.b16 %v8905
    %v9909 = vunpack.c.l.b16 %v8906
    %v9910 = vunpack.c.h.b16 %v8906
    %v9911 = vunpack.c.l.b16 %v8907
    %v9912 = vunpack.c.h.b16 %v8907
    %v9913 = vunpack.c.l.b16 %v8908
    %v9914 = vunpack.c.l.b16 %v8909
    %v9915 = vunpack.c.h.b16 %v8909
    %v9916 = vunpack.c.l.b16 %v8910
    %v9917 = vunpack.c.h.b16 %v8910
    %v9918 = vunpack.c.l.b16 %v8911
    %v9919 = vunpack.c.h.b16 %v8911
    %v9920 = vunpack.c.l.b16 %v8912
    %v9921 = vunpack.c.l.b16 %v8913
    %v9922 = vunpack.c.h.b16 %v8913
    %v9923 = vunpack.c.l.b16 %v8914
    %v9924 = vunpack.c.h.b16 %v8914
    %v9925 = vunpack.c.l.b16 %v8915
    %v9926 = vunpack.c.h.b16 %v8915
    %v9927 = vunpack.c.l.b16 %v8916
    %v9928 = vunpack.c.l.b16 %v8917
    %v9929 = vunpack.c.h.b16 %v8917
    %v9930 = vunpack.c.l.b16 %v8918
    %v9931 = vunpack.c.h.b16 %v8918
    %v9932 = vunpack.c.l.b16 %v8919
    %v9933 = vunpack.c.h.b16 %v8919
    %v9934 = vunpack.c.l.b16 %v8920
    %v9935 = vunpack.c.l.b16 %v8921
    %v9936 = vunpack.c.h.b16 %v8921
    %v9937 = vunpack.c.l.b16 %v8922
    %v9938 = vunpack.c.h.b16 %v8922
    %v9939 = vunpack.c.l.b16 %v8923
    %v9940 = vunpack.c.h.b16 %v8923
    %v9941 = vunpack.c.l.b16 %v8924
    %v9942 = vunpack.c.l.b16 %v8925
    %v9943 = vunpack.c.h.b16 %v8925
    %v9944 = vunpack.c.l.b16 %v8926
    %v9945 = vunpack.c.h.b16 %v8926
    %v9946 = vunpack.c.l.b16 %v8927
    %v9947 = vunpack.c.h.b16 %v8927
    %v9948 = vunpack.c.l.b16 %v8928
    %v9949 = vunpack.c.l.b16 %v8929
    %v9950 = vunpack.c.h.b16 %v8929
    %v9951 = vunpack.c.l.b16 %v8930
    %v9952 = vunpack.c.h.b16 %v8930
    %v9953 = vunpack.c.l.b16 %v8931
    %v9954 = vunpack.c.h.b16 %v8931
    %v9955 = vunpack.c.l.b16 %v8932
    %v9956 = vunpack.c.l.b16 %v8933
    %v9957 = vunpack.c.h.b16 %v8933
    %v9958 = vunpack.c.l.b16 %v8934
    %v9959 = vunpack.c.h.b16 %v8934
    %v9960 = vunpack.c.l.b16 %v8935
    %v9961 = vunpack.c.h.b16 %v8935
    %v9962 = vunpack.c.l.b16 %v8936
    %v9963 = vunpack.c.l.b16 %v8937
    %v9964 = vunpack.c.h.b16 %v8937
    %v9965 = vunpack.c.l.b16 %v8938
    %v9966 = vunpack.c.h.b16 %v8938
    %v9967 = vunpack.c.l.b16 %v8939
    %v9968 = vunpack.c.h.b16 %v8939
    %v9969 = vunpack.c.l.b16 %v8940
    %v9970 = vunpack.c.l.b16 %v8941
    %v9971 = vunpack.c.h.b16 %v8941
    %v9972 = vunpack.c.l.b16 %v8942
    %v9973 = vunpack.c.h.b16 %v8942
    %v9974 = vunpack.c.l.b16 %v8943
    %v9975 = vunpack.c.h.b16 %v8943
    %v9976 = vunpack.c.l.b16 %v8944
    %v9977 = vunpack.c.l.b16 %v8945
    %v9978 = vunpack.c.h.b16 %v8945
    %v9979 = vunpack.c.l.b16 %v8946
    %v9980 = vunpack.c.h.b16 %v8946
    %v9981 = vunpack.c.l.b16 %v8947
    %v9982 = vunpack.c.h.b16 %v8947
    %v9983 = vunpack.c.l.b16 %v8948
    %v9984 = vunpack.c.l.b16 %v8949
    %v9985 = vunpack.c.h.b16 %v8949
    %v9986 = vunpack.c.l.b16 %v8950
    %v9987 = vunpack.c.h.b16 %v8950
    %v9988 = vunpack.c.l.b16 %v8951
    %v9989 = vunpack.c.h.b16 %v8951
    %v9990 = vunpack.c.l.b16 %v8952
    %v9991 = vunpack.c.l.b16 %v8953
    %v9992 = vunpack.c.h.b16 %v8953
    %v9993 = vunpack.c.l.b16 %v8954
    %v9994 = vunpack.c.h.b16 %v8954
    %v9995 = vunpack.c.l.b16 %v8955
    %v9996 = vunpack.c.h.b16 %v8955
    %v9997 = vunpack.c.l.b16 %v8956
    %v9998 = vunpack.c.l.b16 %v8957
    %v9999 = vunpack.c.h.b16 %v8957
    %v10000 = vunpack.c.l.b16 %v8958
    %v10001 = vunpack.c.h.b16 %v8958
    %v10002 = vunpack.c.l.b16 %v8959
    %v10003 = vunpack.c.h.b16 %v8959
    %v10004 = vunpack.c.l.b16 %v8960
    %v10005 = vunpack.c.l.b16 %v8961
    %v10006 = vunpack.c.h.b16 %v8961
    %v10007 = vunpack.c.l.b16 %v8962
    %v10008 = vunpack.c.h.b16 %v8962
    %v10009 = vunpack.c.l.b16 %v8963
    %v10010 = vunpack.c.h.b16 %v8963
    %v10011 = vunpack.c.l.b16 %v8964
    %v10012 = vunpack.c.l.b16 %v8965
    %v10013 = vunpack.c.h.b16 %v8965
    %v10014 = vunpack.c.l.b16 %v8966
    %v10015 = vunpack.c.h.b16 %v8966
    %v10016 = vunpack.c.l.b16 %v8967
    %v10017 = vunpack.c.h.b16 %v8967
    %v10018 = vunpack.c.l.b16 %v8968
    %v10019 = vunpack.c.l.b16 %v8969
    %v10020 = vunpack.c.h.b16 %v8969
    %v10021 = vunpack.c.l.b16 %v8970
    %v10022 = vunpack.c.h.b16 %v8970
    %v10023 = vunpack.c.l.b16 %v8971
    %v10024 = vunpack.c.h.b16 %v8971
    %v10025 = vunpack.c.l.b16 %v8972
    %v10026 = vunpack.c.l.b16 %v8973
    %v10027 = vunpack.c.h.b16 %v8973
    %v10028 = vunpack.c.l.b16 %v8974
    %v10029 = vunpack.c.h.b16 %v8974
    %v10030 = vunpack.c.l.b16 %v8975
    %v10031 = vunpack.c.h.b16 %v8975
    %v10032 = vunpack.c.l.b16 %v8976
    %v10033 = vunpack.c.l.b16 %v8977
    %v10034 = vunpack.c.h.b16 %v8977
    %v10035 = vunpack.c.l.b16 %v8978
    %v10036 = vunpack.c.h.b16 %v8978
    %v10037 = vunpack.c.l.b16 %v8979
    %v10038 = vunpack.c.h.b16 %v8979
    %v10039 = vunpack.c.l.b16 %v8980
    %v10040 = vunpack.c.l.b16 %v8981
    %v10041 = vunpack.c.h.b16 %v8981
    %v10042 = vunpack.c.l.b16 %v8982
    %v10043 = vunpack.c.h.b16 %v8982
    %v10044 = vunpack.c.l.b16 %v8983
    %v10045 = vunpack.c.h.b16 %v8983
    %v10046 = vunpack.c.l.b16 %v8984
    %v10047 = vunpack.c.l.b16 %v8985
    %v10048 = vunpack.c.h.b16 %v8985
    %v10049 = vunpack.c.l.b16 %v8986
    %v10050 = vunpack.c.h.b16 %v8986
    %v10051 = vunpack.c.l.b16 %v8987
    %v10052 = vunpack.c.h.b16 %v8987
    %v10053 = vunpack.c.l.b16 %v8988
    %v10054 = vunpack.c.l.b16 %v8989
    %v10055 = vunpack.c.h.b16 %v8989
    %v10056 = vunpack.c.l.b16 %v8990
    %v10057 = vunpack.c.h.b16 %v8990
    %v10058 = vunpack.c.l.b16 %v8991
    %v10059 = vunpack.c.h.b16 %v8991
    %v10060 = vunpack.c.l.b16 %v8992
    %v10061 = vunpack.c.l.b16 %v8993
    %v10062 = vunpack.c.h.b16 %v8993
    %v10063 = vunpack.c.l.b16 %v8994
    %v10064 = vunpack.c.h.b16 %v8994
    %v10065 = vunpack.c.l.b16 %v8995
    %v10066 = vunpack.c.h.b16 %v8995
    %v10067 = vunpack.c.l.b16 %v8996
    %v10068 = vunpack.c.l.b16 %v8997
    %v10069 = vunpack.c.h.b16 %v8997
    %v10070 = vunpack.c.l.b16 %v8998
    %v10071 = vunpack.c.h.b16 %v8998
    %v10072 = vunpack.c.l.b16 %v8999
    %v10073 = vunpack.c.h.b16 %v8999
    %v10074 = vunpack.c.l.b16 %v9000
    %v10075 = vunpack.c.l.b16 %v9001
    %v10076 = vunpack.c.h.b16 %v9001
    %v10077 = vunpack.c.l.b16 %v9002
    %v10078 = vunpack.c.h.b16 %v9002
    %v10079 = vunpack.c.l.b16 %v9003
    %v10080 = vunpack.c.h.b16 %v9003
    %v10081 = vunpack.c.l.b16 %v9004
    %v10082 = vunpack.c.l.b16 %v9005
    %v10083 = vunpack.c.h.b16 %v9005
    %v10084 = vunpack.c.l.b16 %v9006
    %v10085 = vunpack.c.h.b16 %v9006
    %v10086 = vunpack.c.l.b16 %v9007
    %v10087 = vunpack.c.h.b16 %v9007
    %v10088 = vunpack.c.l.b16 %v9008
    %v10089 = vunpack.c.l.b16 %v9009
    %v10090 = vunpack.c.h.b16 %v9009
    %v10091 = vunpack.c.l.b16 %v9010
    %v10092 = vunpack.c.h.b16 %v9010
    %v10093 = vunpack.c.l.b16 %v9011
    %v10094 = vunpack.c.h.b16 %v9011
    %v10095 = vunpack.c.l.b16 %v9012
    %v10096 = vunpack.c.l.b16 %v9013
    %v10097 = vunpack.c.h.b16 %v9013
    %v10098 = vunpack.c.l.b16 %v9014
    %v10099 = vunpack.c.h.b16 %v9014
    %v10100 = vunpack.c.l.b16 %v9015
    %v10101 = vunpack.c.h.b16 %v9015
    %v10102 = vunpack.c.l.b16 %v9016
    %v10103 = vunpack.c.l.b16 %v9017
    %v10104 = vunpack.c.h.b16 %v9017
    %v10105 = vunpack.c.l.b16 %v9018
    %v10106 = vunpack.c.h.b16 %v9018
    %v10107 = vunpack.c.l.b16 %v9019
    %v10108 = vunpack.c.h.b16 %v9019
    %v10109 = vunpack.c.l.b16 %v9020
    %v10110 = vunpack.c.l.b16 %v9021
    %v10111 = vunpack.c.h.b16 %v9021
    %v10112 = vunpack.c.l.b16 %v9022
    %v10113 = vunpack.c.h.b16 %v9022
    %v10114 = vunpack.c.l.b16 %v9023
    %v10115 = vunpack.c.h.b16 %v9023
    %v10116 = vunpack.c.l.b16 %v9024
    %v10117 = vpack.c.b16 %v9438, %v9431
    %v10118 = vpack.c.b16 %v9439, %v9432
    %v10119 = vpack.c.b16 %v9440, %v9433
    %v10120 = vpack.c.b16 %v9441, %v9434
    %v10121 = vpack.c.b16 %v9442, %v9435
    %v10122 = vpack.c.b16 %v9443, %v9436
    %v10123 = vpack.c.b16 %v9444, %v9437
    %v10124 = vpack.c.b16 %v9452, %v9445
    %v10125 = vpack.c.b16 %v9453, %v9446
    %v10126 = vpack.c.b16 %v9454, %v9447
    %v10127 = vpack.c.b16 %v9455, %v9448
    %v10128 = vpack.c.b16 %v9456, %v9449
    %v10129 = vpack.c.b16 %v9457, %v9450
    %v10130 = vpack.c.b16 %v9458, %v9451
    %v10131 = vpack.c.b16 %v9466, %v9459
    %v10132 = vpack.c.b16 %v9467, %v9460
    %v10133 = vpack.c.b16 %v9468, %v9461
    %v10134 = vpack.c.b16 %v9469, %v9462
    %v10135 = vpack.c.b16 %v9470, %v9463
    %v10136 = vpack.c.b16 %v9471, %v9464
    %v10137 = vpack.c.b16 %v9472, %v9465
    %v10138 = vpack.c.b16 %v9480, %v9473
    %v10139 = vpack.c.b16 %v9481, %v9474
    %v10140 = vpack.c.b16 %v9482, %v9475
    %v10141 = vpack.c.b16 %v9483, %v9476
    %v10142 = vpack.c.b16 %v9484, %v9477
    %v10143 = vpack.c.b16 %v9485, %v9478
    %v10144 = vpack.c.b16 %v9486, %v9479
    %v10145 = vpack.c.b16 %v9494, %v9487
    %v10146 = vpack.c.b16 %v9495, %v9488
    %v10147 = vpack.c.b16 %v9496, %v9489
    %v10148 = vpack.c.b16 %v9497, %v9490
    %v10149 = vpack.c.b16 %v9498, %v9491
    %v10150 = vpack.c.b16 %v9499, %v9492
    %v10151 = vpack.c.b16 %v9500, %v9493
    %v10152 = vpack.c.b16 %v9508, %v9501
    %v10153 = vpack.c.b16 %v9509, %v9502
    %v10154 = vpack.c.b16 %v9510, %v9503
    %v10155 = vpack.c.b16 %v9511, %v9504
    %v10156 = vpack.c.b16 %v9512, %v9505
    %v10157 = vpack.c.b16 %v9513, %v9506
    %v10158 = vpack.c.b16 %v9514, %v9507
    %v10159 = vpack.c.b16 %v9522, %v9515
    %v10160 = vpack.c.b16 %v9523, %v9516
    %v10161 = vpack.c.b16 %v9524, %v9517
    %v10162 = vpack.c.b16 %v9525, %v9518
    %v10163 = vpack.c.b16 %v9526, %v9519
    %v10164 = vpack.c.b16 %v9527, %v9520
    %v10165 = vpack.c.b16 %v9528, %v9521
    %v10166 = vpack.c.b16 %v9536, %v9529
    %v10167 = vpack.c.b16 %v9537, %v9530
    %v10168 = vpack.c.b16 %v9538, %v9531
    %v10169 = vpack.c.b16 %v9539, %v9532
    %v10170 = vpack.c.b16 %v9540, %v9533
    %v10171 = vpack.c.b16 %v9541, %v9534
    %v10172 = vpack.c.b16 %v9542, %v9535
    %v10173 = vpack.c.b16 %v9550, %v9543
    %v10174 = vpack.c.b16 %v9551, %v9544
    %v10175 = vpack.c.b16 %v9552, %v9545
    %v10176 = vpack.c.b16 %v9553, %v9546
    %v10177 = vpack.c.b16 %v9554, %v9547
    %v10178 = vpack.c.b16 %v9555, %v9548
    %v10179 = vpack.c.b16 %v9556, %v9549
    %v10180 = vpack.c.b16 %v9564, %v9557
    %v10181 = vpack.c.b16 %v9565, %v9558
    %v10182 = vpack.c.b16 %v9566, %v9559
    %v10183 = vpack.c.b16 %v9567, %v9560
    %v10184 = vpack.c.b16 %v9568, %v9561
    %v10185 = vpack.c.b16 %v9569, %v9562
    %v10186 = vpack.c.b16 %v9570, %v9563
    %v10187 = vpack.c.b16 %v9578, %v9571
    %v10188 = vpack.c.b16 %v9579, %v9572
    %v10189 = vpack.c.b16 %v9580, %v9573
    %v10190 = vpack.c.b16 %v9581, %v9574
    %v10191 = vpack.c.b16 %v9582, %v9575
    %v10192 = vpack.c.b16 %v9583, %v9576
    %v10193 = vpack.c.b16 %v9584, %v9577
    %v10194 = vpack.c.b16 %v9592, %v9585
    %v10195 = vpack.c.b16 %v9593, %v9586
    %v10196 = vpack.c.b16 %v9594, %v9587
    %v10197 = vpack.c.b16 %v9595, %v9588
    %v10198 = vpack.c.b16 %v9596, %v9589
    %v10199 = vpack.c.b16 %v9597, %v9590
    %v10200 = vpack.c.b16 %v9598, %v9591
    %v10201 = vpack.c.b16 %v9606, %v9599
    %v10202 = vpack.c.b16 %v9607, %v9600
    %v10203 = vpack.c.b16 %v9608, %v9601
    %v10204 = vpack.c.b16 %v9609, %v9602
    %v10205 = vpack.c.b16 %v9610, %v9603
    %v10206 = vpack.c.b16 %v9611, %v9604
    %v10207 = vpack.c.b16 %v9612, %v9605
    %v10208 = vpack.c.b16 %v9620, %v9613
    %v10209 = vpack.c.b16 %v9621, %v9614
    %v10210 = vpack.c.b16 %v9622, %v9615
    %v10211 = vpack.c.b16 %v9623, %v9616
    %v10212 = vpack.c.b16 %v9624, %v9617
    %v10213 = vpack.c.b16 %v9625, %v9618
    %v10214 = vpack.c.b16 %v9626, %v9619
    %v10215 = vpack.c.b16 %v9634, %v9627
    %v10216 = vpack.c.b16 %v9635, %v9628
    %v10217 = vpack.c.b16 %v9636, %v9629
    %v10218 = vpack.c.b16 %v9637, %v9630
    %v10219 = vpack.c.b16 %v9638, %v9631
    %v10220 = vpack.c.b16 %v9639, %v9632
    %v10221 = vpack.c.b16 %v9640, %v9633
    %v10222 = vpack.c.b16 %v9648, %v9641
    %v10223 = vpack.c.b16 %v9649, %v9642
    %v10224 = vpack.c.b16 %v9650, %v9643
    %v10225 = vpack.c.b16 %v9651, %v9644
    %v10226 = vpack.c.b16 %v9652, %v9645
    %v10227 = vpack.c.b16 %v9653, %v9646
    %v10228 = vpack.c.b16 %v9654, %v9647
    %v10229 = vpack.c.b16 %v9662, %v9655
    %v10230 = vpack.c.b16 %v9663, %v9656
    %v10231 = vpack.c.b16 %v9664, %v9657
    %v10232 = vpack.c.b16 %v9665, %v9658
    %v10233 = vpack.c.b16 %v9666, %v9659
    %v10234 = vpack.c.b16 %v9667, %v9660
    %v10235 = vpack.c.b16 %v9668, %v9661
    %v10236 = vpack.c.b16 %v9676, %v9669
    %v10237 = vpack.c.b16 %v9677, %v9670
    %v10238 = vpack.c.b16 %v9678, %v9671
    %v10239 = vpack.c.b16 %v9679, %v9672
    %v10240 = vpack.c.b16 %v9680, %v9673
    %v10241 = vpack.c.b16 %v9681, %v9674
    %v10242 = vpack.c.b16 %v9682, %v9675
    %v10243 = vpack.c.b16 %v9690, %v9683
    %v10244 = vpack.c.b16 %v9691, %v9684
    %v10245 = vpack.c.b16 %v9692, %v9685
    %v10246 = vpack.c.b16 %v9693, %v9686
    %v10247 = vpack.c.b16 %v9694, %v9687
    %v10248 = vpack.c.b16 %v9695, %v9688
    %v10249 = vpack.c.b16 %v9696, %v9689
    %v10250 = vpack.c.b16 %v9704, %v9697
    %v10251 = vpack.c.b16 %v9705, %v9698
    %v10252 = vpack.c.b16 %v9706, %v9699
    %v10253 = vpack.c.b16 %v9707, %v9700
    %v10254 = vpack.c.b16 %v9708, %v9701
    %v10255 = vpack.c.b16 %v9709, %v9702
    %v10256 = vpack.c.b16 %v9710, %v9703
    %v10257 = vpack.c.b16 %v9718, %v9711
    %v10258 = vpack.c.b16 %v9719, %v9712
    %v10259 = vpack.c.b16 %v9720, %v9713
    %v10260 = vpack.c.b16 %v9721, %v9714
    %v10261 = vpack.c.b16 %v9722, %v9715
    %v10262 = vpack.c.b16 %v9723, %v9716
    %v10263 = vpack.c.b16 %v9724, %v9717
    %v10264 = vpack.c.b16 %v9732, %v9725
    %v10265 = vpack.c.b16 %v9733, %v9726
    %v10266 = vpack.c.b16 %v9734, %v9727
    %v10267 = vpack.c.b16 %v9735, %v9728
    %v10268 = vpack.c.b16 %v9736, %v9729
    %v10269 = vpack.c.b16 %v9737, %v9730
    %v10270 = vpack.c.b16 %v9738, %v9731
    %v10271 = vpack.c.b16 %v9746, %v9739
    %v10272 = vpack.c.b16 %v9747, %v9740
    %v10273 = vpack.c.b16 %v9748, %v9741
    %v10274 = vpack.c.b16 %v9749, %v9742
    %v10275 = vpack.c.b16 %v9750, %v9743
    %v10276 = vpack.c.b16 %v9751, %v9744
    %v10277 = vpack.c.b16 %v9752, %v9745
    %v10278 = vpack.c.b16 %v9760, %v9753
    %v10279 = vpack.c.b16 %v9761, %v9754
    %v10280 = vpack.c.b16 %v9762, %v9755
    %v10281 = vpack.c.b16 %v9763, %v9756
    %v10282 = vpack.c.b16 %v9764, %v9757
    %v10283 = vpack.c.b16 %v9765, %v9758
    %v10284 = vpack.c.b16 %v9766, %v9759
    %v10285 = vpack.c.b16 %v9774, %v9767
    %v10286 = vpack.c.b16 %v9775, %v9768
    %v10287 = vpack.c.b16 %v9776, %v9769
    %v10288 = vpack.c.b16 %v9777, %v9770
    %v10289 = vpack.c.b16 %v9778, %v9771
    %v10290 = vpack.c.b16 %v9779, %v9772
    %v10291 = vpack.c.b16 %v9780, %v9773
    %v10292 = vpack.c.b16 %v9788, %v9781
    %v10293 = vpack.c.b16 %v9789, %v9782
    %v10294 = vpack.c.b16 %v9790, %v9783
    %v10295 = vpack.c.b16 %v9791, %v9784
    %v10296 = vpack.c.b16 %v9792, %v9785
    %v10297 = vpack.c.b16 %v9793, %v9786
    %v10298 = vpack.c.b16 %v9794, %v9787
    %v10299 = vpack.c.b16 %v9802, %v9795
    %v10300 = vpack.c.b16 %v9803, %v9796
    %v10301 = vpack.c.b16 %v9804, %v9797
    %v10302 = vpack.c.b16 %v9805, %v9798
    %v10303 = vpack.c.b16 %v9806, %v9799
    %v10304 = vpack.c.b16 %v9807, %v9800
    %v10305 = vpack.c.b16 %v9808, %v9801
    %v10306 = vpack.c.b16 %v9816, %v9809
    %v10307 = vpack.c.b16 %v9817, %v9810
    %v10308 = vpack.c.b16 %v9818, %v9811
    %v10309 = vpack.c.b16 %v9819, %v9812
    %v10310 = vpack.c.b16 %v9820, %v9813
    %v10311 = vpack.c.b16 %v9821, %v9814
    %v10312 = vpack.c.b16 %v9822, %v9815
    %v10313 = vpack.c.b16 %v9830, %v9823
    %v10314 = vpack.c.b16 %v9831, %v9824
    %v10315 = vpack.c.b16 %v9832, %v9825
    %v10316 = vpack.c.b16 %v9833, %v9826
    %v10317 = vpack.c.b16 %v9834, %v9827
    %v10318 = vpack.c.b16 %v9835, %v9828
    %v10319 = vpack.c.b16 %v9836, %v9829
    %v10320 = vpack.c.b16 %v9844, %v9837
    %v10321 = vpack.c.b16 %v9845, %v9838
    %v10322 = vpack.c.b16 %v9846, %v9839
    %v10323 = vpack.c.b16 %v9847, %v9840
    %v10324 = vpack.c.b16 %v9848, %v9841
    %v10325 = vpack.c.b16 %v9849, %v9842
    %v10326 = vpack.c.b16 %v9850, %v9843
    %v10327 = vpack.c.b16 %v9858, %v9851
    %v10328 = vpack.c.b16 %v9859, %v9852
    %v10329 = vpack.c.b16 %v9860, %v9853
    %v10330 = vpack.c.b16 %v9861, %v9854
    %v10331 = vpack.c.b16 %v9862, %v9855
    %v10332 = vpack.c.b16 %v9863, %v9856
    %v10333 = vpack.c.b16 %v9864, %v9857
    %v10334 = vpack.c.b16 %v9872, %v9865
    %v10335 = vpack.c.b16 %v9873, %v9866
    %v10336 = vpack.c.b16 %v9874, %v9867
    %v10337 = vpack.c.b16 %v9875, %v9868
    %v10338 = vpack.c.b16 %v9876, %v9869
    %v10339 = vpack.c.b16 %v9877, %v9870
    %v10340 = vpack.c.b16 %v9878, %v9871
    %v10341 = vpack.c.b16 %v9886, %v9879
    %v10342 = vpack.c.b16 %v9887, %v9880
    %v10343 = vpack.c.b16 %v9888, %v9881
    %v10344 = vpack.c.b16 %v9889, %v9882
    %v10345 = vpack.c.b16 %v9890, %v9883
    %v10346 = vpack.c.b16 %v9891, %v9884
    %v10347 = vpack.c.b16 %v9892, %v9885
    %v10348 = vpack.c.b16 %v9900, %v9893
    %v10349 = vpack.c.b16 %v9901, %v9894
    %v10350 = vpack.c.b16 %v9902, %v9895
    %v10351 = vpack.c.b16 %v9903, %v9896
    %v10352 = vpack.c.b16 %v9904, %v9897
    %v10353 = vpack.c.b16 %v9905, %v9898
    %v10354 = vpack.c.b16 %v9906, %v9899
    %v10355 = vpack.c.b16 %v9914, %v9907
    %v10356 = vpack.c.b16 %v9915, %v9908
    %v10357 = vpack.c.b16 %v9916, %v9909
    %v10358 = vpack.c.b16 %v9917, %v9910
    %v10359 = vpack.c.b16 %v9918, %v9911
    %v10360 = vpack.c.b16 %v9919, %v9912
    %v10361 = vpack.c.b16 %v9920, %v9913
    %v10362 = vpack.c.b16 %v9928, %v9921
    %v10363 = vpack.c.b16 %v9929, %v9922
    %v10364 = vpack.c.b16 %v9930, %v9923
    %v10365 = vpack.c.b16 %v9931, %v9924
    %v10366 = vpack.c.b16 %v9932, %v9925
    %v10367 = vpack.c.b16 %v9933, %v9926
    %v10368 = vpack.c.b16 %v9934, %v9927
    %v10369 = vpack.c.b16 %v9942, %v9935
    %v10370 = vpack.c.b16 %v9943, %v9936
    %v10371 = vpack.c.b16 %v9944, %v9937
    %v10372 = vpack.c.b16 %v9945, %v9938
    %v10373 = vpack.c.b16 %v9946, %v9939
    %v10374 = vpack.c.b16 %v9947, %v9940
    %v10375 = vpack.c.b16 %v9948, %v9941
    %v10376 = vpack.c.b16 %v9956, %v9949
    %v10377 = vpack.c.b16 %v9957, %v9950
    %v10378 = vpack.c.b16 %v9958, %v9951
    %v10379 = vpack.c.b16 %v9959, %v9952
    %v10380 = vpack.c.b16 %v9960, %v9953
    %v10381 = vpack.c.b16 %v9961, %v9954
    %v10382 = vpack.c.b16 %v9962, %v9955
    %v10383 = vpack.c.b16 %v9970, %v9963
    %v10384 = vpack.c.b16 %v9971, %v9964
    %v10385 = vpack.c.b16 %v9972, %v9965
    %v10386 = vpack.c.b16 %v9973, %v9966
    %v10387 = vpack.c.b16 %v9974, %v9967
    %v10388 = vpack.c.b16 %v9975, %v9968
    %v10389 = vpack.c.b16 %v9976, %v9969
    %v10390 = vpack.c.b16 %v9984, %v9977
    %v10391 = vpack.c.b16 %v9985, %v9978
    %v10392 = vpack.c.b16 %v9986, %v9979
    %v10393 = vpack.c.b16 %v9987, %v9980
    %v10394 = vpack.c.b16 %v9988, %v9981
    %v10395 = vpack.c.b16 %v9989, %v9982
    %v10396 = vpack.c.b16 %v9990, %v9983
    %v10397 = vpack.c.b16 %v9998, %v9991
    %v10398 = vpack.c.b16 %v9999, %v9992
    %v10399 = vpack.c.b16 %v10000, %v9993
    %v10400 = vpack.c.b16 %v10001, %v9994
    %v10401 = vpack.c.b16 %v10002, %v9995
    %v10402 = vpack.c.b16 %v10003, %v9996
    %v10403 = vpack.c.b16 %v10004, %v9997
    %v10404 = vpack.c.b16 %v10012, %v10005
    %v10405 = vpack.c.b16 %v10013, %v10006
    %v10406 = vpack.c.b16 %v10014, %v10007
    %v10407 = vpack.c.b16 %v10015, %v10008
    %v10408 = vpack.c.b16 %v10016, %v10009
    %v10409 = vpack.c.b16 %v10017, %v10010
    %v10410 = vpack.c.b16 %v10018, %v10011
    %v10411 = vpack.c.b16 %v10026, %v10019
    %v10412 = vpack.c.b16 %v10027, %v10020
    %v10413 = vpack.c.b16 %v10028, %v10021
    %v10414 = vpack.c.b16 %v10029, %v10022
    %v10415 = vpack.c.b16 %v10030, %v10023
    %v10416 = vpack.c.b16 %v10031, %v10024
    %v10417 = vpack.c.b16 %v10032, %v10025
    %v10418 = vpack.c.b16 %v10040, %v10033
    %v10419 = vpack.c.b16 %v10041, %v10034
    %v10420 = vpack.c.b16 %v10042, %v10035
    %v10421 = vpack.c.b16 %v10043, %v10036
    %v10422 = vpack.c.b16 %v10044, %v10037
    %v10423 = vpack.c.b16 %v10045, %v10038
    %v10424 = vpack.c.b16 %v10046, %v10039
    %v10425 = vpack.c.b16 %v10054, %v10047
    %v10426 = vpack.c.b16 %v10055, %v10048
    %v10427 = vpack.c.b16 %v10056, %v10049
    %v10428 = vpack.c.b16 %v10057, %v10050
    %v10429 = vpack.c.b16 %v10058, %v10051
    %v10430 = vpack.c.b16 %v10059, %v10052
    %v10431 = vpack.c.b16 %v10060, %v10053
    %v10432 = vpack.c.b16 %v10068, %v10061
    %v10433 = vpack.c.b16 %v10069, %v10062
    %v10434 = vpack.c.b16 %v10070, %v10063
    %v10435 = vpack.c.b16 %v10071, %v10064
    %v10436 = vpack.c.b16 %v10072, %v10065
    %v10437 = vpack.c.b16 %v10073, %v10066
    %v10438 = vpack.c.b16 %v10074, %v10067
    %v10439 = vpack.c.b16 %v10082, %v10075
    %v10440 = vpack.c.b16 %v10083, %v10076
    %v10441 = vpack.c.b16 %v10084, %v10077
    %v10442 = vpack.c.b16 %v10085, %v10078
    %v10443 = vpack.c.b16 %v10086, %v10079
    %v10444 = vpack.c.b16 %v10087, %v10080
    %v10445 = vpack.c.b16 %v10088, %v10081
    %v10446 = vpack.c.b16 %v10096, %v10089
    %v10447 = vpack.c.b16 %v10097, %v10090
    %v10448 = vpack.c.b16 %v10098, %v10091
    %v10449 = vpack.c.b16 %v10099, %v10092
    %v10450 = vpack.c.b16 %v10100, %v10093
    %v10451 = vpack.c.b16 %v10101, %v10094
    %v10452 = vpack.c.b16 %v10102, %v10095
    %v10453 = vpack.c.b16 %v10110, %v10103
    %v10454 = vpack.c.b16 %v10111, %v10104
    %v10455 = vpack.c.b16 %v10112, %v10105
    %v10456 = vpack.c.b16 %v10113, %v10106
    %v10457 = vpack.c.b16 %v10114, %v10107
    %v10458 = vpack.c.b16 %v10115, %v10108
    %v10459 = vpack.c.b16 %v10116, %v10109
    %v10803 = vsel %vm2358, %v9032, 0
    %10805 = vmatpush.bf16.msra.mxu0 %v10166
    %10806 = vmatpush.bf16.msra.mxu0 %v10159
    %10807 = vmatpush.bf16.msra.mxu0 %v10152
    %10808 = vmatpush.bf16.msra.mxu0 %v10145
    %10809 = vmatpush.bf16.msra.mxu0 %v10138
    %10810 = vmatpush.bf16.msra.mxu0 %v10131
    %10811 = vmatpush.bf16.msra.mxu0 %v10124
    %10812 = vmatpush.bf16.msra.mxu0 %v10117
    %10813 = vmatmul.bf16.gmra.mxu0 %v9026
    %v10814 = vpop.f32.mrf.mxu0
    %v10815 = vadd.f32 0.0, %v10814
    %v10816 = vpop.f32.mrf.mxu0
    %10817 = vdwg.mxu0
    %10818 = vmatpush.bf16.msra.mxu0 %v10222
    %10819 = vmatpush.bf16.msra.mxu0 %v10215
    %10820 = vmatpush.bf16.msra.mxu0 %v10208
    %10821 = vmatpush.bf16.msra.mxu0 %v10201
    %10822 = vmatpush.bf16.msra.mxu0 %v10194
    %10823 = vmatpush.bf16.msra.mxu0 %v10187
    %10824 = vmatpush.bf16.msra.mxu0 %v10180
    %10825 = vmatpush.bf16.msra.mxu0 %v10173
    %10826 = vmatmul.bf16.gmra.mxu0 %v9027
    %v10827 = vpop.f32.mrf.mxu0
    %v10828 = vadd.f32 %v10815, %v10827
    %v10829 = vpop.f32.mrf.mxu0
    %10830 = vdwg.mxu0
    %10831 = vmatpush.bf16.msra.mxu0 %v10278
    %10832 = vmatpush.bf16.msra.mxu0 %v10271
    %10833 = vmatpush.bf16.msra.mxu0 %v10264
    %10834 = vmatpush.bf16.msra.mxu0 %v10257
    %10835 = vmatpush.bf16.msra.mxu0 %v10250
    %10836 = vmatpush.bf16.msra.mxu0 %v10243
    %10837 = vmatpush.bf16.msra.mxu0 %v10236
    %10838 = vmatpush.bf16.msra.mxu0 %v10229
    %10839 = vmatmul.bf16.gmra.mxu0 %v9028
    %v10840 = vpop.f32.mrf.mxu0
    %v10841 = vadd.f32 %v10828, %v10840
    %v10842 = vpop.f32.mrf.mxu0
    %10843 = vdwg.mxu0
    %10844 = vmatpush.bf16.msra.mxu0 %v10334
    %10845 = vmatpush.bf16.msra.mxu0 %v10327
    %10846 = vmatpush.bf16.msra.mxu0 %v10320
    %10847 = vmatpush.bf16.msra.mxu0 %v10313
    %10848 = vmatpush.bf16.msra.mxu0 %v10306
    %10849 = vmatpush.bf16.msra.mxu0 %v10299
    %10850 = vmatpush.bf16.msra.mxu0 %v10292
    %10851 = vmatpush.bf16.msra.mxu0 %v10285
    %10852 = vmatmul.bf16.gmra.mxu0 %v9029
    %v10853 = vpop.f32.mrf.mxu0
    %v10854 = vadd.f32 %v10841, %v10853
    %v10855 = vpop.f32.mrf.mxu0
    %10856 = vdwg.mxu0
    %10857 = vmatpush.bf16.msra.mxu0 %v10390
    %10858 = vmatpush.bf16.msra.mxu0 %v10383
    %10859 = vmatpush.bf16.msra.mxu0 %v10376
    %10860 = vmatpush.bf16.msra.mxu0 %v10369
    %10861 = vmatpush.bf16.msra.mxu0 %v10362
    %10862 = vmatpush.bf16.msra.mxu0 %v10355
    %10863 = vmatpush.bf16.msra.mxu0 %v10348
    %10864 = vmatpush.bf16.msra.mxu0 %v10341
    %10865 = vmatmul.bf16.gmra.mxu0 %v9030
    %v10866 = vpop.f32.mrf.mxu0
    %v10867 = vadd.f32 %v10854, %v10866
    %v10868 = vpop.f32.mrf.mxu0
    %10869 = vdwg.mxu0
    %10870 = vmatpush.bf16.msra.mxu0 %v10446
    %10871 = vmatpush.bf16.msra.mxu0 %v10439
    %10872 = vmatpush.bf16.msra.mxu0 %v10432
    %10873 = vmatpush.bf16.msra.mxu0 %v10425
    %10874 = vmatpush.bf16.msra.mxu0 %v10418
    %10875 = vmatpush.bf16.msra.mxu0 %v10411
    %10876 = vmatpush.bf16.msra.mxu0 %v10404
    %10877 = vmatpush.bf16.msra.mxu0 %v10397
    %10878 = vmatmul.bf16.gmra.mxu0 %v9031
    %v10879 = vpop.f32.mrf.mxu0
    %v10880 = vadd.f32 %v10867, %v10879
    %v10881 = vpop.f32.mrf.mxu0
    %10882 = vdwg.mxu0
    %10883 = vmatpush.bf16.msra.mxu0 0
    %10884 = vmatpush.bf16.msra.mxu0 0
    %10885 = vmatpush.bf16.msra.mxu0 0
    %10886 = vmatpush.bf16.msra.mxu0 0
    %10887 = vmatpush.bf16.msra.mxu0 0
    %10888 = vmatpush.bf16.msra.mxu0 0
    %10889 = vmatpush.bf16.msra.mxu0 0
    %10890 = vmatpush.bf16.msra.mxu0 %v10453
    %10891 = vmatmul.bf16.gmra.mxu0 %v10803
    %v10892 = vpop.f32.mrf.mxu0
    %v10893 = vadd.f32 %v10880, %v10892
    %v10894 = vpop.f32.mrf.mxu0
    %10895 = vdwg.mxu0
    %10896 = vmatpush.bf16.msra.mxu0 %v10167
    %10897 = vmatpush.bf16.msra.mxu0 %v10160
    %10898 = vmatpush.bf16.msra.mxu0 %v10153
    %10899 = vmatpush.bf16.msra.mxu0 %v10146
    %10900 = vmatpush.bf16.msra.mxu0 %v10139
    %10901 = vmatpush.bf16.msra.mxu0 %v10132
    %10902 = vmatpush.bf16.msra.mxu0 %v10125
    %10903 = vmatpush.bf16.msra.mxu0 %v10118
    %10904 = vmatmul.bf16.gmra.mxu0 %v9026
    %v10905 = vpop.f32.mrf.mxu0
    %v10906 = vadd.f32 0.0, %v10905
    %v10907 = vpop.f32.mrf.mxu0
    %10908 = vdwg.mxu0
    %10909 = vmatpush.bf16.msra.mxu0 %v10223
    %10910 = vmatpush.bf16.msra.mxu0 %v10216
    %10911 = vmatpush.bf16.msra.mxu0 %v10209
    %10912 = vmatpush.bf16.msra.mxu0 %v10202
    %10913 = vmatpush.bf16.msra.mxu0 %v10195
    %10914 = vmatpush.bf16.msra.mxu0 %v10188
    %10915 = vmatpush.bf16.msra.mxu0 %v10181
    %10916 = vmatpush.bf16.msra.mxu0 %v10174
    %10917 = vmatmul.bf16.gmra.mxu0 %v9027
    %v10918 = vpop.f32.mrf.mxu0
    %v10919 = vadd.f32 %v10906, %v10918
    %v10920 = vpop.f32.mrf.mxu0
    %10921 = vdwg.mxu0
    %10922 = vmatpush.bf16.msra.mxu0 %v10279
    %10923 = vmatpush.bf16.msra.mxu0 %v10272
    %10924 = vmatpush.bf16.msra.mxu0 %v10265
    %10925 = vmatpush.bf16.msra.mxu0 %v10258
    %10926 = vmatpush.bf16.msra.mxu0 %v10251
    %10927 = vmatpush.bf16.msra.mxu0 %v10244
    %10928 = vmatpush.bf16.msra.mxu0 %v10237
    %10929 = vmatpush.bf16.msra.mxu0 %v10230
    %10930 = vmatmul.bf16.gmra.mxu0 %v9028
    %v10931 = vpop.f32.mrf.mxu0
    %v10932 = vadd.f32 %v10919, %v10931
    %v10933 = vpop.f32.mrf.mxu0
    %10934 = vdwg.mxu0
    %10935 = vmatpush.bf16.msra.mxu0 %v10335
    %10936 = vmatpush.bf16.msra.mxu0 %v10328
    %10937 = vmatpush.bf16.msra.mxu0 %v10321
    %10938 = vmatpush.bf16.msra.mxu0 %v10314
    %10939 = vmatpush.bf16.msra.mxu0 %v10307
    %10940 = vmatpush.bf16.msra.mxu0 %v10300
    %10941 = vmatpush.bf16.msra.mxu0 %v10293
    %10942 = vmatpush.bf16.msra.mxu0 %v10286
    %10943 = vmatmul.bf16.gmra.mxu0 %v9029
    %v10944 = vpop.f32.mrf.mxu0
    %v10945 = vadd.f32 %v10932, %v10944
    %v10946 = vpop.f32.mrf.mxu0
    %10947 = vdwg.mxu0
    %10948 = vmatpush.bf16.msra.mxu0 %v10391
    %10949 = vmatpush.bf16.msra.mxu0 %v10384
    %10950 = vmatpush.bf16.msra.mxu0 %v10377
    %10951 = vmatpush.bf16.msra.mxu0 %v10370
    %10952 = vmatpush.bf16.msra.mxu0 %v10363
    %10953 = vmatpush.bf16.msra.mxu0 %v10356
    %10954 = vmatpush.bf16.msra.mxu0 %v10349
    %10955 = vmatpush.bf16.msra.mxu0 %v10342
    %10956 = vmatmul.bf16.gmra.mxu0 %v9030
    %v10957 = vpop.f32.mrf.mxu0
    %v10958 = vadd.f32 %v10945, %v10957
    %v10959 = vpop.f32.mrf.mxu0
    %10960 = vdwg.mxu0
    %10961 = vmatpush.bf16.msra.mxu0 %v10447
    %10962 = vmatpush.bf16.msra.mxu0 %v10440
    %10963 = vmatpush.bf16.msra.mxu0 %v10433
    %10964 = vmatpush.bf16.msra.mxu0 %v10426
    %10965 = vmatpush.bf16.msra.mxu0 %v10419
    %10966 = vmatpush.bf16.msra.mxu0 %v10412
    %10967 = vmatpush.bf16.msra.mxu0 %v10405
    %10968 = vmatpush.bf16.msra.mxu0 %v10398
    %10969 = vmatmul.bf16.gmra.mxu0 %v9031
    %v10970 = vpop.f32.mrf.mxu0
    %v10971 = vadd.f32 %v10958, %v10970
    %v10972 = vpop.f32.mrf.mxu0
    %10973 = vdwg.mxu0
    %10974 = vmatpush.bf16.msra.mxu0 0
    %10975 = vmatpush.bf16.msra.mxu0 0
    %10976 = vmatpush.bf16.msra.mxu0 0
    %10977 = vmatpush.bf16.msra.mxu0 0
    %10978 = vmatpush.bf16.msra.mxu0 0
    %10979 = vmatpush.bf16.msra.mxu0 0
    %10980 = vmatpush.bf16.msra.mxu0 0
    %10981 = vmatpush.bf16.msra.mxu0 %v10454
    %10982 = vmatmul.bf16.gmra.mxu0 %v10803
    %v10983 = vpop.f32.mrf.mxu0
    %v10984 = vadd.f32 %v10971, %v10983
    %v10985 = vpop.f32.mrf.mxu0
    %10986 = vdwg.mxu0
    %10987 = vmatpush.bf16.msra.mxu0 %v10168
    %10988 = vmatpush.bf16.msra.mxu0 %v10161
    %10989 = vmatpush.bf16.msra.mxu0 %v10154
    %10990 = vmatpush.bf16.msra.mxu0 %v10147
    %10991 = vmatpush.bf16.msra.mxu0 %v10140
    %10992 = vmatpush.bf16.msra.mxu0 %v10133
    %10993 = vmatpush.bf16.msra.mxu0 %v10126
    %10994 = vmatpush.bf16.msra.mxu0 %v10119
    %10995 = vmatmul.bf16.gmra.mxu0 %v9026
    %v10996 = vpop.f32.mrf.mxu0
    %v10997 = vadd.f32 0.0, %v10996
    %v10998 = vpop.f32.mrf.mxu0
    %10999 = vdwg.mxu0
    %11000 = vmatpush.bf16.msra.mxu0 %v10224
    %11001 = vmatpush.bf16.msra.mxu0 %v10217
    %11002 = vmatpush.bf16.msra.mxu0 %v10210
    %11003 = vmatpush.bf16.msra.mxu0 %v10203
    %11004 = vmatpush.bf16.msra.mxu0 %v10196
    %11005 = vmatpush.bf16.msra.mxu0 %v10189
    %11006 = vmatpush.bf16.msra.mxu0 %v10182
    %11007 = vmatpush.bf16.msra.mxu0 %v10175
    %11008 = vmatmul.bf16.gmra.mxu0 %v9027
    %v11009 = vpop.f32.mrf.mxu0
    %v11010 = vadd.f32 %v10997, %v11009
    %v11011 = vpop.f32.mrf.mxu0
    %11012 = vdwg.mxu0
    %11013 = vmatpush.bf16.msra.mxu0 %v10280
    %11014 = vmatpush.bf16.msra.mxu0 %v10273
    %11015 = vmatpush.bf16.msra.mxu0 %v10266
    %11016 = vmatpush.bf16.msra.mxu0 %v10259
    %11017 = vmatpush.bf16.msra.mxu0 %v10252
    %11018 = vmatpush.bf16.msra.mxu0 %v10245
    %11019 = vmatpush.bf16.msra.mxu0 %v10238
    %11020 = vmatpush.bf16.msra.mxu0 %v10231
    %11021 = vmatmul.bf16.gmra.mxu0 %v9028
    %v11022 = vpop.f32.mrf.mxu0
    %v11023 = vadd.f32 %v11010, %v11022
    %v11024 = vpop.f32.mrf.mxu0
    %11025 = vdwg.mxu0
    %11026 = vmatpush.bf16.msra.mxu0 %v10336
    %11027 = vmatpush.bf16.msra.mxu0 %v10329
    %11028 = vmatpush.bf16.msra.mxu0 %v10322
    %11029 = vmatpush.bf16.msra.mxu0 %v10315
    %11030 = vmatpush.bf16.msra.mxu0 %v10308
    %11031 = vmatpush.bf16.msra.mxu0 %v10301
    %11032 = vmatpush.bf16.msra.mxu0 %v10294
    %11033 = vmatpush.bf16.msra.mxu0 %v10287
    %11034 = vmatmul.bf16.gmra.mxu0 %v9029
    %v11035 = vpop.f32.mrf.mxu0
    %v11036 = vadd.f32 %v11023, %v11035
    %v11037 = vpop.f32.mrf.mxu0
    %11038 = vdwg.mxu0
    %11039 = vmatpush.bf16.msra.mxu0 %v10392
    %11040 = vmatpush.bf16.msra.mxu0 %v10385
    %11041 = vmatpush.bf16.msra.mxu0 %v10378
    %11042 = vmatpush.bf16.msra.mxu0 %v10371
    %11043 = vmatpush.bf16.msra.mxu0 %v10364
    %11044 = vmatpush.bf16.msra.mxu0 %v10357
    %11045 = vmatpush.bf16.msra.mxu0 %v10350
    %11046 = vmatpush.bf16.msra.mxu0 %v10343
    %11047 = vmatmul.bf16.gmra.mxu0 %v9030
    %v11048 = vpop.f32.mrf.mxu0
    %v11049 = vadd.f32 %v11036, %v11048
    %v11050 = vpop.f32.mrf.mxu0
    %11051 = vdwg.mxu0
    %11052 = vmatpush.bf16.msra.mxu0 %v10448
    %11053 = vmatpush.bf16.msra.mxu0 %v10441
    %11054 = vmatpush.bf16.msra.mxu0 %v10434
    %11055 = vmatpush.bf16.msra.mxu0 %v10427
    %11056 = vmatpush.bf16.msra.mxu0 %v10420
    %11057 = vmatpush.bf16.msra.mxu0 %v10413
    %11058 = vmatpush.bf16.msra.mxu0 %v10406
    %11059 = vmatpush.bf16.msra.mxu0 %v10399
    %11060 = vmatmul.bf16.gmra.mxu0 %v9031
    %v11061 = vpop.f32.mrf.mxu0
    %v11062 = vadd.f32 %v11049, %v11061
    %v11063 = vpop.f32.mrf.mxu0
    %11064 = vdwg.mxu0
    %11065 = vmatpush.bf16.msra.mxu0 0
    %11066 = vmatpush.bf16.msra.mxu0 0
    %11067 = vmatpush.bf16.msra.mxu0 0
    %11068 = vmatpush.bf16.msra.mxu0 0
    %11069 = vmatpush.bf16.msra.mxu0 0
    %11070 = vmatpush.bf16.msra.mxu0 0
    %11071 = vmatpush.bf16.msra.mxu0 0
    %11072 = vmatpush.bf16.msra.mxu0 %v10455
    %11073 = vmatmul.bf16.gmra.mxu0 %v10803
    %v11074 = vpop.f32.mrf.mxu0
    %v11075 = vadd.f32 %v11062, %v11074
    %v11076 = vpop.f32.mrf.mxu0
    %11077 = vdwg.mxu0
    %11078 = vmatpush.bf16.msra.mxu0 %v10169
    %11079 = vmatpush.bf16.msra.mxu0 %v10162
    %11080 = vmatpush.bf16.msra.mxu0 %v10155
    %11081 = vmatpush.bf16.msra.mxu0 %v10148
    %11082 = vmatpush.bf16.msra.mxu0 %v10141
    %11083 = vmatpush.bf16.msra.mxu0 %v10134
    %11084 = vmatpush.bf16.msra.mxu0 %v10127
    %11085 = vmatpush.bf16.msra.mxu0 %v10120
    %11086 = vmatmul.bf16.gmra.mxu0 %v9026
    %v11087 = vpop.f32.mrf.mxu0
    %v11088 = vadd.f32 0.0, %v11087
    %v11089 = vpop.f32.mrf.mxu0
    %11090 = vdwg.mxu0
    %11091 = vmatpush.bf16.msra.mxu0 %v10225
    %11092 = vmatpush.bf16.msra.mxu0 %v10218
    %11093 = vmatpush.bf16.msra.mxu0 %v10211
    %11094 = vmatpush.bf16.msra.mxu0 %v10204
    %11095 = vmatpush.bf16.msra.mxu0 %v10197
    %11096 = vmatpush.bf16.msra.mxu0 %v10190
    %11097 = vmatpush.bf16.msra.mxu0 %v10183
    %11098 = vmatpush.bf16.msra.mxu0 %v10176
    %11099 = vmatmul.bf16.gmra.mxu0 %v9027
    %v11100 = vpop.f32.mrf.mxu0
    %v11101 = vadd.f32 %v11088, %v11100
    %v11102 = vpop.f32.mrf.mxu0
    %11103 = vdwg.mxu0
    %11104 = vmatpush.bf16.msra.mxu0 %v10281
    %11105 = vmatpush.bf16.msra.mxu0 %v10274
    %11106 = vmatpush.bf16.msra.mxu0 %v10267
    %11107 = vmatpush.bf16.msra.mxu0 %v10260
    %11108 = vmatpush.bf16.msra.mxu0 %v10253
    %11109 = vmatpush.bf16.msra.mxu0 %v10246
    %11110 = vmatpush.bf16.msra.mxu0 %v10239
    %11111 = vmatpush.bf16.msra.mxu0 %v10232
    %11112 = vmatmul.bf16.gmra.mxu0 %v9028
    %v11113 = vpop.f32.mrf.mxu0
    %v11114 = vadd.f32 %v11101, %v11113
    %v11115 = vpop.f32.mrf.mxu0
    %11116 = vdwg.mxu0
    %11117 = vmatpush.bf16.msra.mxu0 %v10337
    %11118 = vmatpush.bf16.msra.mxu0 %v10330
    %11119 = vmatpush.bf16.msra.mxu0 %v10323
    %11120 = vmatpush.bf16.msra.mxu0 %v10316
    %11121 = vmatpush.bf16.msra.mxu0 %v10309
    %11122 = vmatpush.bf16.msra.mxu0 %v10302
    %11123 = vmatpush.bf16.msra.mxu0 %v10295
    %11124 = vmatpush.bf16.msra.mxu0 %v10288
    %11125 = vmatmul.bf16.gmra.mxu0 %v9029
    %v11126 = vpop.f32.mrf.mxu0
    %v11127 = vadd.f32 %v11114, %v11126
    %v11128 = vpop.f32.mrf.mxu0
    %11129 = vdwg.mxu0
    %11130 = vmatpush.bf16.msra.mxu0 %v10393
    %11131 = vmatpush.bf16.msra.mxu0 %v10386
    %11132 = vmatpush.bf16.msra.mxu0 %v10379
    %11133 = vmatpush.bf16.msra.mxu0 %v10372
    %11134 = vmatpush.bf16.msra.mxu0 %v10365
    %11135 = vmatpush.bf16.msra.mxu0 %v10358
    %11136 = vmatpush.bf16.msra.mxu0 %v10351
    %11137 = vmatpush.bf16.msra.mxu0 %v10344
    %11138 = vmatmul.bf16.gmra.mxu0 %v9030
    %v11139 = vpop.f32.mrf.mxu0
    %v11140 = vadd.f32 %v11127, %v11139
    %v11141 = vpop.f32.mrf.mxu0
    %11142 = vdwg.mxu0
    %11143 = vmatpush.bf16.msra.mxu0 %v10449
    %11144 = vmatpush.bf16.msra.mxu0 %v10442
    %11145 = vmatpush.bf16.msra.mxu0 %v10435
    %11146 = vmatpush.bf16.msra.mxu0 %v10428
    %11147 = vmatpush.bf16.msra.mxu0 %v10421
    %11148 = vmatpush.bf16.msra.mxu0 %v10414
    %11149 = vmatpush.bf16.msra.mxu0 %v10407
    %11150 = vmatpush.bf16.msra.mxu0 %v10400
    %11151 = vmatmul.bf16.gmra.mxu0 %v9031
    %v11152 = vpop.f32.mrf.mxu0
    %v11153 = vadd.f32 %v11140, %v11152
    %v11154 = vpop.f32.mrf.mxu0
    %11155 = vdwg.mxu0
    %11156 = vmatpush.bf16.msra.mxu0 0
    %11157 = vmatpush.bf16.msra.mxu0 0
    %11158 = vmatpush.bf16.msra.mxu0 0
    %11159 = vmatpush.bf16.msra.mxu0 0
    %11160 = vmatpush.bf16.msra.mxu0 0
    %11161 = vmatpush.bf16.msra.mxu0 0
    %11162 = vmatpush.bf16.msra.mxu0 0
    %11163 = vmatpush.bf16.msra.mxu0 %v10456
    %11164 = vmatmul.bf16.gmra.mxu0 %v10803
    %v11165 = vpop.f32.mrf.mxu0
    %v11166 = vadd.f32 %v11153, %v11165
    %v11167 = vpop.f32.mrf.mxu0
    %11168 = vdwg.mxu0
    %11169 = vmatpush.bf16.msra.mxu0 %v10170
    %11170 = vmatpush.bf16.msra.mxu0 %v10163
    %11171 = vmatpush.bf16.msra.mxu0 %v10156
    %11172 = vmatpush.bf16.msra.mxu0 %v10149
    %11173 = vmatpush.bf16.msra.mxu0 %v10142
    %11174 = vmatpush.bf16.msra.mxu0 %v10135
    %11175 = vmatpush.bf16.msra.mxu0 %v10128
    %11176 = vmatpush.bf16.msra.mxu0 %v10121
    %11177 = vmatmul.bf16.gmra.mxu0 %v9026
    %v11178 = vpop.f32.mrf.mxu0
    %v11179 = vadd.f32 0.0, %v11178
    %v11180 = vpop.f32.mrf.mxu0
    %11181 = vdwg.mxu0
    %11182 = vmatpush.bf16.msra.mxu0 %v10226
    %11183 = vmatpush.bf16.msra.mxu0 %v10219
    %11184 = vmatpush.bf16.msra.mxu0 %v10212
    %11185 = vmatpush.bf16.msra.mxu0 %v10205
    %11186 = vmatpush.bf16.msra.mxu0 %v10198
    %11187 = vmatpush.bf16.msra.mxu0 %v10191
    %11188 = vmatpush.bf16.msra.mxu0 %v10184
    %11189 = vmatpush.bf16.msra.mxu0 %v10177
    %11190 = vmatmul.bf16.gmra.mxu0 %v9027
    %v11191 = vpop.f32.mrf.mxu0
    %v11192 = vadd.f32 %v11179, %v11191
    %v11193 = vpop.f32.mrf.mxu0
    %11194 = vdwg.mxu0
    %11195 = vmatpush.bf16.msra.mxu0 %v10282
    %11196 = vmatpush.bf16.msra.mxu0 %v10275
    %11197 = vmatpush.bf16.msra.mxu0 %v10268
    %11198 = vmatpush.bf16.msra.mxu0 %v10261
    %11199 = vmatpush.bf16.msra.mxu0 %v10254
    %11200 = vmatpush.bf16.msra.mxu0 %v10247
    %11201 = vmatpush.bf16.msra.mxu0 %v10240
    %11202 = vmatpush.bf16.msra.mxu0 %v10233
    %11203 = vmatmul.bf16.gmra.mxu0 %v9028
    %v11204 = vpop.f32.mrf.mxu0
    %v11205 = vadd.f32 %v11192, %v11204
    %v11206 = vpop.f32.mrf.mxu0
    %11207 = vdwg.mxu0
    %11208 = vmatpush.bf16.msra.mxu0 %v10338
    %11209 = vmatpush.bf16.msra.mxu0 %v10331
    %11210 = vmatpush.bf16.msra.mxu0 %v10324
    %11211 = vmatpush.bf16.msra.mxu0 %v10317
    %11212 = vmatpush.bf16.msra.mxu0 %v10310
    %11213 = vmatpush.bf16.msra.mxu0 %v10303
    %11214 = vmatpush.bf16.msra.mxu0 %v10296
    %11215 = vmatpush.bf16.msra.mxu0 %v10289
    %11216 = vmatmul.bf16.gmra.mxu0 %v9029
    %v11217 = vpop.f32.mrf.mxu0
    %v11218 = vadd.f32 %v11205, %v11217
    %v11219 = vpop.f32.mrf.mxu0
    %11220 = vdwg.mxu0
    %11221 = vmatpush.bf16.msra.mxu0 %v10394
    %11222 = vmatpush.bf16.msra.mxu0 %v10387
    %11223 = vmatpush.bf16.msra.mxu0 %v10380
    %11224 = vmatpush.bf16.msra.mxu0 %v10373
    %11225 = vmatpush.bf16.msra.mxu0 %v10366
    %11226 = vmatpush.bf16.msra.mxu0 %v10359
    %11227 = vmatpush.bf16.msra.mxu0 %v10352
    %11228 = vmatpush.bf16.msra.mxu0 %v10345
    %11229 = vmatmul.bf16.gmra.mxu0 %v9030
    %v11230 = vpop.f32.mrf.mxu0
    %v11231 = vadd.f32 %v11218, %v11230
    %v11232 = vpop.f32.mrf.mxu0
    %11233 = vdwg.mxu0
    %11234 = vmatpush.bf16.msra.mxu0 %v10450
    %11235 = vmatpush.bf16.msra.mxu0 %v10443
    %11236 = vmatpush.bf16.msra.mxu0 %v10436
    %11237 = vmatpush.bf16.msra.mxu0 %v10429
    %11238 = vmatpush.bf16.msra.mxu0 %v10422
    %11239 = vmatpush.bf16.msra.mxu0 %v10415
    %11240 = vmatpush.bf16.msra.mxu0 %v10408
    %11241 = vmatpush.bf16.msra.mxu0 %v10401
    %11242 = vmatmul.bf16.gmra.mxu0 %v9031
    %v11243 = vpop.f32.mrf.mxu0
    %v11244 = vadd.f32 %v11231, %v11243
    %v11245 = vpop.f32.mrf.mxu0
    %11246 = vdwg.mxu0
    %11247 = vmatpush.bf16.msra.mxu0 0
    %11248 = vmatpush.bf16.msra.mxu0 0
    %11249 = vmatpush.bf16.msra.mxu0 0
    %11250 = vmatpush.bf16.msra.mxu0 0
    %11251 = vmatpush.bf16.msra.mxu0 0
    %11252 = vmatpush.bf16.msra.mxu0 0
    %11253 = vmatpush.bf16.msra.mxu0 0
    %11254 = vmatpush.bf16.msra.mxu0 %v10457
    %11255 = vmatmul.bf16.gmra.mxu0 %v10803
    %v11256 = vpop.f32.mrf.mxu0
    %v11257 = vadd.f32 %v11244, %v11256
    %v11258 = vpop.f32.mrf.mxu0
    %11259 = vdwg.mxu0
    %11260 = vmatpush.bf16.msra.mxu0 %v10171
    %11261 = vmatpush.bf16.msra.mxu0 %v10164
    %11262 = vmatpush.bf16.msra.mxu0 %v10157
    %11263 = vmatpush.bf16.msra.mxu0 %v10150
    %11264 = vmatpush.bf16.msra.mxu0 %v10143
    %11265 = vmatpush.bf16.msra.mxu0 %v10136
    %11266 = vmatpush.bf16.msra.mxu0 %v10129
    %11267 = vmatpush.bf16.msra.mxu0 %v10122
    %11268 = vmatmul.bf16.gmra.mxu0 %v9026
    %v11269 = vpop.f32.mrf.mxu0
    %v11270 = vadd.f32 0.0, %v11269
    %v11271 = vpop.f32.mrf.mxu0
    %11272 = vdwg.mxu0
    %11273 = vmatpush.bf16.msra.mxu0 %v10227
    %11274 = vmatpush.bf16.msra.mxu0 %v10220
    %11275 = vmatpush.bf16.msra.mxu0 %v10213
    %11276 = vmatpush.bf16.msra.mxu0 %v10206
    %11277 = vmatpush.bf16.msra.mxu0 %v10199
    %11278 = vmatpush.bf16.msra.mxu0 %v10192
    %11279 = vmatpush.bf16.msra.mxu0 %v10185
    %11280 = vmatpush.bf16.msra.mxu0 %v10178
    %11281 = vmatmul.bf16.gmra.mxu0 %v9027
    %v11282 = vpop.f32.mrf.mxu0
    %v11283 = vadd.f32 %v11270, %v11282
    %v11284 = vpop.f32.mrf.mxu0
    %11285 = vdwg.mxu0
    %11286 = vmatpush.bf16.msra.mxu0 %v10283
    %11287 = vmatpush.bf16.msra.mxu0 %v10276
    %11288 = vmatpush.bf16.msra.mxu0 %v10269
    %11289 = vmatpush.bf16.msra.mxu0 %v10262
    %11290 = vmatpush.bf16.msra.mxu0 %v10255
    %11291 = vmatpush.bf16.msra.mxu0 %v10248
    %11292 = vmatpush.bf16.msra.mxu0 %v10241
    %11293 = vmatpush.bf16.msra.mxu0 %v10234
    %11294 = vmatmul.bf16.gmra.mxu0 %v9028
    %v11295 = vpop.f32.mrf.mxu0
    %v11296 = vadd.f32 %v11283, %v11295
    %v11297 = vpop.f32.mrf.mxu0
    %11298 = vdwg.mxu0
    %11299 = vmatpush.bf16.msra.mxu0 %v10339
    %11300 = vmatpush.bf16.msra.mxu0 %v10332
    %11301 = vmatpush.bf16.msra.mxu0 %v10325
    %11302 = vmatpush.bf16.msra.mxu0 %v10318
    %11303 = vmatpush.bf16.msra.mxu0 %v10311
    %11304 = vmatpush.bf16.msra.mxu0 %v10304
    %11305 = vmatpush.bf16.msra.mxu0 %v10297
    %11306 = vmatpush.bf16.msra.mxu0 %v10290
    %11307 = vmatmul.bf16.gmra.mxu0 %v9029
    %v11308 = vpop.f32.mrf.mxu0
    %v11309 = vadd.f32 %v11296, %v11308
    %v11310 = vpop.f32.mrf.mxu0
    %11311 = vdwg.mxu0
    %11312 = vmatpush.bf16.msra.mxu0 %v10395
    %11313 = vmatpush.bf16.msra.mxu0 %v10388
    %11314 = vmatpush.bf16.msra.mxu0 %v10381
    %11315 = vmatpush.bf16.msra.mxu0 %v10374
    %11316 = vmatpush.bf16.msra.mxu0 %v10367
    %11317 = vmatpush.bf16.msra.mxu0 %v10360
    %11318 = vmatpush.bf16.msra.mxu0 %v10353
    %11319 = vmatpush.bf16.msra.mxu0 %v10346
    %11320 = vmatmul.bf16.gmra.mxu0 %v9030
    %v11321 = vpop.f32.mrf.mxu0
    %v11322 = vadd.f32 %v11309, %v11321
    %v11323 = vpop.f32.mrf.mxu0
    %11324 = vdwg.mxu0
    %11325 = vmatpush.bf16.msra.mxu0 %v10451
    %11326 = vmatpush.bf16.msra.mxu0 %v10444
    %11327 = vmatpush.bf16.msra.mxu0 %v10437
    %11328 = vmatpush.bf16.msra.mxu0 %v10430
    %11329 = vmatpush.bf16.msra.mxu0 %v10423
    %11330 = vmatpush.bf16.msra.mxu0 %v10416
    %11331 = vmatpush.bf16.msra.mxu0 %v10409
    %11332 = vmatpush.bf16.msra.mxu0 %v10402
    %11333 = vmatmul.bf16.gmra.mxu0 %v9031
    %v11334 = vpop.f32.mrf.mxu0
    %v11335 = vadd.f32 %v11322, %v11334
    %v11336 = vpop.f32.mrf.mxu0
    %11337 = vdwg.mxu0
    %11338 = vmatpush.bf16.msra.mxu0 0
    %11339 = vmatpush.bf16.msra.mxu0 0
    %11340 = vmatpush.bf16.msra.mxu0 0
    %11341 = vmatpush.bf16.msra.mxu0 0
    %11342 = vmatpush.bf16.msra.mxu0 0
    %11343 = vmatpush.bf16.msra.mxu0 0
    %11344 = vmatpush.bf16.msra.mxu0 0
    %11345 = vmatpush.bf16.msra.mxu0 %v10458
    %11346 = vmatmul.bf16.gmra.mxu0 %v10803
    %v11347 = vpop.f32.mrf.mxu0
    %v11348 = vadd.f32 %v11335, %v11347
    %v11349 = vpop.f32.mrf.mxu0
    %11350 = vdwg.mxu0
    %11351 = vmatpush.bf16.msra.mxu0 %v10172
    %11352 = vmatpush.bf16.msra.mxu0 %v10165
    %11353 = vmatpush.bf16.msra.mxu0 %v10158
    %11354 = vmatpush.bf16.msra.mxu0 %v10151
    %11355 = vmatpush.bf16.msra.mxu0 %v10144
    %11356 = vmatpush.bf16.msra.mxu0 %v10137
    %11357 = vmatpush.bf16.msra.mxu0 %v10130
    %11358 = vmatpush.bf16.msra.mxu0 %v10123
    %11359 = vmatmul.bf16.gmra.mxu0 %v9026
    %v11360 = vpop.f32.mrf.mxu0
    %v11361 = vadd.f32 0.0, %v11360
    %v11362 = vpop.f32.mrf.mxu0
    %11363 = vdwg.mxu0
    %11364 = vmatpush.bf16.msra.mxu0 %v10228
    %11365 = vmatpush.bf16.msra.mxu0 %v10221
    %11366 = vmatpush.bf16.msra.mxu0 %v10214
    %11367 = vmatpush.bf16.msra.mxu0 %v10207
    %11368 = vmatpush.bf16.msra.mxu0 %v10200
    %11369 = vmatpush.bf16.msra.mxu0 %v10193
    %11370 = vmatpush.bf16.msra.mxu0 %v10186
    %11371 = vmatpush.bf16.msra.mxu0 %v10179
    %11372 = vmatmul.bf16.gmra.mxu0 %v9027
    %v11373 = vpop.f32.mrf.mxu0
    %v11374 = vadd.f32 %v11361, %v11373
    %v11375 = vpop.f32.mrf.mxu0
    %11376 = vdwg.mxu0
    %11377 = vmatpush.bf16.msra.mxu0 %v10284
    %11378 = vmatpush.bf16.msra.mxu0 %v10277
    %11379 = vmatpush.bf16.msra.mxu0 %v10270
    %11380 = vmatpush.bf16.msra.mxu0 %v10263
    %11381 = vmatpush.bf16.msra.mxu0 %v10256
    %11382 = vmatpush.bf16.msra.mxu0 %v10249
    %11383 = vmatpush.bf16.msra.mxu0 %v10242
    %11384 = vmatpush.bf16.msra.mxu0 %v10235
    %11385 = vmatmul.bf16.gmra.mxu0 %v9028
    %v11386 = vpop.f32.mrf.mxu0
    %v11387 = vadd.f32 %v11374, %v11386
    %v11388 = vpop.f32.mrf.mxu0
    %11389 = vdwg.mxu0
    %11390 = vmatpush.bf16.msra.mxu0 %v10340
    %11391 = vmatpush.bf16.msra.mxu0 %v10333
    %11392 = vmatpush.bf16.msra.mxu0 %v10326
    %11393 = vmatpush.bf16.msra.mxu0 %v10319
    %11394 = vmatpush.bf16.msra.mxu0 %v10312
    %11395 = vmatpush.bf16.msra.mxu0 %v10305
    %11396 = vmatpush.bf16.msra.mxu0 %v10298
    %11397 = vmatpush.bf16.msra.mxu0 %v10291
    %11398 = vmatmul.bf16.gmra.mxu0 %v9029
    %v11399 = vpop.f32.mrf.mxu0
    %v11400 = vadd.f32 %v11387, %v11399
    %v11401 = vpop.f32.mrf.mxu0
    %11402 = vdwg.mxu0
    %11403 = vmatpush.bf16.msra.mxu0 %v10396
    %11404 = vmatpush.bf16.msra.mxu0 %v10389
    %11405 = vmatpush.bf16.msra.mxu0 %v10382
    %11406 = vmatpush.bf16.msra.mxu0 %v10375
    %11407 = vmatpush.bf16.msra.mxu0 %v10368
    %11408 = vmatpush.bf16.msra.mxu0 %v10361
    %11409 = vmatpush.bf16.msra.mxu0 %v10354
    %11410 = vmatpush.bf16.msra.mxu0 %v10347
    %11411 = vmatmul.bf16.gmra.mxu0 %v9030
    %v11412 = vpop.f32.mrf.mxu0
    %v11413 = vadd.f32 %v11400, %v11412
    %v11414 = vpop.f32.mrf.mxu0
    %11415 = vdwg.mxu0
    %11416 = vmatpush.bf16.msra.mxu0 %v10452
    %11417 = vmatpush.bf16.msra.mxu0 %v10445
    %11418 = vmatpush.bf16.msra.mxu0 %v10438
    %11419 = vmatpush.bf16.msra.mxu0 %v10431
    %11420 = vmatpush.bf16.msra.mxu0 %v10424
    %11421 = vmatpush.bf16.msra.mxu0 %v10417
    %11422 = vmatpush.bf16.msra.mxu0 %v10410
    %11423 = vmatpush.bf16.msra.mxu0 %v10403
    %11424 = vmatmul.bf16.gmra.mxu0 %v9031
    %v11425 = vpop.f32.mrf.mxu0
    %v11426 = vadd.f32 %v11413, %v11425
    %v11427 = vpop.f32.mrf.mxu0
    %11428 = vdwg.mxu0
    %11429 = vmatpush.bf16.msra.mxu0 0
    %11430 = vmatpush.bf16.msra.mxu0 0
    %11431 = vmatpush.bf16.msra.mxu0 0
    %11432 = vmatpush.bf16.msra.mxu0 0
    %11433 = vmatpush.bf16.msra.mxu0 0
    %11434 = vmatpush.bf16.msra.mxu0 0
    %11435 = vmatpush.bf16.msra.mxu0 0
    %11436 = vmatpush.bf16.msra.mxu0 %v10459
    %11437 = vmatmul.bf16.gmra.mxu0 %v10803
    %v11438 = vpop.f32.mrf.mxu0
    %v11439 = vadd.f32 %v11426, %v11438
    %v11440 = vpop.f32.mrf.mxu0
    %11441 = vdwg.mxu0
    %v11442 = vmax.f32 %v8625, %v10893
    %v11443 = vmax.f32 %v8626, %v10984
    %v11444 = vmax.f32 %v8627, %v11075
    %v11445 = vmax.f32 %v8628, %v11166
    %v11446 = vmax.f32 %v8629, %v11257
    %v11447 = vmax.f32 %v8630, %v11348
    %v11448 = vmax.f32 %v8631, %v11439
    %v11449 = vld [vmem:[#allocation5] sm:$0x7f]
    %v11451 = vperm.slane %v11449, 0
    %v11452 = vperm.slane %v11449, 1
    %v11453 = vperm.slane %v11449, 2
    %v11454 = vperm.slane %v11449, 3
    %v11455 = vperm.slane %v11449, 4
    %v11456 = vperm.slane %v11449, 5
    %v11457 = vperm.slane %v11449, 6
    %v11465 = vadd.f32 %v11442, %v11451
    %v11466 = vadd.f32 %v11443, %v11452
    %v11467 = vadd.f32 %v11444, %v11453
    %v11468 = vadd.f32 %v11445, %v11454
    %v11469 = vadd.f32 %v11446, %v11455
    %v11470 = vadd.f32 %v11447, %v11456
    %v11471 = vadd.f32 %v11448, %v11457
    %v11472 = vmax.f32 %v11465, 0.0
    %v11473 = vmax.f32 %v11466, 0.0
    %v11474 = vmax.f32 %v11467, 0.0
    %v11475 = vmax.f32 %v11468, 0.0
    %v11476 = vmax.f32 %v11469, 0.0
    %v11477 = vmax.f32 %v11470, 0.0
    %v11478 = vmax.f32 %v11471, 0.0
    %v11479 = vpack.c.bf16 %v11472, %v11472
    %v11480 = vpack.c.bf16 %v11473, %v11473
    %v11481 = vpack.c.bf16 %v11474, %v11474
    %v11482 = vpack.c.bf16 %v11475, %v11475
    %v11483 = vpack.c.bf16 %v11476, %v11476
    %v11484 = vpack.c.bf16 %v11477, %v11477
    %v11485 = vpack.c.bf16 %v11478, %v11478
    %v11486 = vld [vmem:[#allocation7] sm:$0xff]
    %v11487 = vld [vmem:[#allocation7 + $0x8] sm:$0xff]
    %v11488 = vld [vmem:[#allocation7 + $0x10] sm:$0xff]
    %v11489 = vld [vmem:[#allocation7 + $0x18] sm:$0xff]
    %v11490 = vld [vmem:[#allocation7 + $0x20] sm:$0xff]
    %v11491 = vld [vmem:[#allocation7 + $0x28] sm:$0xff]
    %v11492 = vld [vmem:[#allocation7 + $0x30] sm:$0xff]
    %v11493 = vld [vmem:[#allocation7 + $0x38] sm:$0xff]
    %v11494 = vld [vmem:[#allocation7 + $0x40] sm:$0xff]
    %v11495 = vld [vmem:[#allocation7 + $0x48] sm:$0xff]
    %v11496 = vld [vmem:[#allocation7 + $0x50] sm:$0xff]
    %v11497 = vld [vmem:[#allocation7 + $0x58] sm:$0xff]
    %v11498 = vld [vmem:[#allocation7 + $0x60] sm:$0xff]
    %v11499 = vld [vmem:[#allocation7 + $0x68] sm:$0xff]
    %v11500 = vld [vmem:[#allocation7 + $0x70] sm:$0xff]
    %v11501 = vld [vmem:[#allocation7 + $0x78] sm:$0xff]
    %v11502 = vld [vmem:[#allocation7 + $0x80] sm:$0xff]
    %v11503 = vld [vmem:[#allocation7 + $0x88] sm:$0xff]
    %v11504 = vld [vmem:[#allocation7 + $0x90] sm:$0xff]
    %v11505 = vld [vmem:[#allocation7 + $0x98] sm:$0xff]
    %v11506 = vld [vmem:[#allocation7 + $0xa0] sm:$0xff]
    %v11507 = vld [vmem:[#allocation7 + $0xa8] sm:$0xff]
    %v11508 = vld [vmem:[#allocation7 + $0xb0] sm:$0xff]
    %v11509 = vld [vmem:[#allocation7 + $0xb8] sm:$0xff]
    %v11510 = vld [vmem:[#allocation7 + $0xc0] sm:$0xff]
    %v11511 = vld [vmem:[#allocation7 + $0xc8] sm:$0xff]
    %v11512 = vld [vmem:[#allocation7 + $0xd0] sm:$0xff]
    %v11513 = vld [vmem:[#allocation7 + $0xd8] sm:$0xff]
    %v11514 = vld [vmem:[#allocation7 + $0xe0] sm:$0xff]
    %v11515 = vld [vmem:[#allocation7 + $0xe8] sm:$0xff]
    %v11516 = vld [vmem:[#allocation7 + $0xf0] sm:$0xff]
    %v11517 = vld [vmem:[#allocation7 + $0xf8] sm:$0xff]
    %v11518 = vld [vmem:[#allocation7 + $0x100] sm:$0xff]
    %v11519 = vld [vmem:[#allocation7 + $0x108] sm:$0xff]
    %v11520 = vld [vmem:[#allocation7 + $0x110] sm:$0xff]
    %v11521 = vld [vmem:[#allocation7 + $0x118] sm:$0xff]
    %v11522 = vld [vmem:[#allocation7 + $0x120] sm:$0xff]
    %v11523 = vld [vmem:[#allocation7 + $0x128] sm:$0xff]
    %v11524 = vld [vmem:[#allocation7 + $0x130] sm:$0xff]
    %v11525 = vld [vmem:[#allocation7 + $0x138] sm:$0xff]
    %v11526 = vld [vmem:[#allocation7 + $0x140] sm:$0xff]
    %v11527 = vld [vmem:[#allocation7 + $0x148] sm:$0xff]
    %v11528 = vld [vmem:[#allocation7 + $0x150] sm:$0xff]
    %v11529 = vld [vmem:[#allocation7 + $0x158] sm:$0xff]
    %v11530 = vld [vmem:[#allocation7 + $0x160] sm:$0xff]
    %v11531 = vld [vmem:[#allocation7 + $0x168] sm:$0xff]
    %v11532 = vld [vmem:[#allocation7 + $0x170] sm:$0xff]
    %v11533 = vld [vmem:[#allocation7 + $0x178] sm:$0xff]
    %v11534 = vld [vmem:[#allocation7 + $0x180] sm:$0xff]
    %v11535 = vld [vmem:[#allocation7 + $0x188] sm:$0xff]
    %v11536 = vld [vmem:[#allocation7 + $0x190] sm:$0xff]
    %v11537 = vld [vmem:[#allocation7 + $0x198] sm:$0xff]
    %v11538 = vld [vmem:[#allocation7 + $0x1a0] sm:$0xff]
    %v11539 = vld [vmem:[#allocation7 + $0x1a8] sm:$0xff]
    %v11540 = vld [vmem:[#allocation7 + $0x1b0] sm:$0xff]
    %v11541 = vld [vmem:[#allocation7 + $0x1b8] sm:$0xff]
    %v11542 = vld [vmem:[#allocation7 + $0x1c0] sm:$0xff]
    %v11543 = vld [vmem:[#allocation7 + $0x1c8] sm:$0xff]
    %v11544 = vld [vmem:[#allocation7 + $0x1d0] sm:$0xff]
    %v11545 = vld [vmem:[#allocation7 + $0x1d8] sm:$0xff]
    %v11546 = vld [vmem:[#allocation7 + $0x1e0] sm:$0xff]
    %v11547 = vld [vmem:[#allocation7 + $0x1e8] sm:$0xff]
    %v11548 = vld [vmem:[#allocation7 + $0x1f0] sm:$0xff]
    %v11549 = vld [vmem:[#allocation7 + $0x1f8] sm:$0xff]
    %v11550 = vld [vmem:[#allocation7 + $0x200] sm:$0xff]
    %v11551 = vld [vmem:[#allocation7 + $0x208] sm:$0xff]
    %v11552 = vld [vmem:[#allocation7 + $0x210] sm:$0xff]
    %v11553 = vld [vmem:[#allocation7 + $0x218] sm:$0xff]
    %v11554 = vld [vmem:[#allocation7 + $0x220] sm:$0xff]
    %v11555 = vld [vmem:[#allocation7 + $0x228] sm:$0xff]
    %v11556 = vld [vmem:[#allocation7 + $0x230] sm:$0xff]
    %v11557 = vld [vmem:[#allocation7 + $0x238] sm:$0xff]
    %v11558 = vld [vmem:[#allocation7 + $0x240] sm:$0xff]
    %v11559 = vld [vmem:[#allocation7 + $0x248] sm:$0xff]
    %v11560 = vld [vmem:[#allocation7 + $0x250] sm:$0xff]
    %v11561 = vld [vmem:[#allocation7 + $0x258] sm:$0xff]
    %v11562 = vld [vmem:[#allocation7 + $0x260] sm:$0xff]
    %v11563 = vld [vmem:[#allocation7 + $0x268] sm:$0xff]
    %v11564 = vld [vmem:[#allocation7 + $0x270] sm:$0xff]
    %v11565 = vld [vmem:[#allocation7 + $0x278] sm:$0xff]
    %v11566 = vld [vmem:[#allocation7 + $0x280] sm:$0xff]
    %v11567 = vld [vmem:[#allocation7 + $0x288] sm:$0xff]
    %v11568 = vld [vmem:[#allocation7 + $0x290] sm:$0xff]
    %v11569 = vld [vmem:[#allocation7 + $0x298] sm:$0xff]
    %v11570 = vld [vmem:[#allocation7 + $0x2a0] sm:$0xff]
    %v11571 = vld [vmem:[#allocation7 + $0x2a8] sm:$0xff]
    %v11572 = vld [vmem:[#allocation7 + $0x2b0] sm:$0xff]
    %v11573 = vld [vmem:[#allocation7 + $0x2b8] sm:$0xff]
    %v11574 = vld [vmem:[#allocation7 + $0x2c0] sm:$0xff]
    %v11575 = vld [vmem:[#allocation7 + $0x2c8] sm:$0xff]
    %v11576 = vld [vmem:[#allocation7 + $0x2d0] sm:$0xff]
    %v11577 = vld [vmem:[#allocation7 + $0x2d8] sm:$0xff]
    %v11578 = vld [vmem:[#allocation7 + $0x2e0] sm:$0xff]
    %v11579 = vld [vmem:[#allocation7 + $0x2e8] sm:$0xff]
    %v11580 = vld [vmem:[#allocation7 + $0x2f0] sm:$0xff]
    %v11581 = vld [vmem:[#allocation7 + $0x2f8] sm:$0xff]
    %v11582 = vld [vmem:[#allocation7 + $0x300] sm:$0xff]
    %v11583 = vld [vmem:[#allocation7 + $0x308] sm:$0xff]
    %v11584 = vld [vmem:[#allocation7 + $0x310] sm:$0xff]
    %v11585 = vld [vmem:[#allocation7 + $0x318] sm:$0xff]
    %v11586 = vld [vmem:[#allocation7 + $0x320] sm:$0xff]
    %v11587 = vld [vmem:[#allocation7 + $0x328] sm:$0xff]
    %v11588 = vld [vmem:[#allocation7 + $0x330] sm:$0xff]
    %v11589 = vld [vmem:[#allocation7 + $0x338] sm:$0xff]
    %v11590 = vld [vmem:[#allocation7 + $0x340] sm:$0xff]
    %v11591 = vld [vmem:[#allocation7 + $0x348] sm:$0xff]
    %v11592 = vld [vmem:[#allocation7 + $0x350] sm:$0xff]
    %v11593 = vld [vmem:[#allocation7 + $0x358] sm:$0xff]
    %v11702 = vunpack.c.l.b16 %v11486
    %v11703 = vunpack.c.h.b16 %v11486
    %v11704 = vunpack.c.l.b16 %v11487
    %v11705 = vunpack.c.h.b16 %v11487
    %v11706 = vunpack.c.l.b16 %v11488
    %v11707 = vunpack.c.h.b16 %v11488
    %v11708 = vunpack.c.l.b16 %v11489
    %v11709 = vunpack.c.h.b16 %v11489
    %v11710 = vunpack.c.l.b16 %v11490
    %v11711 = vunpack.c.h.b16 %v11490
    %v11712 = vunpack.c.l.b16 %v11491
    %v11713 = vunpack.c.h.b16 %v11491
    %v11714 = vunpack.c.l.b16 %v11492
    %v11715 = vunpack.c.h.b16 %v11492
    %v11716 = vunpack.c.l.b16 %v11493
    %v11717 = vunpack.c.h.b16 %v11493
    %v11718 = vunpack.c.l.b16 %v11494
    %v11719 = vunpack.c.h.b16 %v11494
    %v11720 = vunpack.c.l.b16 %v11495
    %v11721 = vunpack.c.h.b16 %v11495
    %v11722 = vunpack.c.l.b16 %v11496
    %v11723 = vunpack.c.h.b16 %v11496
    %v11724 = vunpack.c.l.b16 %v11497
    %v11725 = vunpack.c.h.b16 %v11497
    %v11726 = vunpack.c.l.b16 %v11498
    %v11727 = vunpack.c.h.b16 %v11498
    %v11728 = vunpack.c.l.b16 %v11499
    %v11729 = vunpack.c.h.b16 %v11499
    %v11730 = vunpack.c.l.b16 %v11500
    %v11731 = vunpack.c.h.b16 %v11500
    %v11732 = vunpack.c.l.b16 %v11501
    %v11733 = vunpack.c.h.b16 %v11501
    %v11734 = vunpack.c.l.b16 %v11502
    %v11735 = vunpack.c.h.b16 %v11502
    %v11736 = vunpack.c.l.b16 %v11503
    %v11737 = vunpack.c.h.b16 %v11503
    %v11738 = vunpack.c.l.b16 %v11504
    %v11739 = vunpack.c.h.b16 %v11504
    %v11740 = vunpack.c.l.b16 %v11505
    %v11741 = vunpack.c.h.b16 %v11505
    %v11742 = vunpack.c.l.b16 %v11506
    %v11743 = vunpack.c.h.b16 %v11506
    %v11744 = vunpack.c.l.b16 %v11507
    %v11745 = vunpack.c.h.b16 %v11507
    %v11746 = vunpack.c.l.b16 %v11508
    %v11747 = vunpack.c.h.b16 %v11508
    %v11748 = vunpack.c.l.b16 %v11509
    %v11749 = vunpack.c.h.b16 %v11509
    %v11750 = vunpack.c.l.b16 %v11510
    %v11751 = vunpack.c.h.b16 %v11510
    %v11752 = vunpack.c.l.b16 %v11511
    %v11753 = vunpack.c.h.b16 %v11511
    %v11754 = vunpack.c.l.b16 %v11512
    %v11755 = vunpack.c.h.b16 %v11512
    %v11756 = vunpack.c.l.b16 %v11513
    %v11757 = vunpack.c.h.b16 %v11513
    %v11758 = vunpack.c.l.b16 %v11514
    %v11759 = vunpack.c.h.b16 %v11514
    %v11760 = vunpack.c.l.b16 %v11515
    %v11761 = vunpack.c.h.b16 %v11515
    %v11762 = vunpack.c.l.b16 %v11516
    %v11763 = vunpack.c.h.b16 %v11516
    %v11764 = vunpack.c.l.b16 %v11517
    %v11765 = vunpack.c.h.b16 %v11517
    %v11766 = vunpack.c.l.b16 %v11518
    %v11767 = vunpack.c.h.b16 %v11518
    %v11768 = vunpack.c.l.b16 %v11519
    %v11769 = vunpack.c.h.b16 %v11519
    %v11770 = vunpack.c.l.b16 %v11520
    %v11771 = vunpack.c.h.b16 %v11520
    %v11772 = vunpack.c.l.b16 %v11521
    %v11773 = vunpack.c.h.b16 %v11521
    %v11774 = vunpack.c.l.b16 %v11522
    %v11775 = vunpack.c.h.b16 %v11522
    %v11776 = vunpack.c.l.b16 %v11523
    %v11777 = vunpack.c.h.b16 %v11523
    %v11778 = vunpack.c.l.b16 %v11524
    %v11779 = vunpack.c.h.b16 %v11524
    %v11780 = vunpack.c.l.b16 %v11525
    %v11781 = vunpack.c.h.b16 %v11525
    %v11782 = vunpack.c.l.b16 %v11526
    %v11783 = vunpack.c.h.b16 %v11526
    %v11784 = vunpack.c.l.b16 %v11527
    %v11785 = vunpack.c.h.b16 %v11527
    %v11786 = vunpack.c.l.b16 %v11528
    %v11787 = vunpack.c.h.b16 %v11528
    %v11788 = vunpack.c.l.b16 %v11529
    %v11789 = vunpack.c.h.b16 %v11529
    %v11790 = vunpack.c.l.b16 %v11530
    %v11791 = vunpack.c.h.b16 %v11530
    %v11792 = vunpack.c.l.b16 %v11531
    %v11793 = vunpack.c.h.b16 %v11531
    %v11794 = vunpack.c.l.b16 %v11532
    %v11795 = vunpack.c.h.b16 %v11532
    %v11796 = vunpack.c.l.b16 %v11533
    %v11797 = vunpack.c.h.b16 %v11533
    %v11798 = vunpack.c.l.b16 %v11534
    %v11799 = vunpack.c.h.b16 %v11534
    %v11800 = vunpack.c.l.b16 %v11535
    %v11801 = vunpack.c.h.b16 %v11535
    %v11802 = vunpack.c.l.b16 %v11536
    %v11803 = vunpack.c.h.b16 %v11536
    %v11804 = vunpack.c.l.b16 %v11537
    %v11805 = vunpack.c.h.b16 %v11537
    %v11806 = vunpack.c.l.b16 %v11538
    %v11807 = vunpack.c.h.b16 %v11538
    %v11808 = vunpack.c.l.b16 %v11539
    %v11809 = vunpack.c.h.b16 %v11539
    %v11810 = vunpack.c.l.b16 %v11540
    %v11811 = vunpack.c.h.b16 %v11540
    %v11812 = vunpack.c.l.b16 %v11541
    %v11813 = vunpack.c.h.b16 %v11541
    %v11814 = vunpack.c.l.b16 %v11542
    %v11815 = vunpack.c.h.b16 %v11542
    %v11816 = vunpack.c.l.b16 %v11543
    %v11817 = vunpack.c.h.b16 %v11543
    %v11818 = vunpack.c.l.b16 %v11544
    %v11819 = vunpack.c.h.b16 %v11544
    %v11820 = vunpack.c.l.b16 %v11545
    %v11821 = vunpack.c.h.b16 %v11545
    %v11822 = vunpack.c.l.b16 %v11546
    %v11823 = vunpack.c.h.b16 %v11546
    %v11824 = vunpack.c.l.b16 %v11547
    %v11825 = vunpack.c.h.b16 %v11547
    %v11826 = vunpack.c.l.b16 %v11548
    %v11827 = vunpack.c.h.b16 %v11548
    %v11828 = vunpack.c.l.b16 %v11549
    %v11829 = vunpack.c.h.b16 %v11549
    %v11830 = vunpack.c.l.b16 %v11550
    %v11831 = vunpack.c.h.b16 %v11550
    %v11832 = vunpack.c.l.b16 %v11551
    %v11833 = vunpack.c.h.b16 %v11551
    %v11834 = vunpack.c.l.b16 %v11552
    %v11835 = vunpack.c.h.b16 %v11552
    %v11836 = vunpack.c.l.b16 %v11553
    %v11837 = vunpack.c.h.b16 %v11553
    %v11838 = vunpack.c.l.b16 %v11554
    %v11839 = vunpack.c.h.b16 %v11554
    %v11840 = vunpack.c.l.b16 %v11555
    %v11841 = vunpack.c.h.b16 %v11555
    %v11842 = vunpack.c.l.b16 %v11556
    %v11843 = vunpack.c.h.b16 %v11556
    %v11844 = vunpack.c.l.b16 %v11557
    %v11845 = vunpack.c.h.b16 %v11557
    %v11846 = vunpack.c.l.b16 %v11558
    %v11847 = vunpack.c.h.b16 %v11558
    %v11848 = vunpack.c.l.b16 %v11559
    %v11849 = vunpack.c.h.b16 %v11559
    %v11850 = vunpack.c.l.b16 %v11560
    %v11851 = vunpack.c.h.b16 %v11560
    %v11852 = vunpack.c.l.b16 %v11561
    %v11853 = vunpack.c.h.b16 %v11561
    %v11854 = vunpack.c.l.b16 %v11562
    %v11855 = vunpack.c.h.b16 %v11562
    %v11856 = vunpack.c.l.b16 %v11563
    %v11857 = vunpack.c.h.b16 %v11563
    %v11858 = vunpack.c.l.b16 %v11564
    %v11859 = vunpack.c.h.b16 %v11564
    %v11860 = vunpack.c.l.b16 %v11565
    %v11861 = vunpack.c.h.b16 %v11565
    %v11862 = vunpack.c.l.b16 %v11566
    %v11863 = vunpack.c.h.b16 %v11566
    %v11864 = vunpack.c.l.b16 %v11567
    %v11865 = vunpack.c.h.b16 %v11567
    %v11866 = vunpack.c.l.b16 %v11568
    %v11867 = vunpack.c.h.b16 %v11568
    %v11868 = vunpack.c.l.b16 %v11569
    %v11869 = vunpack.c.h.b16 %v11569
    %v11870 = vunpack.c.l.b16 %v11570
    %v11871 = vunpack.c.h.b16 %v11570
    %v11872 = vunpack.c.l.b16 %v11571
    %v11873 = vunpack.c.h.b16 %v11571
    %v11874 = vunpack.c.l.b16 %v11572
    %v11875 = vunpack.c.h.b16 %v11572
    %v11876 = vunpack.c.l.b16 %v11573
    %v11877 = vunpack.c.h.b16 %v11573
    %v11878 = vunpack.c.l.b16 %v11574
    %v11879 = vunpack.c.h.b16 %v11574
    %v11880 = vunpack.c.l.b16 %v11575
    %v11881 = vunpack.c.h.b16 %v11575
    %v11882 = vunpack.c.l.b16 %v11576
    %v11883 = vunpack.c.h.b16 %v11576
    %v11884 = vunpack.c.l.b16 %v11577
    %v11885 = vunpack.c.h.b16 %v11577
    %v11886 = vunpack.c.l.b16 %v11578
    %v11887 = vunpack.c.h.b16 %v11578
    %v11888 = vunpack.c.l.b16 %v11579
    %v11889 = vunpack.c.h.b16 %v11579
    %v11890 = vunpack.c.l.b16 %v11580
    %v11891 = vunpack.c.h.b16 %v11580
    %v11892 = vunpack.c.l.b16 %v11581
    %v11893 = vunpack.c.h.b16 %v11581
    %v11894 = vunpack.c.l.b16 %v11582
    %v11895 = vunpack.c.h.b16 %v11582
    %v11896 = vunpack.c.l.b16 %v11583
    %v11897 = vunpack.c.h.b16 %v11583
    %v11898 = vunpack.c.l.b16 %v11584
    %v11899 = vunpack.c.h.b16 %v11584
    %v11900 = vunpack.c.l.b16 %v11585
    %v11901 = vunpack.c.h.b16 %v11585
    %v11902 = vunpack.c.l.b16 %v11586
    %v11903 = vunpack.c.h.b16 %v11586
    %v11904 = vunpack.c.l.b16 %v11587
    %v11905 = vunpack.c.h.b16 %v11587
    %v11906 = vunpack.c.l.b16 %v11588
    %v11907 = vunpack.c.h.b16 %v11588
    %v11908 = vunpack.c.l.b16 %v11589
    %v11909 = vunpack.c.h.b16 %v11589
    %v11910 = vunpack.c.l.b16 %v11590
    %v11911 = vunpack.c.h.b16 %v11590
    %v11912 = vunpack.c.l.b16 %v11591
    %v11913 = vunpack.c.h.b16 %v11591
    %v11914 = vunpack.c.l.b16 %v11592
    %v11915 = vunpack.c.h.b16 %v11592
    %v11916 = vunpack.c.l.b16 %v11593
    %v11917 = vunpack.c.h.b16 %v11593
    %v11918 = vpack.c.b16 %v11704, %v11702
    %v11919 = vpack.c.b16 %v11705, %v11703
    %v11920 = vpack.c.b16 %v11708, %v11706
    %v11921 = vpack.c.b16 %v11709, %v11707
    %v11922 = vpack.c.b16 %v11712, %v11710
    %v11923 = vpack.c.b16 %v11713, %v11711
    %v11924 = vpack.c.b16 %v11716, %v11714
    %v11925 = vpack.c.b16 %v11717, %v11715
    %v11926 = vpack.c.b16 %v11720, %v11718
    %v11927 = vpack.c.b16 %v11721, %v11719
    %v11928 = vpack.c.b16 %v11724, %v11722
    %v11929 = vpack.c.b16 %v11725, %v11723
    %v11930 = vpack.c.b16 %v11728, %v11726
    %v11931 = vpack.c.b16 %v11729, %v11727
    %v11932 = vpack.c.b16 %v11732, %v11730
    %v11933 = vpack.c.b16 %v11733, %v11731
    %v11934 = vpack.c.b16 %v11736, %v11734
    %v11935 = vpack.c.b16 %v11737, %v11735
    %v11936 = vpack.c.b16 %v11740, %v11738
    %v11937 = vpack.c.b16 %v11741, %v11739
    %v11938 = vpack.c.b16 %v11744, %v11742
    %v11939 = vpack.c.b16 %v11745, %v11743
    %v11940 = vpack.c.b16 %v11748, %v11746
    %v11941 = vpack.c.b16 %v11749, %v11747
    %v11942 = vpack.c.b16 %v11752, %v11750
    %v11943 = vpack.c.b16 %v11753, %v11751
    %v11944 = vpack.c.b16 %v11756, %v11754
    %v11945 = vpack.c.b16 %v11757, %v11755
    %v11946 = vpack.c.b16 %v11760, %v11758
    %v11947 = vpack.c.b16 %v11761, %v11759
    %v11948 = vpack.c.b16 %v11764, %v11762
    %v11949 = vpack.c.b16 %v11765, %v11763
    %v11950 = vpack.c.b16 %v11768, %v11766
    %v11951 = vpack.c.b16 %v11769, %v11767
    %v11952 = vpack.c.b16 %v11772, %v11770
    %v11953 = vpack.c.b16 %v11773, %v11771
    %v11954 = vpack.c.b16 %v11776, %v11774
    %v11955 = vpack.c.b16 %v11777, %v11775
    %v11956 = vpack.c.b16 %v11780, %v11778
    %v11957 = vpack.c.b16 %v11781, %v11779
    %v11958 = vpack.c.b16 %v11784, %v11782
    %v11959 = vpack.c.b16 %v11785, %v11783
    %v11960 = vpack.c.b16 %v11788, %v11786
    %v11961 = vpack.c.b16 %v11789, %v11787
    %v11962 = vpack.c.b16 %v11792, %v11790
    %v11963 = vpack.c.b16 %v11793, %v11791
    %v11964 = vpack.c.b16 %v11796, %v11794
    %v11965 = vpack.c.b16 %v11797, %v11795
    %v11966 = vpack.c.b16 %v11800, %v11798
    %v11967 = vpack.c.b16 %v11801, %v11799
    %v11968 = vpack.c.b16 %v11804, %v11802
    %v11969 = vpack.c.b16 %v11805, %v11803
    %v11970 = vpack.c.b16 %v11808, %v11806
    %v11971 = vpack.c.b16 %v11809, %v11807
    %v11972 = vpack.c.b16 %v11812, %v11810
    %v11973 = vpack.c.b16 %v11813, %v11811
    %v11974 = vpack.c.b16 %v11816, %v11814
    %v11975 = vpack.c.b16 %v11817, %v11815
    %v11976 = vpack.c.b16 %v11820, %v11818
    %v11977 = vpack.c.b16 %v11821, %v11819
    %v11978 = vpack.c.b16 %v11824, %v11822
    %v11979 = vpack.c.b16 %v11825, %v11823
    %v11980 = vpack.c.b16 %v11828, %v11826
    %v11981 = vpack.c.b16 %v11829, %v11827
    %v11982 = vpack.c.b16 %v11832, %v11830
    %v11983 = vpack.c.b16 %v11833, %v11831
    %v11984 = vpack.c.b16 %v11836, %v11834
    %v11985 = vpack.c.b16 %v11837, %v11835
    %v11986 = vpack.c.b16 %v11840, %v11838
    %v11987 = vpack.c.b16 %v11841, %v11839
    %v11988 = vpack.c.b16 %v11844, %v11842
    %v11989 = vpack.c.b16 %v11845, %v11843
    %v11990 = vpack.c.b16 %v11848, %v11846
    %v11991 = vpack.c.b16 %v11849, %v11847
    %v11992 = vpack.c.b16 %v11852, %v11850
    %v11993 = vpack.c.b16 %v11853, %v11851
    %v11994 = vpack.c.b16 %v11856, %v11854
    %v11995 = vpack.c.b16 %v11857, %v11855
    %v11996 = vpack.c.b16 %v11860, %v11858
    %v11997 = vpack.c.b16 %v11861, %v11859
    %v11998 = vpack.c.b16 %v11864, %v11862
    %v11999 = vpack.c.b16 %v11865, %v11863
    %v12000 = vpack.c.b16 %v11868, %v11866
    %v12001 = vpack.c.b16 %v11869, %v11867
    %v12002 = vpack.c.b16 %v11872, %v11870
    %v12003 = vpack.c.b16 %v11873, %v11871
    %v12004 = vpack.c.b16 %v11876, %v11874
    %v12005 = vpack.c.b16 %v11877, %v11875
    %v12006 = vpack.c.b16 %v11880, %v11878
    %v12007 = vpack.c.b16 %v11881, %v11879
    %v12008 = vpack.c.b16 %v11884, %v11882
    %v12009 = vpack.c.b16 %v11885, %v11883
    %v12010 = vpack.c.b16 %v11888, %v11886
    %v12011 = vpack.c.b16 %v11889, %v11887
    %v12012 = vpack.c.b16 %v11892, %v11890
    %v12013 = vpack.c.b16 %v11893, %v11891
    %v12014 = vpack.c.b16 %v11896, %v11894
    %v12015 = vpack.c.b16 %v11897, %v11895
    %v12016 = vpack.c.b16 %v11900, %v11898
    %v12017 = vpack.c.b16 %v11901, %v11899
    %v12018 = vpack.c.b16 %v11904, %v11902
    %v12019 = vpack.c.b16 %v11905, %v11903
    %v12020 = vpack.c.b16 %v11908, %v11906
    %v12021 = vpack.c.b16 %v11909, %v11907
    %v12022 = vpack.c.b16 %v11912, %v11910
    %v12023 = vpack.c.b16 %v11913, %v11911
    %v12024 = vpack.c.b16 %v11916, %v11914
    %v12025 = vpack.c.b16 %v11917, %v11915
    %vm12134 = vcmask 785408
    %v12136 = vsel %vm12134, %v11485, 0
    %12138 = vmatpush.bf16.msra.mxu0 %v11932
    %12139 = vmatpush.bf16.msra.mxu0 %v11930
    %12140 = vmatpush.bf16.msra.mxu0 %v11928
    %12141 = vmatpush.bf16.msra.mxu0 %v11926
    %12142 = vmatpush.bf16.msra.mxu0 %v11924
    %12143 = vmatpush.bf16.msra.mxu0 %v11922
    %12144 = vmatpush.bf16.msra.mxu0 %v11920
    %12145 = vmatpush.bf16.msra.mxu0 %v11918
    %12146 = vmatmul.bf16.gmra.mxu0 %v11479
    %v12147 = vpop.f32.mrf.mxu0
    %v12148 = vadd.f32 0.0, %v12147
    %v12149 = vpop.f32.mrf.mxu0
    %12150 = vdwg.mxu0
    %12151 = vmatpush.bf16.msra.mxu0 %v11948
    %12152 = vmatpush.bf16.msra.mxu0 %v11946
    %12153 = vmatpush.bf16.msra.mxu0 %v11944
    %12154 = vmatpush.bf16.msra.mxu0 %v11942
    %12155 = vmatpush.bf16.msra.mxu0 %v11940
    %12156 = vmatpush.bf16.msra.mxu0 %v11938
    %12157 = vmatpush.bf16.msra.mxu0 %v11936
    %12158 = vmatpush.bf16.msra.mxu0 %v11934
    %12159 = vmatmul.bf16.gmra.mxu0 %v11480
    %v12160 = vpop.f32.mrf.mxu0
    %v12161 = vadd.f32 %v12148, %v12160
    %v12162 = vpop.f32.mrf.mxu0
    %12163 = vdwg.mxu0
    %12164 = vmatpush.bf16.msra.mxu0 %v11964
    %12165 = vmatpush.bf16.msra.mxu0 %v11962
    %12166 = vmatpush.bf16.msra.mxu0 %v11960
    %12167 = vmatpush.bf16.msra.mxu0 %v11958
    %12168 = vmatpush.bf16.msra.mxu0 %v11956
    %12169 = vmatpush.bf16.msra.mxu0 %v11954
    %12170 = vmatpush.bf16.msra.mxu0 %v11952
    %12171 = vmatpush.bf16.msra.mxu0 %v11950
    %12172 = vmatmul.bf16.gmra.mxu0 %v11481
    %v12173 = vpop.f32.mrf.mxu0
    %v12174 = vadd.f32 %v12161, %v12173
    %v12175 = vpop.f32.mrf.mxu0
    %12176 = vdwg.mxu0
    %12177 = vmatpush.bf16.msra.mxu0 %v11980
    %12178 = vmatpush.bf16.msra.mxu0 %v11978
    %12179 = vmatpush.bf16.msra.mxu0 %v11976
    %12180 = vmatpush.bf16.msra.mxu0 %v11974
    %12181 = vmatpush.bf16.msra.mxu0 %v11972
    %12182 = vmatpush.bf16.msra.mxu0 %v11970
    %12183 = vmatpush.bf16.msra.mxu0 %v11968
    %12184 = vmatpush.bf16.msra.mxu0 %v11966
    %12185 = vmatmul.bf16.gmra.mxu0 %v11482
    %v12186 = vpop.f32.mrf.mxu0
    %v12187 = vadd.f32 %v12174, %v12186
    %v12188 = vpop.f32.mrf.mxu0
    %12189 = vdwg.mxu0
    %12190 = vmatpush.bf16.msra.mxu0 %v11996
    %12191 = vmatpush.bf16.msra.mxu0 %v11994
    %12192 = vmatpush.bf16.msra.mxu0 %v11992
    %12193 = vmatpush.bf16.msra.mxu0 %v11990
    %12194 = vmatpush.bf16.msra.mxu0 %v11988
    %12195 = vmatpush.bf16.msra.mxu0 %v11986
    %12196 = vmatpush.bf16.msra.mxu0 %v11984
    %12197 = vmatpush.bf16.msra.mxu0 %v11982
    %12198 = vmatmul.bf16.gmra.mxu0 %v11483
    %v12199 = vpop.f32.mrf.mxu0
    %v12200 = vadd.f32 %v12187, %v12199
    %v12201 = vpop.f32.mrf.mxu0
    %12202 = vdwg.mxu0
    %12203 = vmatpush.bf16.msra.mxu0 %v12012
    %12204 = vmatpush.bf16.msra.mxu0 %v12010
    %12205 = vmatpush.bf16.msra.mxu0 %v12008
    %12206 = vmatpush.bf16.msra.mxu0 %v12006
    %12207 = vmatpush.bf16.msra.mxu0 %v12004
    %12208 = vmatpush.bf16.msra.mxu0 %v12002
    %12209 = vmatpush.bf16.msra.mxu0 %v12000
    %12210 = vmatpush.bf16.msra.mxu0 %v11998
    %12211 = vmatmul.bf16.gmra.mxu0 %v11484
    %v12212 = vpop.f32.mrf.mxu0
    %v12213 = vadd.f32 %v12200, %v12212
    %v12214 = vpop.f32.mrf.mxu0
    %12215 = vdwg.mxu0
    %12216 = vmatpush.bf16.msra.mxu0 0
    %12217 = vmatpush.bf16.msra.mxu0 0
    %12218 = vmatpush.bf16.msra.mxu0 %v12024
    %12219 = vmatpush.bf16.msra.mxu0 %v12022
    %12220 = vmatpush.bf16.msra.mxu0 %v12020
    %12221 = vmatpush.bf16.msra.mxu0 %v12018
    %12222 = vmatpush.bf16.msra.mxu0 %v12016
    %12223 = vmatpush.bf16.msra.mxu0 %v12014
    %12224 = vmatmul.bf16.gmra.mxu0 %v12136
    %v12225 = vpop.f32.mrf.mxu0
    %v12226 = vadd.f32 %v12213, %v12225
    %v12227 = vpop.f32.mrf.mxu0
    %12228 = vdwg.mxu0
    %12229 = vmatpush.bf16.msra.mxu0 %v11933
    %12230 = vmatpush.bf16.msra.mxu0 %v11931
    %12231 = vmatpush.bf16.msra.mxu0 %v11929
    %12232 = vmatpush.bf16.msra.mxu0 %v11927
    %12233 = vmatpush.bf16.msra.mxu0 %v11925
    %12234 = vmatpush.bf16.msra.mxu0 %v11923
    %12235 = vmatpush.bf16.msra.mxu0 %v11921
    %12236 = vmatpush.bf16.msra.mxu0 %v11919
    %12237 = vmatmul.bf16.gmra.mxu0 %v11479
    %v12238 = vpop.f32.mrf.mxu0
    %v12239 = vadd.f32 0.0, %v12238
    %v12240 = vpop.f32.mrf.mxu0
    %12241 = vdwg.mxu0
    %12242 = vmatpush.bf16.msra.mxu0 %v11949
    %12243 = vmatpush.bf16.msra.mxu0 %v11947
    %12244 = vmatpush.bf16.msra.mxu0 %v11945
    %12245 = vmatpush.bf16.msra.mxu0 %v11943
    %12246 = vmatpush.bf16.msra.mxu0 %v11941
    %12247 = vmatpush.bf16.msra.mxu0 %v11939
    %12248 = vmatpush.bf16.msra.mxu0 %v11937
    %12249 = vmatpush.bf16.msra.mxu0 %v11935
    %12250 = vmatmul.bf16.gmra.mxu0 %v11480
    %v12251 = vpop.f32.mrf.mxu0
    %v12252 = vadd.f32 %v12239, %v12251
    %v12253 = vpop.f32.mrf.mxu0
    %12254 = vdwg.mxu0
    %12255 = vmatpush.bf16.msra.mxu0 %v11965
    %12256 = vmatpush.bf16.msra.mxu0 %v11963
    %12257 = vmatpush.bf16.msra.mxu0 %v11961
    %12258 = vmatpush.bf16.msra.mxu0 %v11959
    %12259 = vmatpush.bf16.msra.mxu0 %v11957
    %12260 = vmatpush.bf16.msra.mxu0 %v11955
    %12261 = vmatpush.bf16.msra.mxu0 %v11953
    %12262 = vmatpush.bf16.msra.mxu0 %v11951
    %12263 = vmatmul.bf16.gmra.mxu0 %v11481
    %v12264 = vpop.f32.mrf.mxu0
    %v12265 = vadd.f32 %v12252, %v12264
    %v12266 = vpop.f32.mrf.mxu0
    %12267 = vdwg.mxu0
    %12268 = vmatpush.bf16.msra.mxu0 %v11981
    %12269 = vmatpush.bf16.msra.mxu0 %v11979
    %12270 = vmatpush.bf16.msra.mxu0 %v11977
    %12271 = vmatpush.bf16.msra.mxu0 %v11975
    %12272 = vmatpush.bf16.msra.mxu0 %v11973
    %12273 = vmatpush.bf16.msra.mxu0 %v11971
    %12274 = vmatpush.bf16.msra.mxu0 %v11969
    %12275 = vmatpush.bf16.msra.mxu0 %v11967
    %12276 = vmatmul.bf16.gmra.mxu0 %v11482
    %v12277 = vpop.f32.mrf.mxu0
    %v12278 = vadd.f32 %v12265, %v12277
    %v12279 = vpop.f32.mrf.mxu0
    %12280 = vdwg.mxu0
    %12281 = vmatpush.bf16.msra.mxu0 %v11997
    %12282 = vmatpush.bf16.msra.mxu0 %v11995
    %12283 = vmatpush.bf16.msra.mxu0 %v11993
    %12284 = vmatpush.bf16.msra.mxu0 %v11991
    %12285 = vmatpush.bf16.msra.mxu0 %v11989
    %12286 = vmatpush.bf16.msra.mxu0 %v11987
    %12287 = vmatpush.bf16.msra.mxu0 %v11985
    %12288 = vmatpush.bf16.msra.mxu0 %v11983
    %12289 = vmatmul.bf16.gmra.mxu0 %v11483
    %v12290 = vpop.f32.mrf.mxu0
    %v12291 = vadd.f32 %v12278, %v12290
    %v12292 = vpop.f32.mrf.mxu0
    %12293 = vdwg.mxu0
    %12294 = vmatpush.bf16.msra.mxu0 %v12013
    %12295 = vmatpush.bf16.msra.mxu0 %v12011
    %12296 = vmatpush.bf16.msra.mxu0 %v12009
    %12297 = vmatpush.bf16.msra.mxu0 %v12007
    %12298 = vmatpush.bf16.msra.mxu0 %v12005
    %12299 = vmatpush.bf16.msra.mxu0 %v12003
    %12300 = vmatpush.bf16.msra.mxu0 %v12001
    %12301 = vmatpush.bf16.msra.mxu0 %v11999
    %12302 = vmatmul.bf16.gmra.mxu0 %v11484
    %v12303 = vpop.f32.mrf.mxu0
    %v12304 = vadd.f32 %v12291, %v12303
    %v12305 = vpop.f32.mrf.mxu0
    %12306 = vdwg.mxu0
    %12307 = vmatpush.bf16.msra.mxu0 0
    %12308 = vmatpush.bf16.msra.mxu0 0
    %12309 = vmatpush.bf16.msra.mxu0 %v12025
    %12310 = vmatpush.bf16.msra.mxu0 %v12023
    %12311 = vmatpush.bf16.msra.mxu0 %v12021
    %12312 = vmatpush.bf16.msra.mxu0 %v12019
    %12313 = vmatpush.bf16.msra.mxu0 %v12017
    %12314 = vmatpush.bf16.msra.mxu0 %v12015
    %12315 = vmatmul.bf16.gmra.mxu0 %v12136
    %v12316 = vpop.f32.mrf.mxu0
    %v12317 = vadd.f32 %v12304, %v12316
    %v12318 = vpop.f32.mrf.mxu0
    %12319 = vdwg.mxu0
    %s12320 = scalar_lea.vmem [#allocation7], 864
    %v12321 = vld [vmem:[%s12320] sm:$0xff]
    %v12322 = vld [vmem:[%s12320 + $0x8] sm:$0xff]
    %v12323 = vld [vmem:[%s12320 + $0x10] sm:$0xff]
    %v12324 = vld [vmem:[%s12320 + $0x18] sm:$0xff]
    %v12325 = vld [vmem:[%s12320 + $0x20] sm:$0xff]
    %v12326 = vld [vmem:[%s12320 + $0x28] sm:$0xff]
    %v12327 = vld [vmem:[%s12320 + $0x30] sm:$0xff]
    %v12328 = vld [vmem:[%s12320 + $0x38] sm:$0xff]
    %v12329 = vld [vmem:[%s12320 + $0x40] sm:$0xff]
    %v12330 = vld [vmem:[%s12320 + $0x48] sm:$0xff]
    %v12331 = vld [vmem:[%s12320 + $0x50] sm:$0xff]
    %v12332 = vld [vmem:[%s12320 + $0x58] sm:$0xff]
    %v12333 = vld [vmem:[%s12320 + $0x60] sm:$0xff]
    %v12334 = vld [vmem:[%s12320 + $0x68] sm:$0xff]
    %v12335 = vld [vmem:[%s12320 + $0x70] sm:$0xff]
    %v12336 = vld [vmem:[%s12320 + $0x78] sm:$0xff]
    %v12337 = vld [vmem:[%s12320 + $0x80] sm:$0xff]
    %v12338 = vld [vmem:[%s12320 + $0x88] sm:$0xff]
    %v12339 = vld [vmem:[%s12320 + $0x90] sm:$0xff]
    %v12340 = vld [vmem:[%s12320 + $0x98] sm:$0xff]
    %v12341 = vld [vmem:[%s12320 + $0xa0] sm:$0xff]
    %v12342 = vld [vmem:[%s12320 + $0xa8] sm:$0xff]
    %v12343 = vld [vmem:[%s12320 + $0xb0] sm:$0xff]
    %v12344 = vld [vmem:[%s12320 + $0xb8] sm:$0xff]
    %v12345 = vld [vmem:[%s12320 + $0xc0] sm:$0xff]
    %v12346 = vld [vmem:[%s12320 + $0xc8] sm:$0xff]
    %v12347 = vld [vmem:[%s12320 + $0xd0] sm:$0xff]
    %v12348 = vld [vmem:[%s12320 + $0xd8] sm:$0xff]
    %v12349 = vld [vmem:[%s12320 + $0xe0] sm:$0xff]
    %v12350 = vld [vmem:[%s12320 + $0xe8] sm:$0xff]
    %v12351 = vld [vmem:[%s12320 + $0xf0] sm:$0xff]
    %v12352 = vld [vmem:[%s12320 + $0xf8] sm:$0xff]
    %v12353 = vld [vmem:[%s12320 + $0x100] sm:$0xff]
    %v12354 = vld [vmem:[%s12320 + $0x108] sm:$0xff]
    %v12355 = vld [vmem:[%s12320 + $0x110] sm:$0xff]
    %v12356 = vld [vmem:[%s12320 + $0x118] sm:$0xff]
    %v12357 = vld [vmem:[%s12320 + $0x120] sm:$0xff]
    %v12358 = vld [vmem:[%s12320 + $0x128] sm:$0xff]
    %v12359 = vld [vmem:[%s12320 + $0x130] sm:$0xff]
    %v12360 = vld [vmem:[%s12320 + $0x138] sm:$0xff]
    %v12361 = vld [vmem:[%s12320 + $0x140] sm:$0xff]
    %v12362 = vld [vmem:[%s12320 + $0x148] sm:$0xff]
    %v12363 = vld [vmem:[%s12320 + $0x150] sm:$0xff]
    %v12364 = vld [vmem:[%s12320 + $0x158] sm:$0xff]
    %v12365 = vld [vmem:[%s12320 + $0x160] sm:$0xff]
    %v12366 = vld [vmem:[%s12320 + $0x168] sm:$0xff]
    %v12367 = vld [vmem:[%s12320 + $0x170] sm:$0xff]
    %v12368 = vld [vmem:[%s12320 + $0x178] sm:$0xff]
    %v12369 = vld [vmem:[%s12320 + $0x180] sm:$0xff]
    %v12370 = vld [vmem:[%s12320 + $0x188] sm:$0xff]
    %v12371 = vld [vmem:[%s12320 + $0x190] sm:$0xff]
    %v12372 = vld [vmem:[%s12320 + $0x198] sm:$0xff]
    %v12373 = vld [vmem:[%s12320 + $0x1a0] sm:$0xff]
    %v12374 = vld [vmem:[%s12320 + $0x1a8] sm:$0xff]
    %v12375 = vld [vmem:[%s12320 + $0x1b0] sm:$0xff]
    %v12376 = vld [vmem:[%s12320 + $0x1b8] sm:$0xff]
    %v12377 = vld [vmem:[%s12320 + $0x1c0] sm:$0xff]
    %v12378 = vld [vmem:[%s12320 + $0x1c8] sm:$0xff]
    %v12379 = vld [vmem:[%s12320 + $0x1d0] sm:$0xff]
    %v12380 = vld [vmem:[%s12320 + $0x1d8] sm:$0xff]
    %v12381 = vld [vmem:[%s12320 + $0x1e0] sm:$0xff]
    %v12382 = vld [vmem:[%s12320 + $0x1e8] sm:$0xff]
    %v12383 = vld [vmem:[%s12320 + $0x1f0] sm:$0xff]
    %v12384 = vld [vmem:[%s12320 + $0x1f8] sm:$0xff]
    %v12385 = vld [vmem:[%s12320 + $0x200] sm:$0xff]
    %v12386 = vld [vmem:[%s12320 + $0x208] sm:$0xff]
    %v12387 = vld [vmem:[%s12320 + $0x210] sm:$0xff]
    %v12388 = vld [vmem:[%s12320 + $0x218] sm:$0xff]
    %v12389 = vld [vmem:[%s12320 + $0x220] sm:$0xff]
    %v12390 = vld [vmem:[%s12320 + $0x228] sm:$0xff]
    %v12391 = vld [vmem:[%s12320 + $0x230] sm:$0xff]
    %v12392 = vld [vmem:[%s12320 + $0x238] sm:$0xff]
    %v12393 = vld [vmem:[%s12320 + $0x240] sm:$0xff]
    %v12394 = vld [vmem:[%s12320 + $0x248] sm:$0xff]
    %v12395 = vld [vmem:[%s12320 + $0x250] sm:$0xff]
    %v12396 = vld [vmem:[%s12320 + $0x258] sm:$0xff]
    %v12397 = vld [vmem:[%s12320 + $0x260] sm:$0xff]
    %v12398 = vld [vmem:[%s12320 + $0x268] sm:$0xff]
    %v12399 = vld [vmem:[%s12320 + $0x270] sm:$0xff]
    %v12400 = vld [vmem:[%s12320 + $0x278] sm:$0xff]
    %v12401 = vld [vmem:[%s12320 + $0x280] sm:$0xff]
    %v12402 = vld [vmem:[%s12320 + $0x288] sm:$0xff]
    %v12403 = vld [vmem:[%s12320 + $0x290] sm:$0xff]
    %v12404 = vld [vmem:[%s12320 + $0x298] sm:$0xff]
    %v12405 = vld [vmem:[%s12320 + $0x2a0] sm:$0xff]
    %v12406 = vld [vmem:[%s12320 + $0x2a8] sm:$0xff]
    %v12407 = vld [vmem:[%s12320 + $0x2b0] sm:$0xff]
    %v12408 = vld [vmem:[%s12320 + $0x2b8] sm:$0xff]
    %v12409 = vld [vmem:[%s12320 + $0x2c0] sm:$0xff]
    %v12410 = vld [vmem:[%s12320 + $0x2c8] sm:$0xff]
    %v12411 = vld [vmem:[%s12320 + $0x2d0] sm:$0xff]
    %v12412 = vld [vmem:[%s12320 + $0x2d8] sm:$0xff]
    %v12413 = vld [vmem:[%s12320 + $0x2e0] sm:$0xff]
    %v12414 = vld [vmem:[%s12320 + $0x2e8] sm:$0xff]
    %v12415 = vld [vmem:[%s12320 + $0x2f0] sm:$0xff]
    %v12416 = vld [vmem:[%s12320 + $0x2f8] sm:$0xff]
    %v12417 = vld [vmem:[%s12320 + $0x300] sm:$0xff]
    %v12418 = vld [vmem:[%s12320 + $0x308] sm:$0xff]
    %v12419 = vld [vmem:[%s12320 + $0x310] sm:$0xff]
    %v12420 = vld [vmem:[%s12320 + $0x318] sm:$0xff]
    %v12421 = vld [vmem:[%s12320 + $0x320] sm:$0xff]
    %v12422 = vld [vmem:[%s12320 + $0x328] sm:$0xff]
    %v12423 = vld [vmem:[%s12320 + $0x330] sm:$0xff]
    %v12424 = vld [vmem:[%s12320 + $0x338] sm:$0xff]
    %v12425 = vld [vmem:[%s12320 + $0x340] sm:$0xff]
    %v12426 = vld [vmem:[%s12320 + $0x348] sm:$0xff]
    %v12427 = vld [vmem:[%s12320 + $0x350] sm:$0xff]
    %v12428 = vld [vmem:[%s12320 + $0x358] sm:$0xff]
    %v12537 = vunpack.c.l.b16 %v12321
    %v12538 = vunpack.c.h.b16 %v12321
    %v12539 = vunpack.c.l.b16 %v12322
    %v12540 = vunpack.c.h.b16 %v12322
    %v12541 = vunpack.c.l.b16 %v12323
    %v12542 = vunpack.c.h.b16 %v12323
    %v12543 = vunpack.c.l.b16 %v12324
    %v12544 = vunpack.c.h.b16 %v12324
    %v12545 = vunpack.c.l.b16 %v12325
    %v12546 = vunpack.c.h.b16 %v12325
    %v12547 = vunpack.c.l.b16 %v12326
    %v12548 = vunpack.c.h.b16 %v12326
    %v12549 = vunpack.c.l.b16 %v12327
    %v12550 = vunpack.c.h.b16 %v12327
    %v12551 = vunpack.c.l.b16 %v12328
    %v12552 = vunpack.c.h.b16 %v12328
    %v12553 = vunpack.c.l.b16 %v12329
    %v12554 = vunpack.c.h.b16 %v12329
    %v12555 = vunpack.c.l.b16 %v12330
    %v12556 = vunpack.c.h.b16 %v12330
    %v12557 = vunpack.c.l.b16 %v12331
    %v12558 = vunpack.c.h.b16 %v12331
    %v12559 = vunpack.c.l.b16 %v12332
    %v12560 = vunpack.c.h.b16 %v12332
    %v12561 = vunpack.c.l.b16 %v12333
    %v12562 = vunpack.c.h.b16 %v12333
    %v12563 = vunpack.c.l.b16 %v12334
    %v12564 = vunpack.c.h.b16 %v12334
    %v12565 = vunpack.c.l.b16 %v12335
    %v12566 = vunpack.c.h.b16 %v12335
    %v12567 = vunpack.c.l.b16 %v12336
    %v12568 = vunpack.c.h.b16 %v12336
    %v12569 = vunpack.c.l.b16 %v12337
    %v12570 = vunpack.c.h.b16 %v12337
    %v12571 = vunpack.c.l.b16 %v12338
    %v12572 = vunpack.c.h.b16 %v12338
    %v12573 = vunpack.c.l.b16 %v12339
    %v12574 = vunpack.c.h.b16 %v12339
    %v12575 = vunpack.c.l.b16 %v12340
    %v12576 = vunpack.c.h.b16 %v12340
    %v12577 = vunpack.c.l.b16 %v12341
    %v12578 = vunpack.c.h.b16 %v12341
    %v12579 = vunpack.c.l.b16 %v12342
    %v12580 = vunpack.c.h.b16 %v12342
    %v12581 = vunpack.c.l.b16 %v12343
    %v12582 = vunpack.c.h.b16 %v12343
    %v12583 = vunpack.c.l.b16 %v12344
    %v12584 = vunpack.c.h.b16 %v12344
    %v12585 = vunpack.c.l.b16 %v12345
    %v12586 = vunpack.c.h.b16 %v12345
    %v12587 = vunpack.c.l.b16 %v12346
    %v12588 = vunpack.c.h.b16 %v12346
    %v12589 = vunpack.c.l.b16 %v12347
    %v12590 = vunpack.c.h.b16 %v12347
    %v12591 = vunpack.c.l.b16 %v12348
    %v12592 = vunpack.c.h.b16 %v12348
    %v12593 = vunpack.c.l.b16 %v12349
    %v12594 = vunpack.c.h.b16 %v12349
    %v12595 = vunpack.c.l.b16 %v12350
    %v12596 = vunpack.c.h.b16 %v12350
    %v12597 = vunpack.c.l.b16 %v12351
    %v12598 = vunpack.c.h.b16 %v12351
    %v12599 = vunpack.c.l.b16 %v12352
    %v12600 = vunpack.c.h.b16 %v12352
    %v12601 = vunpack.c.l.b16 %v12353
    %v12602 = vunpack.c.h.b16 %v12353
    %v12603 = vunpack.c.l.b16 %v12354
    %v12604 = vunpack.c.h.b16 %v12354
    %v12605 = vunpack.c.l.b16 %v12355
    %v12606 = vunpack.c.h.b16 %v12355
    %v12607 = vunpack.c.l.b16 %v12356
    %v12608 = vunpack.c.h.b16 %v12356
    %v12609 = vunpack.c.l.b16 %v12357
    %v12610 = vunpack.c.h.b16 %v12357
    %v12611 = vunpack.c.l.b16 %v12358
    %v12612 = vunpack.c.h.b16 %v12358
    %v12613 = vunpack.c.l.b16 %v12359
    %v12614 = vunpack.c.h.b16 %v12359
    %v12615 = vunpack.c.l.b16 %v12360
    %v12616 = vunpack.c.h.b16 %v12360
    %v12617 = vunpack.c.l.b16 %v12361
    %v12618 = vunpack.c.h.b16 %v12361
    %v12619 = vunpack.c.l.b16 %v12362
    %v12620 = vunpack.c.h.b16 %v12362
    %v12621 = vunpack.c.l.b16 %v12363
    %v12622 = vunpack.c.h.b16 %v12363
    %v12623 = vunpack.c.l.b16 %v12364
    %v12624 = vunpack.c.h.b16 %v12364
    %v12625 = vunpack.c.l.b16 %v12365
    %v12626 = vunpack.c.h.b16 %v12365
    %v12627 = vunpack.c.l.b16 %v12366
    %v12628 = vunpack.c.h.b16 %v12366
    %v12629 = vunpack.c.l.b16 %v12367
    %v12630 = vunpack.c.h.b16 %v12367
    %v12631 = vunpack.c.l.b16 %v12368
    %v12632 = vunpack.c.h.b16 %v12368
    %v12633 = vunpack.c.l.b16 %v12369
    %v12634 = vunpack.c.h.b16 %v12369
    %v12635 = vunpack.c.l.b16 %v12370
    %v12636 = vunpack.c.h.b16 %v12370
    %v12637 = vunpack.c.l.b16 %v12371
    %v12638 = vunpack.c.h.b16 %v12371
    %v12639 = vunpack.c.l.b16 %v12372
    %v12640 = vunpack.c.h.b16 %v12372
    %v12641 = vunpack.c.l.b16 %v12373
    %v12642 = vunpack.c.h.b16 %v12373
    %v12643 = vunpack.c.l.b16 %v12374
    %v12644 = vunpack.c.h.b16 %v12374
    %v12645 = vunpack.c.l.b16 %v12375
    %v12646 = vunpack.c.h.b16 %v12375
    %v12647 = vunpack.c.l.b16 %v12376
    %v12648 = vunpack.c.h.b16 %v12376
    %v12649 = vunpack.c.l.b16 %v12377
    %v12650 = vunpack.c.h.b16 %v12377
    %v12651 = vunpack.c.l.b16 %v12378
    %v12652 = vunpack.c.h.b16 %v12378
    %v12653 = vunpack.c.l.b16 %v12379
    %v12654 = vunpack.c.h.b16 %v12379
    %v12655 = vunpack.c.l.b16 %v12380
    %v12656 = vunpack.c.h.b16 %v12380
    %v12657 = vunpack.c.l.b16 %v12381
    %v12658 = vunpack.c.h.b16 %v12381
    %v12659 = vunpack.c.l.b16 %v12382
    %v12660 = vunpack.c.h.b16 %v12382
    %v12661 = vunpack.c.l.b16 %v12383
    %v12662 = vunpack.c.h.b16 %v12383
    %v12663 = vunpack.c.l.b16 %v12384
    %v12664 = vunpack.c.h.b16 %v12384
    %v12665 = vunpack.c.l.b16 %v12385
    %v12666 = vunpack.c.h.b16 %v12385
    %v12667 = vunpack.c.l.b16 %v12386
    %v12668 = vunpack.c.h.b16 %v12386
    %v12669 = vunpack.c.l.b16 %v12387
    %v12670 = vunpack.c.h.b16 %v12387
    %v12671 = vunpack.c.l.b16 %v12388
    %v12672 = vunpack.c.h.b16 %v12388
    %v12673 = vunpack.c.l.b16 %v12389
    %v12674 = vunpack.c.h.b16 %v12389
    %v12675 = vunpack.c.l.b16 %v12390
    %v12676 = vunpack.c.h.b16 %v12390
    %v12677 = vunpack.c.l.b16 %v12391
    %v12678 = vunpack.c.h.b16 %v12391
    %v12679 = vunpack.c.l.b16 %v12392
    %v12680 = vunpack.c.h.b16 %v12392
    %v12681 = vunpack.c.l.b16 %v12393
    %v12682 = vunpack.c.h.b16 %v12393
    %v12683 = vunpack.c.l.b16 %v12394
    %v12684 = vunpack.c.h.b16 %v12394
    %v12685 = vunpack.c.l.b16 %v12395
    %v12686 = vunpack.c.h.b16 %v12395
    %v12687 = vunpack.c.l.b16 %v12396
    %v12688 = vunpack.c.h.b16 %v12396
    %v12689 = vunpack.c.l.b16 %v12397
    %v12690 = vunpack.c.h.b16 %v12397
    %v12691 = vunpack.c.l.b16 %v12398
    %v12692 = vunpack.c.h.b16 %v12398
    %v12693 = vunpack.c.l.b16 %v12399
    %v12694 = vunpack.c.h.b16 %v12399
    %v12695 = vunpack.c.l.b16 %v12400
    %v12696 = vunpack.c.h.b16 %v12400
    %v12697 = vunpack.c.l.b16 %v12401
    %v12698 = vunpack.c.h.b16 %v12401
    %v12699 = vunpack.c.l.b16 %v12402
    %v12700 = vunpack.c.h.b16 %v12402
    %v12701 = vunpack.c.l.b16 %v12403
    %v12702 = vunpack.c.h.b16 %v12403
    %v12703 = vunpack.c.l.b16 %v12404
    %v12704 = vunpack.c.h.b16 %v12404
    %v12705 = vunpack.c.l.b16 %v12405
    %v12706 = vunpack.c.h.b16 %v12405
    %v12707 = vunpack.c.l.b16 %v12406
    %v12708 = vunpack.c.h.b16 %v12406
    %v12709 = vunpack.c.l.b16 %v12407
    %v12710 = vunpack.c.h.b16 %v12407
    %v12711 = vunpack.c.l.b16 %v12408
    %v12712 = vunpack.c.h.b16 %v12408
    %v12713 = vunpack.c.l.b16 %v12409
    %v12714 = vunpack.c.h.b16 %v12409
    %v12715 = vunpack.c.l.b16 %v12410
    %v12716 = vunpack.c.h.b16 %v12410
    %v12717 = vunpack.c.l.b16 %v12411
    %v12718 = vunpack.c.h.b16 %v12411
    %v12719 = vunpack.c.l.b16 %v12412
    %v12720 = vunpack.c.h.b16 %v12412
    %v12721 = vunpack.c.l.b16 %v12413
    %v12722 = vunpack.c.h.b16 %v12413
    %v12723 = vunpack.c.l.b16 %v12414
    %v12724 = vunpack.c.h.b16 %v12414
    %v12725 = vunpack.c.l.b16 %v12415
    %v12726 = vunpack.c.h.b16 %v12415
    %v12727 = vunpack.c.l.b16 %v12416
    %v12728 = vunpack.c.h.b16 %v12416
    %v12729 = vunpack.c.l.b16 %v12417
    %v12730 = vunpack.c.h.b16 %v12417
    %v12731 = vunpack.c.l.b16 %v12418
    %v12732 = vunpack.c.h.b16 %v12418
    %v12733 = vunpack.c.l.b16 %v12419
    %v12734 = vunpack.c.h.b16 %v12419
    %v12735 = vunpack.c.l.b16 %v12420
    %v12736 = vunpack.c.h.b16 %v12420
    %v12737 = vunpack.c.l.b16 %v12421
    %v12738 = vunpack.c.h.b16 %v12421
    %v12739 = vunpack.c.l.b16 %v12422
    %v12740 = vunpack.c.h.b16 %v12422
    %v12741 = vunpack.c.l.b16 %v12423
    %v12742 = vunpack.c.h.b16 %v12423
    %v12743 = vunpack.c.l.b16 %v12424
    %v12744 = vunpack.c.h.b16 %v12424
    %v12745 = vunpack.c.l.b16 %v12425
    %v12746 = vunpack.c.h.b16 %v12425
    %v12747 = vunpack.c.l.b16 %v12426
    %v12748 = vunpack.c.h.b16 %v12426
    %v12749 = vunpack.c.l.b16 %v12427
    %v12750 = vunpack.c.h.b16 %v12427
    %v12751 = vunpack.c.l.b16 %v12428
    %v12752 = vunpack.c.h.b16 %v12428
    %v12753 = vpack.c.b16 %v12539, %v12537
    %v12754 = vpack.c.b16 %v12540, %v12538
    %v12755 = vpack.c.b16 %v12543, %v12541
    %v12756 = vpack.c.b16 %v12544, %v12542
    %v12757 = vpack.c.b16 %v12547, %v12545
    %v12758 = vpack.c.b16 %v12548, %v12546
    %v12759 = vpack.c.b16 %v12551, %v12549
    %v12760 = vpack.c.b16 %v12552, %v12550
    %v12761 = vpack.c.b16 %v12555, %v12553
    %v12762 = vpack.c.b16 %v12556, %v12554
    %v12763 = vpack.c.b16 %v12559, %v12557
    %v12764 = vpack.c.b16 %v12560, %v12558
    %v12765 = vpack.c.b16 %v12563, %v12561
    %v12766 = vpack.c.b16 %v12564, %v12562
    %v12767 = vpack.c.b16 %v12567, %v12565
    %v12768 = vpack.c.b16 %v12568, %v12566
    %v12769 = vpack.c.b16 %v12571, %v12569
    %v12770 = vpack.c.b16 %v12572, %v12570
    %v12771 = vpack.c.b16 %v12575, %v12573
    %v12772 = vpack.c.b16 %v12576, %v12574
    %v12773 = vpack.c.b16 %v12579, %v12577
    %v12774 = vpack.c.b16 %v12580, %v12578
    %v12775 = vpack.c.b16 %v12583, %v12581
    %v12776 = vpack.c.b16 %v12584, %v12582
    %v12777 = vpack.c.b16 %v12587, %v12585
    %v12778 = vpack.c.b16 %v12588, %v12586
    %v12779 = vpack.c.b16 %v12591, %v12589
    %v12780 = vpack.c.b16 %v12592, %v12590
    %v12781 = vpack.c.b16 %v12595, %v12593
    %v12782 = vpack.c.b16 %v12596, %v12594
    %v12783 = vpack.c.b16 %v12599, %v12597
    %v12784 = vpack.c.b16 %v12600, %v12598
    %v12785 = vpack.c.b16 %v12603, %v12601
    %v12786 = vpack.c.b16 %v12604, %v12602
    %v12787 = vpack.c.b16 %v12607, %v12605
    %v12788 = vpack.c.b16 %v12608, %v12606
    %v12789 = vpack.c.b16 %v12611, %v12609
    %v12790 = vpack.c.b16 %v12612, %v12610
    %v12791 = vpack.c.b16 %v12615, %v12613
    %v12792 = vpack.c.b16 %v12616, %v12614
    %v12793 = vpack.c.b16 %v12619, %v12617
    %v12794 = vpack.c.b16 %v12620, %v12618
    %v12795 = vpack.c.b16 %v12623, %v12621
    %v12796 = vpack.c.b16 %v12624, %v12622
    %v12797 = vpack.c.b16 %v12627, %v12625
    %v12798 = vpack.c.b16 %v12628, %v12626
    %v12799 = vpack.c.b16 %v12631, %v12629
    %v12800 = vpack.c.b16 %v12632, %v12630
    %v12801 = vpack.c.b16 %v12635, %v12633
    %v12802 = vpack.c.b16 %v12636, %v12634
    %v12803 = vpack.c.b16 %v12639, %v12637
    %v12804 = vpack.c.b16 %v12640, %v12638
    %v12805 = vpack.c.b16 %v12643, %v12641
    %v12806 = vpack.c.b16 %v12644, %v12642
    %v12807 = vpack.c.b16 %v12647, %v12645
    %v12808 = vpack.c.b16 %v12648, %v12646
    %v12809 = vpack.c.b16 %v12651, %v12649
    %v12810 = vpack.c.b16 %v12652, %v12650
    %v12811 = vpack.c.b16 %v12655, %v12653
    %v12812 = vpack.c.b16 %v12656, %v12654
    %v12813 = vpack.c.b16 %v12659, %v12657
    %v12814 = vpack.c.b16 %v12660, %v12658
    %v12815 = vpack.c.b16 %v12663, %v12661
    %v12816 = vpack.c.b16 %v12664, %v12662
    %v12817 = vpack.c.b16 %v12667, %v12665
    %v12818 = vpack.c.b16 %v12668, %v12666
    %v12819 = vpack.c.b16 %v12671, %v12669
    %v12820 = vpack.c.b16 %v12672, %v12670
    %v12821 = vpack.c.b16 %v12675, %v12673
    %v12822 = vpack.c.b16 %v12676, %v12674
    %v12823 = vpack.c.b16 %v12679, %v12677
    %v12824 = vpack.c.b16 %v12680, %v12678
    %v12825 = vpack.c.b16 %v12683, %v12681
    %v12826 = vpack.c.b16 %v12684, %v12682
    %v12827 = vpack.c.b16 %v12687, %v12685
    %v12828 = vpack.c.b16 %v12688, %v12686
    %v12829 = vpack.c.b16 %v12691, %v12689
    %v12830 = vpack.c.b16 %v12692, %v12690
    %v12831 = vpack.c.b16 %v12695, %v12693
    %v12832 = vpack.c.b16 %v12696, %v12694
    %v12833 = vpack.c.b16 %v12699, %v12697
    %v12834 = vpack.c.b16 %v12700, %v12698
    %v12835 = vpack.c.b16 %v12703, %v12701
    %v12836 = vpack.c.b16 %v12704, %v12702
    %v12837 = vpack.c.b16 %v12707, %v12705
    %v12838 = vpack.c.b16 %v12708, %v12706
    %v12839 = vpack.c.b16 %v12711, %v12709
    %v12840 = vpack.c.b16 %v12712, %v12710
    %v12841 = vpack.c.b16 %v12715, %v12713
    %v12842 = vpack.c.b16 %v12716, %v12714
    %v12843 = vpack.c.b16 %v12719, %v12717
    %v12844 = vpack.c.b16 %v12720, %v12718
    %v12845 = vpack.c.b16 %v12723, %v12721
    %v12846 = vpack.c.b16 %v12724, %v12722
    %v12847 = vpack.c.b16 %v12727, %v12725
    %v12848 = vpack.c.b16 %v12728, %v12726
    %v12849 = vpack.c.b16 %v12731, %v12729
    %v12850 = vpack.c.b16 %v12732, %v12730
    %v12851 = vpack.c.b16 %v12735, %v12733
    %v12852 = vpack.c.b16 %v12736, %v12734
    %v12853 = vpack.c.b16 %v12739, %v12737
    %v12854 = vpack.c.b16 %v12740, %v12738
    %v12855 = vpack.c.b16 %v12743, %v12741
    %v12856 = vpack.c.b16 %v12744, %v12742
    %v12857 = vpack.c.b16 %v12747, %v12745
    %v12858 = vpack.c.b16 %v12748, %v12746
    %v12859 = vpack.c.b16 %v12751, %v12749
    %v12860 = vpack.c.b16 %v12752, %v12750
    %12969 = vmatpush.bf16.msra.mxu0 %v12767
    %12970 = vmatpush.bf16.msra.mxu0 %v12765
    %12971 = vmatpush.bf16.msra.mxu0 %v12763
    %12972 = vmatpush.bf16.msra.mxu0 %v12761
    %12973 = vmatpush.bf16.msra.mxu0 %v12759
    %12974 = vmatpush.bf16.msra.mxu0 %v12757
    %12975 = vmatpush.bf16.msra.mxu0 %v12755
    %12976 = vmatpush.bf16.msra.mxu0 %v12753
    %12977 = vmatmul.bf16.gmra.mxu0 %v11479
    %v12978 = vpop.f32.mrf.mxu0
    %v12979 = vadd.f32 0.0, %v12978
    %v12980 = vpop.f32.mrf.mxu0
    %12981 = vdwg.mxu0
    %12982 = vmatpush.bf16.msra.mxu0 %v12783
    %12983 = vmatpush.bf16.msra.mxu0 %v12781
    %12984 = vmatpush.bf16.msra.mxu0 %v12779
    %12985 = vmatpush.bf16.msra.mxu0 %v12777
    %12986 = vmatpush.bf16.msra.mxu0 %v12775
    %12987 = vmatpush.bf16.msra.mxu0 %v12773
    %12988 = vmatpush.bf16.msra.mxu0 %v12771
    %12989 = vmatpush.bf16.msra.mxu0 %v12769
    %12990 = vmatmul.bf16.gmra.mxu0 %v11480
    %v12991 = vpop.f32.mrf.mxu0
    %v12992 = vadd.f32 %v12979, %v12991
    %v12993 = vpop.f32.mrf.mxu0
    %12994 = vdwg.mxu0
    %12995 = vmatpush.bf16.msra.mxu0 %v12799
    %12996 = vmatpush.bf16.msra.mxu0 %v12797
    %12997 = vmatpush.bf16.msra.mxu0 %v12795
    %12998 = vmatpush.bf16.msra.mxu0 %v12793
    %12999 = vmatpush.bf16.msra.mxu0 %v12791
    %13000 = vmatpush.bf16.msra.mxu0 %v12789
    %13001 = vmatpush.bf16.msra.mxu0 %v12787
    %13002 = vmatpush.bf16.msra.mxu0 %v12785
    %13003 = vmatmul.bf16.gmra.mxu0 %v11481
    %v13004 = vpop.f32.mrf.mxu0
    %v13005 = vadd.f32 %v12992, %v13004
    %v13006 = vpop.f32.mrf.mxu0
    %13007 = vdwg.mxu0
    %13008 = vmatpush.bf16.msra.mxu0 %v12815
    %13009 = vmatpush.bf16.msra.mxu0 %v12813
    %13010 = vmatpush.bf16.msra.mxu0 %v12811
    %13011 = vmatpush.bf16.msra.mxu0 %v12809
    %13012 = vmatpush.bf16.msra.mxu0 %v12807
    %13013 = vmatpush.bf16.msra.mxu0 %v12805
    %13014 = vmatpush.bf16.msra.mxu0 %v12803
    %13015 = vmatpush.bf16.msra.mxu0 %v12801
    %13016 = vmatmul.bf16.gmra.mxu0 %v11482
    %v13017 = vpop.f32.mrf.mxu0
    %v13018 = vadd.f32 %v13005, %v13017
    %v13019 = vpop.f32.mrf.mxu0
    %13020 = vdwg.mxu0
    %13021 = vmatpush.bf16.msra.mxu0 %v12831
    %13022 = vmatpush.bf16.msra.mxu0 %v12829
    %13023 = vmatpush.bf16.msra.mxu0 %v12827
    %13024 = vmatpush.bf16.msra.mxu0 %v12825
    %13025 = vmatpush.bf16.msra.mxu0 %v12823
    %13026 = vmatpush.bf16.msra.mxu0 %v12821
    %13027 = vmatpush.bf16.msra.mxu0 %v12819
    %13028 = vmatpush.bf16.msra.mxu0 %v12817
    %13029 = vmatmul.bf16.gmra.mxu0 %v11483
    %v13030 = vpop.f32.mrf.mxu0
    %v13031 = vadd.f32 %v13018, %v13030
    %v13032 = vpop.f32.mrf.mxu0
    %13033 = vdwg.mxu0
    %13034 = vmatpush.bf16.msra.mxu0 %v12847
    %13035 = vmatpush.bf16.msra.mxu0 %v12845
    %13036 = vmatpush.bf16.msra.mxu0 %v12843
    %13037 = vmatpush.bf16.msra.mxu0 %v12841
    %13038 = vmatpush.bf16.msra.mxu0 %v12839
    %13039 = vmatpush.bf16.msra.mxu0 %v12837
    %13040 = vmatpush.bf16.msra.mxu0 %v12835
    %13041 = vmatpush.bf16.msra.mxu0 %v12833
    %13042 = vmatmul.bf16.gmra.mxu0 %v11484
    %v13043 = vpop.f32.mrf.mxu0
    %v13044 = vadd.f32 %v13031, %v13043
    %v13045 = vpop.f32.mrf.mxu0
    %13046 = vdwg.mxu0
    %13047 = vmatpush.bf16.msra.mxu0 0
    %13048 = vmatpush.bf16.msra.mxu0 0
    %13049 = vmatpush.bf16.msra.mxu0 %v12859
    %13050 = vmatpush.bf16.msra.mxu0 %v12857
    %13051 = vmatpush.bf16.msra.mxu0 %v12855
    %13052 = vmatpush.bf16.msra.mxu0 %v12853
    %13053 = vmatpush.bf16.msra.mxu0 %v12851
    %13054 = vmatpush.bf16.msra.mxu0 %v12849
    %13055 = vmatmul.bf16.gmra.mxu0 %v12136
    %v13056 = vpop.f32.mrf.mxu0
    %v13057 = vadd.f32 %v13044, %v13056
    %v13058 = vpop.f32.mrf.mxu0
    %13059 = vdwg.mxu0
    %13060 = vmatpush.bf16.msra.mxu0 %v12768
    %13061 = vmatpush.bf16.msra.mxu0 %v12766
    %13062 = vmatpush.bf16.msra.mxu0 %v12764
    %13063 = vmatpush.bf16.msra.mxu0 %v12762
    %13064 = vmatpush.bf16.msra.mxu0 %v12760
    %13065 = vmatpush.bf16.msra.mxu0 %v12758
    %13066 = vmatpush.bf16.msra.mxu0 %v12756
    %13067 = vmatpush.bf16.msra.mxu0 %v12754
    %13068 = vmatmul.bf16.gmra.mxu0 %v11479
    %v13069 = vpop.f32.mrf.mxu0
    %v13070 = vadd.f32 0.0, %v13069
    %v13071 = vpop.f32.mrf.mxu0
    %13072 = vdwg.mxu0
    %13073 = vmatpush.bf16.msra.mxu0 %v12784
    %13074 = vmatpush.bf16.msra.mxu0 %v12782
    %13075 = vmatpush.bf16.msra.mxu0 %v12780
    %13076 = vmatpush.bf16.msra.mxu0 %v12778
    %13077 = vmatpush.bf16.msra.mxu0 %v12776
    %13078 = vmatpush.bf16.msra.mxu0 %v12774
    %13079 = vmatpush.bf16.msra.mxu0 %v12772
    %13080 = vmatpush.bf16.msra.mxu0 %v12770
    %13081 = vmatmul.bf16.gmra.mxu0 %v11480
    %v13082 = vpop.f32.mrf.mxu0
    %v13083 = vadd.f32 %v13070, %v13082
    %v13084 = vpop.f32.mrf.mxu0
    %13085 = vdwg.mxu0
    %13086 = vmatpush.bf16.msra.mxu0 %v12800
    %13087 = vmatpush.bf16.msra.mxu0 %v12798
    %13088 = vmatpush.bf16.msra.mxu0 %v12796
    %13089 = vmatpush.bf16.msra.mxu0 %v12794
    %13090 = vmatpush.bf16.msra.mxu0 %v12792
    %13091 = vmatpush.bf16.msra.mxu0 %v12790
    %13092 = vmatpush.bf16.msra.mxu0 %v12788
    %13093 = vmatpush.bf16.msra.mxu0 %v12786
    %13094 = vmatmul.bf16.gmra.mxu0 %v11481
    %v13095 = vpop.f32.mrf.mxu0
    %v13096 = vadd.f32 %v13083, %v13095
    %v13097 = vpop.f32.mrf.mxu0
    %13098 = vdwg.mxu0
    %13099 = vmatpush.bf16.msra.mxu0 %v12816
    %13100 = vmatpush.bf16.msra.mxu0 %v12814
    %13101 = vmatpush.bf16.msra.mxu0 %v12812
    %13102 = vmatpush.bf16.msra.mxu0 %v12810
    %13103 = vmatpush.bf16.msra.mxu0 %v12808
    %13104 = vmatpush.bf16.msra.mxu0 %v12806
    %13105 = vmatpush.bf16.msra.mxu0 %v12804
    %13106 = vmatpush.bf16.msra.mxu0 %v12802
    %13107 = vmatmul.bf16.gmra.mxu0 %v11482
    %v13108 = vpop.f32.mrf.mxu0
    %v13109 = vadd.f32 %v13096, %v13108
    %v13110 = vpop.f32.mrf.mxu0
    %13111 = vdwg.mxu0
    %13112 = vmatpush.bf16.msra.mxu0 %v12832
    %13113 = vmatpush.bf16.msra.mxu0 %v12830
    %13114 = vmatpush.bf16.msra.mxu0 %v12828
    %13115 = vmatpush.bf16.msra.mxu0 %v12826
    %13116 = vmatpush.bf16.msra.mxu0 %v12824
    %13117 = vmatpush.bf16.msra.mxu0 %v12822
    %13118 = vmatpush.bf16.msra.mxu0 %v12820
    %13119 = vmatpush.bf16.msra.mxu0 %v12818
    %13120 = vmatmul.bf16.gmra.mxu0 %v11483
    %v13121 = vpop.f32.mrf.mxu0
    %v13122 = vadd.f32 %v13109, %v13121
    %v13123 = vpop.f32.mrf.mxu0
    %13124 = vdwg.mxu0
    %13125 = vmatpush.bf16.msra.mxu0 %v12848
    %13126 = vmatpush.bf16.msra.mxu0 %v12846
    %13127 = vmatpush.bf16.msra.mxu0 %v12844
    %13128 = vmatpush.bf16.msra.mxu0 %v12842
    %13129 = vmatpush.bf16.msra.mxu0 %v12840
    %13130 = vmatpush.bf16.msra.mxu0 %v12838
    %13131 = vmatpush.bf16.msra.mxu0 %v12836
    %13132 = vmatpush.bf16.msra.mxu0 %v12834
    %13133 = vmatmul.bf16.gmra.mxu0 %v11484
    %v13134 = vpop.f32.mrf.mxu0
    %v13135 = vadd.f32 %v13122, %v13134
    %v13136 = vpop.f32.mrf.mxu0
    %13137 = vdwg.mxu0
    %13138 = vmatpush.bf16.msra.mxu0 0
    %13139 = vmatpush.bf16.msra.mxu0 0
    %13140 = vmatpush.bf16.msra.mxu0 %v12860
    %13141 = vmatpush.bf16.msra.mxu0 %v12858
    %13142 = vmatpush.bf16.msra.mxu0 %v12856
    %13143 = vmatpush.bf16.msra.mxu0 %v12854
    %13144 = vmatpush.bf16.msra.mxu0 %v12852
    %13145 = vmatpush.bf16.msra.mxu0 %v12850
    %13146 = vmatmul.bf16.gmra.mxu0 %v12136
    %v13147 = vpop.f32.mrf.mxu0
    %v13148 = vadd.f32 %v13135, %v13147
    %v13149 = vpop.f32.mrf.mxu0
    %13150 = vdwg.mxu0
    %v13151 = vmax.f32 %v12226, %v13057
    %v13152 = vmax.f32 %v12317, %v13148
    %s13153 = scalar_lea.vmem [#allocation7], 1728
    %v13154 = vld [vmem:[%s13153] sm:$0xff]
    %v13155 = vld [vmem:[%s13153 + $0x8] sm:$0xff]
    %v13156 = vld [vmem:[%s13153 + $0x10] sm:$0xff]
    %v13157 = vld [vmem:[%s13153 + $0x18] sm:$0xff]
    %v13158 = vld [vmem:[%s13153 + $0x20] sm:$0xff]
    %v13159 = vld [vmem:[%s13153 + $0x28] sm:$0xff]
    %v13160 = vld [vmem:[%s13153 + $0x30] sm:$0xff]
    %v13161 = vld [vmem:[%s13153 + $0x38] sm:$0xff]
    %v13162 = vld [vmem:[%s13153 + $0x40] sm:$0xff]
    %v13163 = vld [vmem:[%s13153 + $0x48] sm:$0xff]
    %v13164 = vld [vmem:[%s13153 + $0x50] sm:$0xff]
    %v13165 = vld [vmem:[%s13153 + $0x58] sm:$0xff]
    %v13166 = vld [vmem:[%s13153 + $0x60] sm:$0xff]
    %v13167 = vld [vmem:[%s13153 + $0x68] sm:$0xff]
    %v13168 = vld [vmem:[%s13153 + $0x70] sm:$0xff]
    %v13169 = vld [vmem:[%s13153 + $0x78] sm:$0xff]
    %v13170 = vld [vmem:[%s13153 + $0x80] sm:$0xff]
    %v13171 = vld [vmem:[%s13153 + $0x88] sm:$0xff]
    %v13172 = vld [vmem:[%s13153 + $0x90] sm:$0xff]
    %v13173 = vld [vmem:[%s13153 + $0x98] sm:$0xff]
    %v13174 = vld [vmem:[%s13153 + $0xa0] sm:$0xff]
    %v13175 = vld [vmem:[%s13153 + $0xa8] sm:$0xff]
    %v13176 = vld [vmem:[%s13153 + $0xb0] sm:$0xff]
    %v13177 = vld [vmem:[%s13153 + $0xb8] sm:$0xff]
    %v13178 = vld [vmem:[%s13153 + $0xc0] sm:$0xff]
    %v13179 = vld [vmem:[%s13153 + $0xc8] sm:$0xff]
    %v13180 = vld [vmem:[%s13153 + $0xd0] sm:$0xff]
    %v13181 = vld [vmem:[%s13153 + $0xd8] sm:$0xff]
    %v13182 = vld [vmem:[%s13153 + $0xe0] sm:$0xff]
    %v13183 = vld [vmem:[%s13153 + $0xe8] sm:$0xff]
    %v13184 = vld [vmem:[%s13153 + $0xf0] sm:$0xff]
    %v13185 = vld [vmem:[%s13153 + $0xf8] sm:$0xff]
    %v13186 = vld [vmem:[%s13153 + $0x100] sm:$0xff]
    %v13187 = vld [vmem:[%s13153 + $0x108] sm:$0xff]
    %v13188 = vld [vmem:[%s13153 + $0x110] sm:$0xff]
    %v13189 = vld [vmem:[%s13153 + $0x118] sm:$0xff]
    %v13190 = vld [vmem:[%s13153 + $0x120] sm:$0xff]
    %v13191 = vld [vmem:[%s13153 + $0x128] sm:$0xff]
    %v13192 = vld [vmem:[%s13153 + $0x130] sm:$0xff]
    %v13193 = vld [vmem:[%s13153 + $0x138] sm:$0xff]
    %v13194 = vld [vmem:[%s13153 + $0x140] sm:$0xff]
    %v13195 = vld [vmem:[%s13153 + $0x148] sm:$0xff]
    %v13196 = vld [vmem:[%s13153 + $0x150] sm:$0xff]
    %v13197 = vld [vmem:[%s13153 + $0x158] sm:$0xff]
    %v13198 = vld [vmem:[%s13153 + $0x160] sm:$0xff]
    %v13199 = vld [vmem:[%s13153 + $0x168] sm:$0xff]
    %v13200 = vld [vmem:[%s13153 + $0x170] sm:$0xff]
    %v13201 = vld [vmem:[%s13153 + $0x178] sm:$0xff]
    %v13202 = vld [vmem:[%s13153 + $0x180] sm:$0xff]
    %v13203 = vld [vmem:[%s13153 + $0x188] sm:$0xff]
    %v13204 = vld [vmem:[%s13153 + $0x190] sm:$0xff]
    %v13205 = vld [vmem:[%s13153 + $0x198] sm:$0xff]
    %v13206 = vld [vmem:[%s13153 + $0x1a0] sm:$0xff]
    %v13207 = vld [vmem:[%s13153 + $0x1a8] sm:$0xff]
    %v13208 = vld [vmem:[%s13153 + $0x1b0] sm:$0xff]
    %v13209 = vld [vmem:[%s13153 + $0x1b8] sm:$0xff]
    %v13210 = vld [vmem:[%s13153 + $0x1c0] sm:$0xff]
    %v13211 = vld [vmem:[%s13153 + $0x1c8] sm:$0xff]
    %v13212 = vld [vmem:[%s13153 + $0x1d0] sm:$0xff]
    %v13213 = vld [vmem:[%s13153 + $0x1d8] sm:$0xff]
    %v13214 = vld [vmem:[%s13153 + $0x1e0] sm:$0xff]
    %v13215 = vld [vmem:[%s13153 + $0x1e8] sm:$0xff]
    %v13216 = vld [vmem:[%s13153 + $0x1f0] sm:$0xff]
    %v13217 = vld [vmem:[%s13153 + $0x1f8] sm:$0xff]
    %v13218 = vld [vmem:[%s13153 + $0x200] sm:$0xff]
    %v13219 = vld [vmem:[%s13153 + $0x208] sm:$0xff]
    %v13220 = vld [vmem:[%s13153 + $0x210] sm:$0xff]
    %v13221 = vld [vmem:[%s13153 + $0x218] sm:$0xff]
    %v13222 = vld [vmem:[%s13153 + $0x220] sm:$0xff]
    %v13223 = vld [vmem:[%s13153 + $0x228] sm:$0xff]
    %v13224 = vld [vmem:[%s13153 + $0x230] sm:$0xff]
    %v13225 = vld [vmem:[%s13153 + $0x238] sm:$0xff]
    %v13226 = vld [vmem:[%s13153 + $0x240] sm:$0xff]
    %v13227 = vld [vmem:[%s13153 + $0x248] sm:$0xff]
    %v13228 = vld [vmem:[%s13153 + $0x250] sm:$0xff]
    %v13229 = vld [vmem:[%s13153 + $0x258] sm:$0xff]
    %v13230 = vld [vmem:[%s13153 + $0x260] sm:$0xff]
    %v13231 = vld [vmem:[%s13153 + $0x268] sm:$0xff]
    %v13232 = vld [vmem:[%s13153 + $0x270] sm:$0xff]
    %v13233 = vld [vmem:[%s13153 + $0x278] sm:$0xff]
    %v13234 = vld [vmem:[%s13153 + $0x280] sm:$0xff]
    %v13235 = vld [vmem:[%s13153 + $0x288] sm:$0xff]
    %v13236 = vld [vmem:[%s13153 + $0x290] sm:$0xff]
    %v13237 = vld [vmem:[%s13153 + $0x298] sm:$0xff]
    %v13238 = vld [vmem:[%s13153 + $0x2a0] sm:$0xff]
    %v13239 = vld [vmem:[%s13153 + $0x2a8] sm:$0xff]
    %v13240 = vld [vmem:[%s13153 + $0x2b0] sm:$0xff]
    %v13241 = vld [vmem:[%s13153 + $0x2b8] sm:$0xff]
    %v13242 = vld [vmem:[%s13153 + $0x2c0] sm:$0xff]
    %v13243 = vld [vmem:[%s13153 + $0x2c8] sm:$0xff]
    %v13244 = vld [vmem:[%s13153 + $0x2d0] sm:$0xff]
    %v13245 = vld [vmem:[%s13153 + $0x2d8] sm:$0xff]
    %v13246 = vld [vmem:[%s13153 + $0x2e0] sm:$0xff]
    %v13247 = vld [vmem:[%s13153 + $0x2e8] sm:$0xff]
    %v13248 = vld [vmem:[%s13153 + $0x2f0] sm:$0xff]
    %v13249 = vld [vmem:[%s13153 + $0x2f8] sm:$0xff]
    %v13250 = vld [vmem:[%s13153 + $0x300] sm:$0xff]
    %v13251 = vld [vmem:[%s13153 + $0x308] sm:$0xff]
    %v13252 = vld [vmem:[%s13153 + $0x310] sm:$0xff]
    %v13253 = vld [vmem:[%s13153 + $0x318] sm:$0xff]
    %v13254 = vld [vmem:[%s13153 + $0x320] sm:$0xff]
    %v13255 = vld [vmem:[%s13153 + $0x328] sm:$0xff]
    %v13256 = vld [vmem:[%s13153 + $0x330] sm:$0xff]
    %v13257 = vld [vmem:[%s13153 + $0x338] sm:$0xff]
    %v13258 = vld [vmem:[%s13153 + $0x340] sm:$0xff]
    %v13259 = vld [vmem:[%s13153 + $0x348] sm:$0xff]
    %v13260 = vld [vmem:[%s13153 + $0x350] sm:$0xff]
    %v13261 = vld [vmem:[%s13153 + $0x358] sm:$0xff]
    %v13370 = vunpack.c.l.b16 %v13154
    %v13371 = vunpack.c.h.b16 %v13154
    %v13372 = vunpack.c.l.b16 %v13155
    %v13373 = vunpack.c.h.b16 %v13155
    %v13374 = vunpack.c.l.b16 %v13156
    %v13375 = vunpack.c.h.b16 %v13156
    %v13376 = vunpack.c.l.b16 %v13157
    %v13377 = vunpack.c.h.b16 %v13157
    %v13378 = vunpack.c.l.b16 %v13158
    %v13379 = vunpack.c.h.b16 %v13158
    %v13380 = vunpack.c.l.b16 %v13159
    %v13381 = vunpack.c.h.b16 %v13159
    %v13382 = vunpack.c.l.b16 %v13160
    %v13383 = vunpack.c.h.b16 %v13160
    %v13384 = vunpack.c.l.b16 %v13161
    %v13385 = vunpack.c.h.b16 %v13161
    %v13386 = vunpack.c.l.b16 %v13162
    %v13387 = vunpack.c.h.b16 %v13162
    %v13388 = vunpack.c.l.b16 %v13163
    %v13389 = vunpack.c.h.b16 %v13163
    %v13390 = vunpack.c.l.b16 %v13164
    %v13391 = vunpack.c.h.b16 %v13164
    %v13392 = vunpack.c.l.b16 %v13165
    %v13393 = vunpack.c.h.b16 %v13165
    %v13394 = vunpack.c.l.b16 %v13166
    %v13395 = vunpack.c.h.b16 %v13166
    %v13396 = vunpack.c.l.b16 %v13167
    %v13397 = vunpack.c.h.b16 %v13167
    %v13398 = vunpack.c.l.b16 %v13168
    %v13399 = vunpack.c.h.b16 %v13168
    %v13400 = vunpack.c.l.b16 %v13169
    %v13401 = vunpack.c.h.b16 %v13169
    %v13402 = vunpack.c.l.b16 %v13170
    %v13403 = vunpack.c.h.b16 %v13170
    %v13404 = vunpack.c.l.b16 %v13171
    %v13405 = vunpack.c.h.b16 %v13171
    %v13406 = vunpack.c.l.b16 %v13172
    %v13407 = vunpack.c.h.b16 %v13172
    %v13408 = vunpack.c.l.b16 %v13173
    %v13409 = vunpack.c.h.b16 %v13173
    %v13410 = vunpack.c.l.b16 %v13174
    %v13411 = vunpack.c.h.b16 %v13174
    %v13412 = vunpack.c.l.b16 %v13175
    %v13413 = vunpack.c.h.b16 %v13175
    %v13414 = vunpack.c.l.b16 %v13176
    %v13415 = vunpack.c.h.b16 %v13176
    %v13416 = vunpack.c.l.b16 %v13177
    %v13417 = vunpack.c.h.b16 %v13177
    %v13418 = vunpack.c.l.b16 %v13178
    %v13419 = vunpack.c.h.b16 %v13178
    %v13420 = vunpack.c.l.b16 %v13179
    %v13421 = vunpack.c.h.b16 %v13179
    %v13422 = vunpack.c.l.b16 %v13180
    %v13423 = vunpack.c.h.b16 %v13180
    %v13424 = vunpack.c.l.b16 %v13181
    %v13425 = vunpack.c.h.b16 %v13181
    %v13426 = vunpack.c.l.b16 %v13182
    %v13427 = vunpack.c.h.b16 %v13182
    %v13428 = vunpack.c.l.b16 %v13183
    %v13429 = vunpack.c.h.b16 %v13183
    %v13430 = vunpack.c.l.b16 %v13184
    %v13431 = vunpack.c.h.b16 %v13184
    %v13432 = vunpack.c.l.b16 %v13185
    %v13433 = vunpack.c.h.b16 %v13185
    %v13434 = vunpack.c.l.b16 %v13186
    %v13435 = vunpack.c.h.b16 %v13186
    %v13436 = vunpack.c.l.b16 %v13187
    %v13437 = vunpack.c.h.b16 %v13187
    %v13438 = vunpack.c.l.b16 %v13188
    %v13439 = vunpack.c.h.b16 %v13188
    %v13440 = vunpack.c.l.b16 %v13189
    %v13441 = vunpack.c.h.b16 %v13189
    %v13442 = vunpack.c.l.b16 %v13190
    %v13443 = vunpack.c.h.b16 %v13190
    %v13444 = vunpack.c.l.b16 %v13191
    %v13445 = vunpack.c.h.b16 %v13191
    %v13446 = vunpack.c.l.b16 %v13192
    %v13447 = vunpack.c.h.b16 %v13192
    %v13448 = vunpack.c.l.b16 %v13193
    %v13449 = vunpack.c.h.b16 %v13193
    %v13450 = vunpack.c.l.b16 %v13194
    %v13451 = vunpack.c.h.b16 %v13194
    %v13452 = vunpack.c.l.b16 %v13195
    %v13453 = vunpack.c.h.b16 %v13195
    %v13454 = vunpack.c.l.b16 %v13196
    %v13455 = vunpack.c.h.b16 %v13196
    %v13456 = vunpack.c.l.b16 %v13197
    %v13457 = vunpack.c.h.b16 %v13197
    %v13458 = vunpack.c.l.b16 %v13198
    %v13459 = vunpack.c.h.b16 %v13198
    %v13460 = vunpack.c.l.b16 %v13199
    %v13461 = vunpack.c.h.b16 %v13199
    %v13462 = vunpack.c.l.b16 %v13200
    %v13463 = vunpack.c.h.b16 %v13200
    %v13464 = vunpack.c.l.b16 %v13201
    %v13465 = vunpack.c.h.b16 %v13201
    %v13466 = vunpack.c.l.b16 %v13202
    %v13467 = vunpack.c.h.b16 %v13202
    %v13468 = vunpack.c.l.b16 %v13203
    %v13469 = vunpack.c.h.b16 %v13203
    %v13470 = vunpack.c.l.b16 %v13204
    %v13471 = vunpack.c.h.b16 %v13204
    %v13472 = vunpack.c.l.b16 %v13205
    %v13473 = vunpack.c.h.b16 %v13205
    %v13474 = vunpack.c.l.b16 %v13206
    %v13475 = vunpack.c.h.b16 %v13206
    %v13476 = vunpack.c.l.b16 %v13207
    %v13477 = vunpack.c.h.b16 %v13207
    %v13478 = vunpack.c.l.b16 %v13208
    %v13479 = vunpack.c.h.b16 %v13208
    %v13480 = vunpack.c.l.b16 %v13209
    %v13481 = vunpack.c.h.b16 %v13209
    %v13482 = vunpack.c.l.b16 %v13210
    %v13483 = vunpack.c.h.b16 %v13210
    %v13484 = vunpack.c.l.b16 %v13211
    %v13485 = vunpack.c.h.b16 %v13211
    %v13486 = vunpack.c.l.b16 %v13212
    %v13487 = vunpack.c.h.b16 %v13212
    %v13488 = vunpack.c.l.b16 %v13213
    %v13489 = vunpack.c.h.b16 %v13213
    %v13490 = vunpack.c.l.b16 %v13214
    %v13491 = vunpack.c.h.b16 %v13214
    %v13492 = vunpack.c.l.b16 %v13215
    %v13493 = vunpack.c.h.b16 %v13215
    %v13494 = vunpack.c.l.b16 %v13216
    %v13495 = vunpack.c.h.b16 %v13216
    %v13496 = vunpack.c.l.b16 %v13217
    %v13497 = vunpack.c.h.b16 %v13217
    %v13498 = vunpack.c.l.b16 %v13218
    %v13499 = vunpack.c.h.b16 %v13218
    %v13500 = vunpack.c.l.b16 %v13219
    %v13501 = vunpack.c.h.b16 %v13219
    %v13502 = vunpack.c.l.b16 %v13220
    %v13503 = vunpack.c.h.b16 %v13220
    %v13504 = vunpack.c.l.b16 %v13221
    %v13505 = vunpack.c.h.b16 %v13221
    %v13506 = vunpack.c.l.b16 %v13222
    %v13507 = vunpack.c.h.b16 %v13222
    %v13508 = vunpack.c.l.b16 %v13223
    %v13509 = vunpack.c.h.b16 %v13223
    %v13510 = vunpack.c.l.b16 %v13224
    %v13511 = vunpack.c.h.b16 %v13224
    %v13512 = vunpack.c.l.b16 %v13225
    %v13513 = vunpack.c.h.b16 %v13225
    %v13514 = vunpack.c.l.b16 %v13226
    %v13515 = vunpack.c.h.b16 %v13226
    %v13516 = vunpack.c.l.b16 %v13227
    %v13517 = vunpack.c.h.b16 %v13227
    %v13518 = vunpack.c.l.b16 %v13228
    %v13519 = vunpack.c.h.b16 %v13228
    %v13520 = vunpack.c.l.b16 %v13229
    %v13521 = vunpack.c.h.b16 %v13229
    %v13522 = vunpack.c.l.b16 %v13230
    %v13523 = vunpack.c.h.b16 %v13230
    %v13524 = vunpack.c.l.b16 %v13231
    %v13525 = vunpack.c.h.b16 %v13231
    %v13526 = vunpack.c.l.b16 %v13232
    %v13527 = vunpack.c.h.b16 %v13232
    %v13528 = vunpack.c.l.b16 %v13233
    %v13529 = vunpack.c.h.b16 %v13233
    %v13530 = vunpack.c.l.b16 %v13234
    %v13531 = vunpack.c.h.b16 %v13234
    %v13532 = vunpack.c.l.b16 %v13235
    %v13533 = vunpack.c.h.b16 %v13235
    %v13534 = vunpack.c.l.b16 %v13236
    %v13535 = vunpack.c.h.b16 %v13236
    %v13536 = vunpack.c.l.b16 %v13237
    %v13537 = vunpack.c.h.b16 %v13237
    %v13538 = vunpack.c.l.b16 %v13238
    %v13539 = vunpack.c.h.b16 %v13238
    %v13540 = vunpack.c.l.b16 %v13239
    %v13541 = vunpack.c.h.b16 %v13239
    %v13542 = vunpack.c.l.b16 %v13240
    %v13543 = vunpack.c.h.b16 %v13240
    %v13544 = vunpack.c.l.b16 %v13241
    %v13545 = vunpack.c.h.b16 %v13241
    %v13546 = vunpack.c.l.b16 %v13242
    %v13547 = vunpack.c.h.b16 %v13242
    %v13548 = vunpack.c.l.b16 %v13243
    %v13549 = vunpack.c.h.b16 %v13243
    %v13550 = vunpack.c.l.b16 %v13244
    %v13551 = vunpack.c.h.b16 %v13244
    %v13552 = vunpack.c.l.b16 %v13245
    %v13553 = vunpack.c.h.b16 %v13245
    %v13554 = vunpack.c.l.b16 %v13246
    %v13555 = vunpack.c.h.b16 %v13246
    %v13556 = vunpack.c.l.b16 %v13247
    %v13557 = vunpack.c.h.b16 %v13247
    %v13558 = vunpack.c.l.b16 %v13248
    %v13559 = vunpack.c.h.b16 %v13248
    %v13560 = vunpack.c.l.b16 %v13249
    %v13561 = vunpack.c.h.b16 %v13249
    %v13562 = vunpack.c.l.b16 %v13250
    %v13563 = vunpack.c.h.b16 %v13250
    %v13564 = vunpack.c.l.b16 %v13251
    %v13565 = vunpack.c.h.b16 %v13251
    %v13566 = vunpack.c.l.b16 %v13252
    %v13567 = vunpack.c.h.b16 %v13252
    %v13568 = vunpack.c.l.b16 %v13253
    %v13569 = vunpack.c.h.b16 %v13253
    %v13570 = vunpack.c.l.b16 %v13254
    %v13571 = vunpack.c.h.b16 %v13254
    %v13572 = vunpack.c.l.b16 %v13255
    %v13573 = vunpack.c.h.b16 %v13255
    %v13574 = vunpack.c.l.b16 %v13256
    %v13575 = vunpack.c.h.b16 %v13256
    %v13576 = vunpack.c.l.b16 %v13257
    %v13577 = vunpack.c.h.b16 %v13257
    %v13578 = vunpack.c.l.b16 %v13258
    %v13579 = vunpack.c.h.b16 %v13258
    %v13580 = vunpack.c.l.b16 %v13259
    %v13581 = vunpack.c.h.b16 %v13259
    %v13582 = vunpack.c.l.b16 %v13260
    %v13583 = vunpack.c.h.b16 %v13260
    %v13584 = vunpack.c.l.b16 %v13261
    %v13585 = vunpack.c.h.b16 %v13261
    %v13586 = vpack.c.b16 %v13372, %v13370
    %v13587 = vpack.c.b16 %v13373, %v13371
    %v13588 = vpack.c.b16 %v13376, %v13374
    %v13589 = vpack.c.b16 %v13377, %v13375
    %v13590 = vpack.c.b16 %v13380, %v13378
    %v13591 = vpack.c.b16 %v13381, %v13379
    %v13592 = vpack.c.b16 %v13384, %v13382
    %v13593 = vpack.c.b16 %v13385, %v13383
    %v13594 = vpack.c.b16 %v13388, %v13386
    %v13595 = vpack.c.b16 %v13389, %v13387
    %v13596 = vpack.c.b16 %v13392, %v13390
    %v13597 = vpack.c.b16 %v13393, %v13391
    %v13598 = vpack.c.b16 %v13396, %v13394
    %v13599 = vpack.c.b16 %v13397, %v13395
    %v13600 = vpack.c.b16 %v13400, %v13398
    %v13601 = vpack.c.b16 %v13401, %v13399
    %v13602 = vpack.c.b16 %v13404, %v13402
    %v13603 = vpack.c.b16 %v13405, %v13403
    %v13604 = vpack.c.b16 %v13408, %v13406
    %v13605 = vpack.c.b16 %v13409, %v13407
    %v13606 = vpack.c.b16 %v13412, %v13410
    %v13607 = vpack.c.b16 %v13413, %v13411
    %v13608 = vpack.c.b16 %v13416, %v13414
    %v13609 = vpack.c.b16 %v13417, %v13415
    %v13610 = vpack.c.b16 %v13420, %v13418
    %v13611 = vpack.c.b16 %v13421, %v13419
    %v13612 = vpack.c.b16 %v13424, %v13422
    %v13613 = vpack.c.b16 %v13425, %v13423
    %v13614 = vpack.c.b16 %v13428, %v13426
    %v13615 = vpack.c.b16 %v13429, %v13427
    %v13616 = vpack.c.b16 %v13432, %v13430
    %v13617 = vpack.c.b16 %v13433, %v13431
    %v13618 = vpack.c.b16 %v13436, %v13434
    %v13619 = vpack.c.b16 %v13437, %v13435
    %v13620 = vpack.c.b16 %v13440, %v13438
    %v13621 = vpack.c.b16 %v13441, %v13439
    %v13622 = vpack.c.b16 %v13444, %v13442
    %v13623 = vpack.c.b16 %v13445, %v13443
    %v13624 = vpack.c.b16 %v13448, %v13446
    %v13625 = vpack.c.b16 %v13449, %v13447
    %v13626 = vpack.c.b16 %v13452, %v13450
    %v13627 = vpack.c.b16 %v13453, %v13451
    %v13628 = vpack.c.b16 %v13456, %v13454
    %v13629 = vpack.c.b16 %v13457, %v13455
    %v13630 = vpack.c.b16 %v13460, %v13458
    %v13631 = vpack.c.b16 %v13461, %v13459
    %v13632 = vpack.c.b16 %v13464, %v13462
    %v13633 = vpack.c.b16 %v13465, %v13463
    %v13634 = vpack.c.b16 %v13468, %v13466
    %v13635 = vpack.c.b16 %v13469, %v13467
    %v13636 = vpack.c.b16 %v13472, %v13470
    %v13637 = vpack.c.b16 %v13473, %v13471
    %v13638 = vpack.c.b16 %v13476, %v13474
    %v13639 = vpack.c.b16 %v13477, %v13475
    %v13640 = vpack.c.b16 %v13480, %v13478
    %v13641 = vpack.c.b16 %v13481, %v13479
    %v13642 = vpack.c.b16 %v13484, %v13482
    %v13643 = vpack.c.b16 %v13485, %v13483
    %v13644 = vpack.c.b16 %v13488, %v13486
    %v13645 = vpack.c.b16 %v13489, %v13487
    %v13646 = vpack.c.b16 %v13492, %v13490
    %v13647 = vpack.c.b16 %v13493, %v13491
    %v13648 = vpack.c.b16 %v13496, %v13494
    %v13649 = vpack.c.b16 %v13497, %v13495
    %v13650 = vpack.c.b16 %v13500, %v13498
    %v13651 = vpack.c.b16 %v13501, %v13499
    %v13652 = vpack.c.b16 %v13504, %v13502
    %v13653 = vpack.c.b16 %v13505, %v13503
    %v13654 = vpack.c.b16 %v13508, %v13506
    %v13655 = vpack.c.b16 %v13509, %v13507
    %v13656 = vpack.c.b16 %v13512, %v13510
    %v13657 = vpack.c.b16 %v13513, %v13511
    %v13658 = vpack.c.b16 %v13516, %v13514
    %v13659 = vpack.c.b16 %v13517, %v13515
    %v13660 = vpack.c.b16 %v13520, %v13518
    %v13661 = vpack.c.b16 %v13521, %v13519
    %v13662 = vpack.c.b16 %v13524, %v13522
    %v13663 = vpack.c.b16 %v13525, %v13523
    %v13664 = vpack.c.b16 %v13528, %v13526
    %v13665 = vpack.c.b16 %v13529, %v13527
    %v13666 = vpack.c.b16 %v13532, %v13530
    %v13667 = vpack.c.b16 %v13533, %v13531
    %v13668 = vpack.c.b16 %v13536, %v13534
    %v13669 = vpack.c.b16 %v13537, %v13535
    %v13670 = vpack.c.b16 %v13540, %v13538
    %v13671 = vpack.c.b16 %v13541, %v13539
    %v13672 = vpack.c.b16 %v13544, %v13542
    %v13673 = vpack.c.b16 %v13545, %v13543
    %v13674 = vpack.c.b16 %v13548, %v13546
    %v13675 = vpack.c.b16 %v13549, %v13547
    %v13676 = vpack.c.b16 %v13552, %v13550
    %v13677 = vpack.c.b16 %v13553, %v13551
    %v13678 = vpack.c.b16 %v13556, %v13554
    %v13679 = vpack.c.b16 %v13557, %v13555
    %v13680 = vpack.c.b16 %v13560, %v13558
    %v13681 = vpack.c.b16 %v13561, %v13559
    %v13682 = vpack.c.b16 %v13564, %v13562
    %v13683 = vpack.c.b16 %v13565, %v13563
    %v13684 = vpack.c.b16 %v13568, %v13566
    %v13685 = vpack.c.b16 %v13569, %v13567
    %v13686 = vpack.c.b16 %v13572, %v13570
    %v13687 = vpack.c.b16 %v13573, %v13571
    %v13688 = vpack.c.b16 %v13576, %v13574
    %v13689 = vpack.c.b16 %v13577, %v13575
    %v13690 = vpack.c.b16 %v13580, %v13578
    %v13691 = vpack.c.b16 %v13581, %v13579
    %v13692 = vpack.c.b16 %v13584, %v13582
    %v13693 = vpack.c.b16 %v13585, %v13583
    %13802 = vmatpush.bf16.msra.mxu0 %v13600
    %13803 = vmatpush.bf16.msra.mxu0 %v13598
    %13804 = vmatpush.bf16.msra.mxu0 %v13596
    %13805 = vmatpush.bf16.msra.mxu0 %v13594
    %13806 = vmatpush.bf16.msra.mxu0 %v13592
    %13807 = vmatpush.bf16.msra.mxu0 %v13590
    %13808 = vmatpush.bf16.msra.mxu0 %v13588
    %13809 = vmatpush.bf16.msra.mxu0 %v13586
    %13810 = vmatmul.bf16.gmra.mxu0 %v11479
    %v13811 = vpop.f32.mrf.mxu0
    %v13812 = vadd.f32 0.0, %v13811
    %v13813 = vpop.f32.mrf.mxu0
    %13814 = vdwg.mxu0
    %13815 = vmatpush.bf16.msra.mxu0 %v13616
    %13816 = vmatpush.bf16.msra.mxu0 %v13614
    %13817 = vmatpush.bf16.msra.mxu0 %v13612
    %13818 = vmatpush.bf16.msra.mxu0 %v13610
    %13819 = vmatpush.bf16.msra.mxu0 %v13608
    %13820 = vmatpush.bf16.msra.mxu0 %v13606
    %13821 = vmatpush.bf16.msra.mxu0 %v13604
    %13822 = vmatpush.bf16.msra.mxu0 %v13602
    %13823 = vmatmul.bf16.gmra.mxu0 %v11480
    %v13824 = vpop.f32.mrf.mxu0
    %v13825 = vadd.f32 %v13812, %v13824
    %v13826 = vpop.f32.mrf.mxu0
    %13827 = vdwg.mxu0
    %13828 = vmatpush.bf16.msra.mxu0 %v13632
    %13829 = vmatpush.bf16.msra.mxu0 %v13630
    %13830 = vmatpush.bf16.msra.mxu0 %v13628
    %13831 = vmatpush.bf16.msra.mxu0 %v13626
    %13832 = vmatpush.bf16.msra.mxu0 %v13624
    %13833 = vmatpush.bf16.msra.mxu0 %v13622
    %13834 = vmatpush.bf16.msra.mxu0 %v13620
    %13835 = vmatpush.bf16.msra.mxu0 %v13618
    %13836 = vmatmul.bf16.gmra.mxu0 %v11481
    %v13837 = vpop.f32.mrf.mxu0
    %v13838 = vadd.f32 %v13825, %v13837
    %v13839 = vpop.f32.mrf.mxu0
    %13840 = vdwg.mxu0
    %13841 = vmatpush.bf16.msra.mxu0 %v13648
    %13842 = vmatpush.bf16.msra.mxu0 %v13646
    %13843 = vmatpush.bf16.msra.mxu0 %v13644
    %13844 = vmatpush.bf16.msra.mxu0 %v13642
    %13845 = vmatpush.bf16.msra.mxu0 %v13640
    %13846 = vmatpush.bf16.msra.mxu0 %v13638
    %13847 = vmatpush.bf16.msra.mxu0 %v13636
    %13848 = vmatpush.bf16.msra.mxu0 %v13634
    %13849 = vmatmul.bf16.gmra.mxu0 %v11482
    %v13850 = vpop.f32.mrf.mxu0
    %v13851 = vadd.f32 %v13838, %v13850
    %v13852 = vpop.f32.mrf.mxu0
    %13853 = vdwg.mxu0
    %13854 = vmatpush.bf16.msra.mxu0 %v13664
    %13855 = vmatpush.bf16.msra.mxu0 %v13662
    %13856 = vmatpush.bf16.msra.mxu0 %v13660
    %13857 = vmatpush.bf16.msra.mxu0 %v13658
    %13858 = vmatpush.bf16.msra.mxu0 %v13656
    %13859 = vmatpush.bf16.msra.mxu0 %v13654
    %13860 = vmatpush.bf16.msra.mxu0 %v13652
    %13861 = vmatpush.bf16.msra.mxu0 %v13650
    %13862 = vmatmul.bf16.gmra.mxu0 %v11483
    %v13863 = vpop.f32.mrf.mxu0
    %v13864 = vadd.f32 %v13851, %v13863
    %v13865 = vpop.f32.mrf.mxu0
    %13866 = vdwg.mxu0
    %13867 = vmatpush.bf16.msra.mxu0 %v13680
    %13868 = vmatpush.bf16.msra.mxu0 %v13678
    %13869 = vmatpush.bf16.msra.mxu0 %v13676
    %13870 = vmatpush.bf16.msra.mxu0 %v13674
    %13871 = vmatpush.bf16.msra.mxu0 %v13672
    %13872 = vmatpush.bf16.msra.mxu0 %v13670
    %13873 = vmatpush.bf16.msra.mxu0 %v13668
    %13874 = vmatpush.bf16.msra.mxu0 %v13666
    %13875 = vmatmul.bf16.gmra.mxu0 %v11484
    %v13876 = vpop.f32.mrf.mxu0
    %v13877 = vadd.f32 %v13864, %v13876
    %v13878 = vpop.f32.mrf.mxu0
    %13879 = vdwg.mxu0
    %13880 = vmatpush.bf16.msra.mxu0 0
    %13881 = vmatpush.bf16.msra.mxu0 0
    %13882 = vmatpush.bf16.msra.mxu0 %v13692
    %13883 = vmatpush.bf16.msra.mxu0 %v13690
    %13884 = vmatpush.bf16.msra.mxu0 %v13688
    %13885 = vmatpush.bf16.msra.mxu0 %v13686
    %13886 = vmatpush.bf16.msra.mxu0 %v13684
    %13887 = vmatpush.bf16.msra.mxu0 %v13682
    %13888 = vmatmul.bf16.gmra.mxu0 %v12136
    %v13889 = vpop.f32.mrf.mxu0
    %v13890 = vadd.f32 %v13877, %v13889
    %v13891 = vpop.f32.mrf.mxu0
    %13892 = vdwg.mxu0
    %13893 = vmatpush.bf16.msra.mxu0 %v13601
    %13894 = vmatpush.bf16.msra.mxu0 %v13599
    %13895 = vmatpush.bf16.msra.mxu0 %v13597
    %13896 = vmatpush.bf16.msra.mxu0 %v13595
    %13897 = vmatpush.bf16.msra.mxu0 %v13593
    %13898 = vmatpush.bf16.msra.mxu0 %v13591
    %13899 = vmatpush.bf16.msra.mxu0 %v13589
    %13900 = vmatpush.bf16.msra.mxu0 %v13587
    %13901 = vmatmul.bf16.gmra.mxu0 %v11479
    %v13902 = vpop.f32.mrf.mxu0
    %v13903 = vadd.f32 0.0, %v13902
    %v13904 = vpop.f32.mrf.mxu0
    %13905 = vdwg.mxu0
    %13906 = vmatpush.bf16.msra.mxu0 %v13617
    %13907 = vmatpush.bf16.msra.mxu0 %v13615
    %13908 = vmatpush.bf16.msra.mxu0 %v13613
    %13909 = vmatpush.bf16.msra.mxu0 %v13611
    %13910 = vmatpush.bf16.msra.mxu0 %v13609
    %13911 = vmatpush.bf16.msra.mxu0 %v13607
    %13912 = vmatpush.bf16.msra.mxu0 %v13605
    %13913 = vmatpush.bf16.msra.mxu0 %v13603
    %13914 = vmatmul.bf16.gmra.mxu0 %v11480
    %v13915 = vpop.f32.mrf.mxu0
    %v13916 = vadd.f32 %v13903, %v13915
    %v13917 = vpop.f32.mrf.mxu0
    %13918 = vdwg.mxu0
    %13919 = vmatpush.bf16.msra.mxu0 %v13633
    %13920 = vmatpush.bf16.msra.mxu0 %v13631
    %13921 = vmatpush.bf16.msra.mxu0 %v13629
    %13922 = vmatpush.bf16.msra.mxu0 %v13627
    %13923 = vmatpush.bf16.msra.mxu0 %v13625
    %13924 = vmatpush.bf16.msra.mxu0 %v13623
    %13925 = vmatpush.bf16.msra.mxu0 %v13621
    %13926 = vmatpush.bf16.msra.mxu0 %v13619
    %13927 = vmatmul.bf16.gmra.mxu0 %v11481
    %v13928 = vpop.f32.mrf.mxu0
    %v13929 = vadd.f32 %v13916, %v13928
    %v13930 = vpop.f32.mrf.mxu0
    %13931 = vdwg.mxu0
    %13932 = vmatpush.bf16.msra.mxu0 %v13649
    %13933 = vmatpush.bf16.msra.mxu0 %v13647
    %13934 = vmatpush.bf16.msra.mxu0 %v13645
    %13935 = vmatpush.bf16.msra.mxu0 %v13643
    %13936 = vmatpush.bf16.msra.mxu0 %v13641
    %13937 = vmatpush.bf16.msra.mxu0 %v13639
    %13938 = vmatpush.bf16.msra.mxu0 %v13637
    %13939 = vmatpush.bf16.msra.mxu0 %v13635
    %13940 = vmatmul.bf16.gmra.mxu0 %v11482
    %v13941 = vpop.f32.mrf.mxu0
    %v13942 = vadd.f32 %v13929, %v13941
    %v13943 = vpop.f32.mrf.mxu0
    %13944 = vdwg.mxu0
    %13945 = vmatpush.bf16.msra.mxu0 %v13665
    %13946 = vmatpush.bf16.msra.mxu0 %v13663
    %13947 = vmatpush.bf16.msra.mxu0 %v13661
    %13948 = vmatpush.bf16.msra.mxu0 %v13659
    %13949 = vmatpush.bf16.msra.mxu0 %v13657
    %13950 = vmatpush.bf16.msra.mxu0 %v13655
    %13951 = vmatpush.bf16.msra.mxu0 %v13653
    %13952 = vmatpush.bf16.msra.mxu0 %v13651
    %13953 = vmatmul.bf16.gmra.mxu0 %v11483
    %v13954 = vpop.f32.mrf.mxu0
    %v13955 = vadd.f32 %v13942, %v13954
    %v13956 = vpop.f32.mrf.mxu0
    %13957 = vdwg.mxu0
    %13958 = vmatpush.bf16.msra.mxu0 %v13681
    %13959 = vmatpush.bf16.msra.mxu0 %v13679
    %13960 = vmatpush.bf16.msra.mxu0 %v13677
    %13961 = vmatpush.bf16.msra.mxu0 %v13675
    %13962 = vmatpush.bf16.msra.mxu0 %v13673
    %13963 = vmatpush.bf16.msra.mxu0 %v13671
    %13964 = vmatpush.bf16.msra.mxu0 %v13669
    %13965 = vmatpush.bf16.msra.mxu0 %v13667
    %13966 = vmatmul.bf16.gmra.mxu0 %v11484
    %v13967 = vpop.f32.mrf.mxu0
    %v13968 = vadd.f32 %v13955, %v13967
    %v13969 = vpop.f32.mrf.mxu0
    %13970 = vdwg.mxu0
    %13971 = vmatpush.bf16.msra.mxu0 0
    %13972 = vmatpush.bf16.msra.mxu0 0
    %13973 = vmatpush.bf16.msra.mxu0 %v13693
    %13974 = vmatpush.bf16.msra.mxu0 %v13691
    %13975 = vmatpush.bf16.msra.mxu0 %v13689
    %13976 = vmatpush.bf16.msra.mxu0 %v13687
    %13977 = vmatpush.bf16.msra.mxu0 %v13685
    %13978 = vmatpush.bf16.msra.mxu0 %v13683
    %13979 = vmatmul.bf16.gmra.mxu0 %v12136
    %v13980 = vpop.f32.mrf.mxu0
    %v13981 = vadd.f32 %v13968, %v13980
    %v13982 = vpop.f32.mrf.mxu0
    %13983 = vdwg.mxu0
    %v13984 = vmax.f32 %v13151, %v13890
    %v13985 = vmax.f32 %v13152, %v13981
    %s13986 = scalar_lea.vmem [#allocation7], 2592
    %v13987 = vld [vmem:[%s13986] sm:$0xff]
    %v13988 = vld [vmem:[%s13986 + $0x8] sm:$0xff]
    %v13989 = vld [vmem:[%s13986 + $0x10] sm:$0xff]
    %v13990 = vld [vmem:[%s13986 + $0x18] sm:$0xff]
    %v13991 = vld [vmem:[%s13986 + $0x20] sm:$0xff]
    %v13992 = vld [vmem:[%s13986 + $0x28] sm:$0xff]
    %v13993 = vld [vmem:[%s13986 + $0x30] sm:$0xff]
    %v13994 = vld [vmem:[%s13986 + $0x38] sm:$0xff]
    %v13995 = vld [vmem:[%s13986 + $0x40] sm:$0xff]
    %v13996 = vld [vmem:[%s13986 + $0x48] sm:$0xff]
    %v13997 = vld [vmem:[%s13986 + $0x50] sm:$0xff]
    %v13998 = vld [vmem:[%s13986 + $0x58] sm:$0xff]
    %v13999 = vld [vmem:[%s13986 + $0x60] sm:$0xff]
    %v14000 = vld [vmem:[%s13986 + $0x68] sm:$0xff]
    %v14001 = vld [vmem:[%s13986 + $0x70] sm:$0xff]
    %v14002 = vld [vmem:[%s13986 + $0x78] sm:$0xff]
    %v14003 = vld [vmem:[%s13986 + $0x80] sm:$0xff]
    %v14004 = vld [vmem:[%s13986 + $0x88] sm:$0xff]
    %v14005 = vld [vmem:[%s13986 + $0x90] sm:$0xff]
    %v14006 = vld [vmem:[%s13986 + $0x98] sm:$0xff]
    %v14007 = vld [vmem:[%s13986 + $0xa0] sm:$0xff]
    %v14008 = vld [vmem:[%s13986 + $0xa8] sm:$0xff]
    %v14009 = vld [vmem:[%s13986 + $0xb0] sm:$0xff]
    %v14010 = vld [vmem:[%s13986 + $0xb8] sm:$0xff]
    %v14011 = vld [vmem:[%s13986 + $0xc0] sm:$0xff]
    %v14012 = vld [vmem:[%s13986 + $0xc8] sm:$0xff]
    %v14013 = vld [vmem:[%s13986 + $0xd0] sm:$0xff]
    %v14014 = vld [vmem:[%s13986 + $0xd8] sm:$0xff]
    %v14015 = vld [vmem:[%s13986 + $0xe0] sm:$0xff]
    %v14016 = vld [vmem:[%s13986 + $0xe8] sm:$0xff]
    %v14017 = vld [vmem:[%s13986 + $0xf0] sm:$0xff]
    %v14018 = vld [vmem:[%s13986 + $0xf8] sm:$0xff]
    %v14019 = vld [vmem:[%s13986 + $0x100] sm:$0xff]
    %v14020 = vld [vmem:[%s13986 + $0x108] sm:$0xff]
    %v14021 = vld [vmem:[%s13986 + $0x110] sm:$0xff]
    %v14022 = vld [vmem:[%s13986 + $0x118] sm:$0xff]
    %v14023 = vld [vmem:[%s13986 + $0x120] sm:$0xff]
    %v14024 = vld [vmem:[%s13986 + $0x128] sm:$0xff]
    %v14025 = vld [vmem:[%s13986 + $0x130] sm:$0xff]
    %v14026 = vld [vmem:[%s13986 + $0x138] sm:$0xff]
    %v14027 = vld [vmem:[%s13986 + $0x140] sm:$0xff]
    %v14028 = vld [vmem:[%s13986 + $0x148] sm:$0xff]
    %v14029 = vld [vmem:[%s13986 + $0x150] sm:$0xff]
    %v14030 = vld [vmem:[%s13986 + $0x158] sm:$0xff]
    %v14031 = vld [vmem:[%s13986 + $0x160] sm:$0xff]
    %v14032 = vld [vmem:[%s13986 + $0x168] sm:$0xff]
    %v14033 = vld [vmem:[%s13986 + $0x170] sm:$0xff]
    %v14034 = vld [vmem:[%s13986 + $0x178] sm:$0xff]
    %v14035 = vld [vmem:[%s13986 + $0x180] sm:$0xff]
    %v14036 = vld [vmem:[%s13986 + $0x188] sm:$0xff]
    %v14037 = vld [vmem:[%s13986 + $0x190] sm:$0xff]
    %v14038 = vld [vmem:[%s13986 + $0x198] sm:$0xff]
    %v14039 = vld [vmem:[%s13986 + $0x1a0] sm:$0xff]
    %v14040 = vld [vmem:[%s13986 + $0x1a8] sm:$0xff]
    %v14041 = vld [vmem:[%s13986 + $0x1b0] sm:$0xff]
    %v14042 = vld [vmem:[%s13986 + $0x1b8] sm:$0xff]
    %v14043 = vld [vmem:[%s13986 + $0x1c0] sm:$0xff]
    %v14044 = vld [vmem:[%s13986 + $0x1c8] sm:$0xff]
    %v14045 = vld [vmem:[%s13986 + $0x1d0] sm:$0xff]
    %v14046 = vld [vmem:[%s13986 + $0x1d8] sm:$0xff]
    %v14047 = vld [vmem:[%s13986 + $0x1e0] sm:$0xff]
    %v14048 = vld [vmem:[%s13986 + $0x1e8] sm:$0xff]
    %v14049 = vld [vmem:[%s13986 + $0x1f0] sm:$0xff]
    %v14050 = vld [vmem:[%s13986 + $0x1f8] sm:$0xff]
    %v14051 = vld [vmem:[%s13986 + $0x200] sm:$0xff]
    %v14052 = vld [vmem:[%s13986 + $0x208] sm:$0xff]
    %v14053 = vld [vmem:[%s13986 + $0x210] sm:$0xff]
    %v14054 = vld [vmem:[%s13986 + $0x218] sm:$0xff]
    %v14055 = vld [vmem:[%s13986 + $0x220] sm:$0xff]
    %v14056 = vld [vmem:[%s13986 + $0x228] sm:$0xff]
    %v14057 = vld [vmem:[%s13986 + $0x230] sm:$0xff]
    %v14058 = vld [vmem:[%s13986 + $0x238] sm:$0xff]
    %v14059 = vld [vmem:[%s13986 + $0x240] sm:$0xff]
    %v14060 = vld [vmem:[%s13986 + $0x248] sm:$0xff]
    %v14061 = vld [vmem:[%s13986 + $0x250] sm:$0xff]
    %v14062 = vld [vmem:[%s13986 + $0x258] sm:$0xff]
    %v14063 = vld [vmem:[%s13986 + $0x260] sm:$0xff]
    %v14064 = vld [vmem:[%s13986 + $0x268] sm:$0xff]
    %v14065 = vld [vmem:[%s13986 + $0x270] sm:$0xff]
    %v14066 = vld [vmem:[%s13986 + $0x278] sm:$0xff]
    %v14067 = vld [vmem:[%s13986 + $0x280] sm:$0xff]
    %v14068 = vld [vmem:[%s13986 + $0x288] sm:$0xff]
    %v14069 = vld [vmem:[%s13986 + $0x290] sm:$0xff]
    %v14070 = vld [vmem:[%s13986 + $0x298] sm:$0xff]
    %v14071 = vld [vmem:[%s13986 + $0x2a0] sm:$0xff]
    %v14072 = vld [vmem:[%s13986 + $0x2a8] sm:$0xff]
    %v14073 = vld [vmem:[%s13986 + $0x2b0] sm:$0xff]
    %v14074 = vld [vmem:[%s13986 + $0x2b8] sm:$0xff]
    %v14075 = vld [vmem:[%s13986 + $0x2c0] sm:$0xff]
    %v14076 = vld [vmem:[%s13986 + $0x2c8] sm:$0xff]
    %v14077 = vld [vmem:[%s13986 + $0x2d0] sm:$0xff]
    %v14078 = vld [vmem:[%s13986 + $0x2d8] sm:$0xff]
    %v14079 = vld [vmem:[%s13986 + $0x2e0] sm:$0xff]
    %v14080 = vld [vmem:[%s13986 + $0x2e8] sm:$0xff]
    %v14081 = vld [vmem:[%s13986 + $0x2f0] sm:$0xff]
    %v14082 = vld [vmem:[%s13986 + $0x2f8] sm:$0xff]
    %v14083 = vld [vmem:[%s13986 + $0x300] sm:$0xff]
    %v14084 = vld [vmem:[%s13986 + $0x308] sm:$0xff]
    %v14085 = vld [vmem:[%s13986 + $0x310] sm:$0xff]
    %v14086 = vld [vmem:[%s13986 + $0x318] sm:$0xff]
    %v14087 = vld [vmem:[%s13986 + $0x320] sm:$0xff]
    %v14088 = vld [vmem:[%s13986 + $0x328] sm:$0xff]
    %v14089 = vld [vmem:[%s13986 + $0x330] sm:$0xff]
    %v14090 = vld [vmem:[%s13986 + $0x338] sm:$0xff]
    %v14091 = vld [vmem:[%s13986 + $0x340] sm:$0xff]
    %v14092 = vld [vmem:[%s13986 + $0x348] sm:$0xff]
    %v14093 = vld [vmem:[%s13986 + $0x350] sm:$0xff]
    %v14094 = vld [vmem:[%s13986 + $0x358] sm:$0xff]
    %v14203 = vunpack.c.l.b16 %v13987
    %v14204 = vunpack.c.h.b16 %v13987
    %v14205 = vunpack.c.l.b16 %v13988
    %v14206 = vunpack.c.h.b16 %v13988
    %v14207 = vunpack.c.l.b16 %v13989
    %v14208 = vunpack.c.h.b16 %v13989
    %v14209 = vunpack.c.l.b16 %v13990
    %v14210 = vunpack.c.h.b16 %v13990
    %v14211 = vunpack.c.l.b16 %v13991
    %v14212 = vunpack.c.h.b16 %v13991
    %v14213 = vunpack.c.l.b16 %v13992
    %v14214 = vunpack.c.h.b16 %v13992
    %v14215 = vunpack.c.l.b16 %v13993
    %v14216 = vunpack.c.h.b16 %v13993
    %v14217 = vunpack.c.l.b16 %v13994
    %v14218 = vunpack.c.h.b16 %v13994
    %v14219 = vunpack.c.l.b16 %v13995
    %v14220 = vunpack.c.h.b16 %v13995
    %v14221 = vunpack.c.l.b16 %v13996
    %v14222 = vunpack.c.h.b16 %v13996
    %v14223 = vunpack.c.l.b16 %v13997
    %v14224 = vunpack.c.h.b16 %v13997
    %v14225 = vunpack.c.l.b16 %v13998
    %v14226 = vunpack.c.h.b16 %v13998
    %v14227 = vunpack.c.l.b16 %v13999
    %v14228 = vunpack.c.h.b16 %v13999
    %v14229 = vunpack.c.l.b16 %v14000
    %v14230 = vunpack.c.h.b16 %v14000
    %v14231 = vunpack.c.l.b16 %v14001
    %v14232 = vunpack.c.h.b16 %v14001
    %v14233 = vunpack.c.l.b16 %v14002
    %v14234 = vunpack.c.h.b16 %v14002
    %v14235 = vunpack.c.l.b16 %v14003
    %v14236 = vunpack.c.h.b16 %v14003
    %v14237 = vunpack.c.l.b16 %v14004
    %v14238 = vunpack.c.h.b16 %v14004
    %v14239 = vunpack.c.l.b16 %v14005
    %v14240 = vunpack.c.h.b16 %v14005
    %v14241 = vunpack.c.l.b16 %v14006
    %v14242 = vunpack.c.h.b16 %v14006
    %v14243 = vunpack.c.l.b16 %v14007
    %v14244 = vunpack.c.h.b16 %v14007
    %v14245 = vunpack.c.l.b16 %v14008
    %v14246 = vunpack.c.h.b16 %v14008
    %v14247 = vunpack.c.l.b16 %v14009
    %v14248 = vunpack.c.h.b16 %v14009
    %v14249 = vunpack.c.l.b16 %v14010
    %v14250 = vunpack.c.h.b16 %v14010
    %v14251 = vunpack.c.l.b16 %v14011
    %v14252 = vunpack.c.h.b16 %v14011
    %v14253 = vunpack.c.l.b16 %v14012
    %v14254 = vunpack.c.h.b16 %v14012
    %v14255 = vunpack.c.l.b16 %v14013
    %v14256 = vunpack.c.h.b16 %v14013
    %v14257 = vunpack.c.l.b16 %v14014
    %v14258 = vunpack.c.h.b16 %v14014
    %v14259 = vunpack.c.l.b16 %v14015
    %v14260 = vunpack.c.h.b16 %v14015
    %v14261 = vunpack.c.l.b16 %v14016
    %v14262 = vunpack.c.h.b16 %v14016
    %v14263 = vunpack.c.l.b16 %v14017
    %v14264 = vunpack.c.h.b16 %v14017
    %v14265 = vunpack.c.l.b16 %v14018
    %v14266 = vunpack.c.h.b16 %v14018
    %v14267 = vunpack.c.l.b16 %v14019
    %v14268 = vunpack.c.h.b16 %v14019
    %v14269 = vunpack.c.l.b16 %v14020
    %v14270 = vunpack.c.h.b16 %v14020
    %v14271 = vunpack.c.l.b16 %v14021
    %v14272 = vunpack.c.h.b16 %v14021
    %v14273 = vunpack.c.l.b16 %v14022
    %v14274 = vunpack.c.h.b16 %v14022
    %v14275 = vunpack.c.l.b16 %v14023
    %v14276 = vunpack.c.h.b16 %v14023
    %v14277 = vunpack.c.l.b16 %v14024
    %v14278 = vunpack.c.h.b16 %v14024
    %v14279 = vunpack.c.l.b16 %v14025
    %v14280 = vunpack.c.h.b16 %v14025
    %v14281 = vunpack.c.l.b16 %v14026
    %v14282 = vunpack.c.h.b16 %v14026
    %v14283 = vunpack.c.l.b16 %v14027
    %v14284 = vunpack.c.h.b16 %v14027
    %v14285 = vunpack.c.l.b16 %v14028
    %v14286 = vunpack.c.h.b16 %v14028
    %v14287 = vunpack.c.l.b16 %v14029
    %v14288 = vunpack.c.h.b16 %v14029
    %v14289 = vunpack.c.l.b16 %v14030
    %v14290 = vunpack.c.h.b16 %v14030
    %v14291 = vunpack.c.l.b16 %v14031
    %v14292 = vunpack.c.h.b16 %v14031
    %v14293 = vunpack.c.l.b16 %v14032
    %v14294 = vunpack.c.h.b16 %v14032
    %v14295 = vunpack.c.l.b16 %v14033
    %v14296 = vunpack.c.h.b16 %v14033
    %v14297 = vunpack.c.l.b16 %v14034
    %v14298 = vunpack.c.h.b16 %v14034
    %v14299 = vunpack.c.l.b16 %v14035
    %v14300 = vunpack.c.h.b16 %v14035
    %v14301 = vunpack.c.l.b16 %v14036
    %v14302 = vunpack.c.h.b16 %v14036
    %v14303 = vunpack.c.l.b16 %v14037
    %v14304 = vunpack.c.h.b16 %v14037
    %v14305 = vunpack.c.l.b16 %v14038
    %v14306 = vunpack.c.h.b16 %v14038
    %v14307 = vunpack.c.l.b16 %v14039
    %v14308 = vunpack.c.h.b16 %v14039
    %v14309 = vunpack.c.l.b16 %v14040
    %v14310 = vunpack.c.h.b16 %v14040
    %v14311 = vunpack.c.l.b16 %v14041
    %v14312 = vunpack.c.h.b16 %v14041
    %v14313 = vunpack.c.l.b16 %v14042
    %v14314 = vunpack.c.h.b16 %v14042
    %v14315 = vunpack.c.l.b16 %v14043
    %v14316 = vunpack.c.h.b16 %v14043
    %v14317 = vunpack.c.l.b16 %v14044
    %v14318 = vunpack.c.h.b16 %v14044
    %v14319 = vunpack.c.l.b16 %v14045
    %v14320 = vunpack.c.h.b16 %v14045
    %v14321 = vunpack.c.l.b16 %v14046
    %v14322 = vunpack.c.h.b16 %v14046
    %v14323 = vunpack.c.l.b16 %v14047
    %v14324 = vunpack.c.h.b16 %v14047
    %v14325 = vunpack.c.l.b16 %v14048
    %v14326 = vunpack.c.h.b16 %v14048
    %v14327 = vunpack.c.l.b16 %v14049
    %v14328 = vunpack.c.h.b16 %v14049
    %v14329 = vunpack.c.l.b16 %v14050
    %v14330 = vunpack.c.h.b16 %v14050
    %v14331 = vunpack.c.l.b16 %v14051
    %v14332 = vunpack.c.h.b16 %v14051
    %v14333 = vunpack.c.l.b16 %v14052
    %v14334 = vunpack.c.h.b16 %v14052
    %v14335 = vunpack.c.l.b16 %v14053
    %v14336 = vunpack.c.h.b16 %v14053
    %v14337 = vunpack.c.l.b16 %v14054
    %v14338 = vunpack.c.h.b16 %v14054
    %v14339 = vunpack.c.l.b16 %v14055
    %v14340 = vunpack.c.h.b16 %v14055
    %v14341 = vunpack.c.l.b16 %v14056
    %v14342 = vunpack.c.h.b16 %v14056
    %v14343 = vunpack.c.l.b16 %v14057
    %v14344 = vunpack.c.h.b16 %v14057
    %v14345 = vunpack.c.l.b16 %v14058
    %v14346 = vunpack.c.h.b16 %v14058
    %v14347 = vunpack.c.l.b16 %v14059
    %v14348 = vunpack.c.h.b16 %v14059
    %v14349 = vunpack.c.l.b16 %v14060
    %v14350 = vunpack.c.h.b16 %v14060
    %v14351 = vunpack.c.l.b16 %v14061
    %v14352 = vunpack.c.h.b16 %v14061
    %v14353 = vunpack.c.l.b16 %v14062
    %v14354 = vunpack.c.h.b16 %v14062
    %v14355 = vunpack.c.l.b16 %v14063
    %v14356 = vunpack.c.h.b16 %v14063
    %v14357 = vunpack.c.l.b16 %v14064
    %v14358 = vunpack.c.h.b16 %v14064
    %v14359 = vunpack.c.l.b16 %v14065
    %v14360 = vunpack.c.h.b16 %v14065
    %v14361 = vunpack.c.l.b16 %v14066
    %v14362 = vunpack.c.h.b16 %v14066
    %v14363 = vunpack.c.l.b16 %v14067
    %v14364 = vunpack.c.h.b16 %v14067
    %v14365 = vunpack.c.l.b16 %v14068
    %v14366 = vunpack.c.h.b16 %v14068
    %v14367 = vunpack.c.l.b16 %v14069
    %v14368 = vunpack.c.h.b16 %v14069
    %v14369 = vunpack.c.l.b16 %v14070
    %v14370 = vunpack.c.h.b16 %v14070
    %v14371 = vunpack.c.l.b16 %v14071
    %v14372 = vunpack.c.h.b16 %v14071
    %v14373 = vunpack.c.l.b16 %v14072
    %v14374 = vunpack.c.h.b16 %v14072
    %v14375 = vunpack.c.l.b16 %v14073
    %v14376 = vunpack.c.h.b16 %v14073
    %v14377 = vunpack.c.l.b16 %v14074
    %v14378 = vunpack.c.h.b16 %v14074
    %v14379 = vunpack.c.l.b16 %v14075
    %v14380 = vunpack.c.h.b16 %v14075
    %v14381 = vunpack.c.l.b16 %v14076
    %v14382 = vunpack.c.h.b16 %v14076
    %v14383 = vunpack.c.l.b16 %v14077
    %v14384 = vunpack.c.h.b16 %v14077
    %v14385 = vunpack.c.l.b16 %v14078
    %v14386 = vunpack.c.h.b16 %v14078
    %v14387 = vunpack.c.l.b16 %v14079
    %v14388 = vunpack.c.h.b16 %v14079
    %v14389 = vunpack.c.l.b16 %v14080
    %v14390 = vunpack.c.h.b16 %v14080
    %v14391 = vunpack.c.l.b16 %v14081
    %v14392 = vunpack.c.h.b16 %v14081
    %v14393 = vunpack.c.l.b16 %v14082
    %v14394 = vunpack.c.h.b16 %v14082
    %v14395 = vunpack.c.l.b16 %v14083
    %v14396 = vunpack.c.h.b16 %v14083
    %v14397 = vunpack.c.l.b16 %v14084
    %v14398 = vunpack.c.h.b16 %v14084
    %v14399 = vunpack.c.l.b16 %v14085
    %v14400 = vunpack.c.h.b16 %v14085
    %v14401 = vunpack.c.l.b16 %v14086
    %v14402 = vunpack.c.h.b16 %v14086
    %v14403 = vunpack.c.l.b16 %v14087
    %v14404 = vunpack.c.h.b16 %v14087
    %v14405 = vunpack.c.l.b16 %v14088
    %v14406 = vunpack.c.h.b16 %v14088
    %v14407 = vunpack.c.l.b16 %v14089
    %v14408 = vunpack.c.h.b16 %v14089
    %v14409 = vunpack.c.l.b16 %v14090
    %v14410 = vunpack.c.h.b16 %v14090
    %v14411 = vunpack.c.l.b16 %v14091
    %v14412 = vunpack.c.h.b16 %v14091
    %v14413 = vunpack.c.l.b16 %v14092
    %v14414 = vunpack.c.h.b16 %v14092
    %v14415 = vunpack.c.l.b16 %v14093
    %v14416 = vunpack.c.h.b16 %v14093
    %v14417 = vunpack.c.l.b16 %v14094
    %v14418 = vunpack.c.h.b16 %v14094
    %v14419 = vpack.c.b16 %v14205, %v14203
    %v14420 = vpack.c.b16 %v14206, %v14204
    %v14421 = vpack.c.b16 %v14209, %v14207
    %v14422 = vpack.c.b16 %v14210, %v14208
    %v14423 = vpack.c.b16 %v14213, %v14211
    %v14424 = vpack.c.b16 %v14214, %v14212
    %v14425 = vpack.c.b16 %v14217, %v14215
    %v14426 = vpack.c.b16 %v14218, %v14216
    %v14427 = vpack.c.b16 %v14221, %v14219
    %v14428 = vpack.c.b16 %v14222, %v14220
    %v14429 = vpack.c.b16 %v14225, %v14223
    %v14430 = vpack.c.b16 %v14226, %v14224
    %v14431 = vpack.c.b16 %v14229, %v14227
    %v14432 = vpack.c.b16 %v14230, %v14228
    %v14433 = vpack.c.b16 %v14233, %v14231
    %v14434 = vpack.c.b16 %v14234, %v14232
    %v14435 = vpack.c.b16 %v14237, %v14235
    %v14436 = vpack.c.b16 %v14238, %v14236
    %v14437 = vpack.c.b16 %v14241, %v14239
    %v14438 = vpack.c.b16 %v14242, %v14240
    %v14439 = vpack.c.b16 %v14245, %v14243
    %v14440 = vpack.c.b16 %v14246, %v14244
    %v14441 = vpack.c.b16 %v14249, %v14247
    %v14442 = vpack.c.b16 %v14250, %v14248
    %v14443 = vpack.c.b16 %v14253, %v14251
    %v14444 = vpack.c.b16 %v14254, %v14252
    %v14445 = vpack.c.b16 %v14257, %v14255
    %v14446 = vpack.c.b16 %v14258, %v14256
    %v14447 = vpack.c.b16 %v14261, %v14259
    %v14448 = vpack.c.b16 %v14262, %v14260
    %v14449 = vpack.c.b16 %v14265, %v14263
    %v14450 = vpack.c.b16 %v14266, %v14264
    %v14451 = vpack.c.b16 %v14269, %v14267
    %v14452 = vpack.c.b16 %v14270, %v14268
    %v14453 = vpack.c.b16 %v14273, %v14271
    %v14454 = vpack.c.b16 %v14274, %v14272
    %v14455 = vpack.c.b16 %v14277, %v14275
    %v14456 = vpack.c.b16 %v14278, %v14276
    %v14457 = vpack.c.b16 %v14281, %v14279
    %v14458 = vpack.c.b16 %v14282, %v14280
    %v14459 = vpack.c.b16 %v14285, %v14283
    %v14460 = vpack.c.b16 %v14286, %v14284
    %v14461 = vpack.c.b16 %v14289, %v14287
    %v14462 = vpack.c.b16 %v14290, %v14288
    %v14463 = vpack.c.b16 %v14293, %v14291
    %v14464 = vpack.c.b16 %v14294, %v14292
    %v14465 = vpack.c.b16 %v14297, %v14295
    %v14466 = vpack.c.b16 %v14298, %v14296
    %v14467 = vpack.c.b16 %v14301, %v14299
    %v14468 = vpack.c.b16 %v14302, %v14300
    %v14469 = vpack.c.b16 %v14305, %v14303
    %v14470 = vpack.c.b16 %v14306, %v14304
    %v14471 = vpack.c.b16 %v14309, %v14307
    %v14472 = vpack.c.b16 %v14310, %v14308
    %v14473 = vpack.c.b16 %v14313, %v14311
    %v14474 = vpack.c.b16 %v14314, %v14312
    %v14475 = vpack.c.b16 %v14317, %v14315
    %v14476 = vpack.c.b16 %v14318, %v14316
    %v14477 = vpack.c.b16 %v14321, %v14319
    %v14478 = vpack.c.b16 %v14322, %v14320
    %v14479 = vpack.c.b16 %v14325, %v14323
    %v14480 = vpack.c.b16 %v14326, %v14324
    %v14481 = vpack.c.b16 %v14329, %v14327
    %v14482 = vpack.c.b16 %v14330, %v14328
    %v14483 = vpack.c.b16 %v14333, %v14331
    %v14484 = vpack.c.b16 %v14334, %v14332
    %v14485 = vpack.c.b16 %v14337, %v14335
    %v14486 = vpack.c.b16 %v14338, %v14336
    %v14487 = vpack.c.b16 %v14341, %v14339
    %v14488 = vpack.c.b16 %v14342, %v14340
    %v14489 = vpack.c.b16 %v14345, %v14343
    %v14490 = vpack.c.b16 %v14346, %v14344
    %v14491 = vpack.c.b16 %v14349, %v14347
    %v14492 = vpack.c.b16 %v14350, %v14348
    %v14493 = vpack.c.b16 %v14353, %v14351
    %v14494 = vpack.c.b16 %v14354, %v14352
    %v14495 = vpack.c.b16 %v14357, %v14355
    %v14496 = vpack.c.b16 %v14358, %v14356
    %v14497 = vpack.c.b16 %v14361, %v14359
    %v14498 = vpack.c.b16 %v14362, %v14360
    %v14499 = vpack.c.b16 %v14365, %v14363
    %v14500 = vpack.c.b16 %v14366, %v14364
    %v14501 = vpack.c.b16 %v14369, %v14367
    %v14502 = vpack.c.b16 %v14370, %v14368
    %v14503 = vpack.c.b16 %v14373, %v14371
    %v14504 = vpack.c.b16 %v14374, %v14372
    %v14505 = vpack.c.b16 %v14377, %v14375
    %v14506 = vpack.c.b16 %v14378, %v14376
    %v14507 = vpack.c.b16 %v14381, %v14379
    %v14508 = vpack.c.b16 %v14382, %v14380
    %v14509 = vpack.c.b16 %v14385, %v14383
    %v14510 = vpack.c.b16 %v14386, %v14384
    %v14511 = vpack.c.b16 %v14389, %v14387
    %v14512 = vpack.c.b16 %v14390, %v14388
    %v14513 = vpack.c.b16 %v14393, %v14391
    %v14514 = vpack.c.b16 %v14394, %v14392
    %v14515 = vpack.c.b16 %v14397, %v14395
    %v14516 = vpack.c.b16 %v14398, %v14396
    %v14517 = vpack.c.b16 %v14401, %v14399
    %v14518 = vpack.c.b16 %v14402, %v14400
    %v14519 = vpack.c.b16 %v14405, %v14403
    %v14520 = vpack.c.b16 %v14406, %v14404
    %v14521 = vpack.c.b16 %v14409, %v14407
    %v14522 = vpack.c.b16 %v14410, %v14408
    %v14523 = vpack.c.b16 %v14413, %v14411
    %v14524 = vpack.c.b16 %v14414, %v14412
    %v14525 = vpack.c.b16 %v14417, %v14415
    %v14526 = vpack.c.b16 %v14418, %v14416
    %14635 = vmatpush.bf16.msra.mxu0 %v14433
    %14636 = vmatpush.bf16.msra.mxu0 %v14431
    %14637 = vmatpush.bf16.msra.mxu0 %v14429
    %14638 = vmatpush.bf16.msra.mxu0 %v14427
    %14639 = vmatpush.bf16.msra.mxu0 %v14425
    %14640 = vmatpush.bf16.msra.mxu0 %v14423
    %14641 = vmatpush.bf16.msra.mxu0 %v14421
    %14642 = vmatpush.bf16.msra.mxu0 %v14419
    %14643 = vmatmul.bf16.gmra.mxu0 %v11479
    %v14644 = vpop.f32.mrf.mxu0
    %v14645 = vadd.f32 0.0, %v14644
    %v14646 = vpop.f32.mrf.mxu0
    %14647 = vdwg.mxu0
    %14648 = vmatpush.bf16.msra.mxu0 %v14449
    %14649 = vmatpush.bf16.msra.mxu0 %v14447
    %14650 = vmatpush.bf16.msra.mxu0 %v14445
    %14651 = vmatpush.bf16.msra.mxu0 %v14443
    %14652 = vmatpush.bf16.msra.mxu0 %v14441
    %14653 = vmatpush.bf16.msra.mxu0 %v14439
    %14654 = vmatpush.bf16.msra.mxu0 %v14437
    %14655 = vmatpush.bf16.msra.mxu0 %v14435
    %14656 = vmatmul.bf16.gmra.mxu0 %v11480
    %v14657 = vpop.f32.mrf.mxu0
    %v14658 = vadd.f32 %v14645, %v14657
    %v14659 = vpop.f32.mrf.mxu0
    %14660 = vdwg.mxu0
    %14661 = vmatpush.bf16.msra.mxu0 %v14465
    %14662 = vmatpush.bf16.msra.mxu0 %v14463
    %14663 = vmatpush.bf16.msra.mxu0 %v14461
    %14664 = vmatpush.bf16.msra.mxu0 %v14459
    %14665 = vmatpush.bf16.msra.mxu0 %v14457
    %14666 = vmatpush.bf16.msra.mxu0 %v14455
    %14667 = vmatpush.bf16.msra.mxu0 %v14453
    %14668 = vmatpush.bf16.msra.mxu0 %v14451
    %14669 = vmatmul.bf16.gmra.mxu0 %v11481
    %v14670 = vpop.f32.mrf.mxu0
    %v14671 = vadd.f32 %v14658, %v14670
    %v14672 = vpop.f32.mrf.mxu0
    %14673 = vdwg.mxu0
    %14674 = vmatpush.bf16.msra.mxu0 %v14481
    %14675 = vmatpush.bf16.msra.mxu0 %v14479
    %14676 = vmatpush.bf16.msra.mxu0 %v14477
    %14677 = vmatpush.bf16.msra.mxu0 %v14475
    %14678 = vmatpush.bf16.msra.mxu0 %v14473
    %14679 = vmatpush.bf16.msra.mxu0 %v14471
    %14680 = vmatpush.bf16.msra.mxu0 %v14469
    %14681 = vmatpush.bf16.msra.mxu0 %v14467
    %14682 = vmatmul.bf16.gmra.mxu0 %v11482
    %v14683 = vpop.f32.mrf.mxu0
    %v14684 = vadd.f32 %v14671, %v14683
    %v14685 = vpop.f32.mrf.mxu0
    %14686 = vdwg.mxu0
    %14687 = vmatpush.bf16.msra.mxu0 %v14497
    %14688 = vmatpush.bf16.msra.mxu0 %v14495
    %14689 = vmatpush.bf16.msra.mxu0 %v14493
    %14690 = vmatpush.bf16.msra.mxu0 %v14491
    %14691 = vmatpush.bf16.msra.mxu0 %v14489
    %14692 = vmatpush.bf16.msra.mxu0 %v14487
    %14693 = vmatpush.bf16.msra.mxu0 %v14485
    %14694 = vmatpush.bf16.msra.mxu0 %v14483
    %14695 = vmatmul.bf16.gmra.mxu0 %v11483
    %v14696 = vpop.f32.mrf.mxu0
    %v14697 = vadd.f32 %v14684, %v14696
    %v14698 = vpop.f32.mrf.mxu0
    %14699 = vdwg.mxu0
    %14700 = vmatpush.bf16.msra.mxu0 %v14513
    %14701 = vmatpush.bf16.msra.mxu0 %v14511
    %14702 = vmatpush.bf16.msra.mxu0 %v14509
    %14703 = vmatpush.bf16.msra.mxu0 %v14507
    %14704 = vmatpush.bf16.msra.mxu0 %v14505
    %14705 = vmatpush.bf16.msra.mxu0 %v14503
    %14706 = vmatpush.bf16.msra.mxu0 %v14501
    %14707 = vmatpush.bf16.msra.mxu0 %v14499
    %14708 = vmatmul.bf16.gmra.mxu0 %v11484
    %v14709 = vpop.f32.mrf.mxu0
    %v14710 = vadd.f32 %v14697, %v14709
    %v14711 = vpop.f32.mrf.mxu0
    %14712 = vdwg.mxu0
    %14713 = vmatpush.bf16.msra.mxu0 0
    %14714 = vmatpush.bf16.msra.mxu0 0
    %14715 = vmatpush.bf16.msra.mxu0 %v14525
    %14716 = vmatpush.bf16.msra.mxu0 %v14523
    %14717 = vmatpush.bf16.msra.mxu0 %v14521
    %14718 = vmatpush.bf16.msra.mxu0 %v14519
    %14719 = vmatpush.bf16.msra.mxu0 %v14517
    %14720 = vmatpush.bf16.msra.mxu0 %v14515
    %14721 = vmatmul.bf16.gmra.mxu0 %v12136
    %v14722 = vpop.f32.mrf.mxu0
    %v14723 = vadd.f32 %v14710, %v14722
    %v14724 = vpop.f32.mrf.mxu0
    %14725 = vdwg.mxu0
    %14726 = vmatpush.bf16.msra.mxu0 %v14434
    %14727 = vmatpush.bf16.msra.mxu0 %v14432
    %14728 = vmatpush.bf16.msra.mxu0 %v14430
    %14729 = vmatpush.bf16.msra.mxu0 %v14428
    %14730 = vmatpush.bf16.msra.mxu0 %v14426
    %14731 = vmatpush.bf16.msra.mxu0 %v14424
    %14732 = vmatpush.bf16.msra.mxu0 %v14422
    %14733 = vmatpush.bf16.msra.mxu0 %v14420
    %14734 = vmatmul.bf16.gmra.mxu0 %v11479
    %v14735 = vpop.f32.mrf.mxu0
    %v14736 = vadd.f32 0.0, %v14735
    %v14737 = vpop.f32.mrf.mxu0
    %14738 = vdwg.mxu0
    %14739 = vmatpush.bf16.msra.mxu0 %v14450
    %14740 = vmatpush.bf16.msra.mxu0 %v14448
    %14741 = vmatpush.bf16.msra.mxu0 %v14446
    %14742 = vmatpush.bf16.msra.mxu0 %v14444
    %14743 = vmatpush.bf16.msra.mxu0 %v14442
    %14744 = vmatpush.bf16.msra.mxu0 %v14440
    %14745 = vmatpush.bf16.msra.mxu0 %v14438
    %14746 = vmatpush.bf16.msra.mxu0 %v14436
    %14747 = vmatmul.bf16.gmra.mxu0 %v11480
    %v14748 = vpop.f32.mrf.mxu0
    %v14749 = vadd.f32 %v14736, %v14748
    %v14750 = vpop.f32.mrf.mxu0
    %14751 = vdwg.mxu0
    %14752 = vmatpush.bf16.msra.mxu0 %v14466
    %14753 = vmatpush.bf16.msra.mxu0 %v14464
    %14754 = vmatpush.bf16.msra.mxu0 %v14462
    %14755 = vmatpush.bf16.msra.mxu0 %v14460
    %14756 = vmatpush.bf16.msra.mxu0 %v14458
    %14757 = vmatpush.bf16.msra.mxu0 %v14456
    %14758 = vmatpush.bf16.msra.mxu0 %v14454
    %14759 = vmatpush.bf16.msra.mxu0 %v14452
    %14760 = vmatmul.bf16.gmra.mxu0 %v11481
    %v14761 = vpop.f32.mrf.mxu0
    %v14762 = vadd.f32 %v14749, %v14761
    %v14763 = vpop.f32.mrf.mxu0
    %14764 = vdwg.mxu0
    %14765 = vmatpush.bf16.msra.mxu0 %v14482
    %14766 = vmatpush.bf16.msra.mxu0 %v14480
    %14767 = vmatpush.bf16.msra.mxu0 %v14478
    %14768 = vmatpush.bf16.msra.mxu0 %v14476
    %14769 = vmatpush.bf16.msra.mxu0 %v14474
    %14770 = vmatpush.bf16.msra.mxu0 %v14472
    %14771 = vmatpush.bf16.msra.mxu0 %v14470
    %14772 = vmatpush.bf16.msra.mxu0 %v14468
    %14773 = vmatmul.bf16.gmra.mxu0 %v11482
    %v14774 = vpop.f32.mrf.mxu0
    %v14775 = vadd.f32 %v14762, %v14774
    %v14776 = vpop.f32.mrf.mxu0
    %14777 = vdwg.mxu0
    %14778 = vmatpush.bf16.msra.mxu0 %v14498
    %14779 = vmatpush.bf16.msra.mxu0 %v14496
    %14780 = vmatpush.bf16.msra.mxu0 %v14494
    %14781 = vmatpush.bf16.msra.mxu0 %v14492
    %14782 = vmatpush.bf16.msra.mxu0 %v14490
    %14783 = vmatpush.bf16.msra.mxu0 %v14488
    %14784 = vmatpush.bf16.msra.mxu0 %v14486
    %14785 = vmatpush.bf16.msra.mxu0 %v14484
    %14786 = vmatmul.bf16.gmra.mxu0 %v11483
    %v14787 = vpop.f32.mrf.mxu0
    %v14788 = vadd.f32 %v14775, %v14787
    %v14789 = vpop.f32.mrf.mxu0
    %14790 = vdwg.mxu0
    %14791 = vmatpush.bf16.msra.mxu0 %v14514
    %14792 = vmatpush.bf16.msra.mxu0 %v14512
    %14793 = vmatpush.bf16.msra.mxu0 %v14510
    %14794 = vmatpush.bf16.msra.mxu0 %v14508
    %14795 = vmatpush.bf16.msra.mxu0 %v14506
    %14796 = vmatpush.bf16.msra.mxu0 %v14504
    %14797 = vmatpush.bf16.msra.mxu0 %v14502
    %14798 = vmatpush.bf16.msra.mxu0 %v14500
    %14799 = vmatmul.bf16.gmra.mxu0 %v11484
    %v14800 = vpop.f32.mrf.mxu0
    %v14801 = vadd.f32 %v14788, %v14800
    %v14802 = vpop.f32.mrf.mxu0
    %14803 = vdwg.mxu0
    %14804 = vmatpush.bf16.msra.mxu0 0
    %14805 = vmatpush.bf16.msra.mxu0 0
    %14806 = vmatpush.bf16.msra.mxu0 %v14526
    %14807 = vmatpush.bf16.msra.mxu0 %v14524
    %14808 = vmatpush.bf16.msra.mxu0 %v14522
    %14809 = vmatpush.bf16.msra.mxu0 %v14520
    %14810 = vmatpush.bf16.msra.mxu0 %v14518
    %14811 = vmatpush.bf16.msra.mxu0 %v14516
    %14812 = vmatmul.bf16.gmra.mxu0 %v12136
    %v14813 = vpop.f32.mrf.mxu0
    %v14814 = vadd.f32 %v14801, %v14813
    %v14815 = vpop.f32.mrf.mxu0
    %14816 = vdwg.mxu0
    %v14817 = vmax.f32 %v13984, %v14723
    %v14818 = vmax.f32 %v13985, %v14814
    %v14819 = vld [vmem:[#allocation8] sm:$0x3]
    %v14821 = vperm.slane %v14819, 0
    %v14822 = vperm.slane %v14819, 1
    %v14825 = vadd.f32 %v14817, %v14821
    %v14826 = vadd.f32 %v14818, %v14822
    %v14827 = vmax.f32 %v14825, 0.0
    %v14828 = vmax.f32 %v14826, 0.0
    %v14829 = vpack.c.bf16 %v14827, %v14827
    %v14830 = vpack.c.bf16 %v14828, %v14828
    %v14831 = vld [vmem:[#allocation10] sm:$0xf]
    %v14832 = vld [vmem:[#allocation10 + $0x4] sm:$0xf]
    %v14833 = vld [vmem:[#allocation10 + $0x8] sm:$0xf]
    %v14834 = vld [vmem:[#allocation10 + $0xc] sm:$0xf]
    %v14835 = vld [vmem:[#allocation10 + $0x10] sm:$0xf]
    %v14836 = vld [vmem:[#allocation10 + $0x14] sm:$0xf]
    %v14837 = vld [vmem:[#allocation10 + $0x18] sm:$0xf]
    %v14838 = vld [vmem:[#allocation10 + $0x1c] sm:$0xf]
    %v14839 = vld [vmem:[#allocation10 + $0x20] sm:$0xf]
    %v14840 = vld [vmem:[#allocation10 + $0x24] sm:$0xf]
    %v14841 = vld [vmem:[#allocation10 + $0x28] sm:$0xf]
    %v14842 = vld [vmem:[#allocation10 + $0x2c] sm:$0xf]
    %v14843 = vld [vmem:[#allocation10 + $0x30] sm:$0xf]
    %v14844 = vld [vmem:[#allocation10 + $0x34] sm:$0xf]
    %v14845 = vld [vmem:[#allocation10 + $0x38] sm:$0xf]
    %v14846 = vld [vmem:[#allocation10 + $0x3c] sm:$0xf]
    %v14847 = vld [vmem:[#allocation10 + $0x40] sm:$0xf]
    %v14848 = vld [vmem:[#allocation10 + $0x44] sm:$0xf]
    %v14849 = vld [vmem:[#allocation10 + $0x48] sm:$0xf]
    %v14850 = vld [vmem:[#allocation10 + $0x4c] sm:$0xf]
    %v14851 = vld [vmem:[#allocation10 + $0x50] sm:$0xf]
    %v14852 = vld [vmem:[#allocation10 + $0x54] sm:$0xf]
    %v14853 = vld [vmem:[#allocation10 + $0x58] sm:$0xf]
    %v14854 = vld [vmem:[#allocation10 + $0x5c] sm:$0xf]
    %v14855 = vld [vmem:[#allocation10 + $0x60] sm:$0xf]
    %v14856 = vld [vmem:[#allocation10 + $0x64] sm:$0xf]
    %v14857 = vld [vmem:[#allocation10 + $0x68] sm:$0xf]
    %v14858 = vld [vmem:[#allocation10 + $0x6c] sm:$0xf]
    %v14859 = vld [vmem:[#allocation10 + $0x70] sm:$0xf]
    %v14860 = vld [vmem:[#allocation10 + $0x74] sm:$0xf]
    %v14861 = vld [vmem:[#allocation10 + $0x78] sm:$0xf]
    %v14862 = vld [vmem:[#allocation10 + $0x7c] sm:$0xf]
    %v14863 = vld [vmem:[#allocation11] sm:$0x1]
    %v14865 = vperm.slane %v14863, 0
    %v14899 = vunpack.c.l.b16 %v14831
    %v14900 = vunpack.c.l.b16 %v14832
    %v14901 = vunpack.c.l.b16 %v14833
    %v14902 = vunpack.c.l.b16 %v14834
    %v14903 = vunpack.c.l.b16 %v14835
    %v14904 = vunpack.c.l.b16 %v14836
    %v14905 = vunpack.c.l.b16 %v14837
    %v14906 = vunpack.c.l.b16 %v14838
    %v14907 = vunpack.c.l.b16 %v14839
    %v14908 = vunpack.c.l.b16 %v14840
    %v14909 = vunpack.c.l.b16 %v14841
    %v14910 = vunpack.c.l.b16 %v14842
    %v14911 = vunpack.c.l.b16 %v14843
    %v14912 = vunpack.c.l.b16 %v14844
    %v14913 = vunpack.c.l.b16 %v14845
    %v14914 = vunpack.c.l.b16 %v14846
    %v14915 = vunpack.c.l.b16 %v14847
    %v14916 = vunpack.c.l.b16 %v14848
    %v14917 = vunpack.c.l.b16 %v14849
    %v14918 = vunpack.c.l.b16 %v14850
    %v14919 = vunpack.c.l.b16 %v14851
    %v14920 = vunpack.c.l.b16 %v14852
    %v14921 = vunpack.c.l.b16 %v14853
    %v14922 = vunpack.c.l.b16 %v14854
    %v14923 = vunpack.c.l.b16 %v14855
    %v14924 = vunpack.c.l.b16 %v14856
    %v14925 = vunpack.c.l.b16 %v14857
    %v14926 = vunpack.c.l.b16 %v14858
    %v14927 = vunpack.c.l.b16 %v14859
    %v14928 = vunpack.c.l.b16 %v14860
    %v14929 = vunpack.c.l.b16 %v14861
    %v14930 = vunpack.c.l.b16 %v14862
    %v14931 = vpack.c.b16 %v14900, %v14899
    %v14932 = vpack.c.b16 %v14902, %v14901
    %v14933 = vpack.c.b16 %v14904, %v14903
    %v14934 = vpack.c.b16 %v14906, %v14905
    %v14935 = vpack.c.b16 %v14908, %v14907
    %v14936 = vpack.c.b16 %v14910, %v14909
    %v14937 = vpack.c.b16 %v14912, %v14911
    %v14938 = vpack.c.b16 %v14914, %v14913
    %v14939 = vpack.c.b16 %v14916, %v14915
    %v14940 = vpack.c.b16 %v14918, %v14917
    %v14941 = vpack.c.b16 %v14920, %v14919
    %v14942 = vpack.c.b16 %v14922, %v14921
    %v14943 = vpack.c.b16 %v14924, %v14923
    %v14944 = vpack.c.b16 %v14926, %v14925
    %v14945 = vpack.c.b16 %v14928, %v14927
    %v14946 = vpack.c.b16 %v14930, %v14929
    %14963 = vmatpush.bf16.msra.mxu0 %v14938
    %14964 = vmatpush.bf16.msra.mxu0 %v14937
    %14965 = vmatpush.bf16.msra.mxu0 %v14936
    %14966 = vmatpush.bf16.msra.mxu0 %v14935
    %14967 = vmatpush.bf16.msra.mxu0 %v14934
    %14968 = vmatpush.bf16.msra.mxu0 %v14933
    %14969 = vmatpush.bf16.msra.mxu0 %v14932
    %14970 = vmatpush.bf16.msra.mxu0 %v14931
    %14971 = vmatmul.bf16.gmra.mxu0 %v14829
    %v14972 = vpop.f32.mrf.mxu0
    %v14973 = vadd.f32 %v14865, %v14972
    %v14974 = vpop.f32.mrf.mxu0
    %14975 = vdwg.mxu0
    %14976 = vmatpush.bf16.msra.mxu0 %v14946
    %14977 = vmatpush.bf16.msra.mxu0 %v14945
    %14978 = vmatpush.bf16.msra.mxu0 %v14944
    %14979 = vmatpush.bf16.msra.mxu0 %v14943
    %14980 = vmatpush.bf16.msra.mxu0 %v14942
    %14981 = vmatpush.bf16.msra.mxu0 %v14941
    %14982 = vmatpush.bf16.msra.mxu0 %v14940
    %14983 = vmatpush.bf16.msra.mxu0 %v14939
    %14984 = vmatmul.bf16.gmra.mxu0 %v14830
    %v14985 = vpop.f32.mrf.mxu0
    %v14986 = vadd.f32 %v14973, %v14985
    %v14987 = vpop.f32.mrf.mxu0
    %14988 = vdwg.mxu0
    %v14989 = vmax.f32 %v14986, 0.0
    %v14990 = vpack.c.bf16 %v14989, %v14989
    %v14991 = vld [vmem:[#allocation13] sm:$0xf]
    %v14992 = vld [vmem:[#allocation13 + $0x4] sm:$0xf]
    %v14993 = vld [vmem:[#allocation13 + $0x8] sm:$0xf]
    %v14994 = vld [vmem:[#allocation13 + $0xc] sm:$0xf]
    %v14995 = vld [vmem:[#allocation13 + $0x10] sm:$0xf]
    %v14996 = vld [vmem:[#allocation13 + $0x14] sm:$0xf]
    %v14997 = vld [vmem:[#allocation13 + $0x18] sm:$0xf]
    %v14998 = vld [vmem:[#allocation13 + $0x1c] sm:$0xf]
    %v14999 = vld [vmem:[#allocation13 + $0x20] sm:$0xf]
    %v15000 = vld [vmem:[#allocation13 + $0x24] sm:$0xf]
    %v15001 = vld [vmem:[#allocation13 + $0x28] sm:$0xf]
    %v15002 = vld [vmem:[#allocation13 + $0x2c] sm:$0xf]
    %v15003 = vld [vmem:[#allocation13 + $0x30] sm:$0xf]
    %v15004 = vld [vmem:[#allocation13 + $0x34] sm:$0xf]
    %v15005 = vld [vmem:[#allocation13 + $0x38] sm:$0xf]
    %v15006 = vld [vmem:[#allocation13 + $0x3c] sm:$0xf]
    %v15007 = vld [vmem:[#allocation14] sm:$0x1]
    %v15009 = vperm.slane %v15007, 0
    %v15027 = vunpack.c.l.b16 %v14991
    %v15028 = vunpack.c.l.b16 %v14992
    %v15029 = vunpack.c.l.b16 %v14993
    %v15030 = vunpack.c.l.b16 %v14994
    %v15031 = vunpack.c.l.b16 %v14995
    %v15032 = vunpack.c.l.b16 %v14996
    %v15033 = vunpack.c.l.b16 %v14997
    %v15034 = vunpack.c.l.b16 %v14998
    %v15035 = vunpack.c.l.b16 %v14999
    %v15036 = vunpack.c.l.b16 %v15000
    %v15037 = vunpack.c.l.b16 %v15001
    %v15038 = vunpack.c.l.b16 %v15002
    %v15039 = vunpack.c.l.b16 %v15003
    %v15040 = vunpack.c.l.b16 %v15004
    %v15041 = vunpack.c.l.b16 %v15005
    %v15042 = vunpack.c.l.b16 %v15006
    %v15043 = vpack.c.b16 %v15028, %v15027
    %v15044 = vpack.c.b16 %v15030, %v15029
    %v15045 = vpack.c.b16 %v15032, %v15031
    %v15046 = vpack.c.b16 %v15034, %v15033
    %v15047 = vpack.c.b16 %v15036, %v15035
    %v15048 = vpack.c.b16 %v15038, %v15037
    %v15049 = vpack.c.b16 %v15040, %v15039
    %v15050 = vpack.c.b16 %v15042, %v15041
    %15059 = vmatpush.bf16.msra.mxu0 %v15050
    %15060 = vmatpush.bf16.msra.mxu0 %v15049
    %15061 = vmatpush.bf16.msra.mxu0 %v15048
    %15062 = vmatpush.bf16.msra.mxu0 %v15047
    %15063 = vmatpush.bf16.msra.mxu0 %v15046
    %15064 = vmatpush.bf16.msra.mxu0 %v15045
    %15065 = vmatpush.bf16.msra.mxu0 %v15044
    %15066 = vmatpush.bf16.msra.mxu0 %v15043
    %15067 = vmatmul.bf16.gmra.mxu0 %v14990
    %v15068 = vpop.f32.mrf.mxu0
    %v15069 = vadd.f32 %v15009, %v15068
    %v15070 = vpop.f32.mrf.mxu0
    %15071 = vdwg.mxu0
    %v15072 = vmax.f32 %v15069, 0.0
    %v15073 = vpack.c.bf16 %v15072, %v15072
    %v15074 = vld [vmem:[#allocation16] sm:$0xf]
    %v15075 = vld [vmem:[#allocation16 + $0x4] sm:$0xf]
    %v15076 = vld [vmem:[#allocation16 + $0x8] sm:$0xf]
    %v15077 = vld [vmem:[#allocation16 + $0xc] sm:$0xf]
    %v15078 = vld [vmem:[#allocation16 + $0x10] sm:$0xf]
    %v15079 = vld [vmem:[#allocation16 + $0x14] sm:$0xf]
    %v15080 = vld [vmem:[#allocation16 + $0x18] sm:$0xf]
    %v15081 = vld [vmem:[#allocation16 + $0x1c] sm:$0xf]
    %v15082 = vld [vmem:[#allocation16 + $0x20] sm:$0xf]
    %v15083 = vld [vmem:[#allocation16 + $0x24] sm:$0xf]
    %v15084 = vld [vmem:[#allocation16 + $0x28] sm:$0xf]
    %v15085 = vld [vmem:[#allocation16 + $0x2c] sm:$0xf]
    %v15086 = vld [vmem:[#allocation16 + $0x30] sm:$0xf]
    %v15087 = vld [vmem:[#allocation16 + $0x34] sm:$0xf]
    %v15088 = vld [vmem:[#allocation16 + $0x38] sm:$0xf]
    %v15089 = vld [vmem:[#allocation16 + $0x3c] sm:$0xf]
    %v15090 = vld [vmem:[#allocation17] sm:$0x1]
    %v15092 = vperm.slane %v15090, 0
    %v15110 = vunpack.c.l.b16 %v15074
    %v15111 = vunpack.c.l.b16 %v15075
    %v15112 = vunpack.c.l.b16 %v15076
    %v15113 = vunpack.c.l.b16 %v15077
    %v15114 = vunpack.c.l.b16 %v15078
    %v15115 = vunpack.c.l.b16 %v15079
    %v15116 = vunpack.c.l.b16 %v15080
    %v15117 = vunpack.c.l.b16 %v15081
    %v15118 = vunpack.c.l.b16 %v15082
    %v15119 = vunpack.c.l.b16 %v15083
    %v15120 = vunpack.c.l.b16 %v15084
    %v15121 = vunpack.c.l.b16 %v15085
    %v15122 = vunpack.c.l.b16 %v15086
    %v15123 = vunpack.c.l.b16 %v15087
    %v15124 = vunpack.c.l.b16 %v15088
    %v15125 = vunpack.c.l.b16 %v15089
    %v15126 = vpack.c.b16 %v15111, %v15110
    %v15127 = vpack.c.b16 %v15113, %v15112
    %v15128 = vpack.c.b16 %v15115, %v15114
    %v15129 = vpack.c.b16 %v15117, %v15116
    %v15130 = vpack.c.b16 %v15119, %v15118
    %v15131 = vpack.c.b16 %v15121, %v15120
    %v15132 = vpack.c.b16 %v15123, %v15122
    %v15133 = vpack.c.b16 %v15125, %v15124
    %15142 = vmatpush.bf16.msra.mxu0 %v15133
    %15143 = vmatpush.bf16.msra.mxu0 %v15132
    %15144 = vmatpush.bf16.msra.mxu0 %v15131
    %15145 = vmatpush.bf16.msra.mxu0 %v15130
    %15146 = vmatpush.bf16.msra.mxu0 %v15129
    %15147 = vmatpush.bf16.msra.mxu0 %v15128
    %15148 = vmatpush.bf16.msra.mxu0 %v15127
    %15149 = vmatpush.bf16.msra.mxu0 %v15126
    %15150 = vmatmul.bf16.gmra.mxu0 %v15073
    %v15151 = vpop.f32.mrf.mxu0
    %v15152 = vadd.f32 %v15092, %v15151
    %v15153 = vpop.f32.mrf.mxu0
    %15154 = vdwg.mxu0
    %15155 = vst [vmem:[#allocation19] sm:$0x3] %v15152
    // Predicated region
    $region86: #{lenet_pallas.1} parent=1 // pred_check
      _
    $region87: #{lenet_pallas.1} parent=1 // pred_check_branch
      %15157 = sbr.rel (0) target = $region89
    $region88: #{lenet_pallas.1} parent=1 // pred_region
      %15159 = vsyncadd [#allocation4], 0
      %s15161 = sshll.u32 [#allocation19], 4
      %s15162 = int_to_ptr.vmem [resolvable:$true] %s15161
      %s15163 = sshll.u32 %s11, 4
      %s15164 = int_to_ptr.hbm [resolvable:$true] %s15163
      %15166 = dma.vmem_to_hbm [thread:$0]  %s15162, 32, %s15164, [#allocation4]
    $region89: #{lenet_pallas.1} parent=1 // pred_fallthru
      _
    // Predicated region
    $region90: #{lenet_pallas.1} parent=1 // pred_check
      _
    $region91: #{lenet_pallas.1} parent=1 // pred_check_branch
      %15168 = sbr.rel (0) target = $region93
    $region92: #{lenet_pallas.1} parent=1 // pred_region
      %15170 = dma.done [#allocation4], 32
    $region93: #{lenet_pallas.1} parent=1 // pred_fallthru
      _
    %15171 = vsyncpa [#allocation3], 1
    %15172 = vsyncpa [#allocation6], 1
    %15173 = vsyncpa [#allocation9], 1
    %15174 = vsyncpa [#allocation12], 1
    %15175 = vsyncpa [#allocation15], 1
    %15176 = vsyncpa [#allocation18], 1
    %15177 = vsyncpa [#allocation4], 1

</llo_original>
